<compile_context>
chip_gen: v7x
topology: tpu7x:2x2x1
jax: 0.10.0
libtpu: 0.0.40
codegen_flags: <defaults>
</compile_context>

<pallas_src>
import functools

import jax
import jax.numpy as jnp
from jax import lax
from jax.experimental import pallas as pl
from jax.experimental.pallas import tpu as pltpu

EPS = 1e-5
_VMEM_LIMIT = 48 * 1024 * 1024  # leave headroom below v7x's 64 MiB physical VMEM


# ------------------------------ Pallas kernels ------------------------------ #

def _hyper_scale_kernel(betas_ref, w_ref, b_ref, o_ref):
    # ActivationLayer.hyper_block_scale: Linear(1, C): scale[n, c] = w[c] * betas[n, 0] + b[c]
    o_ref[...] = betas_ref[...] * w_ref[...] + b_ref[...]


def _conv3x3_kernel(pre_act, x_top_ref, x_mid_ref, x_bot_ref, w_ref, coef_ref,
                    scale_ref, y_ref, stats_ref):
    """Fused: [optional BN-normalize+ReLU of the input] -> 3x3 conv (9 shifted matmuls)
    -> per-sample hyper-scale -> write y and accumulate BN stats of y."""
    bh = pl.program_id(1)
    nbh = pl.num_programs(1)
    _, th, W, Cp = y_ref.shape

    top = x_top_ref[0].astype(jnp.float32)      # (1,  W, Cp) row just above the band
    mid = x_mid_ref[0].astype(jnp.float32)      # (th, W, Cp) the band itself
    bot = x_bot_ref[0].astype(jnp.float32)      # (1,  W, Cp) row just below the band

    if pre_act:
        a = coef_ref[0:1, :].reshape(1, 1, Cp)  # gamma * rsqrt(var + eps)
        b = coef_ref[1:2, :].reshape(1, 1, Cp)  # beta  - mean * a
        top = jnp.maximum(top * a + b, 0.0)
        mid = jnp.maximum(mid * a + b, 0.0)
        bot = jnp.maximum(bot * a + b, 0.0)

    # Zero the halo rows that fall outside the image (conv zero padding).
    top = top * (bh > 0).astype(jnp.float32)
    bot = bot * (bh < nbh - 1).astype(jnp.float32)

    # bf16 at the matmul boundary only (f32 accumulation on the MXU).
    win = jnp.concatenate([top, mid, bot], axis=0).astype(jnp.bfloat16)  # (th+2, W, Cp)
    zcol = jnp.zeros((th, 1, Cp), jnp.bfloat16)

    acc = jnp.zeros((th * W, Cp), jnp.float32)
    for dh in range(3):
        rows = win[dh:dh + th]                                    # (th, W, Cp)
        for dw in range(3):
            if dw == 0:        # needs input column j-1 (zero at left edge)
                shifted = jnp.concatenate([zcol, rows[:, :W - 1, :]], axis=1)
            elif dw == 1:
                shifted = rows
            else:              # needs input column j+1 (zero at right edge)
                shifted = jnp.concatenate([rows[:, 1:, :], zcol], axis=1)
            acc = acc + jnp.dot(shifted.reshape(th * W, Cp),
                                w_ref[dh * 3 + dw],
                                preferred_element_type=jnp.float32)

    out = acc.reshape(th, W, Cp) * scale_ref[...]                 # hyper-scale (per sample)
    y_ref[...] = out.reshape(1, th, W, Cp)

    # Single-pass BN statistics of this conv's (scaled) output, accumulated over the
    # 'arbitrary' row-band axis.  (sum / sum-of-squares in f32; fine at these scales.)
    flat = out.reshape(th * W, Cp)
    ssum = jnp.sum(flat, axis=0, keepdims=True)                   # (1, Cp)
    ssq = jnp.sum(flat * flat, axis=0, keepdims=True)             # (1, Cp)

    @pl.when(bh == 0)
    def _():
        stats_ref[...] = jnp.zeros_like(stats_ref)

    stats_ref[...] += jnp.concatenate([ssum, ssq], axis=0).reshape(1, 2, Cp)


def _bn_finalize_kernel(count, stats_ref, gamma_ref, beta_ref, coef_ref):
    # Combine per-sample partial stats and produce the affine normalization coefficients
    # a = gamma * rsqrt(var + eps), b = beta - mean * a   (so BN(x) = x*a + b).
    st = stats_ref[...]                                 # (N, 2, Cp)
    s = jnp.sum(st[:, 0:1, :], axis=0)                  # (1, Cp)
    sq = jnp.sum(st[:, 1:2, :], axis=0)                 # (1, Cp)
    mean = s / count
    var = jnp.maximum(sq / count - mean * mean, 0.0)    # biased variance
    a = gamma_ref[...] * lax.rsqrt(var + EPS)
    b = beta_ref[...] - mean * a
    coef_ref[...] = jnp.concatenate([a, b], axis=0)     # (2, Cp)


def _residual_bn_relu_kernel(y_ref, x_ref, coef_ref, o_ref):
    # out = x + relu(BN2(y))   (lane-dense tiles over M = N*H*W)
    a = coef_ref[0:1, :]
    b = coef_ref[1:2, :]
    o_ref[...] = x_ref[...] + jnp.maximum(y_ref[...] * a + b, 0.0)


# ------------------------------ kernel wrappers ------------------------------ #

def _hyper_scale(betas, w_row, b_row):
    N = betas.shape[0]
    Cp = w_row.shape[1]
    scale = pl.pallas_call(
        _hyper_scale_kernel,
        out_shape=jax.ShapeDtypeStruct((N, Cp), jnp.float32),
        grid=(1,),
        in_specs=[pl.BlockSpec((N, 1), lambda i: (0, 0)),
                  pl.BlockSpec((1, Cp), lambda i: (0, 0)),
                  pl.BlockSpec((1, Cp), lambda i: (0, 0))],
        out_specs=pl.BlockSpec((N, Cp), lambda i: (0, 0)),
    )(betas, w_row, b_row)
    return scale.reshape(N, 1, Cp)


def _fused_conv(x_nhwc, w_taps, coef, scale_n, pre_act, th):
    N, H, W, Cp = x_nhwc.shape
    nbh = H // th
    kernel = functools.partial(_conv3x3_kernel, pre_act)

    top_map = lambda n, b: (n, jnp.maximum(b * th - 1, 0), 0, 0)      # 1-row halo above
    mid_map = lambda n, b: (n, b, 0, 0)
    bot_map = lambda n, b: (n, jnp.minimum(b * th + th, H - 1), 0, 0)  # 1-row halo below

    y, stats = pl.pallas_call(
        kernel,
        out_shape=(jax.ShapeDtypeStruct((N, H, W, Cp), jnp.float32),
                   jax.ShapeDtypeStruct((N, 2, Cp), jnp.float32)),
        grid=(N, nbh),
        in_specs=[
            pl.BlockSpec((1, 1, W, Cp), top_map),
            pl.BlockSpec((1, th, W, Cp), mid_map),
            pl.BlockSpec((1, 1, W, Cp), bot_map),
            pl.BlockSpec((9, Cp, Cp), lambda n, b: (0, 0, 0)),   # resident bf16 weights
            pl.BlockSpec((2, Cp), lambda n, b: (0, 0)),          # BN coefs of previous stage
            pl.BlockSpec((1, 1, Cp), lambda n, b: (n, 0, 0)),    # per-sample hyper scale
        ],
        out_specs=(
            pl.BlockSpec((1, th, W, Cp), lambda n, b: (n, b, 0, 0)),
            pl.BlockSpec((1, 2, Cp), lambda n, b: (n, 0, 0)),    # stats accumulator
        ),
        compiler_params=pltpu.CompilerParams(
            dimension_semantics=("parallel", "arbitrary"),
            vmem_limit_bytes=_VMEM_LIMIT,
        ),
    )(x_nhwc, x_nhwc, x_nhwc, w_taps, coef, scale_n)
    return y, stats


def _bn_finalize(stats, gamma, beta, count):
    N, _, Cp = stats.shape
    return pl.pallas_call(
        functools.partial(_bn_finalize_kernel, count),
        out_shape=jax.ShapeDtypeStruct((2, Cp), jnp.float32),
        grid=(1,),
        in_specs=[pl.BlockSpec((N, 2, Cp), lambda i: (0, 0, 0)),
                  pl.BlockSpec((1, Cp), lambda i: (0, 0)),
                  pl.BlockSpec((1, Cp), lambda i: (0, 0))],
        out_specs=pl.BlockSpec((2, Cp), lambda i: (0, 0)),
    )(stats, gamma, beta)


def _residual_bn_relu(y2d, x2d, coef, tm):
    M, Cp = y2d.shape
    return pl.pallas_call(
        _residual_bn_relu_kernel,
        out_shape=jax.ShapeDtypeStruct((M, Cp), jnp.float32),
        grid=(M // tm,),
        in_specs=[pl.BlockSpec((tm, Cp), lambda i: (i, 0)),
                  pl.BlockSpec((tm, Cp), lambda i: (i, 0)),
                  pl.BlockSpec((2, Cp), lambda i: (0, 0))],
        out_specs=pl.BlockSpec((tm, Cp), lambda i: (i, 0)),
        compiler_params=pltpu.CompilerParams(
            dimension_semantics=("parallel",),
            vmem_limit_bytes=_VMEM_LIMIT,
        ),
    )(y2d, x2d, coef)


# ------------------------------- tiling helpers ------------------------------ #

def _round_up(v, m):
    return ((v + m - 1) // m) * m


def _pick_row_tile(H, W, Cp, bytes_cap=2 * 1024 * 1024):
    # Largest divisor of H whose (th, W, Cp) f32 block stays under the VMEM budget
    # (budget chosen to fit comfortably in v7x's 64 MiB with double buffering).
    best = 1
    for th in range(1, H + 1):
        if H % th == 0 and th * W * Cp * 4 <= bytes_cap:
            best = th
    return best


def _pick_m_tile(M, Cp, bytes_cap=2 * 1024 * 1024):
    best = None
    for tm in range(8, M + 1, 8):
        if M % tm == 0 and tm * Cp * 4 <= bytes_cap:
            best = tm
    return best if best is not None else M  # full-dim block is always legal


# -------------------------------- module wrapper ------------------------------ #

@jax.jit
def activated_resblock2d(x_nchw, betas, params):
    """Forward pass equivalent to ActivatedResblock2d(x, betas). x is NCHW, betas is (N, 1)."""
    N, C, H, W = x_nchw.shape
    Cp = _round_up(max(C, 1), 128)  # lane-dense / MXU-friendly channel padding

    # ---- layout prep (pure data movement, done once in JAX) ----
    x = jnp.transpose(x_nchw, (0, 2, 3, 1)).astype(jnp.float32)          # NHWC
    x = jnp.pad(x, ((0, 0), (0, 0), (0, 0), (0, Cp - C)))

    def prep_conv_w(w):  # (Co, Ci, 3, 3) OIHW -> (9, Cp_in, Cp_out) bf16, tap-major (dh,dw)
        w = jnp.pad(w.astype(jnp.float32), ((0, Cp - C), (0, Cp - C), (0, 0), (0, 0)))
        return jnp.transpose(w, (2, 3, 1, 0)).reshape(9, Cp, Cp).astype(jnp.bfloat16)

    def prep_vec(v, fill=0.0):
        return jnp.pad(v.astype(jnp.float32), (0, Cp - C),
                       constant_values=fill).reshape(1, Cp)

    w1 = prep_conv_w(params["w1"])
    w2 = prep_conv_w(params["w2"])
    ws1 = prep_vec(params["ws1"][:, 0]); bs1 = prep_vec(params["bs1"])
    ws2 = prep_vec(params["ws2"][:, 0]); bs2 = prep_vec(params["bs2"])
    g1 = prep_vec(params["gamma1"], 1.0); b1 = prep_vec(params["beta1"])
    g2 = prep_vec(params["gamma2"], 1.0); b2 = prep_vec(params["beta2"])

    # ActivationLayer scales (Linear(1, C) of betas), per sample.
    scale1 = _hyper_scale(betas.astype(jnp.float32), ws1, bs1)   # (N, 1, Cp)
    scale2 = _hyper_scale(betas.astype(jnp.float32), ws2, bs2)

    th = _pick_row_tile(H, W, Cp)
    count = float(N * H * W)
    ident = jnp.concatenate([jnp.ones((1, Cp), jnp.float32),
                             jnp.zeros((1, Cp), jnp.float32)], axis=0)  # unused for conv1

    # conv1 (+ hyper scale), with BN1 stats fused into the epilogue
    y1, stats1 = _fused_conv(x, w1, ident, scale1, pre_act=False, th=th)
    coef1 = _bn_finalize(stats1, g1, b1, count)
    # BN1 normalize + ReLU fused into conv2's input side; conv2 (+ scale) + BN2 stats
    y2, stats2 = _fused_conv(y1, w2, coef1, scale2, pre_act=True, th=th)
    coef2 = _bn_finalize(stats2, g2, b2, count)

    # out = x + relu(BN2(y2)), tiled over M = N*H*W
    M = N * H * W
    tm = _pick_m_tile(M, Cp)
    out2d = _residual_bn_relu(y2.reshape(M, Cp), x.reshape(M, Cp), coef2, tm)

    out = out2d.reshape(N, H, W, Cp)[..., :C]
    return jnp.transpose(out, (0, 3, 1, 2))


# ------------------------------ pure-JAX reference ---------------------------- #

def _ref_forward(x, betas, params):
    """Mirror of the module with the same precision policy as the kernel
    (bf16 conv operands, f32 accumulation, all BN math in f32)."""
    def conv_scale(v, w, ws, bs):
        out = lax.conv_general_dilated(
            v.astype(jnp.bfloat16), w.astype(jnp.bfloat16),
            window_strides=(1, 1), padding=((1, 1), (1, 1)),
            dimension_numbers=("NCHW", "OIHW", "NCHW"),
            preferred_element_type=jnp.float32)
        s = betas @ ws.T + bs                                  # Linear(1, C)
        return out * s[:, :, None, None]

    def bn_relu(v, g, b):
        mean = v.mean(axis=(0, 2, 3), keepdims=True)
        var = ((v - mean) ** 2).mean(axis=(0, 2, 3), keepdims=True)
        y = (v - mean) * lax.rsqrt(var + EPS)
        y = y * g.reshape(1, -1, 1, 1) + b.reshape(1, -1, 1, 1)
        return jnp.maximum(y, 0.0)

    y = conv_scale(x, params["w1"], params["ws1"], params["bs1"])
    y = bn_relu(y, params["gamma1"], params["beta1"])
    y = conv_scale(y, params["w2"], params["ws2"], params["bs2"])
    y = bn_relu(y, params["gamma2"], params["beta2"])
    return x + y


# ------------------------------------ main ------------------------------------ #

if __name__ == "__main__":
    key = jax.random.PRNGKey(0)
    kx, kb, kw1, kw2, kws1, kbs1, kws2, kbs2 = jax.random.split(key, 8)
    N, C, H, W = 2, 4, 16, 16

    x = jax.random.normal(kx, (N, C, H, W), jnp.float32)
    betas = jax.random.uniform(kb, (N, 1), jnp.float32)
    xavier = (2.0 / (1 + C)) ** 0.5
    params = {
        "w1": 0.1 * jax.random.normal(kw1, (C, C, 3, 3), jnp.float32),   # Conv2d (O,I,kh,kw)
        "w2": 0.1 * jax.random.normal(kw2, (C, C, 3, 3), jnp.float32),
        "ws1": xavier * jax.random.normal(kws1, (C, 1), jnp.float32),    # hyper Linear weight
        "bs1": 0.1 * jax.random.normal(kbs1, (C,), jnp.float32),         # hyper Linear bias
        "ws2": xavier * jax.random.normal(kws2, (C, 1), jnp.float32),
        "bs2": 0.1 * jax.random.normal(kbs2, (C,), jnp.float32),
        "gamma1": jnp.ones((C,), jnp.float32),                           # BatchNorm defaults
        "beta1": jnp.zeros((C,), jnp.float32),
        "gamma2": jnp.ones((C,), jnp.float32),
        "beta2": jnp.zeros((C,), jnp.float32),
    }

    out = jax.block_until_ready(activated_resblock2d(x, betas, params))
    ref = jax.block_until_ready(_ref_forward(x, betas, params))

    assert out.shape == (N, C, H, W)
    max_err = float(jnp.max(jnp.abs(out - ref)))
    assert jnp.allclose(out, ref, atol=1e-2, rtol=1e-2), f"mismatch vs reference, max err {max_err}"
    print("KERNEL_OK")
</pallas_src>

<mosaic_0001>
module attributes {stable_mosaic.version = 11 : i64} {
  func.func @_hyper_scale_kernel(%arg0: i32, %arg1: memref<2x1xf32, #tpu.memory_space<vmem>>, %arg2: memref<1x128xf32, #tpu.memory_space<vmem>>, %arg3: memref<1x128xf32, #tpu.memory_space<vmem>>, %arg4: memref<2x128xf32, #tpu.memory_space<vmem>>) attributes {dimension_semantics = [#tpu.dimension_semantics<arbitrary>], iteration_bounds = array<i64: 1>, scalar_prefetch = 0 : i64, scratch_operands = 0 : i64, tpu.core_type = #tpu.core_type<tc>, window_params = [{pipeline_mode = #tpu.pipeline_mode<synchronous>, transform_indices = @transform_0, window_bounds = array<i64: 2, 1>}, {pipeline_mode = #tpu.pipeline_mode<synchronous>, transform_indices = @transform_1, window_bounds = array<i64: 1, 128>}, {pipeline_mode = #tpu.pipeline_mode<synchronous>, transform_indices = @transform_2, window_bounds = array<i64: 1, 128>}, {pipeline_mode = #tpu.pipeline_mode<synchronous>, transform_indices = @transform_3, window_bounds = array<i64: 2, 128>}]} {
    %c0 = arith.constant 0 : index
    %c0_0 = arith.constant 0 : index
    %0 = vector.load %arg1[%c0, %c0_0] : memref<2x1xf32, #tpu.memory_space<vmem>>, vector<2x1xf32>
    %c0_1 = arith.constant 0 : index
    %c0_2 = arith.constant 0 : index
    %1 = vector.load %arg2[%c0_1, %c0_2] : memref<1x128xf32, #tpu.memory_space<vmem>>, vector<1x128xf32>
    %2 = vector.broadcast %0 : vector<2x1xf32> to vector<2x128xf32>
    %3 = vector.broadcast %1 : vector<1x128xf32> to vector<2x128xf32>
    %4 = arith.mulf %2, %3 : vector<2x128xf32>
    %c0_3 = arith.constant 0 : index
    %c0_4 = arith.constant 0 : index
    %5 = vector.load %arg3[%c0_3, %c0_4] : memref<1x128xf32, #tpu.memory_space<vmem>>, vector<1x128xf32>
    %6 = vector.broadcast %5 : vector<1x128xf32> to vector<2x128xf32>
    %7 = arith.addf %4, %6 : vector<2x128xf32>
    %c0_5 = arith.constant 0 : index
    %c0_6 = arith.constant 0 : index
    %8 = vector.load %arg4[%c0_5, %c0_6] : memref<2x128xf32, #tpu.memory_space<vmem>>, vector<2x128xf32>
    tpu.vector_store %arg4[%c0_5, %c0_6], %7 {strides = array<i32>} : memref<2x128xf32, #tpu.memory_space<vmem>>, vector<2x128xf32>,
    return
  }
  func.func @transform_0(%arg0: i32) -> (i32, i32) {
    %c0_i32 = arith.constant 0 : i32
    %c0_i32_0 = arith.constant 0 : i32
    %c0_i32_1 = arith.constant 0 : i32
    return %c0_i32, %c0_i32_0 : i32, i32
  }
  func.func @transform_1(%arg0: i32) -> (i32, i32) {
    %c0_i32 = arith.constant 0 : i32
    %c0_i32_0 = arith.constant 0 : i32
    %c0_i32_1 = arith.constant 0 : i32
    return %c0_i32, %c0_i32_0 : i32, i32
  }
  func.func @transform_2(%arg0: i32) -> (i32, i32) {
    %c0_i32 = arith.constant 0 : i32
    %c0_i32_0 = arith.constant 0 : i32
    %c0_i32_1 = arith.constant 0 : i32
    return %c0_i32, %c0_i32_0 : i32, i32
  }
  func.func @transform_3(%arg0: i32) -> (i32, i32) {
    %c0_i32 = arith.constant 0 : i32
    %c0_i32_0 = arith.constant 0 : i32
    %c0_i32_1 = arith.constant 0 : i32
    return %c0_i32, %c0_i32_0 : i32, i32
  }
}

module attributes {stable_mosaic.version = 11 : i64} {
  func.func @_conv3x3_kernel(%arg0: i32, %arg1: i32, %arg2: memref<1x1x16x128xf32, #tpu.memory_space<vmem>>, %arg3: memref<1x16x16x128xf32, #tpu.memory_space<vmem>>, %arg4: memref<1x1x16x128xf32, #tpu.memory_space<vmem>>, %arg5: memref<9x128x128xbf16, #tpu.memory_space<vmem>>, %arg6: memref<2x128xf32, #tpu.memory_space<vmem>>, %arg7: memref<1x1x128xf32, #tpu.memory_space<vmem>>, %arg8: memref<1x16x16x128xf32, #tpu.memory_space<vmem>>, %arg9: memref<1x2x128xf32, #tpu.memory_space<vmem>>) attributes {dimension_semantics = [#tpu.dimension_semantics<parallel>, #tpu.dimension_semantics<arbitrary>], iteration_bounds = array<i64: 2, 1>, scalar_prefetch = 0 : i64, scratch_operands = 0 : i64, tpu.core_type = #tpu.core_type<tc>, window_params = [{transform_indices = @transform_0, window_bounds = array<i64: 1, 1, 16, 128>}, {transform_indices = @transform_1, window_bounds = array<i64: 1, 16, 16, 128>}, {transform_indices = @transform_2, window_bounds = array<i64: 1, 1, 16, 128>}, {pipeline_mode = #tpu.pipeline_mode<synchronous>, transform_indices = @transform_3, window_bounds = array<i64: 9, 128, 128>}, {pipeline_mode = #tpu.pipeline_mode<synchronous>, transform_indices = @transform_4, window_bounds = array<i64: 2, 128>}, {transform_indices = @transform_5, window_bounds = array<i64: 1, 1, 128>}, {transform_indices = @transform_6, window_bounds = array<i64: 1, 16, 16, 128>}, {transform_indices = @transform_7, window_bounds = array<i64: 1, 2, 128>}]} {
    %c0 = arith.constant 0 : index
    %c0_0 = arith.constant 0 : index
    %c0_1 = arith.constant 0 : index
    %c0_2 = arith.constant 0 : index
    %0 = vector.load %arg2[%c0, %c0_0, %c0_1, %c0_2] : memref<1x1x16x128xf32, #tpu.memory_space<vmem>>, vector<1x1x16x128xf32>
    %1 = vector.shape_cast %0 : vector<1x1x16x128xf32> to vector<1x16x128xf32>
    %c0_3 = arith.constant 0 : index
    %c0_4 = arith.constant 0 : index
    %c0_5 = arith.constant 0 : index
    %c0_6 = arith.constant 0 : index
    %2 = vector.load %arg3[%c0_3, %c0_4, %c0_5, %c0_6] : memref<1x16x16x128xf32, #tpu.memory_space<vmem>>, vector<1x16x16x128xf32>
    %3 = vector.shape_cast %2 : vector<1x16x16x128xf32> to vector<16x16x128xf32>
    %c0_7 = arith.constant 0 : index
    %c0_8 = arith.constant 0 : index
    %c0_9 = arith.constant 0 : index
    %c0_10 = arith.constant 0 : index
    %4 = vector.load %arg4[%c0_7, %c0_8, %c0_9, %c0_10] : memref<1x1x16x128xf32, #tpu.memory_space<vmem>>, vector<1x1x16x128xf32>
    %5 = vector.shape_cast %4 : vector<1x1x16x128xf32> to vector<1x16x128xf32>
    %c0_i32 = arith.constant 0 : i32
    %6 = arith.cmpi sgt, %arg1, %c0_i32 : i32
    %7 = arith.extui %6 : i1 to i32
    %8 = arith.sitofp %7 : i32 to f32
    %9 = vector.broadcast %8 : f32 to vector<1x16x128xf32>
    %10 = arith.mulf %1, %9 : vector<1x16x128xf32>
    %c0_i32_11 = arith.constant 0 : i32
    %11 = arith.cmpi slt, %arg1, %c0_i32_11 : i32
    %12 = arith.extui %11 : i1 to i32
    %13 = arith.sitofp %12 : i32 to f32
    %14 = vector.broadcast %13 : f32 to vector<1x16x128xf32>
    %15 = arith.mulf %5, %14 : vector<1x16x128xf32>
    %16 = tpu.concatenate %10, %3, %15 in 0 : vector<1x16x128xf32>, vector<16x16x128xf32>, vector<1x16x128xf32> -> vector<18x16x128xf32>
    %17 = arith.truncf %16 : vector<18x16x128xf32> to vector<18x16x128xbf16>
    %cst = arith.constant 0.000000e+00 : bf16
    %18 = vector.broadcast %cst : bf16 to vector<16x1x128xbf16>
    %cst_12 = arith.constant 0.000000e+00 : f32
    %19 = vector.broadcast %cst_12 : f32 to vector<256x128xf32>
    %20 = vector.extract_strided_slice %17 {offsets = [0, 0, 0], sizes = [16, 16, 128], strides = [1, 1, 1]} : vector<18x16x128xbf16> to vector<16x16x128xbf16>
    %21 = vector.extract_strided_slice %20 {offsets = [0, 0, 0], sizes = [16, 15, 128], strides = [1, 1, 1]} : vector<16x16x128xbf16> to vector<16x15x128xbf16>
    %22 = tpu.concatenate %18, %21 in 1 : vector<16x1x128xbf16>, vector<16x15x128xbf16> -> vector<16x16x128xbf16>
    %23 = vector.shape_cast %22 : vector<16x16x128xbf16> to vector<256x128xbf16>
    %c0_13 = arith.constant 0 : index
    %c0_14 = arith.constant 0 : index
    %c0_15 = arith.constant 0 : index
    %24 = vector.load %arg5[%c0_13, %c0_14, %c0_15] : memref<9x128x128xbf16, #tpu.memory_space<vmem>>, vector<1x128x128xbf16>
    %25 = vector.shape_cast %24 : vector<1x128x128xbf16> to vector<128x128xbf16>
    %cst_16 = arith.constant dense<0.000000e+00> : vector<256x128xf32>
    %26 = tpu.matmul %23, %25, %cst_16 {dimension_numbers = #tpu.dot_dimension_numbers<[1], [0], [0], [1], [0, 0, 1, 1], [], []>} : vector<256x128xbf16>, vector<128x128xbf16>, vector<256x128xf32> -> vector<256x128xf32>
    %27 = arith.addf %19, %26 : vector<256x128xf32>
    %28 = vector.shape_cast %20 : vector<16x16x128xbf16> to vector<256x128xbf16>
    %c1 = arith.constant 1 : index
    %c0_17 = arith.constant 0 : index
    %c0_18 = arith.constant 0 : index
    %29 = vector.load %arg5[%c1, %c0_17, %c0_18] : memref<9x128x128xbf16, #tpu.memory_space<vmem>>, vector<1x128x128xbf16>
    %30 = vector.shape_cast %29 : vector<1x128x128xbf16> to vector<128x128xbf16>
    %cst_19 = arith.constant dense<0.000000e+00> : vector<256x128xf32>
    %31 = tpu.matmul %28, %30, %cst_19 {dimension_numbers = #tpu.dot_dimension_numbers<[1], [0], [0], [1], [0, 0, 1, 1], [], []>} : vector<256x128xbf16>, vector<128x128xbf16>, vector<256x128xf32> -> vector<256x128xf32>
    %32 = arith.addf %27, %31 : vector<256x128xf32>
    %33 = vector.extract_strided_slice %20 {offsets = [0, 1, 0], sizes = [16, 15, 128], strides = [1, 1, 1]} : vector<16x16x128xbf16> to vector<16x15x128xbf16>
    %34 = tpu.concatenate %33, %18 in 1 : vector<16x15x128xbf16>, vector<16x1x128xbf16> -> vector<16x16x128xbf16>
    %35 = vector.shape_cast %34 : vector<16x16x128xbf16> to vector<256x128xbf16>
    %c2 = arith.constant 2 : index
    %c0_20 = arith.constant 0 : index
    %c0_21 = arith.constant 0 : index
    %36 = vector.load %arg5[%c2, %c0_20, %c0_21] : memref<9x128x128xbf16, #tpu.memory_space<vmem>>, vector<1x128x128xbf16>
    %37 = vector.shape_cast %36 : vector<1x128x128xbf16> to vector<128x128xbf16>
    %cst_22 = arith.constant dense<0.000000e+00> : vector<256x128xf32>
    %38 = tpu.matmul %35, %37, %cst_22 {dimension_numbers = #tpu.dot_dimension_numbers<[1], [0], [0], [1], [0, 0, 1, 1], [], []>} : vector<256x128xbf16>, vector<128x128xbf16>, vector<256x128xf32> -> vector<256x128xf32>
    %39 = arith.addf %32, %38 : vector<256x128xf32>
    %40 = vector.extract_strided_slice %17 {offsets = [1, 0, 0], sizes = [16, 16, 128], strides = [1, 1, 1]} : vector<18x16x128xbf16> to vector<16x16x128xbf16>
    %41 = vector.extract_strided_slice %40 {offsets = [0, 0, 0], sizes = [16, 15, 128], strides = [1, 1, 1]} : vector<16x16x128xbf16> to vector<16x15x128xbf16>
    %42 = tpu.concatenate %18, %41 in 1 : vector<16x1x128xbf16>, vector<16x15x128xbf16> -> vector<16x16x128xbf16>
    %43 = vector.shape_cast %42 : vector<16x16x128xbf16> to vector<256x128xbf16>
    %c3 = arith.constant 3 : index
    %c0_23 = arith.constant 0 : index
    %c0_24 = arith.constant 0 : index
    %44 = vector.load %arg5[%c3, %c0_23, %c0_24] : memref<9x128x128xbf16, #tpu.memory_space<vmem>>, vector<1x128x128xbf16>
    %45 = vector.shape_cast %44 : vector<1x128x128xbf16> to vector<128x128xbf16>
    %cst_25 = arith.constant dense<0.000000e+00> : vector<256x128xf32>
    %46 = tpu.matmul %43, %45, %cst_25 {dimension_numbers = #tpu.dot_dimension_numbers<[1], [0], [0], [1], [0, 0, 1, 1], [], []>} : vector<256x128xbf16>, vector<128x128xbf16>, vector<256x128xf32> -> vector<256x128xf32>
    %47 = arith.addf %39, %46 : vector<256x128xf32>
    %48 = vector.shape_cast %40 : vector<16x16x128xbf16> to vector<256x128xbf16>
    %c4 = arith.constant 4 : index
    %c0_26 = arith.constant 0 : index
    %c0_27 = arith.constant 0 : index
    %49 = vector.load %arg5[%c4, %c0_26, %c0_27] : memref<9x128x128xbf16, #tpu.memory_space<vmem>>, vector<1x128x128xbf16>
    %50 = vector.shape_cast %49 : vector<1x128x128xbf16> to vector<128x128xbf16>
    %cst_28 = arith.constant dense<0.000000e+00> : vector<256x128xf32>
    %51 = tpu.matmul %48, %50, %cst_28 {dimension_numbers = #tpu.dot_dimension_numbers<[1], [0], [0], [1], [0, 0, 1, 1], [], []>} : vector<256x128xbf16>, vector<128x128xbf16>, vector<256x128xf32> -> vector<256x128xf32>
    %52 = arith.addf %47, %51 : vector<256x128xf32>
    %53 = vector.extract_strided_slice %40 {offsets = [0, 1, 0], sizes = [16, 15, 128], strides = [1, 1, 1]} : vector<16x16x128xbf16> to vector<16x15x128xbf16>
    %54 = tpu.concatenate %53, %18 in 1 : vector<16x15x128xbf16>, vector<16x1x128xbf16> -> vector<16x16x128xbf16>
    %55 = vector.shape_cast %54 : vector<16x16x128xbf16> to vector<256x128xbf16>
    %c5 = arith.constant 5 : index
    %c0_29 = arith.constant 0 : index
    %c0_30 = arith.constant 0 : index
    %56 = vector.load %arg5[%c5, %c0_29, %c0_30] : memref<9x128x128xbf16, #tpu.memory_space<vmem>>, vector<1x128x128xbf16>
    %57 = vector.shape_cast %56 : vector<1x128x128xbf16> to vector<128x128xbf16>
    %cst_31 = arith.constant dense<0.000000e+00> : vector<256x128xf32>
    %58 = tpu.matmul %55, %57, %cst_31 {dimension_numbers = #tpu.dot_dimension_numbers<[1], [0], [0], [1], [0, 0, 1, 1], [], []>} : vector<256x128xbf16>, vector<128x128xbf16>, vector<256x128xf32> -> vector<256x128xf32>
    %59 = arith.addf %52, %58 : vector<256x128xf32>
    %60 = vector.extract_strided_slice %17 {offsets = [2, 0, 0], sizes = [16, 16, 128], strides = [1, 1, 1]} : vector<18x16x128xbf16> to vector<16x16x128xbf16>
    %61 = vector.extract_strided_slice %60 {offsets = [0, 0, 0], sizes = [16, 15, 128], strides = [1, 1, 1]} : vector<16x16x128xbf16> to vector<16x15x128xbf16>
    %62 = tpu.concatenate %18, %61 in 1 : vector<16x1x128xbf16>, vector<16x15x128xbf16> -> vector<16x16x128xbf16>
    %63 = vector.shape_cast %62 : vector<16x16x128xbf16> to vector<256x128xbf16>
    %c6 = arith.constant 6 : index
    %c0_32 = arith.constant 0 : index
    %c0_33 = arith.constant 0 : index
    %64 = vector.load %arg5[%c6, %c0_32, %c0_33] : memref<9x128x128xbf16, #tpu.memory_space<vmem>>, vector<1x128x128xbf16>
    %65 = vector.shape_cast %64 : vector<1x128x128xbf16> to vector<128x128xbf16>
    %cst_34 = arith.constant dense<0.000000e+00> : vector<256x128xf32>
    %66 = tpu.matmul %63, %65, %cst_34 {dimension_numbers = #tpu.dot_dimension_numbers<[1], [0], [0], [1], [0, 0, 1, 1], [], []>} : vector<256x128xbf16>, vector<128x128xbf16>, vector<256x128xf32> -> vector<256x128xf32>
    %67 = arith.addf %59, %66 : vector<256x128xf32>
    %68 = vector.shape_cast %60 : vector<16x16x128xbf16> to vector<256x128xbf16>
    %c7 = arith.constant 7 : index
    %c0_35 = arith.constant 0 : index
    %c0_36 = arith.constant 0 : index
    %69 = vector.load %arg5[%c7, %c0_35, %c0_36] : memref<9x128x128xbf16, #tpu.memory_space<vmem>>, vector<1x128x128xbf16>
    %70 = vector.shape_cast %69 : vector<1x128x128xbf16> to vector<128x128xbf16>
    %cst_37 = arith.constant dense<0.000000e+00> : vector<256x128xf32>
    %71 = tpu.matmul %68, %70, %cst_37 {dimension_numbers = #tpu.dot_dimension_numbers<[1], [0], [0], [1], [0, 0, 1, 1], [], []>} : vector<256x128xbf16>, vector<128x128xbf16>, vector<256x128xf32> -> vector<256x128xf32>
    %72 = arith.addf %67, %71 : vector<256x128xf32>
    %73 = vector.extract_strided_slice %60 {offsets = [0, 1, 0], sizes = [16, 15, 128], strides = [1, 1, 1]} : vector<16x16x128xbf16> to vector<16x15x128xbf16>
    %74 = tpu.concatenate %73, %18 in 1 : vector<16x15x128xbf16>, vector<16x1x128xbf16> -> vector<16x16x128xbf16>
    %75 = vector.shape_cast %74 : vector<16x16x128xbf16> to vector<256x128xbf16>
    %c8 = arith.constant 8 : index
    %c0_38 = arith.constant 0 : index
    %c0_39 = arith.constant 0 : index
    %76 = vector.load %arg5[%c8, %c0_38, %c0_39] : memref<9x128x128xbf16, #tpu.memory_space<vmem>>, vector<1x128x128xbf16>
    %77 = vector.shape_cast %76 : vector<1x128x128xbf16> to vector<128x128xbf16>
    %cst_40 = arith.constant dense<0.000000e+00> : vector<256x128xf32>
    %78 = tpu.matmul %75, %77, %cst_40 {dimension_numbers = #tpu.dot_dimension_numbers<[1], [0], [0], [1], [0, 0, 1, 1], [], []>} : vector<256x128xbf16>, vector<128x128xbf16>, vector<256x128xf32> -> vector<256x128xf32>
    %79 = arith.addf %72, %78 : vector<256x128xf32>
    %80 = vector.shape_cast %79 : vector<256x128xf32> to vector<16x16x128xf32>
    %c0_41 = arith.constant 0 : index
    %c0_42 = arith.constant 0 : index
    %c0_43 = arith.constant 0 : index
    %81 = vector.load %arg7[%c0_41, %c0_42, %c0_43] : memref<1x1x128xf32, #tpu.memory_space<vmem>>, vector<1x1x128xf32>
    %82 = vector.broadcast %81 : vector<1x1x128xf32> to vector<16x16x128xf32>
    %83 = arith.mulf %80, %82 : vector<16x16x128xf32>
    %84 = vector.shape_cast %83 : vector<16x16x128xf32> to vector<1x16x16x128xf32>
    %c0_44 = arith.constant 0 : index
    %c0_45 = arith.constant 0 : index
    %c0_46 = arith.constant 0 : index
    %c0_47 = arith.constant 0 : index
    %85 = vector.load %arg8[%c0_44, %c0_45, %c0_46, %c0_47] : memref<1x16x16x128xf32, #tpu.memory_space<vmem>>, vector<1x16x16x128xf32>
    tpu.vector_store %arg8[%c0_44, %c0_45, %c0_46, %c0_47], %84 {strides = array<i32>} : memref<1x16x16x128xf32, #tpu.memory_space<vmem>>, vector<1x16x16x128xf32>,
    %86 = vector.shape_cast %83 : vector<16x16x128xf32> to vector<256x128xf32>
    %cst_48 = arith.constant dense<0.000000e+00> : vector<128xf32>
    %87 = vector.multi_reduction <add>, %86, %cst_48 [0] : vector<256x128xf32> to vector<128xf32>
    %88 = vector.shape_cast %87 : vector<128xf32> to vector<1x128xf32>
    %89 = arith.mulf %86, %86 : vector<256x128xf32>
    %cst_49 = arith.constant dense<0.000000e+00> : vector<128xf32>
    %90 = vector.multi_reduction <add>, %89, %cst_49 [0] : vector<256x128xf32> to vector<128xf32>
    %91 = vector.shape_cast %90 : vector<128xf32> to vector<1x128xf32>
    %c0_i32_50 = arith.constant 0 : i32
    %92 = arith.cmpi eq, %arg1, %c0_i32_50 : i32
    %93 = arith.extui %92 : i1 to i32
    %c0_i32_51 = arith.constant 0 : i32
    %94 = arith.cmpi ne, %93, %c0_i32_51 : i32
    scf.if %94 {
      %cst_58 = arith.constant 0.000000e+00 : f32
      %100 = vector.broadcast %cst_58 : f32 to vector<1x2x128xf32>
      %c0_59 = arith.constant 0 : index
      %c0_60 = arith.constant 0 : index
      %c0_61 = arith.constant 0 : index
      %101 = vector.load %arg9[%c0_59, %c0_60, %c0_61] : memref<1x2x128xf32, #tpu.memory_space<vmem>>, vector<1x2x128xf32>
      tpu.vector_store %arg9[%c0_59, %c0_60, %c0_61], %100 {strides = array<i32>} : memref<1x2x128xf32, #tpu.memory_space<vmem>>, vector<1x2x128xf32>,
    } else {
    }
    %c0_52 = arith.constant 0 : index
    %c0_53 = arith.constant 0 : index
    %c0_54 = arith.constant 0 : index
    %95 = vector.load %arg9[%c0_52, %c0_53, %c0_54] : memref<1x2x128xf32, #tpu.memory_space<vmem>>, vector<1x2x128xf32>
    %96 = tpu.concatenate %88, %91 in 0 : vector<1x128xf32>, vector<1x128xf32> -> vector<2x128xf32>
    %97 = vector.shape_cast %96 : vector<2x128xf32> to vector<1x2x128xf32>
    %98 = arith.addf %95, %97 : vector<1x2x128xf32>
    %c0_55 = arith.constant 0 : index
    %c0_56 = arith.constant 0 : index
    %c0_57 = arith.constant 0 : index
    %99 = vector.load %arg9[%c0_55, %c0_56, %c0_57] : memref<1x2x128xf32, #tpu.memory_space<vmem>>, vector<1x2x128xf32>
    tpu.vector_store %arg9[%c0_55, %c0_56, %c0_57], %98 {strides = array<i32>} : memref<1x2x128xf32, #tpu.memory_space<vmem>>, vector<1x2x128xf32>,
    return
  }
  func.func @transform_0(%arg0: i32, %arg1: i32) -> (i32, i32, i32, i32) {
    %c16_i32 = arith.constant 16 : i32
    %0 = arith.muli %arg1, %c16_i32 : i32
    %c1_i32 = arith.constant 1 : i32
    %1 = arith.subi %0, %c1_i32 : i32
    %c0_i32 = arith.constant 0 : i32
    %2 = arith.maxsi %1, %c0_i32 : i32
    %c0_i32_0 = arith.constant 0 : i32
    %c0_i32_1 = arith.constant 0 : i32
    %c0_i32_2 = arith.constant 0 : i32
    return %arg0, %2, %c0_i32_0, %c0_i32_1 : i32, i32, i32, i32
  }
  func.func @transform_1(%arg0: i32, %arg1: i32) -> (i32, i32, i32, i32) {
    %c0_i32 = arith.constant 0 : i32
    %c0_i32_0 = arith.constant 0 : i32
    %c0_i32_1 = arith.constant 0 : i32
    return %arg0, %arg1, %c0_i32, %c0_i32_0 : i32, i32, i32, i32
  }
  func.func @transform_2(%arg0: i32, %arg1: i32) -> (i32, i32, i32, i32) {
    %c16_i32 = arith.constant 16 : i32
    %0 = arith.muli %arg1, %c16_i32 : i32
    %c16_i32_0 = arith.constant 16 : i32
    %1 = arith.addi %0, %c16_i32_0 : i32
    %c15_i32 = arith.constant 15 : i32
    %2 = arith.minsi %1, %c15_i32 : i32
    %c0_i32 = arith.constant 0 : i32
    %c0_i32_1 = arith.constant 0 : i32
    %c0_i32_2 = arith.constant 0 : i32
    return %arg0, %2, %c0_i32, %c0_i32_1 : i32, i32, i32, i32
  }
  func.func @transform_3(%arg0: i32, %arg1: i32) -> (i32, i32, i32) {
    %c0_i32 = arith.constant 0 : i32
    %c0_i32_0 = arith.constant 0 : i32
    %c0_i32_1 = arith.constant 0 : i32
    %c0_i32_2 = arith.constant 0 : i32
    return %c0_i32, %c0_i32_0, %c0_i32_1 : i32, i32, i32
  }
  func.func @transform_4(%arg0: i32, %arg1: i32) -> (i32, i32) {
    %c0_i32 = arith.constant 0 : i32
    %c0_i32_0 = arith.constant 0 : i32
    %c0_i32_1 = arith.constant 0 : i32
    return %c0_i32, %c0_i32_0 : i32, i32
  }
  func.func @transform_5(%arg0: i32, %arg1: i32) -> (i32, i32, i32) {
    %c0_i32 = arith.constant 0 : i32
    %c0_i32_0 = arith.constant 0 : i32
    %c0_i32_1 = arith.constant 0 : i32
    return %arg0, %c0_i32, %c0_i32_0 : i32, i32, i32
  }
  func.func @transform_6(%arg0: i32, %arg1: i32) -> (i32, i32, i32, i32) {
    %c0_i32 = arith.constant 0 : i32
    %c0_i32_0 = arith.constant 0 : i32
    %c0_i32_1 = arith.constant 0 : i32
    return %arg0, %arg1, %c0_i32, %c0_i32_0 : i32, i32, i32, i32
  }
  func.func @transform_7(%arg0: i32, %arg1: i32) -> (i32, i32, i32) {
    %c0_i32 = arith.constant 0 : i32
    %c0_i32_0 = arith.constant 0 : i32
    %c0_i32_1 = arith.constant 0 : i32
    return %arg0, %c0_i32, %c0_i32_0 : i32, i32, i32
  }
}

module attributes {stable_mosaic.version = 11 : i64} {
  func.func @_bn_finalize_kernel(%arg0: i32, %arg1: memref<2x2x128xf32, #tpu.memory_space<vmem>>, %arg2: memref<1x128xf32, #tpu.memory_space<vmem>>, %arg3: memref<1x128xf32, #tpu.memory_space<vmem>>, %arg4: memref<2x128xf32, #tpu.memory_space<vmem>>) attributes {dimension_semantics = [#tpu.dimension_semantics<arbitrary>], iteration_bounds = array<i64: 1>, scalar_prefetch = 0 : i64, scratch_operands = 0 : i64, tpu.core_type = #tpu.core_type<tc>, window_params = [{pipeline_mode = #tpu.pipeline_mode<synchronous>, transform_indices = @transform_0, window_bounds = array<i64: 2, 2, 128>}, {pipeline_mode = #tpu.pipeline_mode<synchronous>, transform_indices = @transform_1, window_bounds = array<i64: 1, 128>}, {pipeline_mode = #tpu.pipeline_mode<synchronous>, transform_indices = @transform_2, window_bounds = array<i64: 1, 128>}, {pipeline_mode = #tpu.pipeline_mode<synchronous>, transform_indices = @transform_3, window_bounds = array<i64: 2, 128>}]} {
    %c0 = arith.constant 0 : index
    %c0_0 = arith.constant 0 : index
    %c0_1 = arith.constant 0 : index
    %0 = vector.load %arg1[%c0, %c0_0, %c0_1] : memref<2x2x128xf32, #tpu.memory_space<vmem>>, vector<2x2x128xf32>
    %1 = vector.extract_strided_slice %0 {offsets = [0, 0, 0], sizes = [2, 1, 128], strides = [1, 1, 1]} : vector<2x2x128xf32> to vector<2x1x128xf32>
    %cst = arith.constant dense<0.000000e+00> : vector<1x128xf32>
    %2 = vector.multi_reduction <add>, %1, %cst [0] : vector<2x1x128xf32> to vector<1x128xf32>
    %3 = vector.extract_strided_slice %0 {offsets = [0, 1, 0], sizes = [2, 1, 128], strides = [1, 1, 1]} : vector<2x2x128xf32> to vector<2x1x128xf32>
    %cst_2 = arith.constant dense<0.000000e+00> : vector<1x128xf32>
    %4 = vector.multi_reduction <add>, %3, %cst_2 [0] : vector<2x1x128xf32> to vector<1x128xf32>
    %cst_3 = arith.constant 5.120000e+02 : f32
    %5 = vector.broadcast %cst_3 : f32 to vector<1x128xf32>
    %6 = arith.divf %2, %5 : vector<1x128xf32>
    %cst_4 = arith.constant 5.120000e+02 : f32
    %7 = vector.broadcast %cst_4 : f32 to vector<1x128xf32>
    %8 = arith.divf %4, %7 : vector<1x128xf32>
    %9 = arith.mulf %6, %6 : vector<1x128xf32>
    %10 = arith.subf %8, %9 : vector<1x128xf32>
    %cst_5 = arith.constant 0.000000e+00 : f32
    %11 = vector.broadcast %cst_5 : f32 to vector<1x128xf32>
    %12 = arith.maximumf %10, %11 : vector<1x128xf32>
    %c0_6 = arith.constant 0 : index
    %c0_7 = arith.constant 0 : index
    %13 = vector.load %arg2[%c0_6, %c0_7] : memref<1x128xf32, #tpu.memory_space<vmem>>, vector<1x128xf32>
    %cst_8 = arith.constant 9.99999974E-6 : f32
    %14 = vector.broadcast %cst_8 : f32 to vector<1x128xf32>
    %15 = arith.addf %12, %14 : vector<1x128xf32>
    %16 = math.rsqrt %15 : vector<1x128xf32>
    %17 = arith.mulf %13, %16 : vector<1x128xf32>
    %c0_9 = arith.constant 0 : index
    %c0_10 = arith.constant 0 : index
    %18 = vector.load %arg3[%c0_9, %c0_10] : memref<1x128xf32, #tpu.memory_space<vmem>>, vector<1x128xf32>
    %19 = arith.mulf %6, %17 : vector<1x128xf32>
    %20 = arith.subf %18, %19 : vector<1x128xf32>
    %21 = tpu.concatenate %17, %20 in 0 : vector<1x128xf32>, vector<1x128xf32> -> vector<2x128xf32>
    %c0_11 = arith.constant 0 : index
    %c0_12 = arith.constant 0 : index
    %22 = vector.load %arg4[%c0_11, %c0_12] : memref<2x128xf32, #tpu.memory_space<vmem>>, vector<2x128xf32>
    tpu.vector_store %arg4[%c0_11, %c0_12], %21 {strides = array<i32>} : memref<2x128xf32, #tpu.memory_space<vmem>>, vector<2x128xf32>,
    return
  }
  func.func @transform_0(%arg0: i32) -> (i32, i32, i32) {
    %c0_i32 = arith.constant 0 : i32
    %c0_i32_0 = arith.constant 0 : i32
    %c0_i32_1 = arith.constant 0 : i32
    %c0_i32_2 = arith.constant 0 : i32
    return %c0_i32, %c0_i32_0, %c0_i32_1 : i32, i32, i32
  }
  func.func @transform_1(%arg0: i32) -> (i32, i32) {
    %c0_i32 = arith.constant 0 : i32
    %c0_i32_0 = arith.constant 0 : i32
    %c0_i32_1 = arith.constant 0 : i32
    return %c0_i32, %c0_i32_0 : i32, i32
  }
  func.func @transform_2(%arg0: i32) -> (i32, i32) {
    %c0_i32 = arith.constant 0 : i32
    %c0_i32_0 = arith.constant 0 : i32
    %c0_i32_1 = arith.constant 0 : i32
    return %c0_i32, %c0_i32_0 : i32, i32
  }
  func.func @transform_3(%arg0: i32) -> (i32, i32) {
    %c0_i32 = arith.constant 0 : i32
    %c0_i32_0 = arith.constant 0 : i32
    %c0_i32_1 = arith.constant 0 : i32
    return %c0_i32, %c0_i32_0 : i32, i32
  }
}

module attributes {stable_mosaic.version = 11 : i64} {
  func.func @_conv3x3_kernel(%arg0: i32, %arg1: i32, %arg2: memref<1x1x16x128xf32, #tpu.memory_space<vmem>>, %arg3: memref<1x16x16x128xf32, #tpu.memory_space<vmem>>, %arg4: memref<1x1x16x128xf32, #tpu.memory_space<vmem>>, %arg5: memref<9x128x128xbf16, #tpu.memory_space<vmem>>, %arg6: memref<2x128xf32, #tpu.memory_space<vmem>>, %arg7: memref<1x1x128xf32, #tpu.memory_space<vmem>>, %arg8: memref<1x16x16x128xf32, #tpu.memory_space<vmem>>, %arg9: memref<1x2x128xf32, #tpu.memory_space<vmem>>) attributes {dimension_semantics = [#tpu.dimension_semantics<parallel>, #tpu.dimension_semantics<arbitrary>], iteration_bounds = array<i64: 2, 1>, scalar_prefetch = 0 : i64, scratch_operands = 0 : i64, tpu.core_type = #tpu.core_type<tc>, window_params = [{transform_indices = @transform_0, window_bounds = array<i64: 1, 1, 16, 128>}, {transform_indices = @transform_1, window_bounds = array<i64: 1, 16, 16, 128>}, {transform_indices = @transform_2, window_bounds = array<i64: 1, 1, 16, 128>}, {pipeline_mode = #tpu.pipeline_mode<synchronous>, transform_indices = @transform_3, window_bounds = array<i64: 9, 128, 128>}, {pipeline_mode = #tpu.pipeline_mode<synchronous>, transform_indices = @transform_4, window_bounds = array<i64: 2, 128>}, {transform_indices = @transform_5, window_bounds = array<i64: 1, 1, 128>}, {transform_indices = @transform_6, window_bounds = array<i64: 1, 16, 16, 128>}, {transform_indices = @transform_7, window_bounds = array<i64: 1, 2, 128>}]} {
    %c0 = arith.constant 0 : index
    %c0_0 = arith.constant 0 : index
    %c0_1 = arith.constant 0 : index
    %c0_2 = arith.constant 0 : index
    %0 = vector.load %arg2[%c0, %c0_0, %c0_1, %c0_2] : memref<1x1x16x128xf32, #tpu.memory_space<vmem>>, vector<1x1x16x128xf32>
    %1 = vector.shape_cast %0 : vector<1x1x16x128xf32> to vector<1x16x128xf32>
    %c0_3 = arith.constant 0 : index
    %c0_4 = arith.constant 0 : index
    %c0_5 = arith.constant 0 : index
    %c0_6 = arith.constant 0 : index
    %2 = vector.load %arg3[%c0_3, %c0_4, %c0_5, %c0_6] : memref<1x16x16x128xf32, #tpu.memory_space<vmem>>, vector<1x16x16x128xf32>
    %3 = vector.shape_cast %2 : vector<1x16x16x128xf32> to vector<16x16x128xf32>
    %c0_7 = arith.constant 0 : index
    %c0_8 = arith.constant 0 : index
    %c0_9 = arith.constant 0 : index
    %c0_10 = arith.constant 0 : index
    %4 = vector.load %arg4[%c0_7, %c0_8, %c0_9, %c0_10] : memref<1x1x16x128xf32, #tpu.memory_space<vmem>>, vector<1x1x16x128xf32>
    %5 = vector.shape_cast %4 : vector<1x1x16x128xf32> to vector<1x16x128xf32>
    %c0_11 = arith.constant 0 : index
    %c0_12 = arith.constant 0 : index
    %6 = vector.load %arg6[%c0_11, %c0_12] : memref<2x128xf32, #tpu.memory_space<vmem>>, vector<1x128xf32>
    %7 = vector.shape_cast %6 : vector<1x128xf32> to vector<1x1x128xf32>
    %c1 = arith.constant 1 : index
    %c0_13 = arith.constant 0 : index
    %8 = vector.load %arg6[%c1, %c0_13] : memref<2x128xf32, #tpu.memory_space<vmem>>, vector<1x128xf32>
    %9 = vector.shape_cast %8 : vector<1x128xf32> to vector<1x1x128xf32>
    %10 = vector.broadcast %7 : vector<1x1x128xf32> to vector<1x16x128xf32>
    %11 = arith.mulf %1, %10 : vector<1x16x128xf32>
    %12 = vector.broadcast %9 : vector<1x1x128xf32> to vector<1x16x128xf32>
    %13 = arith.addf %11, %12 : vector<1x16x128xf32>
    %cst = arith.constant 0.000000e+00 : f32
    %14 = vector.broadcast %cst : f32 to vector<1x16x128xf32>
    %15 = arith.maximumf %13, %14 : vector<1x16x128xf32>
    %16 = vector.broadcast %7 : vector<1x1x128xf32> to vector<16x16x128xf32>
    %17 = arith.mulf %3, %16 : vector<16x16x128xf32>
    %18 = vector.broadcast %9 : vector<1x1x128xf32> to vector<16x16x128xf32>
    %19 = arith.addf %17, %18 : vector<16x16x128xf32>
    %cst_14 = arith.constant 0.000000e+00 : f32
    %20 = vector.broadcast %cst_14 : f32 to vector<16x16x128xf32>
    %21 = arith.maximumf %19, %20 : vector<16x16x128xf32>
    %22 = vector.broadcast %7 : vector<1x1x128xf32> to vector<1x16x128xf32>
    %23 = arith.mulf %5, %22 : vector<1x16x128xf32>
    %24 = vector.broadcast %9 : vector<1x1x128xf32> to vector<1x16x128xf32>
    %25 = arith.addf %23, %24 : vector<1x16x128xf32>
    %cst_15 = arith.constant 0.000000e+00 : f32
    %26 = vector.broadcast %cst_15 : f32 to vector<1x16x128xf32>
    %27 = arith.maximumf %25, %26 : vector<1x16x128xf32>
    %c0_i32 = arith.constant 0 : i32
    %28 = arith.cmpi sgt, %arg1, %c0_i32 : i32
    %29 = arith.extui %28 : i1 to i32
    %30 = arith.sitofp %29 : i32 to f32
    %31 = vector.broadcast %30 : f32 to vector<1x16x128xf32>
    %32 = arith.mulf %15, %31 : vector<1x16x128xf32>
    %c0_i32_16 = arith.constant 0 : i32
    %33 = arith.cmpi slt, %arg1, %c0_i32_16 : i32
    %34 = arith.extui %33 : i1 to i32
    %35 = arith.sitofp %34 : i32 to f32
    %36 = vector.broadcast %35 : f32 to vector<1x16x128xf32>
    %37 = arith.mulf %27, %36 : vector<1x16x128xf32>
    %38 = tpu.concatenate %32, %21, %37 in 0 : vector<1x16x128xf32>, vector<16x16x128xf32>, vector<1x16x128xf32> -> vector<18x16x128xf32>
    %39 = arith.truncf %38 : vector<18x16x128xf32> to vector<18x16x128xbf16>
    %cst_17 = arith.constant 0.000000e+00 : bf16
    %40 = vector.broadcast %cst_17 : bf16 to vector<16x1x128xbf16>
    %cst_18 = arith.constant 0.000000e+00 : f32
    %41 = vector.broadcast %cst_18 : f32 to vector<256x128xf32>
    %42 = vector.extract_strided_slice %39 {offsets = [0, 0, 0], sizes = [16, 16, 128], strides = [1, 1, 1]} : vector<18x16x128xbf16> to vector<16x16x128xbf16>
    %43 = vector.extract_strided_slice %42 {offsets = [0, 0, 0], sizes = [16, 15, 128], strides = [1, 1, 1]} : vector<16x16x128xbf16> to vector<16x15x128xbf16>
    %44 = tpu.concatenate %40, %43 in 1 : vector<16x1x128xbf16>, vector<16x15x128xbf16> -> vector<16x16x128xbf16>
    %45 = vector.shape_cast %44 : vector<16x16x128xbf16> to vector<256x128xbf16>
    %c0_19 = arith.constant 0 : index
    %c0_20 = arith.constant 0 : index
    %c0_21 = arith.constant 0 : index
    %46 = vector.load %arg5[%c0_19, %c0_20, %c0_21] : memref<9x128x128xbf16, #tpu.memory_space<vmem>>, vector<1x128x128xbf16>
    %47 = vector.shape_cast %46 : vector<1x128x128xbf16> to vector<128x128xbf16>
    %cst_22 = arith.constant dense<0.000000e+00> : vector<256x128xf32>
    %48 = tpu.matmul %45, %47, %cst_22 {dimension_numbers = #tpu.dot_dimension_numbers<[1], [0], [0], [1], [0, 0, 1, 1], [], []>} : vector<256x128xbf16>, vector<128x128xbf16>, vector<256x128xf32> -> vector<256x128xf32>
    %49 = arith.addf %41, %48 : vector<256x128xf32>
    %50 = vector.shape_cast %42 : vector<16x16x128xbf16> to vector<256x128xbf16>
    %c1_23 = arith.constant 1 : index
    %c0_24 = arith.constant 0 : index
    %c0_25 = arith.constant 0 : index
    %51 = vector.load %arg5[%c1_23, %c0_24, %c0_25] : memref<9x128x128xbf16, #tpu.memory_space<vmem>>, vector<1x128x128xbf16>
    %52 = vector.shape_cast %51 : vector<1x128x128xbf16> to vector<128x128xbf16>
    %cst_26 = arith.constant dense<0.000000e+00> : vector<256x128xf32>
    %53 = tpu.matmul %50, %52, %cst_26 {dimension_numbers = #tpu.dot_dimension_numbers<[1], [0], [0], [1], [0, 0, 1, 1], [], []>} : vector<256x128xbf16>, vector<128x128xbf16>, vector<256x128xf32> -> vector<256x128xf32>
    %54 = arith.addf %49, %53 : vector<256x128xf32>
    %55 = vector.extract_strided_slice %42 {offsets = [0, 1, 0], sizes = [16, 15, 128], strides = [1, 1, 1]} : vector<16x16x128xbf16> to vector<16x15x128xbf16>
    %56 = tpu.concatenate %55, %40 in 1 : vector<16x15x128xbf16>, vector<16x1x128xbf16> -> vector<16x16x128xbf16>
    %57 = vector.shape_cast %56 : vector<16x16x128xbf16> to vector<256x128xbf16>
    %c2 = arith.constant 2 : index
    %c0_27 = arith.constant 0 : index
    %c0_28 = arith.constant 0 : index
    %58 = vector.load %arg5[%c2, %c0_27, %c0_28] : memref<9x128x128xbf16, #tpu.memory_space<vmem>>, vector<1x128x128xbf16>
    %59 = vector.shape_cast %58 : vector<1x128x128xbf16> to vector<128x128xbf16>
    %cst_29 = arith.constant dense<0.000000e+00> : vector<256x128xf32>
    %60 = tpu.matmul %57, %59, %cst_29 {dimension_numbers = #tpu.dot_dimension_numbers<[1], [0], [0], [1], [0, 0, 1, 1], [], []>} : vector<256x128xbf16>, vector<128x128xbf16>, vector<256x128xf32> -> vector<256x128xf32>
    %61 = arith.addf %54, %60 : vector<256x128xf32>
    %62 = vector.extract_strided_slice %39 {offsets = [1, 0, 0], sizes = [16, 16, 128], strides = [1, 1, 1]} : vector<18x16x128xbf16> to vector<16x16x128xbf16>
    %63 = vector.extract_strided_slice %62 {offsets = [0, 0, 0], sizes = [16, 15, 128], strides = [1, 1, 1]} : vector<16x16x128xbf16> to vector<16x15x128xbf16>
    %64 = tpu.concatenate %40, %63 in 1 : vector<16x1x128xbf16>, vector<16x15x128xbf16> -> vector<16x16x128xbf16>
    %65 = vector.shape_cast %64 : vector<16x16x128xbf16> to vector<256x128xbf16>
    %c3 = arith.constant 3 : index
    %c0_30 = arith.constant 0 : index
    %c0_31 = arith.constant 0 : index
    %66 = vector.load %arg5[%c3, %c0_30, %c0_31] : memref<9x128x128xbf16, #tpu.memory_space<vmem>>, vector<1x128x128xbf16>
    %67 = vector.shape_cast %66 : vector<1x128x128xbf16> to vector<128x128xbf16>
    %cst_32 = arith.constant dense<0.000000e+00> : vector<256x128xf32>
    %68 = tpu.matmul %65, %67, %cst_32 {dimension_numbers = #tpu.dot_dimension_numbers<[1], [0], [0], [1], [0, 0, 1, 1], [], []>} : vector<256x128xbf16>, vector<128x128xbf16>, vector<256x128xf32> -> vector<256x128xf32>
    %69 = arith.addf %61, %68 : vector<256x128xf32>
    %70 = vector.shape_cast %62 : vector<16x16x128xbf16> to vector<256x128xbf16>
    %c4 = arith.constant 4 : index
    %c0_33 = arith.constant 0 : index
    %c0_34 = arith.constant 0 : index
    %71 = vector.load %arg5[%c4, %c0_33, %c0_34] : memref<9x128x128xbf16, #tpu.memory_space<vmem>>, vector<1x128x128xbf16>
    %72 = vector.shape_cast %71 : vector<1x128x128xbf16> to vector<128x128xbf16>
    %cst_35 = arith.constant dense<0.000000e+00> : vector<256x128xf32>
    %73 = tpu.matmul %70, %72, %cst_35 {dimension_numbers = #tpu.dot_dimension_numbers<[1], [0], [0], [1], [0, 0, 1, 1], [], []>} : vector<256x128xbf16>, vector<128x128xbf16>, vector<256x128xf32> -> vector<256x128xf32>
    %74 = arith.addf %69, %73 : vector<256x128xf32>
    %75 = vector.extract_strided_slice %62 {offsets = [0, 1, 0], sizes = [16, 15, 128], strides = [1, 1, 1]} : vector<16x16x128xbf16> to vector<16x15x128xbf16>
    %76 = tpu.concatenate %75, %40 in 1 : vector<16x15x128xbf16>, vector<16x1x128xbf16> -> vector<16x16x128xbf16>
    %77 = vector.shape_cast %76 : vector<16x16x128xbf16> to vector<256x128xbf16>
    %c5 = arith.constant 5 : index
    %c0_36 = arith.constant 0 : index
    %c0_37 = arith.constant 0 : index
    %78 = vector.load %arg5[%c5, %c0_36, %c0_37] : memref<9x128x128xbf16, #tpu.memory_space<vmem>>, vector<1x128x128xbf16>
    %79 = vector.shape_cast %78 : vector<1x128x128xbf16> to vector<128x128xbf16>
    %cst_38 = arith.constant dense<0.000000e+00> : vector<256x128xf32>
    %80 = tpu.matmul %77, %79, %cst_38 {dimension_numbers = #tpu.dot_dimension_numbers<[1], [0], [0], [1], [0, 0, 1, 1], [], []>} : vector<256x128xbf16>, vector<128x128xbf16>, vector<256x128xf32> -> vector<256x128xf32>
    %81 = arith.addf %74, %80 : vector<256x128xf32>
    %82 = vector.extract_strided_slice %39 {offsets = [2, 0, 0], sizes = [16, 16, 128], strides = [1, 1, 1]} : vector<18x16x128xbf16> to vector<16x16x128xbf16>
    %83 = vector.extract_strided_slice %82 {offsets = [0, 0, 0], sizes = [16, 15, 128], strides = [1, 1, 1]} : vector<16x16x128xbf16> to vector<16x15x128xbf16>
    %84 = tpu.concatenate %40, %83 in 1 : vector<16x1x128xbf16>, vector<16x15x128xbf16> -> vector<16x16x128xbf16>
    %85 = vector.shape_cast %84 : vector<16x16x128xbf16> to vector<256x128xbf16>
    %c6 = arith.constant 6 : index
    %c0_39 = arith.constant 0 : index
    %c0_40 = arith.constant 0 : index
    %86 = vector.load %arg5[%c6, %c0_39, %c0_40] : memref<9x128x128xbf16, #tpu.memory_space<vmem>>, vector<1x128x128xbf16>
    %87 = vector.shape_cast %86 : vector<1x128x128xbf16> to vector<128x128xbf16>
    %cst_41 = arith.constant dense<0.000000e+00> : vector<256x128xf32>
    %88 = tpu.matmul %85, %87, %cst_41 {dimension_numbers = #tpu.dot_dimension_numbers<[1], [0], [0], [1], [0, 0, 1, 1], [], []>} : vector<256x128xbf16>, vector<128x128xbf16>, vector<256x128xf32> -> vector<256x128xf32>
    %89 = arith.addf %81, %88 : vector<256x128xf32>
    %90 = vector.shape_cast %82 : vector<16x16x128xbf16> to vector<256x128xbf16>
    %c7 = arith.constant 7 : index
    %c0_42 = arith.constant 0 : index
    %c0_43 = arith.constant 0 : index
    %91 = vector.load %arg5[%c7, %c0_42, %c0_43] : memref<9x128x128xbf16, #tpu.memory_space<vmem>>, vector<1x128x128xbf16>
    %92 = vector.shape_cast %91 : vector<1x128x128xbf16> to vector<128x128xbf16>
    %cst_44 = arith.constant dense<0.000000e+00> : vector<256x128xf32>
    %93 = tpu.matmul %90, %92, %cst_44 {dimension_numbers = #tpu.dot_dimension_numbers<[1], [0], [0], [1], [0, 0, 1, 1], [], []>} : vector<256x128xbf16>, vector<128x128xbf16>, vector<256x128xf32> -> vector<256x128xf32>
    %94 = arith.addf %89, %93 : vector<256x128xf32>
    %95 = vector.extract_strided_slice %82 {offsets = [0, 1, 0], sizes = [16, 15, 128], strides = [1, 1, 1]} : vector<16x16x128xbf16> to vector<16x15x128xbf16>
    %96 = tpu.concatenate %95, %40 in 1 : vector<16x15x128xbf16>, vector<16x1x128xbf16> -> vector<16x16x128xbf16>
    %97 = vector.shape_cast %96 : vector<16x16x128xbf16> to vector<256x128xbf16>
    %c8 = arith.constant 8 : index
    %c0_45 = arith.constant 0 : index
    %c0_46 = arith.constant 0 : index
    %98 = vector.load %arg5[%c8, %c0_45, %c0_46] : memref<9x128x128xbf16, #tpu.memory_space<vmem>>, vector<1x128x128xbf16>
    %99 = vector.shape_cast %98 : vector<1x128x128xbf16> to vector<128x128xbf16>
    %cst_47 = arith.constant dense<0.000000e+00> : vector<256x128xf32>
    %100 = tpu.matmul %97, %99, %cst_47 {dimension_numbers = #tpu.dot_dimension_numbers<[1], [0], [0], [1], [0, 0, 1, 1], [], []>} : vector<256x128xbf16>, vector<128x128xbf16>, vector<256x128xf32> -> vector<256x128xf32>
    %101 = arith.addf %94, %100 : vector<256x128xf32>
    %102 = vector.shape_cast %101 : vector<256x128xf32> to vector<16x16x128xf32>
    %c0_48 = arith.constant 0 : index
    %c0_49 = arith.constant 0 : index
    %c0_50 = arith.constant 0 : index
    %103 = vector.load %arg7[%c0_48, %c0_49, %c0_50] : memref<1x1x128xf32, #tpu.memory_space<vmem>>, vector<1x1x128xf32>
    %104 = vector.broadcast %103 : vector<1x1x128xf32> to vector<16x16x128xf32>
    %105 = arith.mulf %102, %104 : vector<16x16x128xf32>
    %106 = vector.shape_cast %105 : vector<16x16x128xf32> to vector<1x16x16x128xf32>
    %c0_51 = arith.constant 0 : index
    %c0_52 = arith.constant 0 : index
    %c0_53 = arith.constant 0 : index
    %c0_54 = arith.constant 0 : index
    %107 = vector.load %arg8[%c0_51, %c0_52, %c0_53, %c0_54] : memref<1x16x16x128xf32, #tpu.memory_space<vmem>>, vector<1x16x16x128xf32>
    tpu.vector_store %arg8[%c0_51, %c0_52, %c0_53, %c0_54], %106 {strides = array<i32>} : memref<1x16x16x128xf32, #tpu.memory_space<vmem>>, vector<1x16x16x128xf32>,
    %108 = vector.shape_cast %105 : vector<16x16x128xf32> to vector<256x128xf32>
    %cst_55 = arith.constant dense<0.000000e+00> : vector<128xf32>
    %109 = vector.multi_reduction <add>, %108, %cst_55 [0] : vector<256x128xf32> to vector<128xf32>
    %110 = vector.shape_cast %109 : vector<128xf32> to vector<1x128xf32>
    %111 = arith.mulf %108, %108 : vector<256x128xf32>
    %cst_56 = arith.constant dense<0.000000e+00> : vector<128xf32>
    %112 = vector.multi_reduction <add>, %111, %cst_56 [0] : vector<256x128xf32> to vector<128xf32>
    %113 = vector.shape_cast %112 : vector<128xf32> to vector<1x128xf32>
    %c0_i32_57 = arith.constant 0 : i32
    %114 = arith.cmpi eq, %arg1, %c0_i32_57 : i32
    %115 = arith.extui %114 : i1 to i32
    %c0_i32_58 = arith.constant 0 : i32
    %116 = arith.cmpi ne, %115, %c0_i32_58 : i32
    scf.if %116 {
      %cst_65 = arith.constant 0.000000e+00 : f32
      %122 = vector.broadcast %cst_65 : f32 to vector<1x2x128xf32>
      %c0_66 = arith.constant 0 : index
      %c0_67 = arith.constant 0 : index
      %c0_68 = arith.constant 0 : index
      %123 = vector.load %arg9[%c0_66, %c0_67, %c0_68] : memref<1x2x128xf32, #tpu.memory_space<vmem>>, vector<1x2x128xf32>
      tpu.vector_store %arg9[%c0_66, %c0_67, %c0_68], %122 {strides = array<i32>} : memref<1x2x128xf32, #tpu.memory_space<vmem>>, vector<1x2x128xf32>,
    } else {
    }
    %c0_59 = arith.constant 0 : index
    %c0_60 = arith.constant 0 : index
    %c0_61 = arith.constant 0 : index
    %117 = vector.load %arg9[%c0_59, %c0_60, %c0_61] : memref<1x2x128xf32, #tpu.memory_space<vmem>>, vector<1x2x128xf32>
    %118 = tpu.concatenate %110, %113 in 0 : vector<1x128xf32>, vector<1x128xf32> -> vector<2x128xf32>
    %119 = vector.shape_cast %118 : vector<2x128xf32> to vector<1x2x128xf32>
    %120 = arith.addf %117, %119 : vector<1x2x128xf32>
    %c0_62 = arith.constant 0 : index
    %c0_63 = arith.constant 0 : index
    %c0_64 = arith.constant 0 : index
    %121 = vector.load %arg9[%c0_62, %c0_63, %c0_64] : memref<1x2x128xf32, #tpu.memory_space<vmem>>, vector<1x2x128xf32>
    tpu.vector_store %arg9[%c0_62, %c0_63, %c0_64], %120 {strides = array<i32>} : memref<1x2x128xf32, #tpu.memory_space<vmem>>, vector<1x2x128xf32>,
    return
  }
  func.func @transform_0(%arg0: i32, %arg1: i32) -> (i32, i32, i32, i32) {
    %c16_i32 = arith.constant 16 : i32
    %0 = arith.muli %arg1, %c16_i32 : i32
    %c1_i32 = arith.constant 1 : i32
    %1 = arith.subi %0, %c1_i32 : i32
    %c0_i32 = arith.constant 0 : i32
    %2 = arith.maxsi %1, %c0_i32 : i32
    %c0_i32_0 = arith.constant 0 : i32
    %c0_i32_1 = arith.constant 0 : i32
    %c0_i32_2 = arith.constant 0 : i32
    return %arg0, %2, %c0_i32_0, %c0_i32_1 : i32, i32, i32, i32
  }
  func.func @transform_1(%arg0: i32, %arg1: i32) -> (i32, i32, i32, i32) {
    %c0_i32 = arith.constant 0 : i32
    %c0_i32_0 = arith.constant 0 : i32
    %c0_i32_1 = arith.constant 0 : i32
    return %arg0, %arg1, %c0_i32, %c0_i32_0 : i32, i32, i32, i32
  }
  func.func @transform_2(%arg0: i32, %arg1: i32) -> (i32, i32, i32, i32) {
    %c16_i32 = arith.constant 16 : i32
    %0 = arith.muli %arg1, %c16_i32 : i32
    %c16_i32_0 = arith.constant 16 : i32
    %1 = arith.addi %0, %c16_i32_0 : i32
    %c15_i32 = arith.constant 15 : i32
    %2 = arith.minsi %1, %c15_i32 : i32
    %c0_i32 = arith.constant 0 : i32
    %c0_i32_1 = arith.constant 0 : i32
    %c0_i32_2 = arith.constant 0 : i32
    return %arg0, %2, %c0_i32, %c0_i32_1 : i32, i32, i32, i32
  }
  func.func @transform_3(%arg0: i32, %arg1: i32) -> (i32, i32, i32) {
    %c0_i32 = arith.constant 0 : i32
    %c0_i32_0 = arith.constant 0 : i32
    %c0_i32_1 = arith.constant 0 : i32
    %c0_i32_2 = arith.constant 0 : i32
    return %c0_i32, %c0_i32_0, %c0_i32_1 : i32, i32, i32
  }
  func.func @transform_4(%arg0: i32, %arg1: i32) -> (i32, i32) {
    %c0_i32 = arith.constant 0 : i32
    %c0_i32_0 = arith.constant 0 : i32
    %c0_i32_1 = arith.constant 0 : i32
    return %c0_i32, %c0_i32_0 : i32, i32
  }
  func.func @transform_5(%arg0: i32, %arg1: i32) -> (i32, i32, i32) {
    %c0_i32 = arith.constant 0 : i32
    %c0_i32_0 = arith.constant 0 : i32
    %c0_i32_1 = arith.constant 0 : i32
    return %arg0, %c0_i32, %c0_i32_0 : i32, i32, i32
  }
  func.func @transform_6(%arg0: i32, %arg1: i32) -> (i32, i32, i32, i32) {
    %c0_i32 = arith.constant 0 : i32
    %c0_i32_0 = arith.constant 0 : i32
    %c0_i32_1 = arith.constant 0 : i32
    return %arg0, %arg1, %c0_i32, %c0_i32_0 : i32, i32, i32, i32
  }
  func.func @transform_7(%arg0: i32, %arg1: i32) -> (i32, i32, i32) {
    %c0_i32 = arith.constant 0 : i32
    %c0_i32_0 = arith.constant 0 : i32
    %c0_i32_1 = arith.constant 0 : i32
    return %arg0, %c0_i32, %c0_i32_0 : i32, i32, i32
  }
}

module attributes {stable_mosaic.version = 11 : i64} {
  func.func @_residual_bn_relu_kernel(%arg0: i32, %arg1: memref<512x128xf32, #tpu.memory_space<vmem>>, %arg2: memref<512x128xf32, #tpu.memory_space<vmem>>, %arg3: memref<2x128xf32, #tpu.memory_space<vmem>>, %arg4: memref<512x128xf32, #tpu.memory_space<vmem>>) attributes {dimension_semantics = [#tpu.dimension_semantics<parallel>], iteration_bounds = array<i64: 1>, scalar_prefetch = 0 : i64, scratch_operands = 0 : i64, tpu.core_type = #tpu.core_type<tc>, window_params = [{transform_indices = @transform_0, window_bounds = array<i64: 512, 128>}, {transform_indices = @transform_1, window_bounds = array<i64: 512, 128>}, {pipeline_mode = #tpu.pipeline_mode<synchronous>, transform_indices = @transform_2, window_bounds = array<i64: 2, 128>}, {transform_indices = @transform_3, window_bounds = array<i64: 512, 128>}]} {
    %c0 = arith.constant 0 : index
    %c0_0 = arith.constant 0 : index
    %0 = vector.load %arg3[%c0, %c0_0] : memref<2x128xf32, #tpu.memory_space<vmem>>, vector<1x128xf32>
    %c1 = arith.constant 1 : index
    %c0_1 = arith.constant 0 : index
    %1 = vector.load %arg3[%c1, %c0_1] : memref<2x128xf32, #tpu.memory_space<vmem>>, vector<1x128xf32>
    %c0_2 = arith.constant 0 : index
    %c0_3 = arith.constant 0 : index
    %2 = vector.load %arg2[%c0_2, %c0_3] : memref<512x128xf32, #tpu.memory_space<vmem>>, vector<512x128xf32>
    %c0_4 = arith.constant 0 : index
    %c0_5 = arith.constant 0 : index
    %3 = vector.load %arg1[%c0_4, %c0_5] : memref<512x128xf32, #tpu.memory_space<vmem>>, vector<512x128xf32>
    %4 = vector.broadcast %0 : vector<1x128xf32> to vector<512x128xf32>
    %5 = arith.mulf %3, %4 : vector<512x128xf32>
    %6 = vector.broadcast %1 : vector<1x128xf32> to vector<512x128xf32>
    %7 = arith.addf %5, %6 : vector<512x128xf32>
    %cst = arith.constant 0.000000e+00 : f32
    %8 = vector.broadcast %cst : f32 to vector<512x128xf32>
    %9 = arith.maximumf %7, %8 : vector<512x128xf32>
    %10 = arith.addf %2, %9 : vector<512x128xf32>
    %c0_6 = arith.constant 0 : index
    %c0_7 = arith.constant 0 : index
    %11 = vector.load %arg4[%c0_6, %c0_7] : memref<512x128xf32, #tpu.memory_space<vmem>>, vector<512x128xf32>
    tpu.vector_store %arg4[%c0_6, %c0_7], %10 {strides = array<i32>} : memref<512x128xf32, #tpu.memory_space<vmem>>, vector<512x128xf32>,
    return
  }
  func.func @transform_0(%arg0: i32) -> (i32, i32) {
    %c0_i32 = arith.constant 0 : i32
    %c0_i32_0 = arith.constant 0 : i32
    return %arg0, %c0_i32 : i32, i32
  }
  func.func @transform_1(%arg0: i32) -> (i32, i32) {
    %c0_i32 = arith.constant 0 : i32
    %c0_i32_0 = arith.constant 0 : i32
    return %arg0, %c0_i32 : i32, i32
  }
  func.func @transform_2(%arg0: i32) -> (i32, i32) {
    %c0_i32 = arith.constant 0 : i32
    %c0_i32_0 = arith.constant 0 : i32
    %c0_i32_1 = arith.constant 0 : i32
    return %c0_i32, %c0_i32_0 : i32, i32
  }
  func.func @transform_3(%arg0: i32) -> (i32, i32) {
    %c0_i32 = arith.constant 0 : i32
    %c0_i32_0 = arith.constant 0 : i32
    return %arg0, %c0_i32 : i32, i32
  }
}

</mosaic_0001>

<llo_original>
// kernel: activated_resblock2d.7
$region0: #{activated_resblock2d.7}
  #allocation0 [shape = 'u32[]', space=smem, size = 0x4, offset = 0x4, fixed_abs, tag = 'smem constant byte address 0x4 - core index']
  #allocation1 [shape = 'u32[144,128]{1,0:T(1,128)}', space=vmem, size = 0x12000, scoped, tag = 'internal scratch']
  %s0 = inlined_call_operand.vmem [shape: f32[2,1], index: 0, kind: input, shape index: {}]
  %s1 = inlined_call_operand.vmem [shape: f32[1,128], index: 1, kind: input, shape index: {}]
  %s2 = inlined_call_operand.vmem [shape: f32[1,128], index: 2, kind: input, shape index: {}]
  %s3 = inlined_call_operand.vmem [shape: f32[2,128], index: 3, kind: output, shape index: {}]
  %s4 = sld [smem:[#allocation0]]
  $region22: #{activated_resblock2d.7} parent=0
    _
  %s6 = ssub.s32 1, %s4
  %s7 = scalar_select 0, %s6, %s4
  // Predicated region
  $region2: #{activated_resblock2d.7} parent=0 // pred_check
    _
  $region3: #{activated_resblock2d.7} parent=0 // pred_check_branch
    %9 = sbr.rel (0) target = $region5
  $region4: #{activated_resblock2d.7} parent=0 // pred_region
    _
  $region5: #{activated_resblock2d.7} parent=0 // pred_fallthru
    _
  // Predicated region
  $region6: #{activated_resblock2d.7} parent=0 // pred_check
    _
  $region7: #{activated_resblock2d.7} parent=0 // pred_check_branch
    %11 = sbr.rel (0) target = $region9
  $region8: #{activated_resblock2d.7} parent=0 // pred_region
    _
  $region9: #{activated_resblock2d.7} parent=0 // pred_fallthru
    _
  // Predicated region
  $region10: #{activated_resblock2d.7} parent=0 // pred_check
    _
  $region11: #{activated_resblock2d.7} parent=0 // pred_check_branch
    %13 = sbr.rel (0) target = $region13
  $region12: #{activated_resblock2d.7} parent=0 // pred_region
    _
  $region13: #{activated_resblock2d.7} parent=0 // pred_fallthru
    _
  %v14 = vld [vmem:[%s0] sm:$0x3]
  %v15 = vld [vmem:[%s1] sm:$0x1]
  %17 = vset.pattern.permute.xlu0 0
  %18 = vperm.xlu0 %17, %v14
  %v19 = vpop.permute.xlu0 %18
  %v22 = vlaneseq
  %v23 = vshrl.u32 %v22, 7
  %v24 = vsub.s32 0, %v23
  %v25 = vrot.slane %v15, %v24
  %v27 = vmul.f32 %v19, %v25
  %v28 = vld [vmem:[%s2] sm:$0x1]
  %v30 = vlaneseq
  %v31 = vshrl.u32 %v30, 7
  %v32 = vsub.s32 0, %v31
  %v33 = vrot.slane %v28, %v32
  %v35 = vadd.f32 %v27, %v33
  %36 = vst [vmem:[%s3] sm:$0x3] %v35
  // Predicated region
  $region14: #{activated_resblock2d.7} parent=0 // pred_check
    _
  $region15: #{activated_resblock2d.7} parent=0 // pred_check_branch
    %38 = sbr.rel (0) target = $region17
  $region16: #{activated_resblock2d.7} parent=0 // pred_region
    _
  $region17: #{activated_resblock2d.7} parent=0 // pred_fallthru
    _
  // Predicated region
  $region18: #{activated_resblock2d.7} parent=0 // pred_check
    _
  $region19: #{activated_resblock2d.7} parent=0 // pred_check_branch
    %40 = sbr.rel (0) target = $region21
  $region20: #{activated_resblock2d.7} parent=0 // pred_region
    _
  $region21: #{activated_resblock2d.7} parent=0 // pred_fallthru
    _

// kernel: activated_resblock2d.10
$region0: #{activated_resblock2d.10}
  #allocation0 [shape = 'u32[]', space=smem, size = 0x4, offset = 0x4, fixed_abs, tag = 'smem constant byte address 0x4 - core index']
  #allocation1 [shape = 'u32[144,128]{1,0:T(1,128)}', space=vmem, size = 0x12000, scoped, tag = 'internal scratch']
  %s0 = inlined_call_operand.vmem [shape: f32[2,2,128], index: 0, kind: input, shape index: {}]
  %s1 = inlined_call_operand.vmem [shape: f32[1,128], index: 1, kind: input, shape index: {}]
  %s2 = inlined_call_operand.vmem [shape: f32[1,128], index: 2, kind: input, shape index: {}]
  %s3 = inlined_call_operand.vmem [shape: f32[2,128], index: 3, kind: output, shape index: {}]
  %s4 = sld [smem:[#allocation0]]
  $region22: #{activated_resblock2d.10} parent=0
    _
  %s6 = ssub.s32 1, %s4
  %s7 = scalar_select 0, %s6, %s4
  // Predicated region
  $region2: #{activated_resblock2d.10} parent=0 // pred_check
    _
  $region3: #{activated_resblock2d.10} parent=0 // pred_check_branch
    %9 = sbr.rel (0) target = $region5
  $region4: #{activated_resblock2d.10} parent=0 // pred_region
    _
  $region5: #{activated_resblock2d.10} parent=0 // pred_fallthru
    _
  // Predicated region
  $region6: #{activated_resblock2d.10} parent=0 // pred_check
    _
  $region7: #{activated_resblock2d.10} parent=0 // pred_check_branch
    %11 = sbr.rel (0) target = $region9
  $region8: #{activated_resblock2d.10} parent=0 // pred_region
    _
  $region9: #{activated_resblock2d.10} parent=0 // pred_fallthru
    _
  // Predicated region
  $region10: #{activated_resblock2d.10} parent=0 // pred_check
    _
  $region11: #{activated_resblock2d.10} parent=0 // pred_check_branch
    %13 = sbr.rel (0) target = $region13
  $region12: #{activated_resblock2d.10} parent=0 // pred_region
    _
  $region13: #{activated_resblock2d.10} parent=0 // pred_fallthru
    _
  %v14 = vld [vmem:[%s0] sm:$0x3]
  %v15 = vld [vmem:[%s0 + $0x2] sm:$0x3]
  %vm16 = vcmask 1040384
  %v17 = vsel %vm16, %v14, 0.0
  %v18 = vsel %vm16, %v15, 0.0
  %v19 = vadd.f32 %v17, %v18
  %vm20 = vcmask 1041409
  %v21 = vsel %vm20, %v14, 0.0
  %v22 = vsel %vm20, %v15, 0.0
  %v23 = vadd.f32 %v21, %v22
  %v24 = vrcp.pop 512.0
  %v25 = vmul.f32 %v19, %v24
  %v26 = vmul.f32 %v23, %v24
  %v27 = vmul.f32 %v25, %v25
  %v29 = vrot.slane %v27, 7
  %v31 = vsub.f32 %v26, %v29
  %v32 = vmax.f32 %v31, 0.0
  %v33 = vld [vmem:[%s1] sm:$0x1]
  %v34 = vadd.f32 %v32, 1e-05
  %v35 = vrsqrt.pop %v34
  %v38 = vunpack.c.l.s4 1966171168
  %v39 = vunpack.c.0.s8 %v38
  %v40 = vlaneseq
  %v41 = vshrl.u32 %v40, 7
  %v42 = vsub.s32 %v39, %v41
  %v43 = vrot.slane %v35, %v42
  %v44 = vcombine.high %v43, %v43
  %v46 = vunpack.c.l.s4 1966171168
  %v47 = vunpack.c.0.s8 %v46
  %v48 = vlaneseq
  %v49 = vshrl.u32 %v48, 7
  %v50 = vsub.s32 %v47, %v49
  %v51 = vrot.slane %v44, %v50
  %v53 = vmul.f32 %v33, %v51
  %v54 = vld [vmem:[%s2] sm:$0x1]
  %v55 = vmul.f32 %v25, %v53
  %v56 = vsub.f32 %v54, %v55
  %v58 = vlaneseq
  %v59 = vshrl.u32 %v58, 7
  %v60 = vsub.s32 0, %v59
  %v61 = vrot.slane %v56, %v60
  %v63 = vsel %vm16, %v53, %v61
  %64 = vst [vmem:[%s3] sm:$0x3] %v63
  // Predicated region
  $region14: #{activated_resblock2d.10} parent=0 // pred_check
    _
  $region15: #{activated_resblock2d.10} parent=0 // pred_check_branch
    %66 = sbr.rel (0) target = $region17
  $region16: #{activated_resblock2d.10} parent=0 // pred_region
    _
  $region17: #{activated_resblock2d.10} parent=0 // pred_fallthru
    _
  // Predicated region
  $region18: #{activated_resblock2d.10} parent=0 // pred_check
    _
  $region19: #{activated_resblock2d.10} parent=0 // pred_check_branch
    %68 = sbr.rel (0) target = $region21
  $region20: #{activated_resblock2d.10} parent=0 // pred_region
    _
  $region21: #{activated_resblock2d.10} parent=0 // pred_fallthru
    _

// kernel: activated_resblock2d.13
$region0: #{activated_resblock2d.13}
  #allocation0 [shape = 'u32[]', space=smem, size = 0x4, offset = 0x4, fixed_abs, tag = 'smem constant byte address 0x4 - core index']
  #allocation1 [shape = 'u32[144,128]{1,0:T(1,128)}', space=vmem, size = 0x12000, scoped, tag = 'internal scratch']
  %s0 = inlined_call_operand.vmem [shape: f32[512,128], index: 0, kind: input, shape index: {}]
  %s1 = inlined_call_operand.vmem [shape: f32[512,128], index: 1, kind: input, shape index: {}]
  %s2 = inlined_call_operand.vmem [shape: f32[2,128], index: 2, kind: input, shape index: {}]
  %s3 = inlined_call_operand.vmem [shape: f32[512,128], index: 3, kind: output, shape index: {}]
  %s4 = sld [smem:[#allocation0]]
  $region22: #{activated_resblock2d.13} parent=0
    _
  %s6 = ssub.s32 1, %s4
  %s7 = scalar_select 0, %s6, %s4
  // Predicated region
  $region2: #{activated_resblock2d.13} parent=0 // pred_check
    _
  $region3: #{activated_resblock2d.13} parent=0 // pred_check_branch
    %9 = sbr.rel (0) target = $region5
  $region4: #{activated_resblock2d.13} parent=0 // pred_region
    _
  $region5: #{activated_resblock2d.13} parent=0 // pred_fallthru
    _
  // Predicated region
  $region6: #{activated_resblock2d.13} parent=0 // pred_check
    _
  $region7: #{activated_resblock2d.13} parent=0 // pred_check_branch
    %11 = sbr.rel (0) target = $region9
  $region8: #{activated_resblock2d.13} parent=0 // pred_region
    _
  $region9: #{activated_resblock2d.13} parent=0 // pred_fallthru
    _
  // Predicated region
  $region10: #{activated_resblock2d.13} parent=0 // pred_check
    _
  $region11: #{activated_resblock2d.13} parent=0 // pred_check_branch
    %13 = sbr.rel (0) target = $region13
  $region12: #{activated_resblock2d.13} parent=0 // pred_region
    _
  $region13: #{activated_resblock2d.13} parent=0 // pred_fallthru
    _
  %v14 = vld [vmem:[%s2] sm:$0x1]
  %v15 = vld [vmem:[%s2 + $0x1] sm:$0x1]
  %v16 = vld [vmem:[%s1] sm:$0xff]
  %v17 = vld [vmem:[%s1 + $0x8] sm:$0xff]
  %v18 = vld [vmem:[%s1 + $0x10] sm:$0xff]
  %v19 = vld [vmem:[%s1 + $0x18] sm:$0xff]
  %v20 = vld [vmem:[%s1 + $0x20] sm:$0xff]
  %v21 = vld [vmem:[%s1 + $0x28] sm:$0xff]
  %v22 = vld [vmem:[%s1 + $0x30] sm:$0xff]
  %v23 = vld [vmem:[%s1 + $0x38] sm:$0xff]
  %v24 = vld [vmem:[%s1 + $0x40] sm:$0xff]
  %v25 = vld [vmem:[%s1 + $0x48] sm:$0xff]
  %v26 = vld [vmem:[%s1 + $0x50] sm:$0xff]
  %v27 = vld [vmem:[%s1 + $0x58] sm:$0xff]
  %v28 = vld [vmem:[%s1 + $0x60] sm:$0xff]
  %v29 = vld [vmem:[%s1 + $0x68] sm:$0xff]
  %v30 = vld [vmem:[%s1 + $0x70] sm:$0xff]
  %v31 = vld [vmem:[%s1 + $0x78] sm:$0xff]
  %v32 = vld [vmem:[%s1 + $0x80] sm:$0xff]
  %v33 = vld [vmem:[%s1 + $0x88] sm:$0xff]
  %v34 = vld [vmem:[%s1 + $0x90] sm:$0xff]
  %v35 = vld [vmem:[%s1 + $0x98] sm:$0xff]
  %v36 = vld [vmem:[%s1 + $0xa0] sm:$0xff]
  %v37 = vld [vmem:[%s1 + $0xa8] sm:$0xff]
  %v38 = vld [vmem:[%s1 + $0xb0] sm:$0xff]
  %v39 = vld [vmem:[%s1 + $0xb8] sm:$0xff]
  %v40 = vld [vmem:[%s1 + $0xc0] sm:$0xff]
  %v41 = vld [vmem:[%s1 + $0xc8] sm:$0xff]
  %v42 = vld [vmem:[%s1 + $0xd0] sm:$0xff]
  %v43 = vld [vmem:[%s1 + $0xd8] sm:$0xff]
  %v44 = vld [vmem:[%s1 + $0xe0] sm:$0xff]
  %v45 = vld [vmem:[%s1 + $0xe8] sm:$0xff]
  %v46 = vld [vmem:[%s1 + $0xf0] sm:$0xff]
  %v47 = vld [vmem:[%s1 + $0xf8] sm:$0xff]
  %v48 = vld [vmem:[%s1 + $0x100] sm:$0xff]
  %v49 = vld [vmem:[%s1 + $0x108] sm:$0xff]
  %v50 = vld [vmem:[%s1 + $0x110] sm:$0xff]
  %v51 = vld [vmem:[%s1 + $0x118] sm:$0xff]
  %v52 = vld [vmem:[%s1 + $0x120] sm:$0xff]
  %v53 = vld [vmem:[%s1 + $0x128] sm:$0xff]
  %v54 = vld [vmem:[%s1 + $0x130] sm:$0xff]
  %v55 = vld [vmem:[%s1 + $0x138] sm:$0xff]
  %v56 = vld [vmem:[%s1 + $0x140] sm:$0xff]
  %v57 = vld [vmem:[%s1 + $0x148] sm:$0xff]
  %v58 = vld [vmem:[%s1 + $0x150] sm:$0xff]
  %v59 = vld [vmem:[%s1 + $0x158] sm:$0xff]
  %v60 = vld [vmem:[%s1 + $0x160] sm:$0xff]
  %v61 = vld [vmem:[%s1 + $0x168] sm:$0xff]
  %v62 = vld [vmem:[%s1 + $0x170] sm:$0xff]
  %v63 = vld [vmem:[%s1 + $0x178] sm:$0xff]
  %v64 = vld [vmem:[%s1 + $0x180] sm:$0xff]
  %v65 = vld [vmem:[%s1 + $0x188] sm:$0xff]
  %v66 = vld [vmem:[%s1 + $0x190] sm:$0xff]
  %v67 = vld [vmem:[%s1 + $0x198] sm:$0xff]
  %v68 = vld [vmem:[%s1 + $0x1a0] sm:$0xff]
  %v69 = vld [vmem:[%s1 + $0x1a8] sm:$0xff]
  %v70 = vld [vmem:[%s1 + $0x1b0] sm:$0xff]
  %v71 = vld [vmem:[%s1 + $0x1b8] sm:$0xff]
  %v72 = vld [vmem:[%s1 + $0x1c0] sm:$0xff]
  %v73 = vld [vmem:[%s1 + $0x1c8] sm:$0xff]
  %v74 = vld [vmem:[%s1 + $0x1d0] sm:$0xff]
  %v75 = vld [vmem:[%s1 + $0x1d8] sm:$0xff]
  %v76 = vld [vmem:[%s1 + $0x1e0] sm:$0xff]
  %v77 = vld [vmem:[%s1 + $0x1e8] sm:$0xff]
  %v78 = vld [vmem:[%s1 + $0x1f0] sm:$0xff]
  %v79 = vld [vmem:[%s1 + $0x1f8] sm:$0xff]
  %v80 = vld [vmem:[%s0] sm:$0xff]
  %v81 = vld [vmem:[%s0 + $0x8] sm:$0xff]
  %v82 = vld [vmem:[%s0 + $0x10] sm:$0xff]
  %v83 = vld [vmem:[%s0 + $0x18] sm:$0xff]
  %v84 = vld [vmem:[%s0 + $0x20] sm:$0xff]
  %v85 = vld [vmem:[%s0 + $0x28] sm:$0xff]
  %v86 = vld [vmem:[%s0 + $0x30] sm:$0xff]
  %v87 = vld [vmem:[%s0 + $0x38] sm:$0xff]
  %v88 = vld [vmem:[%s0 + $0x40] sm:$0xff]
  %v89 = vld [vmem:[%s0 + $0x48] sm:$0xff]
  %v90 = vld [vmem:[%s0 + $0x50] sm:$0xff]
  %v91 = vld [vmem:[%s0 + $0x58] sm:$0xff]
  %v92 = vld [vmem:[%s0 + $0x60] sm:$0xff]
  %v93 = vld [vmem:[%s0 + $0x68] sm:$0xff]
  %v94 = vld [vmem:[%s0 + $0x70] sm:$0xff]
  %v95 = vld [vmem:[%s0 + $0x78] sm:$0xff]
  %v96 = vld [vmem:[%s0 + $0x80] sm:$0xff]
  %v97 = vld [vmem:[%s0 + $0x88] sm:$0xff]
  %v98 = vld [vmem:[%s0 + $0x90] sm:$0xff]
  %v99 = vld [vmem:[%s0 + $0x98] sm:$0xff]
  %v100 = vld [vmem:[%s0 + $0xa0] sm:$0xff]
  %v101 = vld [vmem:[%s0 + $0xa8] sm:$0xff]
  %v102 = vld [vmem:[%s0 + $0xb0] sm:$0xff]
  %v103 = vld [vmem:[%s0 + $0xb8] sm:$0xff]
  %v104 = vld [vmem:[%s0 + $0xc0] sm:$0xff]
  %v105 = vld [vmem:[%s0 + $0xc8] sm:$0xff]
  %v106 = vld [vmem:[%s0 + $0xd0] sm:$0xff]
  %v107 = vld [vmem:[%s0 + $0xd8] sm:$0xff]
  %v108 = vld [vmem:[%s0 + $0xe0] sm:$0xff]
  %v109 = vld [vmem:[%s0 + $0xe8] sm:$0xff]
  %v110 = vld [vmem:[%s0 + $0xf0] sm:$0xff]
  %v111 = vld [vmem:[%s0 + $0xf8] sm:$0xff]
  %v112 = vld [vmem:[%s0 + $0x100] sm:$0xff]
  %v113 = vld [vmem:[%s0 + $0x108] sm:$0xff]
  %v114 = vld [vmem:[%s0 + $0x110] sm:$0xff]
  %v115 = vld [vmem:[%s0 + $0x118] sm:$0xff]
  %v116 = vld [vmem:[%s0 + $0x120] sm:$0xff]
  %v117 = vld [vmem:[%s0 + $0x128] sm:$0xff]
  %v118 = vld [vmem:[%s0 + $0x130] sm:$0xff]
  %v119 = vld [vmem:[%s0 + $0x138] sm:$0xff]
  %v120 = vld [vmem:[%s0 + $0x140] sm:$0xff]
  %v121 = vld [vmem:[%s0 + $0x148] sm:$0xff]
  %v122 = vld [vmem:[%s0 + $0x150] sm:$0xff]
  %v123 = vld [vmem:[%s0 + $0x158] sm:$0xff]
  %v124 = vld [vmem:[%s0 + $0x160] sm:$0xff]
  %v125 = vld [vmem:[%s0 + $0x168] sm:$0xff]
  %v126 = vld [vmem:[%s0 + $0x170] sm:$0xff]
  %v127 = vld [vmem:[%s0 + $0x178] sm:$0xff]
  %v128 = vld [vmem:[%s0 + $0x180] sm:$0xff]
  %v129 = vld [vmem:[%s0 + $0x188] sm:$0xff]
  %v130 = vld [vmem:[%s0 + $0x190] sm:$0xff]
  %v131 = vld [vmem:[%s0 + $0x198] sm:$0xff]
  %v132 = vld [vmem:[%s0 + $0x1a0] sm:$0xff]
  %v133 = vld [vmem:[%s0 + $0x1a8] sm:$0xff]
  %v134 = vld [vmem:[%s0 + $0x1b0] sm:$0xff]
  %v135 = vld [vmem:[%s0 + $0x1b8] sm:$0xff]
  %v136 = vld [vmem:[%s0 + $0x1c0] sm:$0xff]
  %v137 = vld [vmem:[%s0 + $0x1c8] sm:$0xff]
  %v138 = vld [vmem:[%s0 + $0x1d0] sm:$0xff]
  %v139 = vld [vmem:[%s0 + $0x1d8] sm:$0xff]
  %v140 = vld [vmem:[%s0 + $0x1e0] sm:$0xff]
  %v141 = vld [vmem:[%s0 + $0x1e8] sm:$0xff]
  %v142 = vld [vmem:[%s0 + $0x1f0] sm:$0xff]
  %v143 = vld [vmem:[%s0 + $0x1f8] sm:$0xff]
  %v144 = vlaneseq
  %v145 = vshrl.u32 %v144, 7
  %v146 = vsub.s32 0, %v145
  %v147 = vrot.slane %v14, %v146
  %v148 = vmul.f32 %v80, %v147
  %v149 = vmul.f32 %v81, %v147
  %v150 = vmul.f32 %v82, %v147
  %v151 = vmul.f32 %v83, %v147
  %v152 = vmul.f32 %v84, %v147
  %v153 = vmul.f32 %v85, %v147
  %v154 = vmul.f32 %v86, %v147
  %v155 = vmul.f32 %v87, %v147
  %v156 = vmul.f32 %v88, %v147
  %v157 = vmul.f32 %v89, %v147
  %v158 = vmul.f32 %v90, %v147
  %v159 = vmul.f32 %v91, %v147
  %v160 = vmul.f32 %v92, %v147
  %v161 = vmul.f32 %v93, %v147
  %v162 = vmul.f32 %v94, %v147
  %v163 = vmul.f32 %v95, %v147
  %v164 = vmul.f32 %v96, %v147
  %v165 = vmul.f32 %v97, %v147
  %v166 = vmul.f32 %v98, %v147
  %v167 = vmul.f32 %v99, %v147
  %v168 = vmul.f32 %v100, %v147
  %v169 = vmul.f32 %v101, %v147
  %v170 = vmul.f32 %v102, %v147
  %v171 = vmul.f32 %v103, %v147
  %v172 = vmul.f32 %v104, %v147
  %v173 = vmul.f32 %v105, %v147
  %v174 = vmul.f32 %v106, %v147
  %v175 = vmul.f32 %v107, %v147
  %v176 = vmul.f32 %v108, %v147
  %v177 = vmul.f32 %v109, %v147
  %v178 = vmul.f32 %v110, %v147
  %v179 = vmul.f32 %v111, %v147
  %v180 = vmul.f32 %v112, %v147
  %v181 = vmul.f32 %v113, %v147
  %v182 = vmul.f32 %v114, %v147
  %v183 = vmul.f32 %v115, %v147
  %v184 = vmul.f32 %v116, %v147
  %v185 = vmul.f32 %v117, %v147
  %v186 = vmul.f32 %v118, %v147
  %v187 = vmul.f32 %v119, %v147
  %v188 = vmul.f32 %v120, %v147
  %v189 = vmul.f32 %v121, %v147
  %v190 = vmul.f32 %v122, %v147
  %v191 = vmul.f32 %v123, %v147
  %v192 = vmul.f32 %v124, %v147
  %v193 = vmul.f32 %v125, %v147
  %v194 = vmul.f32 %v126, %v147
  %v195 = vmul.f32 %v127, %v147
  %v196 = vmul.f32 %v128, %v147
  %v197 = vmul.f32 %v129, %v147
  %v198 = vmul.f32 %v130, %v147
  %v199 = vmul.f32 %v131, %v147
  %v200 = vmul.f32 %v132, %v147
  %v201 = vmul.f32 %v133, %v147
  %v202 = vmul.f32 %v134, %v147
  %v203 = vmul.f32 %v135, %v147
  %v204 = vmul.f32 %v136, %v147
  %v205 = vmul.f32 %v137, %v147
  %v206 = vmul.f32 %v138, %v147
  %v207 = vmul.f32 %v139, %v147
  %v208 = vmul.f32 %v140, %v147
  %v209 = vmul.f32 %v141, %v147
  %v210 = vmul.f32 %v142, %v147
  %v211 = vmul.f32 %v143, %v147
  %v212 = vlaneseq
  %v213 = vshrl.u32 %v212, 7
  %v214 = vsub.s32 0, %v213
  %v215 = vrot.slane %v15, %v214
  %v216 = vadd.f32 %v148, %v215
  %v217 = vadd.f32 %v149, %v215
  %v218 = vadd.f32 %v150, %v215
  %v219 = vadd.f32 %v151, %v215
  %v220 = vadd.f32 %v152, %v215
  %v221 = vadd.f32 %v153, %v215
  %v222 = vadd.f32 %v154, %v215
  %v223 = vadd.f32 %v155, %v215
  %v224 = vadd.f32 %v156, %v215
  %v225 = vadd.f32 %v157, %v215
  %v226 = vadd.f32 %v158, %v215
  %v227 = vadd.f32 %v159, %v215
  %v228 = vadd.f32 %v160, %v215
  %v229 = vadd.f32 %v161, %v215
  %v230 = vadd.f32 %v162, %v215
  %v231 = vadd.f32 %v163, %v215
  %v232 = vadd.f32 %v164, %v215
  %v233 = vadd.f32 %v165, %v215
  %v234 = vadd.f32 %v166, %v215
  %v235 = vadd.f32 %v167, %v215
  %v236 = vadd.f32 %v168, %v215
  %v237 = vadd.f32 %v169, %v215
  %v238 = vadd.f32 %v170, %v215
  %v239 = vadd.f32 %v171, %v215
  %v240 = vadd.f32 %v172, %v215
  %v241 = vadd.f32 %v173, %v215
  %v242 = vadd.f32 %v174, %v215
  %v243 = vadd.f32 %v175, %v215
  %v244 = vadd.f32 %v176, %v215
  %v245 = vadd.f32 %v177, %v215
  %v246 = vadd.f32 %v178, %v215
  %v247 = vadd.f32 %v179, %v215
  %v248 = vadd.f32 %v180, %v215
  %v249 = vadd.f32 %v181, %v215
  %v250 = vadd.f32 %v182, %v215
  %v251 = vadd.f32 %v183, %v215
  %v252 = vadd.f32 %v184, %v215
  %v253 = vadd.f32 %v185, %v215
  %v254 = vadd.f32 %v186, %v215
  %v255 = vadd.f32 %v187, %v215
  %v256 = vadd.f32 %v188, %v215
  %v257 = vadd.f32 %v189, %v215
  %v258 = vadd.f32 %v190, %v215
  %v259 = vadd.f32 %v191, %v215
  %v260 = vadd.f32 %v192, %v215
  %v261 = vadd.f32 %v193, %v215
  %v262 = vadd.f32 %v194, %v215
  %v263 = vadd.f32 %v195, %v215
  %v264 = vadd.f32 %v196, %v215
  %v265 = vadd.f32 %v197, %v215
  %v266 = vadd.f32 %v198, %v215
  %v267 = vadd.f32 %v199, %v215
  %v268 = vadd.f32 %v200, %v215
  %v269 = vadd.f32 %v201, %v215
  %v270 = vadd.f32 %v202, %v215
  %v271 = vadd.f32 %v203, %v215
  %v272 = vadd.f32 %v204, %v215
  %v273 = vadd.f32 %v205, %v215
  %v274 = vadd.f32 %v206, %v215
  %v275 = vadd.f32 %v207, %v215
  %v276 = vadd.f32 %v208, %v215
  %v277 = vadd.f32 %v209, %v215
  %v278 = vadd.f32 %v210, %v215
  %v279 = vadd.f32 %v211, %v215
  %v280 = vmax.f32 %v216, 0.0
  %v281 = vmax.f32 %v217, 0.0
  %v282 = vmax.f32 %v218, 0.0
  %v283 = vmax.f32 %v219, 0.0
  %v284 = vmax.f32 %v220, 0.0
  %v285 = vmax.f32 %v221, 0.0
  %v286 = vmax.f32 %v222, 0.0
  %v287 = vmax.f32 %v223, 0.0
  %v288 = vmax.f32 %v224, 0.0
  %v289 = vmax.f32 %v225, 0.0
  %v290 = vmax.f32 %v226, 0.0
  %v291 = vmax.f32 %v227, 0.0
  %v292 = vmax.f32 %v228, 0.0
  %v293 = vmax.f32 %v229, 0.0
  %v294 = vmax.f32 %v230, 0.0
  %v295 = vmax.f32 %v231, 0.0
  %v296 = vmax.f32 %v232, 0.0
  %v297 = vmax.f32 %v233, 0.0
  %v298 = vmax.f32 %v234, 0.0
  %v299 = vmax.f32 %v235, 0.0
  %v300 = vmax.f32 %v236, 0.0
  %v301 = vmax.f32 %v237, 0.0
  %v302 = vmax.f32 %v238, 0.0
  %v303 = vmax.f32 %v239, 0.0
  %v304 = vmax.f32 %v240, 0.0
  %v305 = vmax.f32 %v241, 0.0
  %v306 = vmax.f32 %v242, 0.0
  %v307 = vmax.f32 %v243, 0.0
  %v308 = vmax.f32 %v244, 0.0
  %v309 = vmax.f32 %v245, 0.0
  %v310 = vmax.f32 %v246, 0.0
  %v311 = vmax.f32 %v247, 0.0
  %v312 = vmax.f32 %v248, 0.0
  %v313 = vmax.f32 %v249, 0.0
  %v314 = vmax.f32 %v250, 0.0
  %v315 = vmax.f32 %v251, 0.0
  %v316 = vmax.f32 %v252, 0.0
  %v317 = vmax.f32 %v253, 0.0
  %v318 = vmax.f32 %v254, 0.0
  %v319 = vmax.f32 %v255, 0.0
  %v320 = vmax.f32 %v256, 0.0
  %v321 = vmax.f32 %v257, 0.0
  %v322 = vmax.f32 %v258, 0.0
  %v323 = vmax.f32 %v259, 0.0
  %v324 = vmax.f32 %v260, 0.0
  %v325 = vmax.f32 %v261, 0.0
  %v326 = vmax.f32 %v262, 0.0
  %v327 = vmax.f32 %v263, 0.0
  %v328 = vmax.f32 %v264, 0.0
  %v329 = vmax.f32 %v265, 0.0
  %v330 = vmax.f32 %v266, 0.0
  %v331 = vmax.f32 %v267, 0.0
  %v332 = vmax.f32 %v268, 0.0
  %v333 = vmax.f32 %v269, 0.0
  %v334 = vmax.f32 %v270, 0.0
  %v335 = vmax.f32 %v271, 0.0
  %v336 = vmax.f32 %v272, 0.0
  %v337 = vmax.f32 %v273, 0.0
  %v338 = vmax.f32 %v274, 0.0
  %v339 = vmax.f32 %v275, 0.0
  %v340 = vmax.f32 %v276, 0.0
  %v341 = vmax.f32 %v277, 0.0
  %v342 = vmax.f32 %v278, 0.0
  %v343 = vmax.f32 %v279, 0.0
  %v344 = vadd.f32 %v16, %v280
  %v345 = vadd.f32 %v17, %v281
  %v346 = vadd.f32 %v18, %v282
  %v347 = vadd.f32 %v19, %v283
  %v348 = vadd.f32 %v20, %v284
  %v349 = vadd.f32 %v21, %v285
  %v350 = vadd.f32 %v22, %v286
  %v351 = vadd.f32 %v23, %v287
  %v352 = vadd.f32 %v24, %v288
  %v353 = vadd.f32 %v25, %v289
  %v354 = vadd.f32 %v26, %v290
  %v355 = vadd.f32 %v27, %v291
  %v356 = vadd.f32 %v28, %v292
  %v357 = vadd.f32 %v29, %v293
  %v358 = vadd.f32 %v30, %v294
  %v359 = vadd.f32 %v31, %v295
  %v360 = vadd.f32 %v32, %v296
  %v361 = vadd.f32 %v33, %v297
  %v362 = vadd.f32 %v34, %v298
  %v363 = vadd.f32 %v35, %v299
  %v364 = vadd.f32 %v36, %v300
  %v365 = vadd.f32 %v37, %v301
  %v366 = vadd.f32 %v38, %v302
  %v367 = vadd.f32 %v39, %v303
  %v368 = vadd.f32 %v40, %v304
  %v369 = vadd.f32 %v41, %v305
  %v370 = vadd.f32 %v42, %v306
  %v371 = vadd.f32 %v43, %v307
  %v372 = vadd.f32 %v44, %v308
  %v373 = vadd.f32 %v45, %v309
  %v374 = vadd.f32 %v46, %v310
  %v375 = vadd.f32 %v47, %v311
  %v376 = vadd.f32 %v48, %v312
  %v377 = vadd.f32 %v49, %v313
  %v378 = vadd.f32 %v50, %v314
  %v379 = vadd.f32 %v51, %v315
  %v380 = vadd.f32 %v52, %v316
  %v381 = vadd.f32 %v53, %v317
  %v382 = vadd.f32 %v54, %v318
  %v383 = vadd.f32 %v55, %v319
  %v384 = vadd.f32 %v56, %v320
  %v385 = vadd.f32 %v57, %v321
  %v386 = vadd.f32 %v58, %v322
  %v387 = vadd.f32 %v59, %v323
  %v388 = vadd.f32 %v60, %v324
  %v389 = vadd.f32 %v61, %v325
  %v390 = vadd.f32 %v62, %v326
  %v391 = vadd.f32 %v63, %v327
  %v392 = vadd.f32 %v64, %v328
  %v393 = vadd.f32 %v65, %v329
  %v394 = vadd.f32 %v66, %v330
  %v395 = vadd.f32 %v67, %v331
  %v396 = vadd.f32 %v68, %v332
  %v397 = vadd.f32 %v69, %v333
  %v398 = vadd.f32 %v70, %v334
  %v399 = vadd.f32 %v71, %v335
  %v400 = vadd.f32 %v72, %v336
  %v401 = vadd.f32 %v73, %v337
  %v402 = vadd.f32 %v74, %v338
  %v403 = vadd.f32 %v75, %v339
  %v404 = vadd.f32 %v76, %v340
  %v405 = vadd.f32 %v77, %v341
  %v406 = vadd.f32 %v78, %v342
  %v407 = vadd.f32 %v79, %v343
  %408 = vst [vmem:[%s3] sm:$0xff] %v344
  %409 = vst [vmem:[%s3 + $0x8] sm:$0xff] %v345
  %410 = vst [vmem:[%s3 + $0x10] sm:$0xff] %v346
  %411 = vst [vmem:[%s3 + $0x18] sm:$0xff] %v347
  %412 = vst [vmem:[%s3 + $0x20] sm:$0xff] %v348
  %413 = vst [vmem:[%s3 + $0x28] sm:$0xff] %v349
  %414 = vst [vmem:[%s3 + $0x30] sm:$0xff] %v350
  %415 = vst [vmem:[%s3 + $0x38] sm:$0xff] %v351
  %416 = vst [vmem:[%s3 + $0x40] sm:$0xff] %v352
  %417 = vst [vmem:[%s3 + $0x48] sm:$0xff] %v353
  %418 = vst [vmem:[%s3 + $0x50] sm:$0xff] %v354
  %419 = vst [vmem:[%s3 + $0x58] sm:$0xff] %v355
  %420 = vst [vmem:[%s3 + $0x60] sm:$0xff] %v356
  %421 = vst [vmem:[%s3 + $0x68] sm:$0xff] %v357
  %422 = vst [vmem:[%s3 + $0x70] sm:$0xff] %v358
  %423 = vst [vmem:[%s3 + $0x78] sm:$0xff] %v359
  %424 = vst [vmem:[%s3 + $0x80] sm:$0xff] %v360
  %425 = vst [vmem:[%s3 + $0x88] sm:$0xff] %v361
  %426 = vst [vmem:[%s3 + $0x90] sm:$0xff] %v362
  %427 = vst [vmem:[%s3 + $0x98] sm:$0xff] %v363
  %428 = vst [vmem:[%s3 + $0xa0] sm:$0xff] %v364
  %429 = vst [vmem:[%s3 + $0xa8] sm:$0xff] %v365
  %430 = vst [vmem:[%s3 + $0xb0] sm:$0xff] %v366
  %431 = vst [vmem:[%s3 + $0xb8] sm:$0xff] %v367
  %432 = vst [vmem:[%s3 + $0xc0] sm:$0xff] %v368
  %433 = vst [vmem:[%s3 + $0xc8] sm:$0xff] %v369
  %434 = vst [vmem:[%s3 + $0xd0] sm:$0xff] %v370
  %435 = vst [vmem:[%s3 + $0xd8] sm:$0xff] %v371
  %436 = vst [vmem:[%s3 + $0xe0] sm:$0xff] %v372
  %437 = vst [vmem:[%s3 + $0xe8] sm:$0xff] %v373
  %438 = vst [vmem:[%s3 + $0xf0] sm:$0xff] %v374
  %439 = vst [vmem:[%s3 + $0xf8] sm:$0xff] %v375
  %440 = vst [vmem:[%s3 + $0x100] sm:$0xff] %v376
  %441 = vst [vmem:[%s3 + $0x108] sm:$0xff] %v377
  %442 = vst [vmem:[%s3 + $0x110] sm:$0xff] %v378
  %443 = vst [vmem:[%s3 + $0x118] sm:$0xff] %v379
  %444 = vst [vmem:[%s3 + $0x120] sm:$0xff] %v380
  %445 = vst [vmem:[%s3 + $0x128] sm:$0xff] %v381
  %446 = vst [vmem:[%s3 + $0x130] sm:$0xff] %v382
  %447 = vst [vmem:[%s3 + $0x138] sm:$0xff] %v383
  %448 = vst [vmem:[%s3 + $0x140] sm:$0xff] %v384
  %449 = vst [vmem:[%s3 + $0x148] sm:$0xff] %v385
  %450 = vst [vmem:[%s3 + $0x150] sm:$0xff] %v386
  %451 = vst [vmem:[%s3 + $0x158] sm:$0xff] %v387
  %452 = vst [vmem:[%s3 + $0x160] sm:$0xff] %v388
  %453 = vst [vmem:[%s3 + $0x168] sm:$0xff] %v389
  %454 = vst [vmem:[%s3 + $0x170] sm:$0xff] %v390
  %455 = vst [vmem:[%s3 + $0x178] sm:$0xff] %v391
  %456 = vst [vmem:[%s3 + $0x180] sm:$0xff] %v392
  %457 = vst [vmem:[%s3 + $0x188] sm:$0xff] %v393
  %458 = vst [vmem:[%s3 + $0x190] sm:$0xff] %v394
  %459 = vst [vmem:[%s3 + $0x198] sm:$0xff] %v395
  %460 = vst [vmem:[%s3 + $0x1a0] sm:$0xff] %v396
  %461 = vst [vmem:[%s3 + $0x1a8] sm:$0xff] %v397
  %462 = vst [vmem:[%s3 + $0x1b0] sm:$0xff] %v398
  %463 = vst [vmem:[%s3 + $0x1b8] sm:$0xff] %v399
  %464 = vst [vmem:[%s3 + $0x1c0] sm:$0xff] %v400
  %465 = vst [vmem:[%s3 + $0x1c8] sm:$0xff] %v401
  %466 = vst [vmem:[%s3 + $0x1d0] sm:$0xff] %v402
  %467 = vst [vmem:[%s3 + $0x1d8] sm:$0xff] %v403
  %468 = vst [vmem:[%s3 + $0x1e0] sm:$0xff] %v404
  %469 = vst [vmem:[%s3 + $0x1e8] sm:$0xff] %v405
  %470 = vst [vmem:[%s3 + $0x1f0] sm:$0xff] %v406
  %471 = vst [vmem:[%s3 + $0x1f8] sm:$0xff] %v407
  // Predicated region
  $region14: #{activated_resblock2d.13} parent=0 // pred_check
    _
  $region15: #{activated_resblock2d.13} parent=0 // pred_check_branch
    %473 = sbr.rel (0) target = $region17
  $region16: #{activated_resblock2d.13} parent=0 // pred_region
    _
  $region17: #{activated_resblock2d.13} parent=0 // pred_fallthru
    _
  // Predicated region
  $region18: #{activated_resblock2d.13} parent=0 // pred_check
    _
  $region19: #{activated_resblock2d.13} parent=0 // pred_check_branch
    %475 = sbr.rel (0) target = $region21
  $region20: #{activated_resblock2d.13} parent=0 // pred_region
    _
  $region21: #{activated_resblock2d.13} parent=0 // pred_fallthru
    _

// kernel: activated_resblock2d.9
$region0: #{activated_resblock2d.9}
  #allocation0 [shape = 'u32[]', space=smem, size = 0x4, offset = 0x4, fixed_abs, tag = 'smem constant byte address 0x4 - core index']
  #allocation1 [shape = 'u32[144,128]{1,0:T(1,128)}', space=vmem, size = 0x12000, scoped, tag = 'internal scratch']
  %s0 = inlined_call_operand.vmem [shape: f32[2,16,16,128], index: 0, kind: input, shape index: {}, may-alias: {0,1,2}]
  %s1 = inlined_call_operand.vmem [shape: f32[2,16,16,128], index: 1, kind: input, shape index: {}, may-alias: {0,1,2}]
  %s2 = inlined_call_operand.vmem [shape: f32[2,16,16,128], index: 2, kind: input, shape index: {}, may-alias: {0,1,2}]
  %s3 = inlined_call_operand.vmem [shape: bf16[9,128,128], index: 3, kind: input, shape index: {}]
  %s4 = inlined_call_operand.vmem [shape: f32[2,128], index: 4, kind: input, shape index: {}]
  %s5 = inlined_call_operand.vmem [shape: f32[2,1,128], index: 5, kind: input, shape index: {}]
  %s6 = inlined_call_operand.vmem [shape: f32[2,16,16,128], index: 6, kind: output, shape index: {0}]
  %s7 = inlined_call_operand.vmem [shape: f32[2,2,128], index: 7, kind: output, shape index: {1}]
  %8 = xla_tuple %s6, %s7
  %s9 = sld [smem:[#allocation0]]
  $region69: #{activated_resblock2d.9} parent=0
    _
  %s11 = ssub.s32 1, %s9
  %s12 = scalar_select 0, %s11, %s9
  loop: start=0, step=1, limit=4
  $region2: #{activated_resblock2d.9} parent=0 // loop_pre_header
    _
  $region3: #{activated_resblock2d.9} parent=0 // loop_header
    %s14 = sphi 0, %s18
    %p15 = scmp.ge.s32.totalorder %s14, 4
    %s21 = sphi 0, %s33
    %s22 = sphi 0, %s29
    %s23 = sphi 0, %s21
    %s24 = sphi 0, %s22
    %s25 = sphi 0, %s23
    %s26 = sphi 0, %s24
    %s46 = sphi 0, %s48
    %s49 = sphi 0, %s46
    %s50 = sphi 0, %s49
    %s66 = sphi 0, %s50
    %s74 = sphi 0, %s76
    %s77 = sphi 0, %s74
    %s78 = sphi 0, %s77
    %s94 = sphi 0, %s78
    %s110 = sphi 0, %s112
    %s113 = sphi 0, %s110
    %s114 = sphi 0, %s113
    %s130 = sphi 0, %s114
    %s134 = sphi 0, %s134
    %s136 = sphi 0, %s134
    %s137 = sphi 0, %s136
    %s151 = sphi 0, %s137
    %s155 = sphi 0, %s155
    %s157 = sphi 0, %s155
    %s158 = sphi 0, %s157
    %s172 = sphi 0, %s158
    %s178 = sphi 0, %s180
    %s181 = sphi 0, %s178
    %s182 = sphi 0, %s181
    %s198 = sphi 0, %s182
    %s206 = sphi 0, %s208
    %s209 = sphi 0, %s206
    %s210 = sphi 0, %s209
    %s226 = sphi 0, %s210
    %s232 = sphi 0, %s234
    %s235 = sphi 0, %s232
    %s236 = sphi 0, %s235
    %s252 = sphi 0, %s236
  $region4: #{activated_resblock2d.9} parent=0 // loop_header_branch
    %17 = sbr.rel (%p15) target = $region8
  $region5: #{activated_resblock2d.9} parent=0 // loop_body
    %s19 = ssub.s32 %s14, 1
    %s20 = ssub.s32 %s14, 2
    %s27 = sadd.s32 1, %s22
    %p28 = scmp.ge.s32.totalorder %s27, 1
    %s29 = scalar_select %p28, 0, %s27
    %s30 = sadd.s32 1, %s21
    %s31 = scalar_select %p28, %s30, %s21
    %p32 = scmp.ge.s32.totalorder %s31, 2
    %s33 = scalar_select %p32, 0, %s31
    %s34 = smul.u32 %s22, 16
    %s35 = ssub.s32 %s34, 1
    %p36 = scmp.gt.s32.totalorder %s35, 0
    %s37 = scalar_select %p36, %s35, 0
    %s38 = smul.u32 %s29, 16
    %s39 = ssub.s32 %s38, 1
    %p40 = scmp.gt.s32.totalorder %s39, 0
    %s41 = scalar_select %p40, %s39, 0
    %s42 = ssub.s32 %s21, %s33
    %s43 = ssub.s32 %s37, %s41
    %s44 = sor.u32 %s42, %s43
    %p45 = scmp.eq.s32.totalorder %s44, 0
    %s47 = sadd.s32 %s46, 1
    %s48 = scalar_select %p45, %s46, %s47
    %p51 = pneg %p45
    %p52 = scmp.eq.s32.totalorder %s14, 1
    %p53 = por %p51, %p52
    %p54 = scmp.ne.s32.totalorder %s46, %s49
    %p55 = scmp.eq.s32.totalorder %s14, 0
    %p56 = por %p54, %p55
    %p57 = scmp.ne.s32.totalorder %s46, %s49
    %p58 = scmp.eq.s32.totalorder %s19, 1
    %p59 = por %p57, %p58
    %p60 = scmp.ne.s32.totalorder %s49, %s50
    %p61 = scmp.eq.s32.totalorder %s19, 0
    %p62 = por %p60, %p61
    %p63 = scmp.ne.s32.totalorder %s49, %s50
    %p64 = scmp.eq.s32.totalorder %s20, 1
    %p65 = por %p63, %p64
    %p67 = scmp.ne.s32.totalorder %s50, %s66
    %p68 = scmp.eq.s32.totalorder %s20, 0
    %p69 = por %p67, %p68
    %s70 = ssub.s32 %s21, %s33
    %s71 = ssub.s32 %s22, %s29
    %s72 = sor.u32 %s70, %s71
    %p73 = scmp.eq.s32.totalorder %s72, 0
    %s75 = sadd.s32 %s74, 1
    %s76 = scalar_select %p73, %s74, %s75
    %p79 = pneg %p73
    %p80 = scmp.eq.s32.totalorder %s14, 1
    %p81 = por %p79, %p80
    %p82 = scmp.ne.s32.totalorder %s74, %s77
    %p83 = scmp.eq.s32.totalorder %s14, 0
    %p84 = por %p82, %p83
    %p85 = scmp.ne.s32.totalorder %s74, %s77
    %p86 = scmp.eq.s32.totalorder %s19, 1
    %p87 = por %p85, %p86
    %p88 = scmp.ne.s32.totalorder %s77, %s78
    %p89 = scmp.eq.s32.totalorder %s19, 0
    %p90 = por %p88, %p89
    %p91 = scmp.ne.s32.totalorder %s77, %s78
    %p92 = scmp.eq.s32.totalorder %s20, 1
    %p93 = por %p91, %p92
    %p95 = scmp.ne.s32.totalorder %s78, %s94
    %p96 = scmp.eq.s32.totalorder %s20, 0
    %p97 = por %p95, %p96
    %s98 = smul.u32 %s22, 16
    %s99 = sadd.s32 %s98, 16
    %p100 = scmp.lt.s32.totalorder %s99, 15
    %s101 = scalar_select %p100, %s99, 15
    %s102 = smul.u32 %s29, 16
    %s103 = sadd.s32 %s102, 16
    %p104 = scmp.lt.s32.totalorder %s103, 15
    %s105 = scalar_select %p104, %s103, 15
    %s106 = ssub.s32 %s21, %s33
    %s107 = ssub.s32 %s101, %s105
    %s108 = sor.u32 %s106, %s107
    %p109 = scmp.eq.s32.totalorder %s108, 0
    %s111 = sadd.s32 %s110, 1
    %s112 = scalar_select %p109, %s110, %s111
    %p115 = pneg %p109
    %p116 = scmp.eq.s32.totalorder %s14, 1
    %p117 = por %p115, %p116
    %p118 = scmp.ne.s32.totalorder %s110, %s113
    %p119 = scmp.eq.s32.totalorder %s14, 0
    %p120 = por %p118, %p119
    %p121 = scmp.ne.s32.totalorder %s110, %s113
    %p122 = scmp.eq.s32.totalorder %s19, 1
    %p123 = por %p121, %p122
    %p124 = scmp.ne.s32.totalorder %s113, %s114
    %p125 = scmp.eq.s32.totalorder %s19, 0
    %p126 = por %p124, %p125
    %p127 = scmp.ne.s32.totalorder %s113, %s114
    %p128 = scmp.eq.s32.totalorder %s20, 1
    %p129 = por %p127, %p128
    %p131 = scmp.ne.s32.totalorder %s114, %s130
    %p132 = scmp.eq.s32.totalorder %s20, 0
    %p133 = por %p131, %p132
    %s135 = sadd.s32 %s134, 1
    %p138 = scmp.eq.s32.totalorder %s14, 1
    %p139 = scmp.ne.s32.totalorder %s134, %s136
    %p140 = scmp.eq.s32.totalorder %s14, 0
    %p141 = por %p139, %p140
    %p142 = scmp.ne.s32.totalorder %s134, %s136
    %p143 = scmp.eq.s32.totalorder %s19, 1
    %p144 = por %p142, %p143
    %p145 = scmp.ne.s32.totalorder %s136, %s137
    %p146 = scmp.eq.s32.totalorder %s19, 0
    %p147 = por %p145, %p146
    %p148 = scmp.ne.s32.totalorder %s136, %s137
    %p149 = scmp.eq.s32.totalorder %s20, 1
    %p150 = por %p148, %p149
    %p152 = scmp.ne.s32.totalorder %s137, %s151
    %p153 = scmp.eq.s32.totalorder %s20, 0
    %p154 = por %p152, %p153
    %s156 = sadd.s32 %s155, 1
    %p159 = scmp.eq.s32.totalorder %s14, 1
    %p160 = scmp.ne.s32.totalorder %s155, %s157
    %p161 = scmp.eq.s32.totalorder %s14, 0
    %p162 = por %p160, %p161
    %p163 = scmp.ne.s32.totalorder %s155, %s157
    %p164 = scmp.eq.s32.totalorder %s19, 1
    %p165 = por %p163, %p164
    %p166 = scmp.ne.s32.totalorder %s157, %s158
    %p167 = scmp.eq.s32.totalorder %s19, 0
    %p168 = por %p166, %p167
    %p169 = scmp.ne.s32.totalorder %s157, %s158
    %p170 = scmp.eq.s32.totalorder %s20, 1
    %p171 = por %p169, %p170
    %p173 = scmp.ne.s32.totalorder %s158, %s172
    %p174 = scmp.eq.s32.totalorder %s20, 0
    %p175 = por %p173, %p174
    %s176 = ssub.s32 %s21, %s33
    %p177 = scmp.eq.s32.totalorder %s176, 0
    %s179 = sadd.s32 %s178, 1
    %s180 = scalar_select %p177, %s178, %s179
    %p183 = pneg %p177
    %p184 = scmp.eq.s32.totalorder %s14, 1
    %p185 = por %p183, %p184
    %p186 = scmp.ne.s32.totalorder %s178, %s181
    %p187 = scmp.eq.s32.totalorder %s14, 0
    %p188 = por %p186, %p187
    %p189 = scmp.ne.s32.totalorder %s178, %s181
    %p190 = scmp.eq.s32.totalorder %s19, 1
    %p191 = por %p189, %p190
    %p192 = scmp.ne.s32.totalorder %s181, %s182
    %p193 = scmp.eq.s32.totalorder %s19, 0
    %p194 = por %p192, %p193
    %p195 = scmp.ne.s32.totalorder %s181, %s182
    %p196 = scmp.eq.s32.totalorder %s20, 1
    %p197 = por %p195, %p196
    %p199 = scmp.ne.s32.totalorder %s182, %s198
    %p200 = scmp.eq.s32.totalorder %s20, 0
    %p201 = por %p199, %p200
    %s202 = ssub.s32 %s21, %s33
    %s203 = ssub.s32 %s22, %s29
    %s204 = sor.u32 %s202, %s203
    %p205 = scmp.eq.s32.totalorder %s204, 0
    %s207 = sadd.s32 %s206, 1
    %s208 = scalar_select %p205, %s206, %s207
    %p211 = pneg %p205
    %p212 = scmp.eq.s32.totalorder %s14, 1
    %p213 = por %p211, %p212
    %p214 = scmp.ne.s32.totalorder %s206, %s209
    %p215 = scmp.eq.s32.totalorder %s14, 0
    %p216 = por %p214, %p215
    %p217 = scmp.ne.s32.totalorder %s206, %s209
    %p218 = scmp.eq.s32.totalorder %s19, 1
    %p219 = por %p217, %p218
    %p220 = scmp.ne.s32.totalorder %s209, %s210
    %p221 = scmp.eq.s32.totalorder %s19, 0
    %p222 = por %p220, %p221
    %p223 = scmp.ne.s32.totalorder %s209, %s210
    %p224 = scmp.eq.s32.totalorder %s20, 1
    %p225 = por %p223, %p224
    %p227 = scmp.ne.s32.totalorder %s210, %s226
    %p228 = scmp.eq.s32.totalorder %s20, 0
    %p229 = por %p227, %p228
    %s230 = ssub.s32 %s21, %s33
    %p231 = scmp.eq.s32.totalorder %s230, 0
    %s233 = sadd.s32 %s232, 1
    %s234 = scalar_select %p231, %s232, %s233
    %p237 = pneg %p231
    %p238 = scmp.eq.s32.totalorder %s14, 1
    %p239 = por %p237, %p238
    %p240 = scmp.ne.s32.totalorder %s232, %s235
    %p241 = scmp.eq.s32.totalorder %s14, 0
    %p242 = por %p240, %p241
    %p243 = scmp.ne.s32.totalorder %s232, %s235
    %p244 = scmp.eq.s32.totalorder %s19, 1
    %p245 = por %p243, %p244
    %p246 = scmp.ne.s32.totalorder %s235, %s236
    %p247 = scmp.eq.s32.totalorder %s19, 0
    %p248 = por %p246, %p247
    %p249 = scmp.ne.s32.totalorder %s235, %s236
    %p250 = scmp.eq.s32.totalorder %s20, 1
    %p251 = por %p249, %p250
    %p253 = scmp.ne.s32.totalorder %s236, %s252
    %p254 = scmp.eq.s32.totalorder %s20, 0
    %p255 = por %p253, %p254
    %p256 = scmp.le.s32.totalorder 1, %s14
    %p257 = scmp.lt.s32.totalorder %s14, 3
    %p258 = pnand %p256, %p257
    %p259 = pneg %p258
    // Predicated region
    $region9: #{activated_resblock2d.9} parent=5 // pred_check
      _
    $region10: #{activated_resblock2d.9} parent=5 // pred_check_branch
      %261 = sbr.rel (%p258) target = $region12
    $region11: #{activated_resblock2d.9} parent=5 // pred_region
      %s262 = ssub.s32 %s14, 1
      // Predicated region
      $region13: #{activated_resblock2d.9} parent=11 // pred_check
        %p263 = pneg %p147
      $region14: #{activated_resblock2d.9} parent=11 // pred_check_branch
        %265 = sbr.rel (%p263) target = $region16
      $region15: #{activated_resblock2d.9} parent=11 // pred_region
        _
      $region16: #{activated_resblock2d.9} parent=11 // pred_fallthru
        _
      // Predicated region
      $region17: #{activated_resblock2d.9} parent=11 // pred_check
        %p266 = pneg %p168
      $region18: #{activated_resblock2d.9} parent=11 // pred_check_branch
        %268 = sbr.rel (%p266) target = $region20
      $region19: #{activated_resblock2d.9} parent=11 // pred_region
        _
      $region20: #{activated_resblock2d.9} parent=11 // pred_fallthru
        _
    $region12: #{activated_resblock2d.9} parent=5 // pred_fallthru
      _
    %p269 = scmp.lt.s32.totalorder %s14, 2
    // Predicated region
    $region21: #{activated_resblock2d.9} parent=5 // pred_check
      %p270 = pneg %p269
    $region22: #{activated_resblock2d.9} parent=5 // pred_check_branch
      %272 = sbr.rel (%p270) target = $region24
    $region23: #{activated_resblock2d.9} parent=5 // pred_region
      // Predicated region
      $region25: #{activated_resblock2d.9} parent=23 // pred_check
        %p273 = pneg %p56
      $region26: #{activated_resblock2d.9} parent=23 // pred_check_branch
        %275 = sbr.rel (%p273) target = $region28
      $region27: #{activated_resblock2d.9} parent=23 // pred_region
        %s276 = smul.u32 %s22, 16
        %s277 = ssub.s32 %s276, 1
        %p278 = scmp.gt.s32.totalorder %s277, 0
        %s279 = scalar_select %p278, %s277, 0
        %p280 = scmp.lt.s32.totalorder %s21, 1
        %s281 = scalar_select %p280, %s21, 1
        %p282 = scmp.lt.s32.totalorder %s279, 15
        %s283 = scalar_select %p282, %s279, 15
        %s284 = smul.addr %s283, 2
        %s285 = smul.addr %s281, 32
        %s286 = sadd.s32 %s284, %s285
        %s287 = smul.addr %s286, 8
        %s288 = scalar_lea.vmem %s0, %s287
        %s289 = smul.u32 %s22, 16
        %s290 = ssub.s32 %s289, 1
        %p291 = scmp.gt.s32.totalorder %s290, 0
        %s292 = scalar_select %p291, %s290, 0
      $region28: #{activated_resblock2d.9} parent=23 // pred_fallthru
        _
      // Predicated region
      $region29: #{activated_resblock2d.9} parent=23 // pred_check
        %p293 = pneg %p84
      $region30: #{activated_resblock2d.9} parent=23 // pred_check_branch
        %295 = sbr.rel (%p293) target = $region32
      $region31: #{activated_resblock2d.9} parent=23 // pred_region
        %s296 = smul.u32 16, %s22
        %p297 = scmp.lt.s32.totalorder %s21, 1
        %s298 = scalar_select %p297, %s21, 1
        %p299 = scmp.lt.s32.totalorder %s296, 15
        %s300 = scalar_select %p299, %s296, 15
        %s301 = smul.addr %s300, 2
        %s302 = smul.addr %s298, 32
        %s303 = sadd.s32 %s301, %s302
        %s304 = smul.addr %s303, 8
        %s305 = scalar_lea.vmem %s1, %s304
        %s306 = smul.u32 16, %s22
      $region32: #{activated_resblock2d.9} parent=23 // pred_fallthru
        _
      // Predicated region
      $region33: #{activated_resblock2d.9} parent=23 // pred_check
        %p307 = pneg %p120
      $region34: #{activated_resblock2d.9} parent=23 // pred_check_branch
        %309 = sbr.rel (%p307) target = $region36
      $region35: #{activated_resblock2d.9} parent=23 // pred_region
        %s310 = smul.u32 %s22, 16
        %s311 = sadd.s32 %s310, 16
        %p312 = scmp.lt.s32.totalorder %s311, 15
        %s313 = scalar_select %p312, %s311, 15
        %p314 = scmp.lt.s32.totalorder %s21, 1
        %s315 = scalar_select %p314, %s21, 1
        %p316 = scmp.lt.s32.totalorder %s313, 15
        %s317 = scalar_select %p316, %s313, 15
        %s318 = smul.addr %s317, 2
        %s319 = smul.addr %s315, 32
        %s320 = sadd.s32 %s318, %s319
        %s321 = smul.addr %s320, 8
        %s322 = scalar_lea.vmem %s2, %s321
        %s323 = smul.u32 %s22, 16
        %s324 = sadd.s32 %s323, 16
        %p325 = scmp.lt.s32.totalorder %s324, 15
        %s326 = scalar_select %p325, %s324, 15
      $region36: #{activated_resblock2d.9} parent=23 // pred_fallthru
        _
      // Predicated region
      $region37: #{activated_resblock2d.9} parent=23 // pred_check
        %p327 = pneg %p188
      $region38: #{activated_resblock2d.9} parent=23 // pred_check_branch
        %329 = sbr.rel (%p327) target = $region40
      $region39: #{activated_resblock2d.9} parent=23 // pred_region
        %p330 = scmp.lt.s32.totalorder %s21, 1
        %s331 = scalar_select %p330, %s21, 1
        %s332 = scalar_lea.vmem %s5, %s331
      $region40: #{activated_resblock2d.9} parent=23 // pred_fallthru
        _
    $region24: #{activated_resblock2d.9} parent=5 // pred_fallthru
      _
    %p333 = scmp.le.s32.totalorder 1, %s14
    %p334 = scmp.lt.s32.totalorder %s14, 3
    %p335 = pnand %p333, %p334
    %p336 = pneg %p335
    // Predicated region
    $region41: #{activated_resblock2d.9} parent=5 // pred_check
      _
    $region42: #{activated_resblock2d.9} parent=5 // pred_check_branch
      %338 = sbr.rel (%p335) target = $region44
    $region43: #{activated_resblock2d.9} parent=5 // pred_region
      %s339 = ssub.s32 %s14, 1
      %s340 = smul.u32 %s24, 16
      %s341 = ssub.s32 %s340, 1
      %p342 = scmp.gt.s32.totalorder %s341, 0
      %s343 = scalar_select %p342, %s341, 0
      %p344 = scmp.lt.s32.totalorder %s23, 1
      %s345 = scalar_select %p344, %s23, 1
      %p346 = scmp.lt.s32.totalorder %s343, 15
      %s347 = scalar_select %p346, %s343, 15
      %s348 = smul.addr %s347, 2
      %s349 = smul.addr %s345, 32
      %s350 = sadd.s32 %s348, %s349
      %s351 = smul.addr %s350, 8
      %s352 = scalar_lea.vmem %s0, %s351
      %p353 = pneg %p62
      %p354 = pneg %p59
      %s355 = smul.u32 16, %s24
      %p356 = scmp.lt.s32.totalorder %s23, 1
      %s357 = scalar_select %p356, %s23, 1
      %p358 = scmp.lt.s32.totalorder %s355, 15
      %s359 = scalar_select %p358, %s355, 15
      %s360 = smul.addr %s359, 2
      %s361 = smul.addr %s357, 32
      %s362 = sadd.s32 %s360, %s361
      %s363 = smul.addr %s362, 8
      %s364 = scalar_lea.vmem %s1, %s363
      %p365 = pneg %p90
      %p366 = pneg %p87
      %s367 = smul.u32 %s24, 16
      %s368 = sadd.s32 %s367, 16
      %p369 = scmp.lt.s32.totalorder %s368, 15
      %s370 = scalar_select %p369, %s368, 15
      %p371 = scmp.lt.s32.totalorder %s23, 1
      %s372 = scalar_select %p371, %s23, 1
      %p373 = scmp.lt.s32.totalorder %s370, 15
      %s374 = scalar_select %p373, %s370, 15
      %s375 = smul.addr %s374, 2
      %s376 = smul.addr %s372, 32
      %s377 = sadd.s32 %s375, %s376
      %s378 = smul.addr %s377, 8
      %s379 = scalar_lea.vmem %s2, %s378
      %p380 = pneg %p126
      %p381 = pneg %p123
      %p382 = pneg %p147
      %p383 = pneg %p144
      %p384 = pneg %p168
      %p385 = pneg %p165
      %p386 = scmp.lt.s32.totalorder %s23, 1
      %s387 = scalar_select %p386, %s23, 1
      %s388 = scalar_lea.vmem %s5, %s387
      %p389 = pneg %p194
      %p390 = pneg %p191
      %p391 = pneg %p222
      %p392 = pneg %p219
      %s393 = smul.u32 16, %s24
      %p394 = scmp.lt.s32.totalorder %s23, 1
      %s395 = scalar_select %p394, %s23, 1
      %p396 = scmp.lt.s32.totalorder %s393, 15
      %s397 = scalar_select %p396, %s393, 15
      %s398 = smul.addr %s397, 2
      %s399 = smul.addr %s395, 32
      %s400 = sadd.s32 %s398, %s399
      %s401 = smul.addr %s400, 8
      %s402 = scalar_lea.vmem %s6, %s401
      %p403 = pneg %p248
      %p404 = pneg %p245
      %p405 = scmp.lt.s32.totalorder %s23, 1
      %s406 = scalar_select %p405, %s23, 1
      %s407 = smul.addr %s406, 2
      %s408 = scalar_lea.vmem %s7, %s407
      %s409 = smul.u32 %s24, 16
      %s410 = ssub.s32 %s409, 1
      %p411 = scmp.gt.s32.totalorder %s410, 0
      %s412 = scalar_select %p411, %s410, 0
      %p413 = scmp.lt.s32.totalorder %s23, 1
      %s414 = scalar_select %p413, %s23, 1
      %p415 = scmp.lt.s32.totalorder %s412, 15
      %s416 = scalar_select %p415, %s412, 15
      %s417 = smul.addr %s416, 2
      %s418 = smul.addr %s414, 32
      %s419 = sadd.s32 %s417, %s418
      %s420 = smul.addr %s419, 8
      %s421 = scalar_lea.vmem %s0, %s420
      %s422 = smul.u32 %s24, 16
      %s423 = ssub.s32 %s422, 1
      %p424 = scmp.gt.s32.totalorder %s423, 0
      %s425 = scalar_select %p424, %s423, 0
      %s426 = smul.u32 16, %s24
      %p427 = scmp.lt.s32.totalorder %s23, 1
      %s428 = scalar_select %p427, %s23, 1
      %p429 = scmp.lt.s32.totalorder %s426, 15
      %s430 = scalar_select %p429, %s426, 15
      %s431 = smul.addr %s430, 2
      %s432 = smul.addr %s428, 32
      %s433 = sadd.s32 %s431, %s432
      %s434 = smul.addr %s433, 8
      %s435 = scalar_lea.vmem %s1, %s434
      %s436 = smul.u32 16, %s24
      %s437 = smul.u32 %s24, 16
      %s438 = sadd.s32 %s437, 16
      %p439 = scmp.lt.s32.totalorder %s438, 15
      %s440 = scalar_select %p439, %s438, 15
      %p441 = scmp.lt.s32.totalorder %s23, 1
      %s442 = scalar_select %p441, %s23, 1
      %p443 = scmp.lt.s32.totalorder %s440, 15
      %s444 = scalar_select %p443, %s440, 15
      %s445 = smul.addr %s444, 2
      %s446 = smul.addr %s442, 32
      %s447 = sadd.s32 %s445, %s446
      %s448 = smul.addr %s447, 8
      %s449 = scalar_lea.vmem %s2, %s448
      %s450 = smul.u32 %s24, 16
      %s451 = sadd.s32 %s450, 16
      %p452 = scmp.lt.s32.totalorder %s451, 15
      %s453 = scalar_select %p452, %s451, 15
      %p454 = scmp.lt.s32.totalorder %s23, 1
      %s455 = scalar_select %p454, %s23, 1
      %s456 = scalar_lea.vmem %s5, %s455
      %s457 = smul.u32 16, %s24
      %p458 = scmp.lt.s32.totalorder %s23, 1
      %s459 = scalar_select %p458, %s23, 1
      %p460 = scmp.lt.s32.totalorder %s457, 15
      %s461 = scalar_select %p460, %s457, 15
      %s462 = smul.addr %s461, 2
      %s463 = smul.addr %s459, 32
      %s464 = sadd.s32 %s462, %s463
      %s465 = smul.addr %s464, 8
      %s466 = scalar_lea.vmem %s6, %s465
      %s467 = smul.u32 16, %s24
      %p468 = scmp.lt.s32.totalorder %s23, 1
      %s469 = scalar_select %p468, %s23, 1
      %s470 = smul.addr %s469, 2
      %s471 = scalar_lea.vmem %s7, %s470
      %v473 = vld [vmem:[%s421] sm:$0xff]
      %v474 = vld [vmem:[%s421 + $0x8] sm:$0xff]
      %v475 = vld [vmem:[%s435] sm:$0xff]
      %v476 = vld [vmem:[%s435 + $0x8] sm:$0xff]
      %v477 = vld [vmem:[%s435 + $0x10] sm:$0xff]
      %v478 = vld [vmem:[%s435 + $0x18] sm:$0xff]
      %v479 = vld [vmem:[%s435 + $0x20] sm:$0xff]
      %v480 = vld [vmem:[%s435 + $0x28] sm:$0xff]
      %v481 = vld [vmem:[%s435 + $0x30] sm:$0xff]
      %v482 = vld [vmem:[%s435 + $0x38] sm:$0xff]
      %v483 = vld [vmem:[%s435 + $0x40] sm:$0xff]
      %v484 = vld [vmem:[%s435 + $0x48] sm:$0xff]
      %v485 = vld [vmem:[%s435 + $0x50] sm:$0xff]
      %v486 = vld [vmem:[%s435 + $0x58] sm:$0xff]
      %v487 = vld [vmem:[%s435 + $0x60] sm:$0xff]
      %v488 = vld [vmem:[%s435 + $0x68] sm:$0xff]
      %v489 = vld [vmem:[%s435 + $0x70] sm:$0xff]
      %v490 = vld [vmem:[%s435 + $0x78] sm:$0xff]
      %v491 = vld [vmem:[%s435 + $0x80] sm:$0xff]
      %v492 = vld [vmem:[%s435 + $0x88] sm:$0xff]
      %v493 = vld [vmem:[%s435 + $0x90] sm:$0xff]
      %v494 = vld [vmem:[%s435 + $0x98] sm:$0xff]
      %v495 = vld [vmem:[%s435 + $0xa0] sm:$0xff]
      %v496 = vld [vmem:[%s435 + $0xa8] sm:$0xff]
      %v497 = vld [vmem:[%s435 + $0xb0] sm:$0xff]
      %v498 = vld [vmem:[%s435 + $0xb8] sm:$0xff]
      %v499 = vld [vmem:[%s435 + $0xc0] sm:$0xff]
      %v500 = vld [vmem:[%s435 + $0xc8] sm:$0xff]
      %v501 = vld [vmem:[%s435 + $0xd0] sm:$0xff]
      %v502 = vld [vmem:[%s435 + $0xd8] sm:$0xff]
      %v503 = vld [vmem:[%s435 + $0xe0] sm:$0xff]
      %v504 = vld [vmem:[%s435 + $0xe8] sm:$0xff]
      %v505 = vld [vmem:[%s435 + $0xf0] sm:$0xff]
      %v506 = vld [vmem:[%s435 + $0xf8] sm:$0xff]
      %v507 = vld [vmem:[%s449] sm:$0xff]
      %v508 = vld [vmem:[%s449 + $0x8] sm:$0xff]
      %p509 = scmp.gt.s32.totalorder %s24, 0
      %s510 = scalar_select %p509, 1, 0
      %s511 = scvt.s32.f32 %s510
      %v512 = vstv %s511
      %v513 = vmul.f32 %v473, %v512
      %v514 = vmul.f32 %v474, %v512
      %p515 = scmp.lt.s32.totalorder %s24, 0
      %s516 = scalar_select %p515, 1, 0
      %s517 = scvt.s32.f32 %s516
      %v518 = vstv %s517
      %v519 = vmul.f32 %v507, %v518
      %v520 = vmul.f32 %v508, %v518
      %v521 = vpack.c.bf16 %v514, %v513
      %v522 = vpack.c.bf16 %v476, %v475
      %v523 = vpack.c.bf16 %v478, %v477
      %v524 = vpack.c.bf16 %v480, %v479
      %v525 = vpack.c.bf16 %v482, %v481
      %v526 = vpack.c.bf16 %v484, %v483
      %v527 = vpack.c.bf16 %v486, %v485
      %v528 = vpack.c.bf16 %v488, %v487
      %v529 = vpack.c.bf16 %v490, %v489
      %v530 = vpack.c.bf16 %v492, %v491
      %v531 = vpack.c.bf16 %v494, %v493
      %v532 = vpack.c.bf16 %v496, %v495
      %v533 = vpack.c.bf16 %v498, %v497
      %v534 = vpack.c.bf16 %v500, %v499
      %v535 = vpack.c.bf16 %v502, %v501
      %v536 = vpack.c.bf16 %v504, %v503
      %v537 = vpack.c.bf16 %v506, %v505
      %v538 = vpack.c.bf16 %v520, %v519
      %v540 = vshrl.u32 %v521, 16
      %v542 = vrot.slane %v540, 7
      %v543 = vshll.u32 %v521, 16
      %v545 = vor.u32 %v542, %v543
      %v547 = vshrl.u32 %v522, 16
      %v549 = vrot.slane %v547, 7
      %v550 = vshll.u32 %v522, 16
      %v552 = vor.u32 %v549, %v550
      %v554 = vshrl.u32 %v523, 16
      %v556 = vrot.slane %v554, 7
      %v557 = vshll.u32 %v523, 16
      %v559 = vor.u32 %v556, %v557
      %v561 = vshrl.u32 %v524, 16
      %v563 = vrot.slane %v561, 7
      %v564 = vshll.u32 %v524, 16
      %v566 = vor.u32 %v563, %v564
      %v568 = vshrl.u32 %v525, 16
      %v570 = vrot.slane %v568, 7
      %v571 = vshll.u32 %v525, 16
      %v573 = vor.u32 %v570, %v571
      %v575 = vshrl.u32 %v526, 16
      %v577 = vrot.slane %v575, 7
      %v578 = vshll.u32 %v526, 16
      %v580 = vor.u32 %v577, %v578
      %v582 = vshrl.u32 %v527, 16
      %v584 = vrot.slane %v582, 7
      %v585 = vshll.u32 %v527, 16
      %v587 = vor.u32 %v584, %v585
      %v589 = vshrl.u32 %v528, 16
      %v591 = vrot.slane %v589, 7
      %v592 = vshll.u32 %v528, 16
      %v594 = vor.u32 %v591, %v592
      %v596 = vshrl.u32 %v529, 16
      %v598 = vrot.slane %v596, 7
      %v599 = vshll.u32 %v529, 16
      %v601 = vor.u32 %v598, %v599
      %v603 = vshrl.u32 %v530, 16
      %v605 = vrot.slane %v603, 7
      %v606 = vshll.u32 %v530, 16
      %v608 = vor.u32 %v605, %v606
      %v610 = vshrl.u32 %v531, 16
      %v612 = vrot.slane %v610, 7
      %v613 = vshll.u32 %v531, 16
      %v615 = vor.u32 %v612, %v613
      %v617 = vshrl.u32 %v532, 16
      %v619 = vrot.slane %v617, 7
      %v620 = vshll.u32 %v532, 16
      %v622 = vor.u32 %v619, %v620
      %v624 = vshrl.u32 %v533, 16
      %v626 = vrot.slane %v624, 7
      %v627 = vshll.u32 %v533, 16
      %v629 = vor.u32 %v626, %v627
      %v631 = vshrl.u32 %v534, 16
      %v633 = vrot.slane %v631, 7
      %v634 = vshll.u32 %v534, 16
      %v636 = vor.u32 %v633, %v634
      %v638 = vshrl.u32 %v535, 16
      %v640 = vrot.slane %v638, 7
      %v641 = vshll.u32 %v535, 16
      %v643 = vor.u32 %v640, %v641
      %v645 = vshrl.u32 %v536, 16
      %v647 = vrot.slane %v645, 7
      %v648 = vshll.u32 %v536, 16
      %v650 = vor.u32 %v647, %v648
      %vm667 = vcmask 1040384
      %vm668 = vsmask.f32 256
      %vm669 = vmand %vm667, %vm668
      %v670 = vsel %vm669, 0, %v545
      %v671 = vsel %vm669, 0, %v552
      %v672 = vsel %vm669, 0, %v559
      %v673 = vsel %vm669, 0, %v566
      %v674 = vsel %vm669, 0, %v573
      %v675 = vsel %vm669, 0, %v580
      %v676 = vsel %vm669, 0, %v587
      %v677 = vsel %vm669, 0, %v594
      %v678 = vsel %vm669, 0, %v601
      %v679 = vsel %vm669, 0, %v608
      %v680 = vsel %vm669, 0, %v615
      %v681 = vsel %vm669, 0, %v622
      %v682 = vsel %vm669, 0, %v629
      %v683 = vsel %vm669, 0, %v636
      %v684 = vsel %vm669, 0, %v643
      %v685 = vsel %vm669, 0, %v650
      %v686 = vld [vmem:[%s3] sm:$0xf]
      %v687 = vld [vmem:[%s3 + $0x4] sm:$0xf]
      %v688 = vld [vmem:[%s3 + $0x8] sm:$0xf]
      %v689 = vld [vmem:[%s3 + $0xc] sm:$0xf]
      %v690 = vld [vmem:[%s3 + $0x10] sm:$0xf]
      %v691 = vld [vmem:[%s3 + $0x14] sm:$0xf]
      %v692 = vld [vmem:[%s3 + $0x18] sm:$0xf]
      %v693 = vld [vmem:[%s3 + $0x1c] sm:$0xf]
      %v694 = vld [vmem:[%s3 + $0x20] sm:$0xf]
      %v695 = vld [vmem:[%s3 + $0x24] sm:$0xf]
      %v696 = vld [vmem:[%s3 + $0x28] sm:$0xf]
      %v697 = vld [vmem:[%s3 + $0x2c] sm:$0xf]
      %v698 = vld [vmem:[%s3 + $0x30] sm:$0xf]
      %v699 = vld [vmem:[%s3 + $0x34] sm:$0xf]
      %v700 = vld [vmem:[%s3 + $0x38] sm:$0xf]
      %v701 = vld [vmem:[%s3 + $0x3c] sm:$0xf]
      %s702 = scalar_lea.vmem %s3, 64
      %v703 = vld [vmem:[%s702] sm:$0xf]
      %v704 = vld [vmem:[%s702 + $0x4] sm:$0xf]
      %v705 = vld [vmem:[%s702 + $0x8] sm:$0xf]
      %v706 = vld [vmem:[%s702 + $0xc] sm:$0xf]
      %v707 = vld [vmem:[%s702 + $0x10] sm:$0xf]
      %v708 = vld [vmem:[%s702 + $0x14] sm:$0xf]
      %v709 = vld [vmem:[%s702 + $0x18] sm:$0xf]
      %v710 = vld [vmem:[%s702 + $0x1c] sm:$0xf]
      %v711 = vld [vmem:[%s702 + $0x20] sm:$0xf]
      %v712 = vld [vmem:[%s702 + $0x24] sm:$0xf]
      %v713 = vld [vmem:[%s702 + $0x28] sm:$0xf]
      %v714 = vld [vmem:[%s702 + $0x2c] sm:$0xf]
      %v715 = vld [vmem:[%s702 + $0x30] sm:$0xf]
      %v716 = vld [vmem:[%s702 + $0x34] sm:$0xf]
      %v717 = vld [vmem:[%s702 + $0x38] sm:$0xf]
      %v718 = vld [vmem:[%s702 + $0x3c] sm:$0xf]
      %v735 = vunpack.c.l.b16 %v703
      %v736 = vunpack.c.l.b16 %v704
      %v737 = vunpack.c.l.b16 %v705
      %v738 = vunpack.c.l.b16 %v706
      %v739 = vunpack.c.l.b16 %v707
      %v740 = vunpack.c.l.b16 %v708
      %v741 = vunpack.c.l.b16 %v709
      %v742 = vunpack.c.l.b16 %v710
      %v743 = vunpack.c.l.b16 %v711
      %v744 = vunpack.c.l.b16 %v712
      %v745 = vunpack.c.l.b16 %v713
      %v746 = vunpack.c.l.b16 %v714
      %v747 = vunpack.c.l.b16 %v715
      %v748 = vunpack.c.l.b16 %v716
      %v749 = vunpack.c.l.b16 %v717
      %v750 = vunpack.c.l.b16 %v718
      %v751 = vpack.c.b16 %v736, %v735
      %v752 = vpack.c.b16 %v738, %v737
      %v753 = vpack.c.b16 %v740, %v739
      %v754 = vpack.c.b16 %v742, %v741
      %v755 = vpack.c.b16 %v744, %v743
      %v756 = vpack.c.b16 %v746, %v745
      %v757 = vpack.c.b16 %v748, %v747
      %v758 = vpack.c.b16 %v750, %v749
      %767 = vmatprep.subr.bf16.mxu0 0
      %768 = vmatpush1.bf16.msra.mxu0 %v751
      %769 = vmatprep.subr.bf16.mxu0 0
      %770 = vmatpush1.bf16.msra.mxu0 %v752
      %771 = vmatprep.subr.bf16.mxu0 0
      %772 = vmatpush1.bf16.msra.mxu0 %v753
      %773 = vmatprep.subr.bf16.mxu0 0
      %774 = vmatpush1.bf16.msra.mxu0 %v754
      %775 = vmatprep.subr.bf16.mxu0 0
      %776 = vmatpush1.bf16.msra.mxu0 %v755
      %777 = vmatprep.subr.bf16.mxu0 0
      %778 = vmatpush1.bf16.msra.mxu0 %v756
      %779 = vmatprep.subr.bf16.mxu0 0
      %780 = vmatpush1.bf16.msra.mxu0 %v757
      %781 = vmatprep.subr.bf16.mxu0 0
      %782 = vmatpush1.bf16.msra.mxu0 %v758
      %783 = vmatprep.subr.bf16.mxu0 0
      %784 = vmatpush1.bf16.msra.mxu0 0
      %785 = vmatprep.subr.bf16.mxu0 0
      %786 = vmatpush1.bf16.msra.mxu0 0
      %787 = vmatprep.subr.bf16.mxu0 0
      %788 = vmatpush1.bf16.msra.mxu0 0
      %789 = vmatprep.subr.bf16.mxu0 0
      %790 = vmatpush1.bf16.msra.mxu0 0
      %791 = vmatprep.subr.bf16.mxu0 0
      %792 = vmatpush1.bf16.msra.mxu0 0
      %793 = vmatprep.subr.bf16.mxu0 0
      %794 = vmatpush1.bf16.msra.mxu0 0
      %795 = vmatprep.subr.bf16.mxu0 0
      %796 = vmatpush1.bf16.msra.mxu0 0
      %797 = vmatprep.subr.bf16.mxu0 0
      %798 = vmatpush1.bf16.msra.mxu0 0
      %799 = vmatprep.mubr.bf16.mxu0 0
      %800 = vmatmul.mubr.bf16.gmra.mrb[0].mxu0 %v521
      %v801 = vpop.f32.mrb[0].mxu0
      %v802 = vadd.f32 0.0, %v801
      %v803 = vpop.f32.mrb[0].mxu0
      %v804 = vpop.f32.mrb[0].mxu0
      %v805 = vadd.f32 0.0, %v804
      %v806 = vpop.f32.mrb[0].mxu0
      %807 = vmatprep.mubr.bf16.mxu0 0
      %808 = vmatmul.mubr.bf16.gmra.mrb[0].mxu0 %v522
      %v809 = vpop.f32.mrb[0].mxu0
      %v810 = vadd.f32 0.0, %v809
      %v811 = vpop.f32.mrb[0].mxu0
      %v812 = vpop.f32.mrb[0].mxu0
      %v813 = vadd.f32 0.0, %v812
      %v814 = vpop.f32.mrb[0].mxu0
      %815 = vmatprep.mubr.bf16.mxu0 0
      %816 = vmatmul.mubr.bf16.gmra.mrb[0].mxu0 %v523
      %v817 = vpop.f32.mrb[0].mxu0
      %v818 = vadd.f32 0.0, %v817
      %v819 = vpop.f32.mrb[0].mxu0
      %v820 = vpop.f32.mrb[0].mxu0
      %v821 = vadd.f32 0.0, %v820
      %v822 = vpop.f32.mrb[0].mxu0
      %823 = vmatprep.mubr.bf16.mxu0 0
      %824 = vmatmul.mubr.bf16.gmra.mrb[0].mxu0 %v524
      %v825 = vpop.f32.mrb[0].mxu0
      %v826 = vadd.f32 0.0, %v825
      %v827 = vpop.f32.mrb[0].mxu0
      %v828 = vpop.f32.mrb[0].mxu0
      %v829 = vadd.f32 0.0, %v828
      %v830 = vpop.f32.mrb[0].mxu0
      %831 = vmatprep.mubr.bf16.mxu0 0
      %832 = vmatmul.mubr.bf16.gmra.mrb[0].mxu0 %v525
      %v833 = vpop.f32.mrb[0].mxu0
      %v834 = vadd.f32 0.0, %v833
      %v835 = vpop.f32.mrb[0].mxu0
      %v836 = vpop.f32.mrb[0].mxu0
      %v837 = vadd.f32 0.0, %v836
      %v838 = vpop.f32.mrb[0].mxu0
      %839 = vmatprep.mubr.bf16.mxu0 0
      %840 = vmatmul.mubr.bf16.gmra.mrb[0].mxu0 %v526
      %v841 = vpop.f32.mrb[0].mxu0
      %v842 = vadd.f32 0.0, %v841
      %v843 = vpop.f32.mrb[0].mxu0
      %v844 = vpop.f32.mrb[0].mxu0
      %v845 = vadd.f32 0.0, %v844
      %v846 = vpop.f32.mrb[0].mxu0
      %847 = vmatprep.mubr.bf16.mxu0 0
      %848 = vmatmul.mubr.bf16.gmra.mrb[0].mxu0 %v527
      %v849 = vpop.f32.mrb[0].mxu0
      %v850 = vadd.f32 0.0, %v849
      %v851 = vpop.f32.mrb[0].mxu0
      %v852 = vpop.f32.mrb[0].mxu0
      %v853 = vadd.f32 0.0, %v852
      %v854 = vpop.f32.mrb[0].mxu0
      %855 = vmatprep.mubr.bf16.mxu0 0
      %856 = vmatmul.mubr.bf16.gmra.mrb[0].mxu0 %v528
      %v857 = vpop.f32.mrb[0].mxu0
      %v858 = vadd.f32 0.0, %v857
      %v859 = vpop.f32.mrb[0].mxu0
      %v860 = vpop.f32.mrb[0].mxu0
      %v861 = vadd.f32 0.0, %v860
      %v862 = vpop.f32.mrb[0].mxu0
      %863 = vmatprep.mubr.bf16.mxu0 0
      %864 = vmatmul.mubr.bf16.gmra.mrb[0].mxu0 %v529
      %v865 = vpop.f32.mrb[0].mxu0
      %v866 = vadd.f32 0.0, %v865
      %v867 = vpop.f32.mrb[0].mxu0
      %v868 = vpop.f32.mrb[0].mxu0
      %v869 = vadd.f32 0.0, %v868
      %v870 = vpop.f32.mrb[0].mxu0
      %871 = vmatprep.mubr.bf16.mxu0 0
      %872 = vmatmul.mubr.bf16.gmra.mrb[0].mxu0 %v530
      %v873 = vpop.f32.mrb[0].mxu0
      %v874 = vadd.f32 0.0, %v873
      %v875 = vpop.f32.mrb[0].mxu0
      %v876 = vpop.f32.mrb[0].mxu0
      %v877 = vadd.f32 0.0, %v876
      %v878 = vpop.f32.mrb[0].mxu0
      %879 = vmatprep.mubr.bf16.mxu0 0
      %880 = vmatmul.mubr.bf16.gmra.mrb[0].mxu0 %v531
      %v881 = vpop.f32.mrb[0].mxu0
      %v882 = vadd.f32 0.0, %v881
      %v883 = vpop.f32.mrb[0].mxu0
      %v884 = vpop.f32.mrb[0].mxu0
      %v885 = vadd.f32 0.0, %v884
      %v886 = vpop.f32.mrb[0].mxu0
      %887 = vmatprep.mubr.bf16.mxu0 0
      %888 = vmatmul.mubr.bf16.gmra.mrb[0].mxu0 %v532
      %v889 = vpop.f32.mrb[0].mxu0
      %v890 = vadd.f32 0.0, %v889
      %v891 = vpop.f32.mrb[0].mxu0
      %v892 = vpop.f32.mrb[0].mxu0
      %v893 = vadd.f32 0.0, %v892
      %v894 = vpop.f32.mrb[0].mxu0
      %895 = vmatprep.mubr.bf16.mxu0 0
      %896 = vmatmul.mubr.bf16.gmra.mrb[0].mxu0 %v533
      %v897 = vpop.f32.mrb[0].mxu0
      %v898 = vadd.f32 0.0, %v897
      %v899 = vpop.f32.mrb[0].mxu0
      %v900 = vpop.f32.mrb[0].mxu0
      %v901 = vadd.f32 0.0, %v900
      %v902 = vpop.f32.mrb[0].mxu0
      %903 = vmatprep.mubr.bf16.mxu0 0
      %904 = vmatmul.mubr.bf16.gmra.mrb[0].mxu0 %v534
      %v905 = vpop.f32.mrb[0].mxu0
      %v906 = vadd.f32 0.0, %v905
      %v907 = vpop.f32.mrb[0].mxu0
      %v908 = vpop.f32.mrb[0].mxu0
      %v909 = vadd.f32 0.0, %v908
      %v910 = vpop.f32.mrb[0].mxu0
      %911 = vmatprep.mubr.bf16.mxu0 0
      %912 = vmatmul.mubr.bf16.gmra.mrb[0].mxu0 %v535
      %v913 = vpop.f32.mrb[0].mxu0
      %v914 = vadd.f32 0.0, %v913
      %v915 = vpop.f32.mrb[0].mxu0
      %v916 = vpop.f32.mrb[0].mxu0
      %v917 = vadd.f32 0.0, %v916
      %v918 = vpop.f32.mrb[0].mxu0
      %919 = vmatprep.mubr.bf16.mxu0 0
      %920 = vmatmul.mubr.bf16.gmra.mrb[0].mxu0 %v536
      %v921 = vpop.f32.mrb[0].mxu0
      %v922 = vadd.f32 0.0, %v921
      %v923 = vpop.f32.mrb[0].mxu0
      %v924 = vpop.f32.mrb[0].mxu0
      %v925 = vadd.f32 0.0, %v924
      %v926 = vpop.f32.mrb[0].mxu0
      %927 = vdwg.mxu0
      %v944 = vunpack.c.l.b16 %v686
      %v945 = vunpack.c.l.b16 %v687
      %v946 = vunpack.c.l.b16 %v688
      %v947 = vunpack.c.l.b16 %v689
      %v948 = vunpack.c.l.b16 %v690
      %v949 = vunpack.c.l.b16 %v691
      %v950 = vunpack.c.l.b16 %v692
      %v951 = vunpack.c.l.b16 %v693
      %v952 = vunpack.c.l.b16 %v694
      %v953 = vunpack.c.l.b16 %v695
      %v954 = vunpack.c.l.b16 %v696
      %v955 = vunpack.c.l.b16 %v697
      %v956 = vunpack.c.l.b16 %v698
      %v957 = vunpack.c.l.b16 %v699
      %v958 = vunpack.c.l.b16 %v700
      %v959 = vunpack.c.l.b16 %v701
      %v960 = vpack.c.b16 %v945, %v944
      %v961 = vpack.c.b16 %v947, %v946
      %v962 = vpack.c.b16 %v949, %v948
      %v963 = vpack.c.b16 %v951, %v950
      %v964 = vpack.c.b16 %v953, %v952
      %v965 = vpack.c.b16 %v955, %v954
      %v966 = vpack.c.b16 %v957, %v956
      %v967 = vpack.c.b16 %v959, %v958
      %976 = vmatprep.subr.bf16.mxu0 0
      %977 = vmatpush1.bf16.msra.mxu0 %v960
      %978 = vmatprep.subr.bf16.mxu0 0
      %979 = vmatpush1.bf16.msra.mxu0 %v961
      %980 = vmatprep.subr.bf16.mxu0 0
      %981 = vmatpush1.bf16.msra.mxu0 %v962
      %982 = vmatprep.subr.bf16.mxu0 0
      %983 = vmatpush1.bf16.msra.mxu0 %v963
      %984 = vmatprep.subr.bf16.mxu0 0
      %985 = vmatpush1.bf16.msra.mxu0 %v964
      %986 = vmatprep.subr.bf16.mxu0 0
      %987 = vmatpush1.bf16.msra.mxu0 %v965
      %988 = vmatprep.subr.bf16.mxu0 0
      %989 = vmatpush1.bf16.msra.mxu0 %v966
      %990 = vmatprep.subr.bf16.mxu0 0
      %991 = vmatpush1.bf16.msra.mxu0 %v967
      %992 = vmatprep.subr.bf16.mxu0 0
      %993 = vmatpush1.bf16.msra.mxu0 0
      %994 = vmatprep.subr.bf16.mxu0 0
      %995 = vmatpush1.bf16.msra.mxu0 0
      %996 = vmatprep.subr.bf16.mxu0 0
      %997 = vmatpush1.bf16.msra.mxu0 0
      %998 = vmatprep.subr.bf16.mxu0 0
      %999 = vmatpush1.bf16.msra.mxu0 0
      %1000 = vmatprep.subr.bf16.mxu0 0
      %1001 = vmatpush1.bf16.msra.mxu0 0
      %1002 = vmatprep.subr.bf16.mxu0 0
      %1003 = vmatpush1.bf16.msra.mxu0 0
      %1004 = vmatprep.subr.bf16.mxu0 0
      %1005 = vmatpush1.bf16.msra.mxu0 0
      %1006 = vmatprep.subr.bf16.mxu0 0
      %1007 = vmatpush1.bf16.msra.mxu0 0
      %1008 = vmatprep.mubr.bf16.mxu0 0
      %1009 = vmatmul.mubr.bf16.gmra.mrb[0].mxu0 %v670
      %v1010 = vpop.f32.mrb[0].mxu0
      %v1011 = vadd.f32 %v802, %v1010
      %v1012 = vpop.f32.mrb[0].mxu0
      %v1013 = vpop.f32.mrb[0].mxu0
      %v1014 = vadd.f32 %v805, %v1013
      %v1015 = vpop.f32.mrb[0].mxu0
      %1016 = vmatprep.mubr.bf16.mxu0 0
      %1017 = vmatmul.mubr.bf16.gmra.mrb[0].mxu0 %v671
      %v1018 = vpop.f32.mrb[0].mxu0
      %v1019 = vadd.f32 %v810, %v1018
      %v1020 = vpop.f32.mrb[0].mxu0
      %v1021 = vpop.f32.mrb[0].mxu0
      %v1022 = vadd.f32 %v813, %v1021
      %v1023 = vpop.f32.mrb[0].mxu0
      %1024 = vmatprep.mubr.bf16.mxu0 0
      %1025 = vmatmul.mubr.bf16.gmra.mrb[0].mxu0 %v672
      %v1026 = vpop.f32.mrb[0].mxu0
      %v1027 = vadd.f32 %v818, %v1026
      %v1028 = vpop.f32.mrb[0].mxu0
      %v1029 = vpop.f32.mrb[0].mxu0
      %v1030 = vadd.f32 %v821, %v1029
      %v1031 = vpop.f32.mrb[0].mxu0
      %1032 = vmatprep.mubr.bf16.mxu0 0
      %1033 = vmatmul.mubr.bf16.gmra.mrb[0].mxu0 %v673
      %v1034 = vpop.f32.mrb[0].mxu0
      %v1035 = vadd.f32 %v826, %v1034
      %v1036 = vpop.f32.mrb[0].mxu0
      %v1037 = vpop.f32.mrb[0].mxu0
      %v1038 = vadd.f32 %v829, %v1037
      %v1039 = vpop.f32.mrb[0].mxu0
      %1040 = vmatprep.mubr.bf16.mxu0 0
      %1041 = vmatmul.mubr.bf16.gmra.mrb[0].mxu0 %v674
      %v1042 = vpop.f32.mrb[0].mxu0
      %v1043 = vadd.f32 %v834, %v1042
      %v1044 = vpop.f32.mrb[0].mxu0
      %v1045 = vpop.f32.mrb[0].mxu0
      %v1046 = vadd.f32 %v837, %v1045
      %v1047 = vpop.f32.mrb[0].mxu0
      %1048 = vmatprep.mubr.bf16.mxu0 0
      %1049 = vmatmul.mubr.bf16.gmra.mrb[0].mxu0 %v675
      %v1050 = vpop.f32.mrb[0].mxu0
      %v1051 = vadd.f32 %v842, %v1050
      %v1052 = vpop.f32.mrb[0].mxu0
      %v1053 = vpop.f32.mrb[0].mxu0
      %v1054 = vadd.f32 %v845, %v1053
      %v1055 = vpop.f32.mrb[0].mxu0
      %1056 = vmatprep.mubr.bf16.mxu0 0
      %1057 = vmatmul.mubr.bf16.gmra.mrb[0].mxu0 %v676
      %v1058 = vpop.f32.mrb[0].mxu0
      %v1059 = vadd.f32 %v850, %v1058
      %v1060 = vpop.f32.mrb[0].mxu0
      %v1061 = vpop.f32.mrb[0].mxu0
      %v1062 = vadd.f32 %v853, %v1061
      %v1063 = vpop.f32.mrb[0].mxu0
      %1064 = vmatprep.mubr.bf16.mxu0 0
      %1065 = vmatmul.mubr.bf16.gmra.mrb[0].mxu0 %v677
      %v1066 = vpop.f32.mrb[0].mxu0
      %v1067 = vadd.f32 %v858, %v1066
      %v1068 = vpop.f32.mrb[0].mxu0
      %v1069 = vpop.f32.mrb[0].mxu0
      %v1070 = vadd.f32 %v861, %v1069
      %v1071 = vpop.f32.mrb[0].mxu0
      %1072 = vmatprep.mubr.bf16.mxu0 0
      %1073 = vmatmul.mubr.bf16.gmra.mrb[0].mxu0 %v678
      %v1074 = vpop.f32.mrb[0].mxu0
      %v1075 = vadd.f32 %v866, %v1074
      %v1076 = vpop.f32.mrb[0].mxu0
      %v1077 = vpop.f32.mrb[0].mxu0
      %v1078 = vadd.f32 %v869, %v1077
      %v1079 = vpop.f32.mrb[0].mxu0
      %1080 = vmatprep.mubr.bf16.mxu0 0
      %1081 = vmatmul.mubr.bf16.gmra.mrb[0].mxu0 %v679
      %v1082 = vpop.f32.mrb[0].mxu0
      %v1083 = vadd.f32 %v874, %v1082
      %v1084 = vpop.f32.mrb[0].mxu0
      %v1085 = vpop.f32.mrb[0].mxu0
      %v1086 = vadd.f32 %v877, %v1085
      %v1087 = vpop.f32.mrb[0].mxu0
      %1088 = vmatprep.mubr.bf16.mxu0 0
      %1089 = vmatmul.mubr.bf16.gmra.mrb[0].mxu0 %v680
      %v1090 = vpop.f32.mrb[0].mxu0
      %v1091 = vadd.f32 %v882, %v1090
      %v1092 = vpop.f32.mrb[0].mxu0
      %v1093 = vpop.f32.mrb[0].mxu0
      %v1094 = vadd.f32 %v885, %v1093
      %v1095 = vpop.f32.mrb[0].mxu0
      %1096 = vmatprep.mubr.bf16.mxu0 0
      %1097 = vmatmul.mubr.bf16.gmra.mrb[0].mxu0 %v681
      %v1098 = vpop.f32.mrb[0].mxu0
      %v1099 = vadd.f32 %v890, %v1098
      %v1100 = vpop.f32.mrb[0].mxu0
      %v1101 = vpop.f32.mrb[0].mxu0
      %v1102 = vadd.f32 %v893, %v1101
      %v1103 = vpop.f32.mrb[0].mxu0
      %1104 = vmatprep.mubr.bf16.mxu0 0
      %1105 = vmatmul.mubr.bf16.gmra.mrb[0].mxu0 %v682
      %v1106 = vpop.f32.mrb[0].mxu0
      %v1107 = vadd.f32 %v898, %v1106
      %v1108 = vpop.f32.mrb[0].mxu0
      %v1109 = vpop.f32.mrb[0].mxu0
      %v1110 = vadd.f32 %v901, %v1109
      %v1111 = vpop.f32.mrb[0].mxu0
      %1112 = vmatprep.mubr.bf16.mxu0 0
      %1113 = vmatmul.mubr.bf16.gmra.mrb[0].mxu0 %v683
      %v1114 = vpop.f32.mrb[0].mxu0
      %v1115 = vadd.f32 %v906, %v1114
      %v1116 = vpop.f32.mrb[0].mxu0
      %v1117 = vpop.f32.mrb[0].mxu0
      %v1118 = vadd.f32 %v909, %v1117
      %v1119 = vpop.f32.mrb[0].mxu0
      %1120 = vmatprep.mubr.bf16.mxu0 0
      %1121 = vmatmul.mubr.bf16.gmra.mrb[0].mxu0 %v684
      %v1122 = vpop.f32.mrb[0].mxu0
      %v1123 = vadd.f32 %v914, %v1122
      %v1124 = vpop.f32.mrb[0].mxu0
      %v1125 = vpop.f32.mrb[0].mxu0
      %v1126 = vadd.f32 %v917, %v1125
      %v1127 = vpop.f32.mrb[0].mxu0
      %1128 = vmatprep.mubr.bf16.mxu0 0
      %1129 = vmatmul.mubr.bf16.gmra.mrb[0].mxu0 %v685
      %v1130 = vpop.f32.mrb[0].mxu0
      %v1131 = vadd.f32 %v922, %v1130
      %v1132 = vpop.f32.mrb[0].mxu0
      %v1133 = vpop.f32.mrb[0].mxu0
      %v1134 = vadd.f32 %v925, %v1133
      %v1135 = vpop.f32.mrb[0].mxu0
      %1136 = vdwg.mxu0
      %v1137 = vrot.slane %v543, 1
      %v1138 = vor.u32 %v540, %v1137
      %v1139 = vrot.slane %v550, 1
      %v1140 = vor.u32 %v547, %v1139
      %v1141 = vrot.slane %v557, 1
      %v1142 = vor.u32 %v554, %v1141
      %v1143 = vrot.slane %v564, 1
      %v1144 = vor.u32 %v561, %v1143
      %v1145 = vrot.slane %v571, 1
      %v1146 = vor.u32 %v568, %v1145
      %v1147 = vrot.slane %v578, 1
      %v1148 = vor.u32 %v575, %v1147
      %v1149 = vrot.slane %v585, 1
      %v1150 = vor.u32 %v582, %v1149
      %v1151 = vrot.slane %v592, 1
      %v1152 = vor.u32 %v589, %v1151
      %v1153 = vrot.slane %v599, 1
      %v1154 = vor.u32 %v596, %v1153
      %v1155 = vrot.slane %v606, 1
      %v1156 = vor.u32 %v603, %v1155
      %v1157 = vrot.slane %v613, 1
      %v1158 = vor.u32 %v610, %v1157
      %v1159 = vrot.slane %v620, 1
      %v1160 = vor.u32 %v617, %v1159
      %v1161 = vrot.slane %v627, 1
      %v1162 = vor.u32 %v624, %v1161
      %v1163 = vrot.slane %v634, 1
      %v1164 = vor.u32 %v631, %v1163
      %v1165 = vrot.slane %v641, 1
      %v1166 = vor.u32 %v638, %v1165
      %v1167 = vrot.slane %v648, 1
      %v1168 = vor.u32 %v645, %v1167
      %vm1185 = vcmask 1047552
      %vm1186 = vsmask.f32 7424
      %vm1187 = vmand %vm1185, %vm1186
      %v1188 = vsel %vm1187, %v1138, 0
      %v1189 = vsel %vm1187, %v1140, 0
      %v1190 = vsel %vm1187, %v1142, 0
      %v1191 = vsel %vm1187, %v1144, 0
      %v1192 = vsel %vm1187, %v1146, 0
      %v1193 = vsel %vm1187, %v1148, 0
      %v1194 = vsel %vm1187, %v1150, 0
      %v1195 = vsel %vm1187, %v1152, 0
      %v1196 = vsel %vm1187, %v1154, 0
      %v1197 = vsel %vm1187, %v1156, 0
      %v1198 = vsel %vm1187, %v1158, 0
      %v1199 = vsel %vm1187, %v1160, 0
      %v1200 = vsel %vm1187, %v1162, 0
      %v1201 = vsel %vm1187, %v1164, 0
      %v1202 = vsel %vm1187, %v1166, 0
      %v1203 = vsel %vm1187, %v1168, 0
      %s1204 = scalar_lea.vmem %s3, 128
      %v1205 = vld [vmem:[%s1204] sm:$0xf]
      %v1206 = vld [vmem:[%s1204 + $0x4] sm:$0xf]
      %v1207 = vld [vmem:[%s1204 + $0x8] sm:$0xf]
      %v1208 = vld [vmem:[%s1204 + $0xc] sm:$0xf]
      %v1209 = vld [vmem:[%s1204 + $0x10] sm:$0xf]
      %v1210 = vld [vmem:[%s1204 + $0x14] sm:$0xf]
      %v1211 = vld [vmem:[%s1204 + $0x18] sm:$0xf]
      %v1212 = vld [vmem:[%s1204 + $0x1c] sm:$0xf]
      %v1213 = vld [vmem:[%s1204 + $0x20] sm:$0xf]
      %v1214 = vld [vmem:[%s1204 + $0x24] sm:$0xf]
      %v1215 = vld [vmem:[%s1204 + $0x28] sm:$0xf]
      %v1216 = vld [vmem:[%s1204 + $0x2c] sm:$0xf]
      %v1217 = vld [vmem:[%s1204 + $0x30] sm:$0xf]
      %v1218 = vld [vmem:[%s1204 + $0x34] sm:$0xf]
      %v1219 = vld [vmem:[%s1204 + $0x38] sm:$0xf]
      %v1220 = vld [vmem:[%s1204 + $0x3c] sm:$0xf]
      %v1237 = vunpack.c.l.b16 %v1205
      %v1238 = vunpack.c.l.b16 %v1206
      %v1239 = vunpack.c.l.b16 %v1207
      %v1240 = vunpack.c.l.b16 %v1208
      %v1241 = vunpack.c.l.b16 %v1209
      %v1242 = vunpack.c.l.b16 %v1210
      %v1243 = vunpack.c.l.b16 %v1211
      %v1244 = vunpack.c.l.b16 %v1212
      %v1245 = vunpack.c.l.b16 %v1213
      %v1246 = vunpack.c.l.b16 %v1214
      %v1247 = vunpack.c.l.b16 %v1215
      %v1248 = vunpack.c.l.b16 %v1216
      %v1249 = vunpack.c.l.b16 %v1217
      %v1250 = vunpack.c.l.b16 %v1218
      %v1251 = vunpack.c.l.b16 %v1219
      %v1252 = vunpack.c.l.b16 %v1220
      %v1253 = vpack.c.b16 %v1238, %v1237
      %v1254 = vpack.c.b16 %v1240, %v1239
      %v1255 = vpack.c.b16 %v1242, %v1241
      %v1256 = vpack.c.b16 %v1244, %v1243
      %v1257 = vpack.c.b16 %v1246, %v1245
      %v1258 = vpack.c.b16 %v1248, %v1247
      %v1259 = vpack.c.b16 %v1250, %v1249
      %v1260 = vpack.c.b16 %v1252, %v1251
      %1269 = vmatprep.subr.bf16.mxu0 0
      %1270 = vmatpush1.bf16.msra.mxu0 %v1253
      %1271 = vmatprep.subr.bf16.mxu0 0
      %1272 = vmatpush1.bf16.msra.mxu0 %v1254
      %1273 = vmatprep.subr.bf16.mxu0 0
      %1274 = vmatpush1.bf16.msra.mxu0 %v1255
      %1275 = vmatprep.subr.bf16.mxu0 0
      %1276 = vmatpush1.bf16.msra.mxu0 %v1256
      %1277 = vmatprep.subr.bf16.mxu0 0
      %1278 = vmatpush1.bf16.msra.mxu0 %v1257
      %1279 = vmatprep.subr.bf16.mxu0 0
      %1280 = vmatpush1.bf16.msra.mxu0 %v1258
      %1281 = vmatprep.subr.bf16.mxu0 0
      %1282 = vmatpush1.bf16.msra.mxu0 %v1259
      %1283 = vmatprep.subr.bf16.mxu0 0
      %1284 = vmatpush1.bf16.msra.mxu0 %v1260
      %1285 = vmatprep.subr.bf16.mxu0 0
      %1286 = vmatpush1.bf16.msra.mxu0 0
      %1287 = vmatprep.subr.bf16.mxu0 0
      %1288 = vmatpush1.bf16.msra.mxu0 0
      %1289 = vmatprep.subr.bf16.mxu0 0
      %1290 = vmatpush1.bf16.msra.mxu0 0
      %1291 = vmatprep.subr.bf16.mxu0 0
      %1292 = vmatpush1.bf16.msra.mxu0 0
      %1293 = vmatprep.subr.bf16.mxu0 0
      %1294 = vmatpush1.bf16.msra.mxu0 0
      %1295 = vmatprep.subr.bf16.mxu0 0
      %1296 = vmatpush1.bf16.msra.mxu0 0
      %1297 = vmatprep.subr.bf16.mxu0 0
      %1298 = vmatpush1.bf16.msra.mxu0 0
      %1299 = vmatprep.subr.bf16.mxu0 0
      %1300 = vmatpush1.bf16.msra.mxu0 0
      %1301 = vmatprep.mubr.bf16.mxu0 0
      %1302 = vmatmul.mubr.bf16.gmra.mrb[0].mxu0 %v1188
      %v1303 = vpop.f32.mrb[0].mxu0
      %v1304 = vadd.f32 0.0, %v1303
      %v1305 = vpop.f32.mrb[0].mxu0
      %v1306 = vpop.f32.mrb[0].mxu0
      %v1307 = vadd.f32 0.0, %v1306
      %v1308 = vpop.f32.mrb[0].mxu0
      %1309 = vmatprep.mubr.bf16.mxu0 0
      %1310 = vmatmul.mubr.bf16.gmra.mrb[0].mxu0 %v1189
      %v1311 = vpop.f32.mrb[0].mxu0
      %v1312 = vadd.f32 0.0, %v1311
      %v1313 = vpop.f32.mrb[0].mxu0
      %v1314 = vpop.f32.mrb[0].mxu0
      %v1315 = vadd.f32 0.0, %v1314
      %v1316 = vpop.f32.mrb[0].mxu0
      %1317 = vmatprep.mubr.bf16.mxu0 0
      %1318 = vmatmul.mubr.bf16.gmra.mrb[0].mxu0 %v1190
      %v1319 = vpop.f32.mrb[0].mxu0
      %v1320 = vadd.f32 0.0, %v1319
      %v1321 = vpop.f32.mrb[0].mxu0
      %v1322 = vpop.f32.mrb[0].mxu0
      %v1323 = vadd.f32 0.0, %v1322
      %v1324 = vpop.f32.mrb[0].mxu0
      %1325 = vmatprep.mubr.bf16.mxu0 0
      %1326 = vmatmul.mubr.bf16.gmra.mrb[0].mxu0 %v1191
      %v1327 = vpop.f32.mrb[0].mxu0
      %v1328 = vadd.f32 0.0, %v1327
      %v1329 = vpop.f32.mrb[0].mxu0
      %v1330 = vpop.f32.mrb[0].mxu0
      %v1331 = vadd.f32 0.0, %v1330
      %v1332 = vpop.f32.mrb[0].mxu0
      %1333 = vmatprep.mubr.bf16.mxu0 0
      %1334 = vmatmul.mubr.bf16.gmra.mrb[0].mxu0 %v1192
      %v1335 = vpop.f32.mrb[0].mxu0
      %v1336 = vadd.f32 0.0, %v1335
      %v1337 = vpop.f32.mrb[0].mxu0
      %v1338 = vpop.f32.mrb[0].mxu0
      %v1339 = vadd.f32 0.0, %v1338
      %v1340 = vpop.f32.mrb[0].mxu0
      %1341 = vmatprep.mubr.bf16.mxu0 0
      %1342 = vmatmul.mubr.bf16.gmra.mrb[0].mxu0 %v1193
      %v1343 = vpop.f32.mrb[0].mxu0
      %v1344 = vadd.f32 0.0, %v1343
      %v1345 = vpop.f32.mrb[0].mxu0
      %v1346 = vpop.f32.mrb[0].mxu0
      %v1347 = vadd.f32 0.0, %v1346
      %v1348 = vpop.f32.mrb[0].mxu0
      %1349 = vmatprep.mubr.bf16.mxu0 0
      %1350 = vmatmul.mubr.bf16.gmra.mrb[0].mxu0 %v1194
      %v1351 = vpop.f32.mrb[0].mxu0
      %v1352 = vadd.f32 0.0, %v1351
      %v1353 = vpop.f32.mrb[0].mxu0
      %v1354 = vpop.f32.mrb[0].mxu0
      %v1355 = vadd.f32 0.0, %v1354
      %v1356 = vpop.f32.mrb[0].mxu0
      %1357 = vmatprep.mubr.bf16.mxu0 0
      %1358 = vmatmul.mubr.bf16.gmra.mrb[0].mxu0 %v1195
      %v1359 = vpop.f32.mrb[0].mxu0
      %v1360 = vadd.f32 0.0, %v1359
      %v1361 = vpop.f32.mrb[0].mxu0
      %v1362 = vpop.f32.mrb[0].mxu0
      %v1363 = vadd.f32 0.0, %v1362
      %v1364 = vpop.f32.mrb[0].mxu0
      %1365 = vmatprep.mubr.bf16.mxu0 0
      %1366 = vmatmul.mubr.bf16.gmra.mrb[0].mxu0 %v1196
      %v1367 = vpop.f32.mrb[0].mxu0
      %v1368 = vadd.f32 0.0, %v1367
      %v1369 = vpop.f32.mrb[0].mxu0
      %v1370 = vpop.f32.mrb[0].mxu0
      %v1371 = vadd.f32 0.0, %v1370
      %v1372 = vpop.f32.mrb[0].mxu0
      %1373 = vmatprep.mubr.bf16.mxu0 0
      %1374 = vmatmul.mubr.bf16.gmra.mrb[0].mxu0 %v1197
      %v1375 = vpop.f32.mrb[0].mxu0
      %v1376 = vadd.f32 0.0, %v1375
      %v1377 = vpop.f32.mrb[0].mxu0
      %v1378 = vpop.f32.mrb[0].mxu0
      %v1379 = vadd.f32 0.0, %v1378
      %v1380 = vpop.f32.mrb[0].mxu0
      %1381 = vmatprep.mubr.bf16.mxu0 0
      %1382 = vmatmul.mubr.bf16.gmra.mrb[0].mxu0 %v1198
      %v1383 = vpop.f32.mrb[0].mxu0
      %v1384 = vadd.f32 0.0, %v1383
      %v1385 = vpop.f32.mrb[0].mxu0
      %v1386 = vpop.f32.mrb[0].mxu0
      %v1387 = vadd.f32 0.0, %v1386
      %v1388 = vpop.f32.mrb[0].mxu0
      %1389 = vmatprep.mubr.bf16.mxu0 0
      %1390 = vmatmul.mubr.bf16.gmra.mrb[0].mxu0 %v1199
      %v1391 = vpop.f32.mrb[0].mxu0
      %v1392 = vadd.f32 0.0, %v1391
      %v1393 = vpop.f32.mrb[0].mxu0
      %v1394 = vpop.f32.mrb[0].mxu0
      %v1395 = vadd.f32 0.0, %v1394
      %v1396 = vpop.f32.mrb[0].mxu0
      %1397 = vmatprep.mubr.bf16.mxu0 0
      %1398 = vmatmul.mubr.bf16.gmra.mrb[0].mxu0 %v1200
      %v1399 = vpop.f32.mrb[0].mxu0
      %v1400 = vadd.f32 0.0, %v1399
      %v1401 = vpop.f32.mrb[0].mxu0
      %v1402 = vpop.f32.mrb[0].mxu0
      %v1403 = vadd.f32 0.0, %v1402
      %v1404 = vpop.f32.mrb[0].mxu0
      %1405 = vmatprep.mubr.bf16.mxu0 0
      %1406 = vmatmul.mubr.bf16.gmra.mrb[0].mxu0 %v1201
      %v1407 = vpop.f32.mrb[0].mxu0
      %v1408 = vadd.f32 0.0, %v1407
      %v1409 = vpop.f32.mrb[0].mxu0
      %v1410 = vpop.f32.mrb[0].mxu0
      %v1411 = vadd.f32 0.0, %v1410
      %v1412 = vpop.f32.mrb[0].mxu0
      %1413 = vmatprep.mubr.bf16.mxu0 0
      %1414 = vmatmul.mubr.bf16.gmra.mrb[0].mxu0 %v1202
      %v1415 = vpop.f32.mrb[0].mxu0
      %v1416 = vadd.f32 0.0, %v1415
      %v1417 = vpop.f32.mrb[0].mxu0
      %v1418 = vpop.f32.mrb[0].mxu0
      %v1419 = vadd.f32 0.0, %v1418
      %v1420 = vpop.f32.mrb[0].mxu0
      %1421 = vmatprep.mubr.bf16.mxu0 0
      %1422 = vmatmul.mubr.bf16.gmra.mrb[0].mxu0 %v1203
      %v1423 = vpop.f32.mrb[0].mxu0
      %v1424 = vadd.f32 0.0, %v1423
      %v1425 = vpop.f32.mrb[0].mxu0
      %v1426 = vpop.f32.mrb[0].mxu0
      %v1427 = vadd.f32 0.0, %v1426
      %v1428 = vpop.f32.mrb[0].mxu0
      %1429 = vdwg.mxu0
      %v1430 = vadd.f32 %v1011, %v1304
      %v1431 = vadd.f32 %v1014, %v1307
      %v1432 = vadd.f32 %v1019, %v1312
      %v1433 = vadd.f32 %v1022, %v1315
      %v1434 = vadd.f32 %v1027, %v1320
      %v1435 = vadd.f32 %v1030, %v1323
      %v1436 = vadd.f32 %v1035, %v1328
      %v1437 = vadd.f32 %v1038, %v1331
      %v1438 = vadd.f32 %v1043, %v1336
      %v1439 = vadd.f32 %v1046, %v1339
      %v1440 = vadd.f32 %v1051, %v1344
      %v1441 = vadd.f32 %v1054, %v1347
      %v1442 = vadd.f32 %v1059, %v1352
      %v1443 = vadd.f32 %v1062, %v1355
      %v1444 = vadd.f32 %v1067, %v1360
      %v1445 = vadd.f32 %v1070, %v1363
      %v1446 = vadd.f32 %v1075, %v1368
      %v1447 = vadd.f32 %v1078, %v1371
      %v1448 = vadd.f32 %v1083, %v1376
      %v1449 = vadd.f32 %v1086, %v1379
      %v1450 = vadd.f32 %v1091, %v1384
      %v1451 = vadd.f32 %v1094, %v1387
      %v1452 = vadd.f32 %v1099, %v1392
      %v1453 = vadd.f32 %v1102, %v1395
      %v1454 = vadd.f32 %v1107, %v1400
      %v1455 = vadd.f32 %v1110, %v1403
      %v1456 = vadd.f32 %v1115, %v1408
      %v1457 = vadd.f32 %v1118, %v1411
      %v1458 = vadd.f32 %v1123, %v1416
      %v1459 = vadd.f32 %v1126, %v1419
      %v1460 = vadd.f32 %v1131, %v1424
      %v1461 = vadd.f32 %v1134, %v1427
      %v1463 = vshrl.u32 %v537, 16
      %v1465 = vrot.slane %v1463, 7
      %v1466 = vshll.u32 %v537, 16
      %v1468 = vor.u32 %v1465, %v1466
      %v1470 = vsel %vm669, 0, %v1468
      %s1471 = scalar_lea.vmem %s3, 192
      %v1472 = vld [vmem:[%s1471] sm:$0xf]
      %v1473 = vld [vmem:[%s1471 + $0x4] sm:$0xf]
      %v1474 = vld [vmem:[%s1471 + $0x8] sm:$0xf]
      %v1475 = vld [vmem:[%s1471 + $0xc] sm:$0xf]
      %v1476 = vld [vmem:[%s1471 + $0x10] sm:$0xf]
      %v1477 = vld [vmem:[%s1471 + $0x14] sm:$0xf]
      %v1478 = vld [vmem:[%s1471 + $0x18] sm:$0xf]
      %v1479 = vld [vmem:[%s1471 + $0x1c] sm:$0xf]
      %v1480 = vld [vmem:[%s1471 + $0x20] sm:$0xf]
      %v1481 = vld [vmem:[%s1471 + $0x24] sm:$0xf]
      %v1482 = vld [vmem:[%s1471 + $0x28] sm:$0xf]
      %v1483 = vld [vmem:[%s1471 + $0x2c] sm:$0xf]
      %v1484 = vld [vmem:[%s1471 + $0x30] sm:$0xf]
      %v1485 = vld [vmem:[%s1471 + $0x34] sm:$0xf]
      %v1486 = vld [vmem:[%s1471 + $0x38] sm:$0xf]
      %v1487 = vld [vmem:[%s1471 + $0x3c] sm:$0xf]
      %v1504 = vunpack.c.l.b16 %v1472
      %v1505 = vunpack.c.l.b16 %v1473
      %v1506 = vunpack.c.l.b16 %v1474
      %v1507 = vunpack.c.l.b16 %v1475
      %v1508 = vunpack.c.l.b16 %v1476
      %v1509 = vunpack.c.l.b16 %v1477
      %v1510 = vunpack.c.l.b16 %v1478
      %v1511 = vunpack.c.l.b16 %v1479
      %v1512 = vunpack.c.l.b16 %v1480
      %v1513 = vunpack.c.l.b16 %v1481
      %v1514 = vunpack.c.l.b16 %v1482
      %v1515 = vunpack.c.l.b16 %v1483
      %v1516 = vunpack.c.l.b16 %v1484
      %v1517 = vunpack.c.l.b16 %v1485
      %v1518 = vunpack.c.l.b16 %v1486
      %v1519 = vunpack.c.l.b16 %v1487
      %v1520 = vpack.c.b16 %v1505, %v1504
      %v1521 = vpack.c.b16 %v1507, %v1506
      %v1522 = vpack.c.b16 %v1509, %v1508
      %v1523 = vpack.c.b16 %v1511, %v1510
      %v1524 = vpack.c.b16 %v1513, %v1512
      %v1525 = vpack.c.b16 %v1515, %v1514
      %v1526 = vpack.c.b16 %v1517, %v1516
      %v1527 = vpack.c.b16 %v1519, %v1518
      %1536 = vmatprep.subr.bf16.mxu0 0
      %1537 = vmatpush1.bf16.msra.mxu0 %v1520
      %1538 = vmatprep.subr.bf16.mxu0 0
      %1539 = vmatpush1.bf16.msra.mxu0 %v1521
      %1540 = vmatprep.subr.bf16.mxu0 0
      %1541 = vmatpush1.bf16.msra.mxu0 %v1522
      %1542 = vmatprep.subr.bf16.mxu0 0
      %1543 = vmatpush1.bf16.msra.mxu0 %v1523
      %1544 = vmatprep.subr.bf16.mxu0 0
      %1545 = vmatpush1.bf16.msra.mxu0 %v1524
      %1546 = vmatprep.subr.bf16.mxu0 0
      %1547 = vmatpush1.bf16.msra.mxu0 %v1525
      %1548 = vmatprep.subr.bf16.mxu0 0
      %1549 = vmatpush1.bf16.msra.mxu0 %v1526
      %1550 = vmatprep.subr.bf16.mxu0 0
      %1551 = vmatpush1.bf16.msra.mxu0 %v1527
      %1552 = vmatprep.subr.bf16.mxu0 0
      %1553 = vmatpush1.bf16.msra.mxu0 0
      %1554 = vmatprep.subr.bf16.mxu0 0
      %1555 = vmatpush1.bf16.msra.mxu0 0
      %1556 = vmatprep.subr.bf16.mxu0 0
      %1557 = vmatpush1.bf16.msra.mxu0 0
      %1558 = vmatprep.subr.bf16.mxu0 0
      %1559 = vmatpush1.bf16.msra.mxu0 0
      %1560 = vmatprep.subr.bf16.mxu0 0
      %1561 = vmatpush1.bf16.msra.mxu0 0
      %1562 = vmatprep.subr.bf16.mxu0 0
      %1563 = vmatpush1.bf16.msra.mxu0 0
      %1564 = vmatprep.subr.bf16.mxu0 0
      %1565 = vmatpush1.bf16.msra.mxu0 0
      %1566 = vmatprep.subr.bf16.mxu0 0
      %1567 = vmatpush1.bf16.msra.mxu0 0
      %1568 = vmatprep.mubr.bf16.mxu0 0
      %1569 = vmatmul.mubr.bf16.gmra.mrb[0].mxu0 %v671
      %v1570 = vpop.f32.mrb[0].mxu0
      %v1571 = vadd.f32 0.0, %v1570
      %v1572 = vpop.f32.mrb[0].mxu0
      %v1573 = vpop.f32.mrb[0].mxu0
      %v1574 = vadd.f32 0.0, %v1573
      %v1575 = vpop.f32.mrb[0].mxu0
      %1576 = vmatprep.mubr.bf16.mxu0 0
      %1577 = vmatmul.mubr.bf16.gmra.mrb[0].mxu0 %v672
      %v1578 = vpop.f32.mrb[0].mxu0
      %v1579 = vadd.f32 0.0, %v1578
      %v1580 = vpop.f32.mrb[0].mxu0
      %v1581 = vpop.f32.mrb[0].mxu0
      %v1582 = vadd.f32 0.0, %v1581
      %v1583 = vpop.f32.mrb[0].mxu0
      %1584 = vmatprep.mubr.bf16.mxu0 0
      %1585 = vmatmul.mubr.bf16.gmra.mrb[0].mxu0 %v673
      %v1586 = vpop.f32.mrb[0].mxu0
      %v1587 = vadd.f32 0.0, %v1586
      %v1588 = vpop.f32.mrb[0].mxu0
      %v1589 = vpop.f32.mrb[0].mxu0
      %v1590 = vadd.f32 0.0, %v1589
      %v1591 = vpop.f32.mrb[0].mxu0
      %1592 = vmatprep.mubr.bf16.mxu0 0
      %1593 = vmatmul.mubr.bf16.gmra.mrb[0].mxu0 %v674
      %v1594 = vpop.f32.mrb[0].mxu0
      %v1595 = vadd.f32 0.0, %v1594
      %v1596 = vpop.f32.mrb[0].mxu0
      %v1597 = vpop.f32.mrb[0].mxu0
      %v1598 = vadd.f32 0.0, %v1597
      %v1599 = vpop.f32.mrb[0].mxu0
      %1600 = vmatprep.mubr.bf16.mxu0 0
      %1601 = vmatmul.mubr.bf16.gmra.mrb[0].mxu0 %v675
      %v1602 = vpop.f32.mrb[0].mxu0
      %v1603 = vadd.f32 0.0, %v1602
      %v1604 = vpop.f32.mrb[0].mxu0
      %v1605 = vpop.f32.mrb[0].mxu0
      %v1606 = vadd.f32 0.0, %v1605
      %v1607 = vpop.f32.mrb[0].mxu0
      %1608 = vmatprep.mubr.bf16.mxu0 0
      %1609 = vmatmul.mubr.bf16.gmra.mrb[0].mxu0 %v676
      %v1610 = vpop.f32.mrb[0].mxu0
      %v1611 = vadd.f32 0.0, %v1610
      %v1612 = vpop.f32.mrb[0].mxu0
      %v1613 = vpop.f32.mrb[0].mxu0
      %v1614 = vadd.f32 0.0, %v1613
      %v1615 = vpop.f32.mrb[0].mxu0
      %1616 = vmatprep.mubr.bf16.mxu0 0
      %1617 = vmatmul.mubr.bf16.gmra.mrb[0].mxu0 %v677
      %v1618 = vpop.f32.mrb[0].mxu0
      %v1619 = vadd.f32 0.0, %v1618
      %v1620 = vpop.f32.mrb[0].mxu0
      %v1621 = vpop.f32.mrb[0].mxu0
      %v1622 = vadd.f32 0.0, %v1621
      %v1623 = vpop.f32.mrb[0].mxu0
      %1624 = vmatprep.mubr.bf16.mxu0 0
      %1625 = vmatmul.mubr.bf16.gmra.mrb[0].mxu0 %v678
      %v1626 = vpop.f32.mrb[0].mxu0
      %v1627 = vadd.f32 0.0, %v1626
      %v1628 = vpop.f32.mrb[0].mxu0
      %v1629 = vpop.f32.mrb[0].mxu0
      %v1630 = vadd.f32 0.0, %v1629
      %v1631 = vpop.f32.mrb[0].mxu0
      %1632 = vmatprep.mubr.bf16.mxu0 0
      %1633 = vmatmul.mubr.bf16.gmra.mrb[0].mxu0 %v679
      %v1634 = vpop.f32.mrb[0].mxu0
      %v1635 = vadd.f32 0.0, %v1634
      %v1636 = vpop.f32.mrb[0].mxu0
      %v1637 = vpop.f32.mrb[0].mxu0
      %v1638 = vadd.f32 0.0, %v1637
      %v1639 = vpop.f32.mrb[0].mxu0
      %1640 = vmatprep.mubr.bf16.mxu0 0
      %1641 = vmatmul.mubr.bf16.gmra.mrb[0].mxu0 %v680
      %v1642 = vpop.f32.mrb[0].mxu0
      %v1643 = vadd.f32 0.0, %v1642
      %v1644 = vpop.f32.mrb[0].mxu0
      %v1645 = vpop.f32.mrb[0].mxu0
      %v1646 = vadd.f32 0.0, %v1645
      %v1647 = vpop.f32.mrb[0].mxu0
      %1648 = vmatprep.mubr.bf16.mxu0 0
      %1649 = vmatmul.mubr.bf16.gmra.mrb[0].mxu0 %v681
      %v1650 = vpop.f32.mrb[0].mxu0
      %v1651 = vadd.f32 0.0, %v1650
      %v1652 = vpop.f32.mrb[0].mxu0
      %v1653 = vpop.f32.mrb[0].mxu0
      %v1654 = vadd.f32 0.0, %v1653
      %v1655 = vpop.f32.mrb[0].mxu0
      %1656 = vmatprep.mubr.bf16.mxu0 0
      %1657 = vmatmul.mubr.bf16.gmra.mrb[0].mxu0 %v682
      %v1658 = vpop.f32.mrb[0].mxu0
      %v1659 = vadd.f32 0.0, %v1658
      %v1660 = vpop.f32.mrb[0].mxu0
      %v1661 = vpop.f32.mrb[0].mxu0
      %v1662 = vadd.f32 0.0, %v1661
      %v1663 = vpop.f32.mrb[0].mxu0
      %1664 = vmatprep.mubr.bf16.mxu0 0
      %1665 = vmatmul.mubr.bf16.gmra.mrb[0].mxu0 %v683
      %v1666 = vpop.f32.mrb[0].mxu0
      %v1667 = vadd.f32 0.0, %v1666
      %v1668 = vpop.f32.mrb[0].mxu0
      %v1669 = vpop.f32.mrb[0].mxu0
      %v1670 = vadd.f32 0.0, %v1669
      %v1671 = vpop.f32.mrb[0].mxu0
      %1672 = vmatprep.mubr.bf16.mxu0 0
      %1673 = vmatmul.mubr.bf16.gmra.mrb[0].mxu0 %v684
      %v1674 = vpop.f32.mrb[0].mxu0
      %v1675 = vadd.f32 0.0, %v1674
      %v1676 = vpop.f32.mrb[0].mxu0
      %v1677 = vpop.f32.mrb[0].mxu0
      %v1678 = vadd.f32 0.0, %v1677
      %v1679 = vpop.f32.mrb[0].mxu0
      %1680 = vmatprep.mubr.bf16.mxu0 0
      %1681 = vmatmul.mubr.bf16.gmra.mrb[0].mxu0 %v685
      %v1682 = vpop.f32.mrb[0].mxu0
      %v1683 = vadd.f32 0.0, %v1682
      %v1684 = vpop.f32.mrb[0].mxu0
      %v1685 = vpop.f32.mrb[0].mxu0
      %v1686 = vadd.f32 0.0, %v1685
      %v1687 = vpop.f32.mrb[0].mxu0
      %1688 = vmatprep.mubr.bf16.mxu0 0
      %1689 = vmatmul.mubr.bf16.gmra.mrb[0].mxu0 %v1470
      %v1690 = vpop.f32.mrb[0].mxu0
      %v1691 = vadd.f32 0.0, %v1690
      %v1692 = vpop.f32.mrb[0].mxu0
      %v1693 = vpop.f32.mrb[0].mxu0
      %v1694 = vadd.f32 0.0, %v1693
      %v1695 = vpop.f32.mrb[0].mxu0
      %1696 = vdwg.mxu0
      %v1697 = vadd.f32 %v1430, %v1571
      %v1698 = vadd.f32 %v1431, %v1574
      %v1699 = vadd.f32 %v1432, %v1579
      %v1700 = vadd.f32 %v1433, %v1582
      %v1701 = vadd.f32 %v1434, %v1587
      %v1702 = vadd.f32 %v1435, %v1590
      %v1703 = vadd.f32 %v1436, %v1595
      %v1704 = vadd.f32 %v1437, %v1598
      %v1705 = vadd.f32 %v1438, %v1603
      %v1706 = vadd.f32 %v1439, %v1606
      %v1707 = vadd.f32 %v1440, %v1611
      %v1708 = vadd.f32 %v1441, %v1614
      %v1709 = vadd.f32 %v1442, %v1619
      %v1710 = vadd.f32 %v1443, %v1622
      %v1711 = vadd.f32 %v1444, %v1627
      %v1712 = vadd.f32 %v1445, %v1630
      %v1713 = vadd.f32 %v1446, %v1635
      %v1714 = vadd.f32 %v1447, %v1638
      %v1715 = vadd.f32 %v1448, %v1643
      %v1716 = vadd.f32 %v1449, %v1646
      %v1717 = vadd.f32 %v1450, %v1651
      %v1718 = vadd.f32 %v1451, %v1654
      %v1719 = vadd.f32 %v1452, %v1659
      %v1720 = vadd.f32 %v1453, %v1662
      %v1721 = vadd.f32 %v1454, %v1667
      %v1722 = vadd.f32 %v1455, %v1670
      %v1723 = vadd.f32 %v1456, %v1675
      %v1724 = vadd.f32 %v1457, %v1678
      %v1725 = vadd.f32 %v1458, %v1683
      %v1726 = vadd.f32 %v1459, %v1686
      %v1727 = vadd.f32 %v1460, %v1691
      %v1728 = vadd.f32 %v1461, %v1694
      %s1729 = scalar_lea.vmem %s3, 256
      %v1730 = vld [vmem:[%s1729] sm:$0xf]
      %v1731 = vld [vmem:[%s1729 + $0x4] sm:$0xf]
      %v1732 = vld [vmem:[%s1729 + $0x8] sm:$0xf]
      %v1733 = vld [vmem:[%s1729 + $0xc] sm:$0xf]
      %v1734 = vld [vmem:[%s1729 + $0x10] sm:$0xf]
      %v1735 = vld [vmem:[%s1729 + $0x14] sm:$0xf]
      %v1736 = vld [vmem:[%s1729 + $0x18] sm:$0xf]
      %v1737 = vld [vmem:[%s1729 + $0x1c] sm:$0xf]
      %v1738 = vld [vmem:[%s1729 + $0x20] sm:$0xf]
      %v1739 = vld [vmem:[%s1729 + $0x24] sm:$0xf]
      %v1740 = vld [vmem:[%s1729 + $0x28] sm:$0xf]
      %v1741 = vld [vmem:[%s1729 + $0x2c] sm:$0xf]
      %v1742 = vld [vmem:[%s1729 + $0x30] sm:$0xf]
      %v1743 = vld [vmem:[%s1729 + $0x34] sm:$0xf]
      %v1744 = vld [vmem:[%s1729 + $0x38] sm:$0xf]
      %v1745 = vld [vmem:[%s1729 + $0x3c] sm:$0xf]
      %v1762 = vunpack.c.l.b16 %v1730
      %v1763 = vunpack.c.l.b16 %v1731
      %v1764 = vunpack.c.l.b16 %v1732
      %v1765 = vunpack.c.l.b16 %v1733
      %v1766 = vunpack.c.l.b16 %v1734
      %v1767 = vunpack.c.l.b16 %v1735
      %v1768 = vunpack.c.l.b16 %v1736
      %v1769 = vunpack.c.l.b16 %v1737
      %v1770 = vunpack.c.l.b16 %v1738
      %v1771 = vunpack.c.l.b16 %v1739
      %v1772 = vunpack.c.l.b16 %v1740
      %v1773 = vunpack.c.l.b16 %v1741
      %v1774 = vunpack.c.l.b16 %v1742
      %v1775 = vunpack.c.l.b16 %v1743
      %v1776 = vunpack.c.l.b16 %v1744
      %v1777 = vunpack.c.l.b16 %v1745
      %v1778 = vpack.c.b16 %v1763, %v1762
      %v1779 = vpack.c.b16 %v1765, %v1764
      %v1780 = vpack.c.b16 %v1767, %v1766
      %v1781 = vpack.c.b16 %v1769, %v1768
      %v1782 = vpack.c.b16 %v1771, %v1770
      %v1783 = vpack.c.b16 %v1773, %v1772
      %v1784 = vpack.c.b16 %v1775, %v1774
      %v1785 = vpack.c.b16 %v1777, %v1776
      %1794 = vmatprep.subr.bf16.mxu0 0
      %1795 = vmatpush1.bf16.msra.mxu0 %v1778
      %1796 = vmatprep.subr.bf16.mxu0 0
      %1797 = vmatpush1.bf16.msra.mxu0 %v1779
      %1798 = vmatprep.subr.bf16.mxu0 0
      %1799 = vmatpush1.bf16.msra.mxu0 %v1780
      %1800 = vmatprep.subr.bf16.mxu0 0
      %1801 = vmatpush1.bf16.msra.mxu0 %v1781
      %1802 = vmatprep.subr.bf16.mxu0 0
      %1803 = vmatpush1.bf16.msra.mxu0 %v1782
      %1804 = vmatprep.subr.bf16.mxu0 0
      %1805 = vmatpush1.bf16.msra.mxu0 %v1783
      %1806 = vmatprep.subr.bf16.mxu0 0
      %1807 = vmatpush1.bf16.msra.mxu0 %v1784
      %1808 = vmatprep.subr.bf16.mxu0 0
      %1809 = vmatpush1.bf16.msra.mxu0 %v1785
      %1810 = vmatprep.subr.bf16.mxu0 0
      %1811 = vmatpush1.bf16.msra.mxu0 0
      %1812 = vmatprep.subr.bf16.mxu0 0
      %1813 = vmatpush1.bf16.msra.mxu0 0
      %1814 = vmatprep.subr.bf16.mxu0 0
      %1815 = vmatpush1.bf16.msra.mxu0 0
      %1816 = vmatprep.subr.bf16.mxu0 0
      %1817 = vmatpush1.bf16.msra.mxu0 0
      %1818 = vmatprep.subr.bf16.mxu0 0
      %1819 = vmatpush1.bf16.msra.mxu0 0
      %1820 = vmatprep.subr.bf16.mxu0 0
      %1821 = vmatpush1.bf16.msra.mxu0 0
      %1822 = vmatprep.subr.bf16.mxu0 0
      %1823 = vmatpush1.bf16.msra.mxu0 0
      %1824 = vmatprep.subr.bf16.mxu0 0
      %1825 = vmatpush1.bf16.msra.mxu0 0
      %1826 = vmatprep.mubr.bf16.mxu0 0
      %1827 = vmatmul.mubr.bf16.gmra.mrb[0].mxu0 %v522
      %v1828 = vpop.f32.mrb[0].mxu0
      %v1829 = vadd.f32 0.0, %v1828
      %v1830 = vpop.f32.mrb[0].mxu0
      %v1831 = vpop.f32.mrb[0].mxu0
      %v1832 = vadd.f32 0.0, %v1831
      %v1833 = vpop.f32.mrb[0].mxu0
      %1834 = vmatprep.mubr.bf16.mxu0 0
      %1835 = vmatmul.mubr.bf16.gmra.mrb[0].mxu0 %v523
      %v1836 = vpop.f32.mrb[0].mxu0
      %v1837 = vadd.f32 0.0, %v1836
      %v1838 = vpop.f32.mrb[0].mxu0
      %v1839 = vpop.f32.mrb[0].mxu0
      %v1840 = vadd.f32 0.0, %v1839
      %v1841 = vpop.f32.mrb[0].mxu0
      %1842 = vmatprep.mubr.bf16.mxu0 0
      %1843 = vmatmul.mubr.bf16.gmra.mrb[0].mxu0 %v524
      %v1844 = vpop.f32.mrb[0].mxu0
      %v1845 = vadd.f32 0.0, %v1844
      %v1846 = vpop.f32.mrb[0].mxu0
      %v1847 = vpop.f32.mrb[0].mxu0
      %v1848 = vadd.f32 0.0, %v1847
      %v1849 = vpop.f32.mrb[0].mxu0
      %1850 = vmatprep.mubr.bf16.mxu0 0
      %1851 = vmatmul.mubr.bf16.gmra.mrb[0].mxu0 %v525
      %v1852 = vpop.f32.mrb[0].mxu0
      %v1853 = vadd.f32 0.0, %v1852
      %v1854 = vpop.f32.mrb[0].mxu0
      %v1855 = vpop.f32.mrb[0].mxu0
      %v1856 = vadd.f32 0.0, %v1855
      %v1857 = vpop.f32.mrb[0].mxu0
      %1858 = vmatprep.mubr.bf16.mxu0 0
      %1859 = vmatmul.mubr.bf16.gmra.mrb[0].mxu0 %v526
      %v1860 = vpop.f32.mrb[0].mxu0
      %v1861 = vadd.f32 0.0, %v1860
      %v1862 = vpop.f32.mrb[0].mxu0
      %v1863 = vpop.f32.mrb[0].mxu0
      %v1864 = vadd.f32 0.0, %v1863
      %v1865 = vpop.f32.mrb[0].mxu0
      %1866 = vmatprep.mubr.bf16.mxu0 0
      %1867 = vmatmul.mubr.bf16.gmra.mrb[0].mxu0 %v527
      %v1868 = vpop.f32.mrb[0].mxu0
      %v1869 = vadd.f32 0.0, %v1868
      %v1870 = vpop.f32.mrb[0].mxu0
      %v1871 = vpop.f32.mrb[0].mxu0
      %v1872 = vadd.f32 0.0, %v1871
      %v1873 = vpop.f32.mrb[0].mxu0
      %1874 = vmatprep.mubr.bf16.mxu0 0
      %1875 = vmatmul.mubr.bf16.gmra.mrb[0].mxu0 %v528
      %v1876 = vpop.f32.mrb[0].mxu0
      %v1877 = vadd.f32 0.0, %v1876
      %v1878 = vpop.f32.mrb[0].mxu0
      %v1879 = vpop.f32.mrb[0].mxu0
      %v1880 = vadd.f32 0.0, %v1879
      %v1881 = vpop.f32.mrb[0].mxu0
      %1882 = vmatprep.mubr.bf16.mxu0 0
      %1883 = vmatmul.mubr.bf16.gmra.mrb[0].mxu0 %v529
      %v1884 = vpop.f32.mrb[0].mxu0
      %v1885 = vadd.f32 0.0, %v1884
      %v1886 = vpop.f32.mrb[0].mxu0
      %v1887 = vpop.f32.mrb[0].mxu0
      %v1888 = vadd.f32 0.0, %v1887
      %v1889 = vpop.f32.mrb[0].mxu0
      %1890 = vmatprep.mubr.bf16.mxu0 0
      %1891 = vmatmul.mubr.bf16.gmra.mrb[0].mxu0 %v530
      %v1892 = vpop.f32.mrb[0].mxu0
      %v1893 = vadd.f32 0.0, %v1892
      %v1894 = vpop.f32.mrb[0].mxu0
      %v1895 = vpop.f32.mrb[0].mxu0
      %v1896 = vadd.f32 0.0, %v1895
      %v1897 = vpop.f32.mrb[0].mxu0
      %1898 = vmatprep.mubr.bf16.mxu0 0
      %1899 = vmatmul.mubr.bf16.gmra.mrb[0].mxu0 %v531
      %v1900 = vpop.f32.mrb[0].mxu0
      %v1901 = vadd.f32 0.0, %v1900
      %v1902 = vpop.f32.mrb[0].mxu0
      %v1903 = vpop.f32.mrb[0].mxu0
      %v1904 = vadd.f32 0.0, %v1903
      %v1905 = vpop.f32.mrb[0].mxu0
      %1906 = vmatprep.mubr.bf16.mxu0 0
      %1907 = vmatmul.mubr.bf16.gmra.mrb[0].mxu0 %v532
      %v1908 = vpop.f32.mrb[0].mxu0
      %v1909 = vadd.f32 0.0, %v1908
      %v1910 = vpop.f32.mrb[0].mxu0
      %v1911 = vpop.f32.mrb[0].mxu0
      %v1912 = vadd.f32 0.0, %v1911
      %v1913 = vpop.f32.mrb[0].mxu0
      %1914 = vmatprep.mubr.bf16.mxu0 0
      %1915 = vmatmul.mubr.bf16.gmra.mrb[0].mxu0 %v533
      %v1916 = vpop.f32.mrb[0].mxu0
      %v1917 = vadd.f32 0.0, %v1916
      %v1918 = vpop.f32.mrb[0].mxu0
      %v1919 = vpop.f32.mrb[0].mxu0
      %v1920 = vadd.f32 0.0, %v1919
      %v1921 = vpop.f32.mrb[0].mxu0
      %1922 = vmatprep.mubr.bf16.mxu0 0
      %1923 = vmatmul.mubr.bf16.gmra.mrb[0].mxu0 %v534
      %v1924 = vpop.f32.mrb[0].mxu0
      %v1925 = vadd.f32 0.0, %v1924
      %v1926 = vpop.f32.mrb[0].mxu0
      %v1927 = vpop.f32.mrb[0].mxu0
      %v1928 = vadd.f32 0.0, %v1927
      %v1929 = vpop.f32.mrb[0].mxu0
      %1930 = vmatprep.mubr.bf16.mxu0 0
      %1931 = vmatmul.mubr.bf16.gmra.mrb[0].mxu0 %v535
      %v1932 = vpop.f32.mrb[0].mxu0
      %v1933 = vadd.f32 0.0, %v1932
      %v1934 = vpop.f32.mrb[0].mxu0
      %v1935 = vpop.f32.mrb[0].mxu0
      %v1936 = vadd.f32 0.0, %v1935
      %v1937 = vpop.f32.mrb[0].mxu0
      %1938 = vmatprep.mubr.bf16.mxu0 0
      %1939 = vmatmul.mubr.bf16.gmra.mrb[0].mxu0 %v536
      %v1940 = vpop.f32.mrb[0].mxu0
      %v1941 = vadd.f32 0.0, %v1940
      %v1942 = vpop.f32.mrb[0].mxu0
      %v1943 = vpop.f32.mrb[0].mxu0
      %v1944 = vadd.f32 0.0, %v1943
      %v1945 = vpop.f32.mrb[0].mxu0
      %1946 = vmatprep.mubr.bf16.mxu0 0
      %1947 = vmatmul.mubr.bf16.gmra.mrb[0].mxu0 %v537
      %v1948 = vpop.f32.mrb[0].mxu0
      %v1949 = vadd.f32 0.0, %v1948
      %v1950 = vpop.f32.mrb[0].mxu0
      %v1951 = vpop.f32.mrb[0].mxu0
      %v1952 = vadd.f32 0.0, %v1951
      %v1953 = vpop.f32.mrb[0].mxu0
      %1954 = vdwg.mxu0
      %v1955 = vadd.f32 %v1697, %v1829
      %v1956 = vadd.f32 %v1698, %v1832
      %v1957 = vadd.f32 %v1699, %v1837
      %v1958 = vadd.f32 %v1700, %v1840
      %v1959 = vadd.f32 %v1701, %v1845
      %v1960 = vadd.f32 %v1702, %v1848
      %v1961 = vadd.f32 %v1703, %v1853
      %v1962 = vadd.f32 %v1704, %v1856
      %v1963 = vadd.f32 %v1705, %v1861
      %v1964 = vadd.f32 %v1706, %v1864
      %v1965 = vadd.f32 %v1707, %v1869
      %v1966 = vadd.f32 %v1708, %v1872
      %v1967 = vadd.f32 %v1709, %v1877
      %v1968 = vadd.f32 %v1710, %v1880
      %v1969 = vadd.f32 %v1711, %v1885
      %v1970 = vadd.f32 %v1712, %v1888
      %v1971 = vadd.f32 %v1713, %v1893
      %v1972 = vadd.f32 %v1714, %v1896
      %v1973 = vadd.f32 %v1715, %v1901
      %v1974 = vadd.f32 %v1716, %v1904
      %v1975 = vadd.f32 %v1717, %v1909
      %v1976 = vadd.f32 %v1718, %v1912
      %v1977 = vadd.f32 %v1719, %v1917
      %v1978 = vadd.f32 %v1720, %v1920
      %v1979 = vadd.f32 %v1721, %v1925
      %v1980 = vadd.f32 %v1722, %v1928
      %v1981 = vadd.f32 %v1723, %v1933
      %v1982 = vadd.f32 %v1724, %v1936
      %v1983 = vadd.f32 %v1725, %v1941
      %v1984 = vadd.f32 %v1726, %v1944
      %v1985 = vadd.f32 %v1727, %v1949
      %v1986 = vadd.f32 %v1728, %v1952
      %v1987 = vrot.slane %v1466, 1
      %v1988 = vor.u32 %v1463, %v1987
      %v1990 = vsel %vm1187, %v1988, 0
      %s1991 = scalar_lea.vmem %s3, 320
      %v1992 = vld [vmem:[%s1991] sm:$0xf]
      %v1993 = vld [vmem:[%s1991 + $0x4] sm:$0xf]
      %v1994 = vld [vmem:[%s1991 + $0x8] sm:$0xf]
      %v1995 = vld [vmem:[%s1991 + $0xc] sm:$0xf]
      %v1996 = vld [vmem:[%s1991 + $0x10] sm:$0xf]
      %v1997 = vld [vmem:[%s1991 + $0x14] sm:$0xf]
      %v1998 = vld [vmem:[%s1991 + $0x18] sm:$0xf]
      %v1999 = vld [vmem:[%s1991 + $0x1c] sm:$0xf]
      %v2000 = vld [vmem:[%s1991 + $0x20] sm:$0xf]
      %v2001 = vld [vmem:[%s1991 + $0x24] sm:$0xf]
      %v2002 = vld [vmem:[%s1991 + $0x28] sm:$0xf]
      %v2003 = vld [vmem:[%s1991 + $0x2c] sm:$0xf]
      %v2004 = vld [vmem:[%s1991 + $0x30] sm:$0xf]
      %v2005 = vld [vmem:[%s1991 + $0x34] sm:$0xf]
      %v2006 = vld [vmem:[%s1991 + $0x38] sm:$0xf]
      %v2007 = vld [vmem:[%s1991 + $0x3c] sm:$0xf]
      %v2024 = vunpack.c.l.b16 %v1992
      %v2025 = vunpack.c.l.b16 %v1993
      %v2026 = vunpack.c.l.b16 %v1994
      %v2027 = vunpack.c.l.b16 %v1995
      %v2028 = vunpack.c.l.b16 %v1996
      %v2029 = vunpack.c.l.b16 %v1997
      %v2030 = vunpack.c.l.b16 %v1998
      %v2031 = vunpack.c.l.b16 %v1999
      %v2032 = vunpack.c.l.b16 %v2000
      %v2033 = vunpack.c.l.b16 %v2001
      %v2034 = vunpack.c.l.b16 %v2002
      %v2035 = vunpack.c.l.b16 %v2003
      %v2036 = vunpack.c.l.b16 %v2004
      %v2037 = vunpack.c.l.b16 %v2005
      %v2038 = vunpack.c.l.b16 %v2006
      %v2039 = vunpack.c.l.b16 %v2007
      %v2040 = vpack.c.b16 %v2025, %v2024
      %v2041 = vpack.c.b16 %v2027, %v2026
      %v2042 = vpack.c.b16 %v2029, %v2028
      %v2043 = vpack.c.b16 %v2031, %v2030
      %v2044 = vpack.c.b16 %v2033, %v2032
      %v2045 = vpack.c.b16 %v2035, %v2034
      %v2046 = vpack.c.b16 %v2037, %v2036
      %v2047 = vpack.c.b16 %v2039, %v2038
      %2056 = vmatprep.subr.bf16.mxu0 0
      %2057 = vmatpush1.bf16.msra.mxu0 %v2040
      %2058 = vmatprep.subr.bf16.mxu0 0
      %2059 = vmatpush1.bf16.msra.mxu0 %v2041
      %2060 = vmatprep.subr.bf16.mxu0 0
      %2061 = vmatpush1.bf16.msra.mxu0 %v2042
      %2062 = vmatprep.subr.bf16.mxu0 0
      %2063 = vmatpush1.bf16.msra.mxu0 %v2043
      %2064 = vmatprep.subr.bf16.mxu0 0
      %2065 = vmatpush1.bf16.msra.mxu0 %v2044
      %2066 = vmatprep.subr.bf16.mxu0 0
      %2067 = vmatpush1.bf16.msra.mxu0 %v2045
      %2068 = vmatprep.subr.bf16.mxu0 0
      %2069 = vmatpush1.bf16.msra.mxu0 %v2046
      %2070 = vmatprep.subr.bf16.mxu0 0
      %2071 = vmatpush1.bf16.msra.mxu0 %v2047
      %2072 = vmatprep.subr.bf16.mxu0 0
      %2073 = vmatpush1.bf16.msra.mxu0 0
      %2074 = vmatprep.subr.bf16.mxu0 0
      %2075 = vmatpush1.bf16.msra.mxu0 0
      %2076 = vmatprep.subr.bf16.mxu0 0
      %2077 = vmatpush1.bf16.msra.mxu0 0
      %2078 = vmatprep.subr.bf16.mxu0 0
      %2079 = vmatpush1.bf16.msra.mxu0 0
      %2080 = vmatprep.subr.bf16.mxu0 0
      %2081 = vmatpush1.bf16.msra.mxu0 0
      %2082 = vmatprep.subr.bf16.mxu0 0
      %2083 = vmatpush1.bf16.msra.mxu0 0
      %2084 = vmatprep.subr.bf16.mxu0 0
      %2085 = vmatpush1.bf16.msra.mxu0 0
      %2086 = vmatprep.subr.bf16.mxu0 0
      %2087 = vmatpush1.bf16.msra.mxu0 0
      %2088 = vmatprep.mubr.bf16.mxu0 0
      %2089 = vmatmul.mubr.bf16.gmra.mrb[0].mxu0 %v1189
      %v2090 = vpop.f32.mrb[0].mxu0
      %v2091 = vadd.f32 0.0, %v2090
      %v2092 = vpop.f32.mrb[0].mxu0
      %v2093 = vpop.f32.mrb[0].mxu0
      %v2094 = vadd.f32 0.0, %v2093
      %v2095 = vpop.f32.mrb[0].mxu0
      %2096 = vmatprep.mubr.bf16.mxu0 0
      %2097 = vmatmul.mubr.bf16.gmra.mrb[0].mxu0 %v1190
      %v2098 = vpop.f32.mrb[0].mxu0
      %v2099 = vadd.f32 0.0, %v2098
      %v2100 = vpop.f32.mrb[0].mxu0
      %v2101 = vpop.f32.mrb[0].mxu0
      %v2102 = vadd.f32 0.0, %v2101
      %v2103 = vpop.f32.mrb[0].mxu0
      %2104 = vmatprep.mubr.bf16.mxu0 0
      %2105 = vmatmul.mubr.bf16.gmra.mrb[0].mxu0 %v1191
      %v2106 = vpop.f32.mrb[0].mxu0
      %v2107 = vadd.f32 0.0, %v2106
      %v2108 = vpop.f32.mrb[0].mxu0
      %v2109 = vpop.f32.mrb[0].mxu0
      %v2110 = vadd.f32 0.0, %v2109
      %v2111 = vpop.f32.mrb[0].mxu0
      %2112 = vmatprep.mubr.bf16.mxu0 0
      %2113 = vmatmul.mubr.bf16.gmra.mrb[0].mxu0 %v1192
      %v2114 = vpop.f32.mrb[0].mxu0
      %v2115 = vadd.f32 0.0, %v2114
      %v2116 = vpop.f32.mrb[0].mxu0
      %v2117 = vpop.f32.mrb[0].mxu0
      %v2118 = vadd.f32 0.0, %v2117
      %v2119 = vpop.f32.mrb[0].mxu0
      %2120 = vmatprep.mubr.bf16.mxu0 0
      %2121 = vmatmul.mubr.bf16.gmra.mrb[0].mxu0 %v1193
      %v2122 = vpop.f32.mrb[0].mxu0
      %v2123 = vadd.f32 0.0, %v2122
      %v2124 = vpop.f32.mrb[0].mxu0
      %v2125 = vpop.f32.mrb[0].mxu0
      %v2126 = vadd.f32 0.0, %v2125
      %v2127 = vpop.f32.mrb[0].mxu0
      %2128 = vmatprep.mubr.bf16.mxu0 0
      %2129 = vmatmul.mubr.bf16.gmra.mrb[0].mxu0 %v1194
      %v2130 = vpop.f32.mrb[0].mxu0
      %v2131 = vadd.f32 0.0, %v2130
      %v2132 = vpop.f32.mrb[0].mxu0
      %v2133 = vpop.f32.mrb[0].mxu0
      %v2134 = vadd.f32 0.0, %v2133
      %v2135 = vpop.f32.mrb[0].mxu0
      %2136 = vmatprep.mubr.bf16.mxu0 0
      %2137 = vmatmul.mubr.bf16.gmra.mrb[0].mxu0 %v1195
      %v2138 = vpop.f32.mrb[0].mxu0
      %v2139 = vadd.f32 0.0, %v2138
      %v2140 = vpop.f32.mrb[0].mxu0
      %v2141 = vpop.f32.mrb[0].mxu0
      %v2142 = vadd.f32 0.0, %v2141
      %v2143 = vpop.f32.mrb[0].mxu0
      %2144 = vmatprep.mubr.bf16.mxu0 0
      %2145 = vmatmul.mubr.bf16.gmra.mrb[0].mxu0 %v1196
      %v2146 = vpop.f32.mrb[0].mxu0
      %v2147 = vadd.f32 0.0, %v2146
      %v2148 = vpop.f32.mrb[0].mxu0
      %v2149 = vpop.f32.mrb[0].mxu0
      %v2150 = vadd.f32 0.0, %v2149
      %v2151 = vpop.f32.mrb[0].mxu0
      %2152 = vmatprep.mubr.bf16.mxu0 0
      %2153 = vmatmul.mubr.bf16.gmra.mrb[0].mxu0 %v1197
      %v2154 = vpop.f32.mrb[0].mxu0
      %v2155 = vadd.f32 0.0, %v2154
      %v2156 = vpop.f32.mrb[0].mxu0
      %v2157 = vpop.f32.mrb[0].mxu0
      %v2158 = vadd.f32 0.0, %v2157
      %v2159 = vpop.f32.mrb[0].mxu0
      %2160 = vmatprep.mubr.bf16.mxu0 0
      %2161 = vmatmul.mubr.bf16.gmra.mrb[0].mxu0 %v1198
      %v2162 = vpop.f32.mrb[0].mxu0
      %v2163 = vadd.f32 0.0, %v2162
      %v2164 = vpop.f32.mrb[0].mxu0
      %v2165 = vpop.f32.mrb[0].mxu0
      %v2166 = vadd.f32 0.0, %v2165
      %v2167 = vpop.f32.mrb[0].mxu0
      %2168 = vmatprep.mubr.bf16.mxu0 0
      %2169 = vmatmul.mubr.bf16.gmra.mrb[0].mxu0 %v1199
      %v2170 = vpop.f32.mrb[0].mxu0
      %v2171 = vadd.f32 0.0, %v2170
      %v2172 = vpop.f32.mrb[0].mxu0
      %v2173 = vpop.f32.mrb[0].mxu0
      %v2174 = vadd.f32 0.0, %v2173
      %v2175 = vpop.f32.mrb[0].mxu0
      %2176 = vmatprep.mubr.bf16.mxu0 0
      %2177 = vmatmul.mubr.bf16.gmra.mrb[0].mxu0 %v1200
      %v2178 = vpop.f32.mrb[0].mxu0
      %v2179 = vadd.f32 0.0, %v2178
      %v2180 = vpop.f32.mrb[0].mxu0
      %v2181 = vpop.f32.mrb[0].mxu0
      %v2182 = vadd.f32 0.0, %v2181
      %v2183 = vpop.f32.mrb[0].mxu0
      %2184 = vmatprep.mubr.bf16.mxu0 0
      %2185 = vmatmul.mubr.bf16.gmra.mrb[0].mxu0 %v1201
      %v2186 = vpop.f32.mrb[0].mxu0
      %v2187 = vadd.f32 0.0, %v2186
      %v2188 = vpop.f32.mrb[0].mxu0
      %v2189 = vpop.f32.mrb[0].mxu0
      %v2190 = vadd.f32 0.0, %v2189
      %v2191 = vpop.f32.mrb[0].mxu0
      %2192 = vmatprep.mubr.bf16.mxu0 0
      %2193 = vmatmul.mubr.bf16.gmra.mrb[0].mxu0 %v1202
      %v2194 = vpop.f32.mrb[0].mxu0
      %v2195 = vadd.f32 0.0, %v2194
      %v2196 = vpop.f32.mrb[0].mxu0
      %v2197 = vpop.f32.mrb[0].mxu0
      %v2198 = vadd.f32 0.0, %v2197
      %v2199 = vpop.f32.mrb[0].mxu0
      %2200 = vmatprep.mubr.bf16.mxu0 0
      %2201 = vmatmul.mubr.bf16.gmra.mrb[0].mxu0 %v1203
      %v2202 = vpop.f32.mrb[0].mxu0
      %v2203 = vadd.f32 0.0, %v2202
      %v2204 = vpop.f32.mrb[0].mxu0
      %v2205 = vpop.f32.mrb[0].mxu0
      %v2206 = vadd.f32 0.0, %v2205
      %v2207 = vpop.f32.mrb[0].mxu0
      %2208 = vmatprep.mubr.bf16.mxu0 0
      %2209 = vmatmul.mubr.bf16.gmra.mrb[0].mxu0 %v1990
      %v2210 = vpop.f32.mrb[0].mxu0
      %v2211 = vadd.f32 0.0, %v2210
      %v2212 = vpop.f32.mrb[0].mxu0
      %v2213 = vpop.f32.mrb[0].mxu0
      %v2214 = vadd.f32 0.0, %v2213
      %v2215 = vpop.f32.mrb[0].mxu0
      %2216 = vdwg.mxu0
      %v2217 = vadd.f32 %v1955, %v2091
      %v2218 = vadd.f32 %v1956, %v2094
      %v2219 = vadd.f32 %v1957, %v2099
      %v2220 = vadd.f32 %v1958, %v2102
      %v2221 = vadd.f32 %v1959, %v2107
      %v2222 = vadd.f32 %v1960, %v2110
      %v2223 = vadd.f32 %v1961, %v2115
      %v2224 = vadd.f32 %v1962, %v2118
      %v2225 = vadd.f32 %v1963, %v2123
      %v2226 = vadd.f32 %v1964, %v2126
      %v2227 = vadd.f32 %v1965, %v2131
      %v2228 = vadd.f32 %v1966, %v2134
      %v2229 = vadd.f32 %v1967, %v2139
      %v2230 = vadd.f32 %v1968, %v2142
      %v2231 = vadd.f32 %v1969, %v2147
      %v2232 = vadd.f32 %v1970, %v2150
      %v2233 = vadd.f32 %v1971, %v2155
      %v2234 = vadd.f32 %v1972, %v2158
      %v2235 = vadd.f32 %v1973, %v2163
      %v2236 = vadd.f32 %v1974, %v2166
      %v2237 = vadd.f32 %v1975, %v2171
      %v2238 = vadd.f32 %v1976, %v2174
      %v2239 = vadd.f32 %v1977, %v2179
      %v2240 = vadd.f32 %v1978, %v2182
      %v2241 = vadd.f32 %v1979, %v2187
      %v2242 = vadd.f32 %v1980, %v2190
      %v2243 = vadd.f32 %v1981, %v2195
      %v2244 = vadd.f32 %v1982, %v2198
      %v2245 = vadd.f32 %v1983, %v2203
      %v2246 = vadd.f32 %v1984, %v2206
      %v2247 = vadd.f32 %v1985, %v2211
      %v2248 = vadd.f32 %v1986, %v2214
      %v2250 = vshrl.u32 %v538, 16
      %v2252 = vrot.slane %v2250, 7
      %v2253 = vshll.u32 %v538, 16
      %v2255 = vor.u32 %v2252, %v2253
      %v2257 = vsel %vm669, 0, %v2255
      %s2258 = scalar_lea.vmem %s3, 384
      %v2259 = vld [vmem:[%s2258] sm:$0xf]
      %v2260 = vld [vmem:[%s2258 + $0x4] sm:$0xf]
      %v2261 = vld [vmem:[%s2258 + $0x8] sm:$0xf]
      %v2262 = vld [vmem:[%s2258 + $0xc] sm:$0xf]
      %v2263 = vld [vmem:[%s2258 + $0x10] sm:$0xf]
      %v2264 = vld [vmem:[%s2258 + $0x14] sm:$0xf]
      %v2265 = vld [vmem:[%s2258 + $0x18] sm:$0xf]
      %v2266 = vld [vmem:[%s2258 + $0x1c] sm:$0xf]
      %v2267 = vld [vmem:[%s2258 + $0x20] sm:$0xf]
      %v2268 = vld [vmem:[%s2258 + $0x24] sm:$0xf]
      %v2269 = vld [vmem:[%s2258 + $0x28] sm:$0xf]
      %v2270 = vld [vmem:[%s2258 + $0x2c] sm:$0xf]
      %v2271 = vld [vmem:[%s2258 + $0x30] sm:$0xf]
      %v2272 = vld [vmem:[%s2258 + $0x34] sm:$0xf]
      %v2273 = vld [vmem:[%s2258 + $0x38] sm:$0xf]
      %v2274 = vld [vmem:[%s2258 + $0x3c] sm:$0xf]
      %v2291 = vunpack.c.l.b16 %v2259
      %v2292 = vunpack.c.l.b16 %v2260
      %v2293 = vunpack.c.l.b16 %v2261
      %v2294 = vunpack.c.l.b16 %v2262
      %v2295 = vunpack.c.l.b16 %v2263
      %v2296 = vunpack.c.l.b16 %v2264
      %v2297 = vunpack.c.l.b16 %v2265
      %v2298 = vunpack.c.l.b16 %v2266
      %v2299 = vunpack.c.l.b16 %v2267
      %v2300 = vunpack.c.l.b16 %v2268
      %v2301 = vunpack.c.l.b16 %v2269
      %v2302 = vunpack.c.l.b16 %v2270
      %v2303 = vunpack.c.l.b16 %v2271
      %v2304 = vunpack.c.l.b16 %v2272
      %v2305 = vunpack.c.l.b16 %v2273
      %v2306 = vunpack.c.l.b16 %v2274
      %v2307 = vpack.c.b16 %v2292, %v2291
      %v2308 = vpack.c.b16 %v2294, %v2293
      %v2309 = vpack.c.b16 %v2296, %v2295
      %v2310 = vpack.c.b16 %v2298, %v2297
      %v2311 = vpack.c.b16 %v2300, %v2299
      %v2312 = vpack.c.b16 %v2302, %v2301
      %v2313 = vpack.c.b16 %v2304, %v2303
      %v2314 = vpack.c.b16 %v2306, %v2305
      %2323 = vmatprep.subr.bf16.mxu0 0
      %2324 = vmatpush1.bf16.msra.mxu0 %v2307
      %2325 = vmatprep.subr.bf16.mxu0 0
      %2326 = vmatpush1.bf16.msra.mxu0 %v2308
      %2327 = vmatprep.subr.bf16.mxu0 0
      %2328 = vmatpush1.bf16.msra.mxu0 %v2309
      %2329 = vmatprep.subr.bf16.mxu0 0
      %2330 = vmatpush1.bf16.msra.mxu0 %v2310
      %2331 = vmatprep.subr.bf16.mxu0 0
      %2332 = vmatpush1.bf16.msra.mxu0 %v2311
      %2333 = vmatprep.subr.bf16.mxu0 0
      %2334 = vmatpush1.bf16.msra.mxu0 %v2312
      %2335 = vmatprep.subr.bf16.mxu0 0
      %2336 = vmatpush1.bf16.msra.mxu0 %v2313
      %2337 = vmatprep.subr.bf16.mxu0 0
      %2338 = vmatpush1.bf16.msra.mxu0 %v2314
      %2339 = vmatprep.subr.bf16.mxu0 0
      %2340 = vmatpush1.bf16.msra.mxu0 0
      %2341 = vmatprep.subr.bf16.mxu0 0
      %2342 = vmatpush1.bf16.msra.mxu0 0
      %2343 = vmatprep.subr.bf16.mxu0 0
      %2344 = vmatpush1.bf16.msra.mxu0 0
      %2345 = vmatprep.subr.bf16.mxu0 0
      %2346 = vmatpush1.bf16.msra.mxu0 0
      %2347 = vmatprep.subr.bf16.mxu0 0
      %2348 = vmatpush1.bf16.msra.mxu0 0
      %2349 = vmatprep.subr.bf16.mxu0 0
      %2350 = vmatpush1.bf16.msra.mxu0 0
      %2351 = vmatprep.subr.bf16.mxu0 0
      %2352 = vmatpush1.bf16.msra.mxu0 0
      %2353 = vmatprep.subr.bf16.mxu0 0
      %2354 = vmatpush1.bf16.msra.mxu0 0
      %2355 = vmatprep.mubr.bf16.mxu0 0
      %2356 = vmatmul.mubr.bf16.gmra.mrb[0].mxu0 %v672
      %v2357 = vpop.f32.mrb[0].mxu0
      %v2358 = vadd.f32 0.0, %v2357
      %v2359 = vpop.f32.mrb[0].mxu0
      %v2360 = vpop.f32.mrb[0].mxu0
      %v2361 = vadd.f32 0.0, %v2360
      %v2362 = vpop.f32.mrb[0].mxu0
      %2363 = vmatprep.mubr.bf16.mxu0 0
      %2364 = vmatmul.mubr.bf16.gmra.mrb[0].mxu0 %v673
      %v2365 = vpop.f32.mrb[0].mxu0
      %v2366 = vadd.f32 0.0, %v2365
      %v2367 = vpop.f32.mrb[0].mxu0
      %v2368 = vpop.f32.mrb[0].mxu0
      %v2369 = vadd.f32 0.0, %v2368
      %v2370 = vpop.f32.mrb[0].mxu0
      %2371 = vmatprep.mubr.bf16.mxu0 0
      %2372 = vmatmul.mubr.bf16.gmra.mrb[0].mxu0 %v674
      %v2373 = vpop.f32.mrb[0].mxu0
      %v2374 = vadd.f32 0.0, %v2373
      %v2375 = vpop.f32.mrb[0].mxu0
      %v2376 = vpop.f32.mrb[0].mxu0
      %v2377 = vadd.f32 0.0, %v2376
      %v2378 = vpop.f32.mrb[0].mxu0
      %2379 = vmatprep.mubr.bf16.mxu0 0
      %2380 = vmatmul.mubr.bf16.gmra.mrb[0].mxu0 %v675
      %v2381 = vpop.f32.mrb[0].mxu0
      %v2382 = vadd.f32 0.0, %v2381
      %v2383 = vpop.f32.mrb[0].mxu0
      %v2384 = vpop.f32.mrb[0].mxu0
      %v2385 = vadd.f32 0.0, %v2384
      %v2386 = vpop.f32.mrb[0].mxu0
      %2387 = vmatprep.mubr.bf16.mxu0 0
      %2388 = vmatmul.mubr.bf16.gmra.mrb[0].mxu0 %v676
      %v2389 = vpop.f32.mrb[0].mxu0
      %v2390 = vadd.f32 0.0, %v2389
      %v2391 = vpop.f32.mrb[0].mxu0
      %v2392 = vpop.f32.mrb[0].mxu0
      %v2393 = vadd.f32 0.0, %v2392
      %v2394 = vpop.f32.mrb[0].mxu0
      %2395 = vmatprep.mubr.bf16.mxu0 0
      %2396 = vmatmul.mubr.bf16.gmra.mrb[0].mxu0 %v677
      %v2397 = vpop.f32.mrb[0].mxu0
      %v2398 = vadd.f32 0.0, %v2397
      %v2399 = vpop.f32.mrb[0].mxu0
      %v2400 = vpop.f32.mrb[0].mxu0
      %v2401 = vadd.f32 0.0, %v2400
      %v2402 = vpop.f32.mrb[0].mxu0
      %2403 = vmatprep.mubr.bf16.mxu0 0
      %2404 = vmatmul.mubr.bf16.gmra.mrb[0].mxu0 %v678
      %v2405 = vpop.f32.mrb[0].mxu0
      %v2406 = vadd.f32 0.0, %v2405
      %v2407 = vpop.f32.mrb[0].mxu0
      %v2408 = vpop.f32.mrb[0].mxu0
      %v2409 = vadd.f32 0.0, %v2408
      %v2410 = vpop.f32.mrb[0].mxu0
      %2411 = vmatprep.mubr.bf16.mxu0 0
      %2412 = vmatmul.mubr.bf16.gmra.mrb[0].mxu0 %v679
      %v2413 = vpop.f32.mrb[0].mxu0
      %v2414 = vadd.f32 0.0, %v2413
      %v2415 = vpop.f32.mrb[0].mxu0
      %v2416 = vpop.f32.mrb[0].mxu0
      %v2417 = vadd.f32 0.0, %v2416
      %v2418 = vpop.f32.mrb[0].mxu0
      %2419 = vmatprep.mubr.bf16.mxu0 0
      %2420 = vmatmul.mubr.bf16.gmra.mrb[0].mxu0 %v680
      %v2421 = vpop.f32.mrb[0].mxu0
      %v2422 = vadd.f32 0.0, %v2421
      %v2423 = vpop.f32.mrb[0].mxu0
      %v2424 = vpop.f32.mrb[0].mxu0
      %v2425 = vadd.f32 0.0, %v2424
      %v2426 = vpop.f32.mrb[0].mxu0
      %2427 = vmatprep.mubr.bf16.mxu0 0
      %2428 = vmatmul.mubr.bf16.gmra.mrb[0].mxu0 %v681
      %v2429 = vpop.f32.mrb[0].mxu0
      %v2430 = vadd.f32 0.0, %v2429
      %v2431 = vpop.f32.mrb[0].mxu0
      %v2432 = vpop.f32.mrb[0].mxu0
      %v2433 = vadd.f32 0.0, %v2432
      %v2434 = vpop.f32.mrb[0].mxu0
      %2435 = vmatprep.mubr.bf16.mxu0 0
      %2436 = vmatmul.mubr.bf16.gmra.mrb[0].mxu0 %v682
      %v2437 = vpop.f32.mrb[0].mxu0
      %v2438 = vadd.f32 0.0, %v2437
      %v2439 = vpop.f32.mrb[0].mxu0
      %v2440 = vpop.f32.mrb[0].mxu0
      %v2441 = vadd.f32 0.0, %v2440
      %v2442 = vpop.f32.mrb[0].mxu0
      %2443 = vmatprep.mubr.bf16.mxu0 0
      %2444 = vmatmul.mubr.bf16.gmra.mrb[0].mxu0 %v683
      %v2445 = vpop.f32.mrb[0].mxu0
      %v2446 = vadd.f32 0.0, %v2445
      %v2447 = vpop.f32.mrb[0].mxu0
      %v2448 = vpop.f32.mrb[0].mxu0
      %v2449 = vadd.f32 0.0, %v2448
      %v2450 = vpop.f32.mrb[0].mxu0
      %2451 = vmatprep.mubr.bf16.mxu0 0
      %2452 = vmatmul.mubr.bf16.gmra.mrb[0].mxu0 %v684
      %v2453 = vpop.f32.mrb[0].mxu0
      %v2454 = vadd.f32 0.0, %v2453
      %v2455 = vpop.f32.mrb[0].mxu0
      %v2456 = vpop.f32.mrb[0].mxu0
      %v2457 = vadd.f32 0.0, %v2456
      %v2458 = vpop.f32.mrb[0].mxu0
      %2459 = vmatprep.mubr.bf16.mxu0 0
      %2460 = vmatmul.mubr.bf16.gmra.mrb[0].mxu0 %v685
      %v2461 = vpop.f32.mrb[0].mxu0
      %v2462 = vadd.f32 0.0, %v2461
      %v2463 = vpop.f32.mrb[0].mxu0
      %v2464 = vpop.f32.mrb[0].mxu0
      %v2465 = vadd.f32 0.0, %v2464
      %v2466 = vpop.f32.mrb[0].mxu0
      %2467 = vmatprep.mubr.bf16.mxu0 0
      %2468 = vmatmul.mubr.bf16.gmra.mrb[0].mxu0 %v1470
      %v2469 = vpop.f32.mrb[0].mxu0
      %v2470 = vadd.f32 0.0, %v2469
      %v2471 = vpop.f32.mrb[0].mxu0
      %v2472 = vpop.f32.mrb[0].mxu0
      %v2473 = vadd.f32 0.0, %v2472
      %v2474 = vpop.f32.mrb[0].mxu0
      %2475 = vmatprep.mubr.bf16.mxu0 0
      %2476 = vmatmul.mubr.bf16.gmra.mrb[0].mxu0 %v2257
      %v2477 = vpop.f32.mrb[0].mxu0
      %v2478 = vadd.f32 0.0, %v2477
      %v2479 = vpop.f32.mrb[0].mxu0
      %v2480 = vpop.f32.mrb[0].mxu0
      %v2481 = vadd.f32 0.0, %v2480
      %v2482 = vpop.f32.mrb[0].mxu0
      %2483 = vdwg.mxu0
      %v2484 = vadd.f32 %v2217, %v2358
      %v2485 = vadd.f32 %v2218, %v2361
      %v2486 = vadd.f32 %v2219, %v2366
      %v2487 = vadd.f32 %v2220, %v2369
      %v2488 = vadd.f32 %v2221, %v2374
      %v2489 = vadd.f32 %v2222, %v2377
      %v2490 = vadd.f32 %v2223, %v2382
      %v2491 = vadd.f32 %v2224, %v2385
      %v2492 = vadd.f32 %v2225, %v2390
      %v2493 = vadd.f32 %v2226, %v2393
      %v2494 = vadd.f32 %v2227, %v2398
      %v2495 = vadd.f32 %v2228, %v2401
      %v2496 = vadd.f32 %v2229, %v2406
      %v2497 = vadd.f32 %v2230, %v2409
      %v2498 = vadd.f32 %v2231, %v2414
      %v2499 = vadd.f32 %v2232, %v2417
      %v2500 = vadd.f32 %v2233, %v2422
      %v2501 = vadd.f32 %v2234, %v2425
      %v2502 = vadd.f32 %v2235, %v2430
      %v2503 = vadd.f32 %v2236, %v2433
      %v2504 = vadd.f32 %v2237, %v2438
      %v2505 = vadd.f32 %v2238, %v2441
      %v2506 = vadd.f32 %v2239, %v2446
      %v2507 = vadd.f32 %v2240, %v2449
      %v2508 = vadd.f32 %v2241, %v2454
      %v2509 = vadd.f32 %v2242, %v2457
      %v2510 = vadd.f32 %v2243, %v2462
      %v2511 = vadd.f32 %v2244, %v2465
      %v2512 = vadd.f32 %v2245, %v2470
      %v2513 = vadd.f32 %v2246, %v2473
      %v2514 = vadd.f32 %v2247, %v2478
      %v2515 = vadd.f32 %v2248, %v2481
      %s2516 = scalar_lea.vmem %s3, 448
      %v2517 = vld [vmem:[%s2516] sm:$0xf]
      %v2518 = vld [vmem:[%s2516 + $0x4] sm:$0xf]
      %v2519 = vld [vmem:[%s2516 + $0x8] sm:$0xf]
      %v2520 = vld [vmem:[%s2516 + $0xc] sm:$0xf]
      %v2521 = vld [vmem:[%s2516 + $0x10] sm:$0xf]
      %v2522 = vld [vmem:[%s2516 + $0x14] sm:$0xf]
      %v2523 = vld [vmem:[%s2516 + $0x18] sm:$0xf]
      %v2524 = vld [vmem:[%s2516 + $0x1c] sm:$0xf]
      %v2525 = vld [vmem:[%s2516 + $0x20] sm:$0xf]
      %v2526 = vld [vmem:[%s2516 + $0x24] sm:$0xf]
      %v2527 = vld [vmem:[%s2516 + $0x28] sm:$0xf]
      %v2528 = vld [vmem:[%s2516 + $0x2c] sm:$0xf]
      %v2529 = vld [vmem:[%s2516 + $0x30] sm:$0xf]
      %v2530 = vld [vmem:[%s2516 + $0x34] sm:$0xf]
      %v2531 = vld [vmem:[%s2516 + $0x38] sm:$0xf]
      %v2532 = vld [vmem:[%s2516 + $0x3c] sm:$0xf]
      %v2549 = vunpack.c.l.b16 %v2517
      %v2550 = vunpack.c.l.b16 %v2518
      %v2551 = vunpack.c.l.b16 %v2519
      %v2552 = vunpack.c.l.b16 %v2520
      %v2553 = vunpack.c.l.b16 %v2521
      %v2554 = vunpack.c.l.b16 %v2522
      %v2555 = vunpack.c.l.b16 %v2523
      %v2556 = vunpack.c.l.b16 %v2524
      %v2557 = vunpack.c.l.b16 %v2525
      %v2558 = vunpack.c.l.b16 %v2526
      %v2559 = vunpack.c.l.b16 %v2527
      %v2560 = vunpack.c.l.b16 %v2528
      %v2561 = vunpack.c.l.b16 %v2529
      %v2562 = vunpack.c.l.b16 %v2530
      %v2563 = vunpack.c.l.b16 %v2531
      %v2564 = vunpack.c.l.b16 %v2532
      %v2565 = vpack.c.b16 %v2550, %v2549
      %v2566 = vpack.c.b16 %v2552, %v2551
      %v2567 = vpack.c.b16 %v2554, %v2553
      %v2568 = vpack.c.b16 %v2556, %v2555
      %v2569 = vpack.c.b16 %v2558, %v2557
      %v2570 = vpack.c.b16 %v2560, %v2559
      %v2571 = vpack.c.b16 %v2562, %v2561
      %v2572 = vpack.c.b16 %v2564, %v2563
      %2581 = vmatprep.subr.bf16.mxu0 0
      %2582 = vmatpush1.bf16.msra.mxu0 %v2565
      %2583 = vmatprep.subr.bf16.mxu0 0
      %2584 = vmatpush1.bf16.msra.mxu0 %v2566
      %2585 = vmatprep.subr.bf16.mxu0 0
      %2586 = vmatpush1.bf16.msra.mxu0 %v2567
      %2587 = vmatprep.subr.bf16.mxu0 0
      %2588 = vmatpush1.bf16.msra.mxu0 %v2568
      %2589 = vmatprep.subr.bf16.mxu0 0
      %2590 = vmatpush1.bf16.msra.mxu0 %v2569
      %2591 = vmatprep.subr.bf16.mxu0 0
      %2592 = vmatpush1.bf16.msra.mxu0 %v2570
      %2593 = vmatprep.subr.bf16.mxu0 0
      %2594 = vmatpush1.bf16.msra.mxu0 %v2571
      %2595 = vmatprep.subr.bf16.mxu0 0
      %2596 = vmatpush1.bf16.msra.mxu0 %v2572
      %2597 = vmatprep.subr.bf16.mxu0 0
      %2598 = vmatpush1.bf16.msra.mxu0 0
      %2599 = vmatprep.subr.bf16.mxu0 0
      %2600 = vmatpush1.bf16.msra.mxu0 0
      %2601 = vmatprep.subr.bf16.mxu0 0
      %2602 = vmatpush1.bf16.msra.mxu0 0
      %2603 = vmatprep.subr.bf16.mxu0 0
      %2604 = vmatpush1.bf16.msra.mxu0 0
      %2605 = vmatprep.subr.bf16.mxu0 0
      %2606 = vmatpush1.bf16.msra.mxu0 0
      %2607 = vmatprep.subr.bf16.mxu0 0
      %2608 = vmatpush1.bf16.msra.mxu0 0
      %2609 = vmatprep.subr.bf16.mxu0 0
      %2610 = vmatpush1.bf16.msra.mxu0 0
      %2611 = vmatprep.subr.bf16.mxu0 0
      %2612 = vmatpush1.bf16.msra.mxu0 0
      %2613 = vmatprep.mubr.bf16.mxu0 0
      %2614 = vmatmul.mubr.bf16.gmra.mrb[0].mxu0 %v523
      %v2615 = vpop.f32.mrb[0].mxu0
      %v2616 = vadd.f32 0.0, %v2615
      %v2617 = vpop.f32.mrb[0].mxu0
      %v2618 = vpop.f32.mrb[0].mxu0
      %v2619 = vadd.f32 0.0, %v2618
      %v2620 = vpop.f32.mrb[0].mxu0
      %2621 = vmatprep.mubr.bf16.mxu0 0
      %2622 = vmatmul.mubr.bf16.gmra.mrb[0].mxu0 %v524
      %v2623 = vpop.f32.mrb[0].mxu0
      %v2624 = vadd.f32 0.0, %v2623
      %v2625 = vpop.f32.mrb[0].mxu0
      %v2626 = vpop.f32.mrb[0].mxu0
      %v2627 = vadd.f32 0.0, %v2626
      %v2628 = vpop.f32.mrb[0].mxu0
      %2629 = vmatprep.mubr.bf16.mxu0 0
      %2630 = vmatmul.mubr.bf16.gmra.mrb[0].mxu0 %v525
      %v2631 = vpop.f32.mrb[0].mxu0
      %v2632 = vadd.f32 0.0, %v2631
      %v2633 = vpop.f32.mrb[0].mxu0
      %v2634 = vpop.f32.mrb[0].mxu0
      %v2635 = vadd.f32 0.0, %v2634
      %v2636 = vpop.f32.mrb[0].mxu0
      %2637 = vmatprep.mubr.bf16.mxu0 0
      %2638 = vmatmul.mubr.bf16.gmra.mrb[0].mxu0 %v526
      %v2639 = vpop.f32.mrb[0].mxu0
      %v2640 = vadd.f32 0.0, %v2639
      %v2641 = vpop.f32.mrb[0].mxu0
      %v2642 = vpop.f32.mrb[0].mxu0
      %v2643 = vadd.f32 0.0, %v2642
      %v2644 = vpop.f32.mrb[0].mxu0
      %2645 = vmatprep.mubr.bf16.mxu0 0
      %2646 = vmatmul.mubr.bf16.gmra.mrb[0].mxu0 %v527
      %v2647 = vpop.f32.mrb[0].mxu0
      %v2648 = vadd.f32 0.0, %v2647
      %v2649 = vpop.f32.mrb[0].mxu0
      %v2650 = vpop.f32.mrb[0].mxu0
      %v2651 = vadd.f32 0.0, %v2650
      %v2652 = vpop.f32.mrb[0].mxu0
      %2653 = vmatprep.mubr.bf16.mxu0 0
      %2654 = vmatmul.mubr.bf16.gmra.mrb[0].mxu0 %v528
      %v2655 = vpop.f32.mrb[0].mxu0
      %v2656 = vadd.f32 0.0, %v2655
      %v2657 = vpop.f32.mrb[0].mxu0
      %v2658 = vpop.f32.mrb[0].mxu0
      %v2659 = vadd.f32 0.0, %v2658
      %v2660 = vpop.f32.mrb[0].mxu0
      %2661 = vmatprep.mubr.bf16.mxu0 0
      %2662 = vmatmul.mubr.bf16.gmra.mrb[0].mxu0 %v529
      %v2663 = vpop.f32.mrb[0].mxu0
      %v2664 = vadd.f32 0.0, %v2663
      %v2665 = vpop.f32.mrb[0].mxu0
      %v2666 = vpop.f32.mrb[0].mxu0
      %v2667 = vadd.f32 0.0, %v2666
      %v2668 = vpop.f32.mrb[0].mxu0
      %2669 = vmatprep.mubr.bf16.mxu0 0
      %2670 = vmatmul.mubr.bf16.gmra.mrb[0].mxu0 %v530
      %v2671 = vpop.f32.mrb[0].mxu0
      %v2672 = vadd.f32 0.0, %v2671
      %v2673 = vpop.f32.mrb[0].mxu0
      %v2674 = vpop.f32.mrb[0].mxu0
      %v2675 = vadd.f32 0.0, %v2674
      %v2676 = vpop.f32.mrb[0].mxu0
      %2677 = vmatprep.mubr.bf16.mxu0 0
      %2678 = vmatmul.mubr.bf16.gmra.mrb[0].mxu0 %v531
      %v2679 = vpop.f32.mrb[0].mxu0
      %v2680 = vadd.f32 0.0, %v2679
      %v2681 = vpop.f32.mrb[0].mxu0
      %v2682 = vpop.f32.mrb[0].mxu0
      %v2683 = vadd.f32 0.0, %v2682
      %v2684 = vpop.f32.mrb[0].mxu0
      %2685 = vmatprep.mubr.bf16.mxu0 0
      %2686 = vmatmul.mubr.bf16.gmra.mrb[0].mxu0 %v532
      %v2687 = vpop.f32.mrb[0].mxu0
      %v2688 = vadd.f32 0.0, %v2687
      %v2689 = vpop.f32.mrb[0].mxu0
      %v2690 = vpop.f32.mrb[0].mxu0
      %v2691 = vadd.f32 0.0, %v2690
      %v2692 = vpop.f32.mrb[0].mxu0
      %2693 = vmatprep.mubr.bf16.mxu0 0
      %2694 = vmatmul.mubr.bf16.gmra.mrb[0].mxu0 %v533
      %v2695 = vpop.f32.mrb[0].mxu0
      %v2696 = vadd.f32 0.0, %v2695
      %v2697 = vpop.f32.mrb[0].mxu0
      %v2698 = vpop.f32.mrb[0].mxu0
      %v2699 = vadd.f32 0.0, %v2698
      %v2700 = vpop.f32.mrb[0].mxu0
      %2701 = vmatprep.mubr.bf16.mxu0 0
      %2702 = vmatmul.mubr.bf16.gmra.mrb[0].mxu0 %v534
      %v2703 = vpop.f32.mrb[0].mxu0
      %v2704 = vadd.f32 0.0, %v2703
      %v2705 = vpop.f32.mrb[0].mxu0
      %v2706 = vpop.f32.mrb[0].mxu0
      %v2707 = vadd.f32 0.0, %v2706
      %v2708 = vpop.f32.mrb[0].mxu0
      %2709 = vmatprep.mubr.bf16.mxu0 0
      %2710 = vmatmul.mubr.bf16.gmra.mrb[0].mxu0 %v535
      %v2711 = vpop.f32.mrb[0].mxu0
      %v2712 = vadd.f32 0.0, %v2711
      %v2713 = vpop.f32.mrb[0].mxu0
      %v2714 = vpop.f32.mrb[0].mxu0
      %v2715 = vadd.f32 0.0, %v2714
      %v2716 = vpop.f32.mrb[0].mxu0
      %2717 = vmatprep.mubr.bf16.mxu0 0
      %2718 = vmatmul.mubr.bf16.gmra.mrb[0].mxu0 %v536
      %v2719 = vpop.f32.mrb[0].mxu0
      %v2720 = vadd.f32 0.0, %v2719
      %v2721 = vpop.f32.mrb[0].mxu0
      %v2722 = vpop.f32.mrb[0].mxu0
      %v2723 = vadd.f32 0.0, %v2722
      %v2724 = vpop.f32.mrb[0].mxu0
      %2725 = vmatprep.mubr.bf16.mxu0 0
      %2726 = vmatmul.mubr.bf16.gmra.mrb[0].mxu0 %v537
      %v2727 = vpop.f32.mrb[0].mxu0
      %v2728 = vadd.f32 0.0, %v2727
      %v2729 = vpop.f32.mrb[0].mxu0
      %v2730 = vpop.f32.mrb[0].mxu0
      %v2731 = vadd.f32 0.0, %v2730
      %v2732 = vpop.f32.mrb[0].mxu0
      %2733 = vmatprep.mubr.bf16.mxu0 0
      %2734 = vmatmul.mubr.bf16.gmra.mrb[0].mxu0 %v538
      %v2735 = vpop.f32.mrb[0].mxu0
      %v2736 = vadd.f32 0.0, %v2735
      %v2737 = vpop.f32.mrb[0].mxu0
      %v2738 = vpop.f32.mrb[0].mxu0
      %v2739 = vadd.f32 0.0, %v2738
      %v2740 = vpop.f32.mrb[0].mxu0
      %2741 = vdwg.mxu0
      %v2742 = vadd.f32 %v2484, %v2616
      %v2743 = vadd.f32 %v2485, %v2619
      %v2744 = vadd.f32 %v2486, %v2624
      %v2745 = vadd.f32 %v2487, %v2627
      %v2746 = vadd.f32 %v2488, %v2632
      %v2747 = vadd.f32 %v2489, %v2635
      %v2748 = vadd.f32 %v2490, %v2640
      %v2749 = vadd.f32 %v2491, %v2643
      %v2750 = vadd.f32 %v2492, %v2648
      %v2751 = vadd.f32 %v2493, %v2651
      %v2752 = vadd.f32 %v2494, %v2656
      %v2753 = vadd.f32 %v2495, %v2659
      %v2754 = vadd.f32 %v2496, %v2664
      %v2755 = vadd.f32 %v2497, %v2667
      %v2756 = vadd.f32 %v2498, %v2672
      %v2757 = vadd.f32 %v2499, %v2675
      %v2758 = vadd.f32 %v2500, %v2680
      %v2759 = vadd.f32 %v2501, %v2683
      %v2760 = vadd.f32 %v2502, %v2688
      %v2761 = vadd.f32 %v2503, %v2691
      %v2762 = vadd.f32 %v2504, %v2696
      %v2763 = vadd.f32 %v2505, %v2699
      %v2764 = vadd.f32 %v2506, %v2704
      %v2765 = vadd.f32 %v2507, %v2707
      %v2766 = vadd.f32 %v2508, %v2712
      %v2767 = vadd.f32 %v2509, %v2715
      %v2768 = vadd.f32 %v2510, %v2720
      %v2769 = vadd.f32 %v2511, %v2723
      %v2770 = vadd.f32 %v2512, %v2728
      %v2771 = vadd.f32 %v2513, %v2731
      %v2772 = vadd.f32 %v2514, %v2736
      %v2773 = vadd.f32 %v2515, %v2739
      %v2774 = vrot.slane %v2253, 1
      %v2775 = vor.u32 %v2250, %v2774
      %v2777 = vsel %vm1187, %v2775, 0
      %s2778 = scalar_lea.vmem %s3, 512
      %v2779 = vld [vmem:[%s2778] sm:$0xf]
      %v2780 = vld [vmem:[%s2778 + $0x4] sm:$0xf]
      %v2781 = vld [vmem:[%s2778 + $0x8] sm:$0xf]
      %v2782 = vld [vmem:[%s2778 + $0xc] sm:$0xf]
      %v2783 = vld [vmem:[%s2778 + $0x10] sm:$0xf]
      %v2784 = vld [vmem:[%s2778 + $0x14] sm:$0xf]
      %v2785 = vld [vmem:[%s2778 + $0x18] sm:$0xf]
      %v2786 = vld [vmem:[%s2778 + $0x1c] sm:$0xf]
      %v2787 = vld [vmem:[%s2778 + $0x20] sm:$0xf]
      %v2788 = vld [vmem:[%s2778 + $0x24] sm:$0xf]
      %v2789 = vld [vmem:[%s2778 + $0x28] sm:$0xf]
      %v2790 = vld [vmem:[%s2778 + $0x2c] sm:$0xf]
      %v2791 = vld [vmem:[%s2778 + $0x30] sm:$0xf]
      %v2792 = vld [vmem:[%s2778 + $0x34] sm:$0xf]
      %v2793 = vld [vmem:[%s2778 + $0x38] sm:$0xf]
      %v2794 = vld [vmem:[%s2778 + $0x3c] sm:$0xf]
      %v2811 = vunpack.c.l.b16 %v2779
      %v2812 = vunpack.c.l.b16 %v2780
      %v2813 = vunpack.c.l.b16 %v2781
      %v2814 = vunpack.c.l.b16 %v2782
      %v2815 = vunpack.c.l.b16 %v2783
      %v2816 = vunpack.c.l.b16 %v2784
      %v2817 = vunpack.c.l.b16 %v2785
      %v2818 = vunpack.c.l.b16 %v2786
      %v2819 = vunpack.c.l.b16 %v2787
      %v2820 = vunpack.c.l.b16 %v2788
      %v2821 = vunpack.c.l.b16 %v2789
      %v2822 = vunpack.c.l.b16 %v2790
      %v2823 = vunpack.c.l.b16 %v2791
      %v2824 = vunpack.c.l.b16 %v2792
      %v2825 = vunpack.c.l.b16 %v2793
      %v2826 = vunpack.c.l.b16 %v2794
      %v2827 = vpack.c.b16 %v2812, %v2811
      %v2828 = vpack.c.b16 %v2814, %v2813
      %v2829 = vpack.c.b16 %v2816, %v2815
      %v2830 = vpack.c.b16 %v2818, %v2817
      %v2831 = vpack.c.b16 %v2820, %v2819
      %v2832 = vpack.c.b16 %v2822, %v2821
      %v2833 = vpack.c.b16 %v2824, %v2823
      %v2834 = vpack.c.b16 %v2826, %v2825
      %2843 = vmatprep.subr.bf16.mxu0 0
      %2844 = vmatpush1.bf16.msra.mxu0 %v2827
      %2845 = vmatprep.subr.bf16.mxu0 0
      %2846 = vmatpush1.bf16.msra.mxu0 %v2828
      %2847 = vmatprep.subr.bf16.mxu0 0
      %2848 = vmatpush1.bf16.msra.mxu0 %v2829
      %2849 = vmatprep.subr.bf16.mxu0 0
      %2850 = vmatpush1.bf16.msra.mxu0 %v2830
      %2851 = vmatprep.subr.bf16.mxu0 0
      %2852 = vmatpush1.bf16.msra.mxu0 %v2831
      %2853 = vmatprep.subr.bf16.mxu0 0
      %2854 = vmatpush1.bf16.msra.mxu0 %v2832
      %2855 = vmatprep.subr.bf16.mxu0 0
      %2856 = vmatpush1.bf16.msra.mxu0 %v2833
      %2857 = vmatprep.subr.bf16.mxu0 0
      %2858 = vmatpush1.bf16.msra.mxu0 %v2834
      %2859 = vmatprep.subr.bf16.mxu0 0
      %2860 = vmatpush1.bf16.msra.mxu0 0
      %2861 = vmatprep.subr.bf16.mxu0 0
      %2862 = vmatpush1.bf16.msra.mxu0 0
      %2863 = vmatprep.subr.bf16.mxu0 0
      %2864 = vmatpush1.bf16.msra.mxu0 0
      %2865 = vmatprep.subr.bf16.mxu0 0
      %2866 = vmatpush1.bf16.msra.mxu0 0
      %2867 = vmatprep.subr.bf16.mxu0 0
      %2868 = vmatpush1.bf16.msra.mxu0 0
      %2869 = vmatprep.subr.bf16.mxu0 0
      %2870 = vmatpush1.bf16.msra.mxu0 0
      %2871 = vmatprep.subr.bf16.mxu0 0
      %2872 = vmatpush1.bf16.msra.mxu0 0
      %2873 = vmatprep.subr.bf16.mxu0 0
      %2874 = vmatpush1.bf16.msra.mxu0 0
      %2875 = vmatprep.mubr.bf16.mxu0 0
      %2876 = vmatmul.mubr.bf16.gmra.mrb[0].mxu0 %v1190
      %v2877 = vpop.f32.mrb[0].mxu0
      %v2878 = vadd.f32 0.0, %v2877
      %v2879 = vpop.f32.mrb[0].mxu0
      %v2880 = vpop.f32.mrb[0].mxu0
      %v2881 = vadd.f32 0.0, %v2880
      %v2882 = vpop.f32.mrb[0].mxu0
      %2883 = vmatprep.mubr.bf16.mxu0 0
      %2884 = vmatmul.mubr.bf16.gmra.mrb[0].mxu0 %v1191
      %v2885 = vpop.f32.mrb[0].mxu0
      %v2886 = vadd.f32 0.0, %v2885
      %v2887 = vpop.f32.mrb[0].mxu0
      %v2888 = vpop.f32.mrb[0].mxu0
      %v2889 = vadd.f32 0.0, %v2888
      %v2890 = vpop.f32.mrb[0].mxu0
      %2891 = vmatprep.mubr.bf16.mxu0 0
      %2892 = vmatmul.mubr.bf16.gmra.mrb[0].mxu0 %v1192
      %v2893 = vpop.f32.mrb[0].mxu0
      %v2894 = vadd.f32 0.0, %v2893
      %v2895 = vpop.f32.mrb[0].mxu0
      %v2896 = vpop.f32.mrb[0].mxu0
      %v2897 = vadd.f32 0.0, %v2896
      %v2898 = vpop.f32.mrb[0].mxu0
      %2899 = vmatprep.mubr.bf16.mxu0 0
      %2900 = vmatmul.mubr.bf16.gmra.mrb[0].mxu0 %v1193
      %v2901 = vpop.f32.mrb[0].mxu0
      %v2902 = vadd.f32 0.0, %v2901
      %v2903 = vpop.f32.mrb[0].mxu0
      %v2904 = vpop.f32.mrb[0].mxu0
      %v2905 = vadd.f32 0.0, %v2904
      %v2906 = vpop.f32.mrb[0].mxu0
      %2907 = vmatprep.mubr.bf16.mxu0 0
      %2908 = vmatmul.mubr.bf16.gmra.mrb[0].mxu0 %v1194
      %v2909 = vpop.f32.mrb[0].mxu0
      %v2910 = vadd.f32 0.0, %v2909
      %v2911 = vpop.f32.mrb[0].mxu0
      %v2912 = vpop.f32.mrb[0].mxu0
      %v2913 = vadd.f32 0.0, %v2912
      %v2914 = vpop.f32.mrb[0].mxu0
      %2915 = vmatprep.mubr.bf16.mxu0 0
      %2916 = vmatmul.mubr.bf16.gmra.mrb[0].mxu0 %v1195
      %v2917 = vpop.f32.mrb[0].mxu0
      %v2918 = vadd.f32 0.0, %v2917
      %v2919 = vpop.f32.mrb[0].mxu0
      %v2920 = vpop.f32.mrb[0].mxu0
      %v2921 = vadd.f32 0.0, %v2920
      %v2922 = vpop.f32.mrb[0].mxu0
      %2923 = vmatprep.mubr.bf16.mxu0 0
      %2924 = vmatmul.mubr.bf16.gmra.mrb[0].mxu0 %v1196
      %v2925 = vpop.f32.mrb[0].mxu0
      %v2926 = vadd.f32 0.0, %v2925
      %v2927 = vpop.f32.mrb[0].mxu0
      %v2928 = vpop.f32.mrb[0].mxu0
      %v2929 = vadd.f32 0.0, %v2928
      %v2930 = vpop.f32.mrb[0].mxu0
      %2931 = vmatprep.mubr.bf16.mxu0 0
      %2932 = vmatmul.mubr.bf16.gmra.mrb[0].mxu0 %v1197
      %v2933 = vpop.f32.mrb[0].mxu0
      %v2934 = vadd.f32 0.0, %v2933
      %v2935 = vpop.f32.mrb[0].mxu0
      %v2936 = vpop.f32.mrb[0].mxu0
      %v2937 = vadd.f32 0.0, %v2936
      %v2938 = vpop.f32.mrb[0].mxu0
      %2939 = vmatprep.mubr.bf16.mxu0 0
      %2940 = vmatmul.mubr.bf16.gmra.mrb[0].mxu0 %v1198
      %v2941 = vpop.f32.mrb[0].mxu0
      %v2942 = vadd.f32 0.0, %v2941
      %v2943 = vpop.f32.mrb[0].mxu0
      %v2944 = vpop.f32.mrb[0].mxu0
      %v2945 = vadd.f32 0.0, %v2944
      %v2946 = vpop.f32.mrb[0].mxu0
      %2947 = vmatprep.mubr.bf16.mxu0 0
      %2948 = vmatmul.mubr.bf16.gmra.mrb[0].mxu0 %v1199
      %v2949 = vpop.f32.mrb[0].mxu0
      %v2950 = vadd.f32 0.0, %v2949
      %v2951 = vpop.f32.mrb[0].mxu0
      %v2952 = vpop.f32.mrb[0].mxu0
      %v2953 = vadd.f32 0.0, %v2952
      %v2954 = vpop.f32.mrb[0].mxu0
      %2955 = vmatprep.mubr.bf16.mxu0 0
      %2956 = vmatmul.mubr.bf16.gmra.mrb[0].mxu0 %v1200
      %v2957 = vpop.f32.mrb[0].mxu0
      %v2958 = vadd.f32 0.0, %v2957
      %v2959 = vpop.f32.mrb[0].mxu0
      %v2960 = vpop.f32.mrb[0].mxu0
      %v2961 = vadd.f32 0.0, %v2960
      %v2962 = vpop.f32.mrb[0].mxu0
      %2963 = vmatprep.mubr.bf16.mxu0 0
      %2964 = vmatmul.mubr.bf16.gmra.mrb[0].mxu0 %v1201
      %v2965 = vpop.f32.mrb[0].mxu0
      %v2966 = vadd.f32 0.0, %v2965
      %v2967 = vpop.f32.mrb[0].mxu0
      %v2968 = vpop.f32.mrb[0].mxu0
      %v2969 = vadd.f32 0.0, %v2968
      %v2970 = vpop.f32.mrb[0].mxu0
      %2971 = vmatprep.mubr.bf16.mxu0 0
      %2972 = vmatmul.mubr.bf16.gmra.mrb[0].mxu0 %v1202
      %v2973 = vpop.f32.mrb[0].mxu0
      %v2974 = vadd.f32 0.0, %v2973
      %v2975 = vpop.f32.mrb[0].mxu0
      %v2976 = vpop.f32.mrb[0].mxu0
      %v2977 = vadd.f32 0.0, %v2976
      %v2978 = vpop.f32.mrb[0].mxu0
      %2979 = vmatprep.mubr.bf16.mxu0 0
      %2980 = vmatmul.mubr.bf16.gmra.mrb[0].mxu0 %v1203
      %v2981 = vpop.f32.mrb[0].mxu0
      %v2982 = vadd.f32 0.0, %v2981
      %v2983 = vpop.f32.mrb[0].mxu0
      %v2984 = vpop.f32.mrb[0].mxu0
      %v2985 = vadd.f32 0.0, %v2984
      %v2986 = vpop.f32.mrb[0].mxu0
      %2987 = vmatprep.mubr.bf16.mxu0 0
      %2988 = vmatmul.mubr.bf16.gmra.mrb[0].mxu0 %v1990
      %v2989 = vpop.f32.mrb[0].mxu0
      %v2990 = vadd.f32 0.0, %v2989
      %v2991 = vpop.f32.mrb[0].mxu0
      %v2992 = vpop.f32.mrb[0].mxu0
      %v2993 = vadd.f32 0.0, %v2992
      %v2994 = vpop.f32.mrb[0].mxu0
      %2995 = vmatprep.mubr.bf16.mxu0 0
      %2996 = vmatmul.mubr.bf16.gmra.mrb[0].mxu0 %v2777
      %v2997 = vpop.f32.mrb[0].mxu0
      %v2998 = vadd.f32 0.0, %v2997
      %v2999 = vpop.f32.mrb[0].mxu0
      %v3000 = vpop.f32.mrb[0].mxu0
      %v3001 = vadd.f32 0.0, %v3000
      %v3002 = vpop.f32.mrb[0].mxu0
      %3003 = vdwg.mxu0
      %v3004 = vadd.f32 %v2742, %v2878
      %v3005 = vadd.f32 %v2743, %v2881
      %v3006 = vadd.f32 %v2744, %v2886
      %v3007 = vadd.f32 %v2745, %v2889
      %v3008 = vadd.f32 %v2746, %v2894
      %v3009 = vadd.f32 %v2747, %v2897
      %v3010 = vadd.f32 %v2748, %v2902
      %v3011 = vadd.f32 %v2749, %v2905
      %v3012 = vadd.f32 %v2750, %v2910
      %v3013 = vadd.f32 %v2751, %v2913
      %v3014 = vadd.f32 %v2752, %v2918
      %v3015 = vadd.f32 %v2753, %v2921
      %v3016 = vadd.f32 %v2754, %v2926
      %v3017 = vadd.f32 %v2755, %v2929
      %v3018 = vadd.f32 %v2756, %v2934
      %v3019 = vadd.f32 %v2757, %v2937
      %v3020 = vadd.f32 %v2758, %v2942
      %v3021 = vadd.f32 %v2759, %v2945
      %v3022 = vadd.f32 %v2760, %v2950
      %v3023 = vadd.f32 %v2761, %v2953
      %v3024 = vadd.f32 %v2762, %v2958
      %v3025 = vadd.f32 %v2763, %v2961
      %v3026 = vadd.f32 %v2764, %v2966
      %v3027 = vadd.f32 %v2765, %v2969
      %v3028 = vadd.f32 %v2766, %v2974
      %v3029 = vadd.f32 %v2767, %v2977
      %v3030 = vadd.f32 %v2768, %v2982
      %v3031 = vadd.f32 %v2769, %v2985
      %v3032 = vadd.f32 %v2770, %v2990
      %v3033 = vadd.f32 %v2771, %v2993
      %v3034 = vadd.f32 %v2772, %v2998
      %v3035 = vadd.f32 %v2773, %v3001
      %v3036 = vld [vmem:[%s456] sm:$0x1]
      %v3038 = vlaneseq
      %v3039 = vshrl.u32 %v3038, 7
      %v3040 = vsub.s32 0, %v3039
      %v3041 = vrot.slane %v3036, %v3040
      %v3043 = vmul.f32 %v3004, %v3041
      %v3044 = vmul.f32 %v3005, %v3041
      %v3045 = vmul.f32 %v3006, %v3041
      %v3046 = vmul.f32 %v3007, %v3041
      %v3047 = vmul.f32 %v3008, %v3041
      %v3048 = vmul.f32 %v3009, %v3041
      %v3049 = vmul.f32 %v3010, %v3041
      %v3050 = vmul.f32 %v3011, %v3041
      %v3051 = vmul.f32 %v3012, %v3041
      %v3052 = vmul.f32 %v3013, %v3041
      %v3053 = vmul.f32 %v3014, %v3041
      %v3054 = vmul.f32 %v3015, %v3041
      %v3055 = vmul.f32 %v3016, %v3041
      %v3056 = vmul.f32 %v3017, %v3041
      %v3057 = vmul.f32 %v3018, %v3041
      %v3058 = vmul.f32 %v3019, %v3041
      %v3059 = vmul.f32 %v3020, %v3041
      %v3060 = vmul.f32 %v3021, %v3041
      %v3061 = vmul.f32 %v3022, %v3041
      %v3062 = vmul.f32 %v3023, %v3041
      %v3063 = vmul.f32 %v3024, %v3041
      %v3064 = vmul.f32 %v3025, %v3041
      %v3065 = vmul.f32 %v3026, %v3041
      %v3066 = vmul.f32 %v3027, %v3041
      %v3067 = vmul.f32 %v3028, %v3041
      %v3068 = vmul.f32 %v3029, %v3041
      %v3069 = vmul.f32 %v3030, %v3041
      %v3070 = vmul.f32 %v3031, %v3041
      %v3071 = vmul.f32 %v3032, %v3041
      %v3072 = vmul.f32 %v3033, %v3041
      %v3073 = vmul.f32 %v3034, %v3041
      %v3074 = vmul.f32 %v3035, %v3041
      %3075 = vst [vmem:[%s466] sm:$0xff] %v3043
      %3076 = vst [vmem:[%s466 + $0x8] sm:$0xff] %v3044
      %3077 = vst [vmem:[%s466 + $0x10] sm:$0xff] %v3045
      %3078 = vst [vmem:[%s466 + $0x18] sm:$0xff] %v3046
      %3079 = vst [vmem:[%s466 + $0x20] sm:$0xff] %v3047
      %3080 = vst [vmem:[%s466 + $0x28] sm:$0xff] %v3048
      %3081 = vst [vmem:[%s466 + $0x30] sm:$0xff] %v3049
      %3082 = vst [vmem:[%s466 + $0x38] sm:$0xff] %v3050
      %3083 = vst [vmem:[%s466 + $0x40] sm:$0xff] %v3051
      %3084 = vst [vmem:[%s466 + $0x48] sm:$0xff] %v3052
      %3085 = vst [vmem:[%s466 + $0x50] sm:$0xff] %v3053
      %3086 = vst [vmem:[%s466 + $0x58] sm:$0xff] %v3054
      %3087 = vst [vmem:[%s466 + $0x60] sm:$0xff] %v3055
      %3088 = vst [vmem:[%s466 + $0x68] sm:$0xff] %v3056
      %3089 = vst [vmem:[%s466 + $0x70] sm:$0xff] %v3057
      %3090 = vst [vmem:[%s466 + $0x78] sm:$0xff] %v3058
      %3091 = vst [vmem:[%s466 + $0x80] sm:$0xff] %v3059
      %3092 = vst [vmem:[%s466 + $0x88] sm:$0xff] %v3060
      %3093 = vst [vmem:[%s466 + $0x90] sm:$0xff] %v3061
      %3094 = vst [vmem:[%s466 + $0x98] sm:$0xff] %v3062
      %3095 = vst [vmem:[%s466 + $0xa0] sm:$0xff] %v3063
      %3096 = vst [vmem:[%s466 + $0xa8] sm:$0xff] %v3064
      %3097 = vst [vmem:[%s466 + $0xb0] sm:$0xff] %v3065
      %3098 = vst [vmem:[%s466 + $0xb8] sm:$0xff] %v3066
      %3099 = vst [vmem:[%s466 + $0xc0] sm:$0xff] %v3067
      %3100 = vst [vmem:[%s466 + $0xc8] sm:$0xff] %v3068
      %3101 = vst [vmem:[%s466 + $0xd0] sm:$0xff] %v3069
      %3102 = vst [vmem:[%s466 + $0xd8] sm:$0xff] %v3070
      %3103 = vst [vmem:[%s466 + $0xe0] sm:$0xff] %v3071
      %3104 = vst [vmem:[%s466 + $0xe8] sm:$0xff] %v3072
      %3105 = vst [vmem:[%s466 + $0xf0] sm:$0xff] %v3073
      %3106 = vst [vmem:[%s466 + $0xf8] sm:$0xff] %v3074
      %v3107 = vadd.f32 %v3043, %v3044
      %v3108 = vadd.f32 %v3107, %v3045
      %v3109 = vadd.f32 %v3108, %v3046
      %v3110 = vadd.f32 %v3109, %v3047
      %v3111 = vadd.f32 %v3110, %v3048
      %v3112 = vadd.f32 %v3111, %v3049
      %v3113 = vadd.f32 %v3112, %v3050
      %v3114 = vadd.f32 %v3113, %v3051
      %v3115 = vadd.f32 %v3114, %v3052
      %v3116 = vadd.f32 %v3115, %v3053
      %v3117 = vadd.f32 %v3116, %v3054
      %v3118 = vadd.f32 %v3117, %v3055
      %v3119 = vadd.f32 %v3118, %v3056
      %v3120 = vadd.f32 %v3119, %v3057
      %v3121 = vadd.f32 %v3120, %v3058
      %v3122 = vadd.f32 %v3121, %v3059
      %v3123 = vadd.f32 %v3122, %v3060
      %v3124 = vadd.f32 %v3123, %v3061
      %v3125 = vadd.f32 %v3124, %v3062
      %v3126 = vadd.f32 %v3125, %v3063
      %v3127 = vadd.f32 %v3126, %v3064
      %v3128 = vadd.f32 %v3127, %v3065
      %v3129 = vadd.f32 %v3128, %v3066
      %v3130 = vadd.f32 %v3129, %v3067
      %v3131 = vadd.f32 %v3130, %v3068
      %v3132 = vadd.f32 %v3131, %v3069
      %v3133 = vadd.f32 %v3132, %v3070
      %v3134 = vadd.f32 %v3133, %v3071
      %v3135 = vadd.f32 %v3134, %v3072
      %v3136 = vadd.f32 %v3135, %v3073
      %v3137 = vadd.f32 %v3136, %v3074
      %v3138 = vrot.slane %v3137, 4
      %v3139 = vadd.f32 %v3137, %v3138
      %v3140 = vrot.slane %v3139, 2
      %v3141 = vadd.f32 %v3139, %v3140
      %v3142 = vrot.slane %v3141, 1
      %v3143 = vadd.f32 %v3141, %v3142
      %v3144 = vmul.f32 %v3043, %v3043
      %v3145 = vmul.f32 %v3044, %v3044
      %v3146 = vmul.f32 %v3045, %v3045
      %v3147 = vmul.f32 %v3046, %v3046
      %v3148 = vmul.f32 %v3047, %v3047
      %v3149 = vmul.f32 %v3048, %v3048
      %v3150 = vmul.f32 %v3049, %v3049
      %v3151 = vmul.f32 %v3050, %v3050
      %v3152 = vmul.f32 %v3051, %v3051
      %v3153 = vmul.f32 %v3052, %v3052
      %v3154 = vmul.f32 %v3053, %v3053
      %v3155 = vmul.f32 %v3054, %v3054
      %v3156 = vmul.f32 %v3055, %v3055
      %v3157 = vmul.f32 %v3056, %v3056
      %v3158 = vmul.f32 %v3057, %v3057
      %v3159 = vmul.f32 %v3058, %v3058
      %v3160 = vmul.f32 %v3059, %v3059
      %v3161 = vmul.f32 %v3060, %v3060
      %v3162 = vmul.f32 %v3061, %v3061
      %v3163 = vmul.f32 %v3062, %v3062
      %v3164 = vmul.f32 %v3063, %v3063
      %v3165 = vmul.f32 %v3064, %v3064
      %v3166 = vmul.f32 %v3065, %v3065
      %v3167 = vmul.f32 %v3066, %v3066
      %v3168 = vmul.f32 %v3067, %v3067
      %v3169 = vmul.f32 %v3068, %v3068
      %v3170 = vmul.f32 %v3069, %v3069
      %v3171 = vmul.f32 %v3070, %v3070
      %v3172 = vmul.f32 %v3071, %v3071
      %v3173 = vmul.f32 %v3072, %v3072
      %v3174 = vmul.f32 %v3073, %v3073
      %v3175 = vmul.f32 %v3074, %v3074
      %v3176 = vadd.f32 %v3144, %v3145
      %v3177 = vadd.f32 %v3176, %v3146
      %v3178 = vadd.f32 %v3177, %v3147
      %v3179 = vadd.f32 %v3178, %v3148
      %v3180 = vadd.f32 %v3179, %v3149
      %v3181 = vadd.f32 %v3180, %v3150
      %v3182 = vadd.f32 %v3181, %v3151
      %v3183 = vadd.f32 %v3182, %v3152
      %v3184 = vadd.f32 %v3183, %v3153
      %v3185 = vadd.f32 %v3184, %v3154
      %v3186 = vadd.f32 %v3185, %v3155
      %v3187 = vadd.f32 %v3186, %v3156
      %v3188 = vadd.f32 %v3187, %v3157
      %v3189 = vadd.f32 %v3188, %v3158
      %v3190 = vadd.f32 %v3189, %v3159
      %v3191 = vadd.f32 %v3190, %v3160
      %v3192 = vadd.f32 %v3191, %v3161
      %v3193 = vadd.f32 %v3192, %v3162
      %v3194 = vadd.f32 %v3193, %v3163
      %v3195 = vadd.f32 %v3194, %v3164
      %v3196 = vadd.f32 %v3195, %v3165
      %v3197 = vadd.f32 %v3196, %v3166
      %v3198 = vadd.f32 %v3197, %v3167
      %v3199 = vadd.f32 %v3198, %v3168
      %v3200 = vadd.f32 %v3199, %v3169
      %v3201 = vadd.f32 %v3200, %v3170
      %v3202 = vadd.f32 %v3201, %v3171
      %v3203 = vadd.f32 %v3202, %v3172
      %v3204 = vadd.f32 %v3203, %v3173
      %v3205 = vadd.f32 %v3204, %v3174
      %v3206 = vadd.f32 %v3205, %v3175
      %v3207 = vrot.slane %v3206, 4
      %v3208 = vadd.f32 %v3206, %v3207
      %v3209 = vrot.slane %v3208, 2
      %v3210 = vadd.f32 %v3208, %v3209
      %v3211 = vrot.slane %v3210, 1
      %v3212 = vadd.f32 %v3210, %v3211
      %p3213 = scmp.eq.s32.totalorder %s24, 0
      // Predicated region
      $region45: #{activated_resblock2d.9} parent=43 // pred_check
        %p3214 = pneg %p3213
      $region46: #{activated_resblock2d.9} parent=43 // pred_check_branch
        %3216 = sbr.rel (%p3214) target = $region48
      $region47: #{activated_resblock2d.9} parent=43 // pred_region
        %3217 = vst [vmem:[%s471] sm:$0x3] 0.0
      $region48: #{activated_resblock2d.9} parent=43 // pred_fallthru
        _
      %v3218 = vld [vmem:[%s471] sm:$0x3]
      %vm3219 = vcmask 1040384
      %v3220 = vsel %vm3219, %v3143, %v3212
      %v3221 = vadd.f32 %v3218, %v3220
      %3222 = vst [vmem:[%s471] sm:$0x3] %v3221
      %s3223 = smul.u32 16, %s24
      %p3224 = scmp.lt.s32.totalorder %s23, 1
      %s3225 = scalar_select %p3224, %s23, 1
      %p3226 = scmp.lt.s32.totalorder %s3223, 15
      %s3227 = scalar_select %p3226, %s3223, 15
      %s3228 = smul.addr %s3227, 2
      %s3229 = smul.addr %s3225, 32
      %s3230 = sadd.s32 %s3228, %s3229
      %s3231 = smul.addr %s3230, 8
      %s3232 = scalar_lea.vmem %s6, %s3231
      %p3233 = scmp.lt.s32.totalorder %s23, 1
      %s3234 = scalar_select %p3233, %s23, 1
      %s3235 = smul.addr %s3234, 2
      %s3236 = scalar_lea.vmem %s7, %s3235
      // Predicated region
      $region49: #{activated_resblock2d.9} parent=43 // pred_check
        %p3237 = pneg %p219
      $region50: #{activated_resblock2d.9} parent=43 // pred_check_branch
        %3239 = sbr.rel (%p3237) target = $region52
      $region51: #{activated_resblock2d.9} parent=43 // pred_region
        %s3240 = smul.u32 16, %s24
      $region52: #{activated_resblock2d.9} parent=43 // pred_fallthru
        _
      // Predicated region
      $region53: #{activated_resblock2d.9} parent=43 // pred_check
        %p3241 = pneg %p245
      $region54: #{activated_resblock2d.9} parent=43 // pred_check_branch
        %3243 = sbr.rel (%p3241) target = $region56
      $region55: #{activated_resblock2d.9} parent=43 // pred_region
        _
      $region56: #{activated_resblock2d.9} parent=43 // pred_fallthru
        _
    $region44: #{activated_resblock2d.9} parent=5 // pred_fallthru
      _
    %p3244 = scmp.le.s32.totalorder 2, %s14
    // Predicated region
    $region57: #{activated_resblock2d.9} parent=5 // pred_check
      %p3245 = pneg %p3244
    $region58: #{activated_resblock2d.9} parent=5 // pred_check_branch
      %3247 = sbr.rel (%p3245) target = $region60
    $region59: #{activated_resblock2d.9} parent=5 // pred_region
      %s3248 = ssub.s32 %s14, 2
      // Predicated region
      $region61: #{activated_resblock2d.9} parent=59 // pred_check
        %p3249 = pneg %p225
      $region62: #{activated_resblock2d.9} parent=59 // pred_check_branch
        %3251 = sbr.rel (%p3249) target = $region64
      $region63: #{activated_resblock2d.9} parent=59 // pred_region
        %s3252 = smul.u32 16, %s26
        %p3253 = scmp.lt.s32.totalorder %s25, 1
        %s3254 = scalar_select %p3253, %s25, 1
        %p3255 = scmp.lt.s32.totalorder %s3252, 15
        %s3256 = scalar_select %p3255, %s3252, 15
        %s3257 = smul.addr %s3256, 2
        %s3258 = smul.addr %s3254, 32
        %s3259 = sadd.s32 %s3257, %s3258
        %s3260 = smul.addr %s3259, 8
        %s3261 = scalar_lea.vmem %s6, %s3260
      $region64: #{activated_resblock2d.9} parent=59 // pred_fallthru
        _
      // Predicated region
      $region65: #{activated_resblock2d.9} parent=59 // pred_check
        %p3262 = pneg %p251
      $region66: #{activated_resblock2d.9} parent=59 // pred_check_branch
        %3264 = sbr.rel (%p3262) target = $region68
      $region67: #{activated_resblock2d.9} parent=59 // pred_region
        %p3265 = scmp.lt.s32.totalorder %s25, 1
        %s3266 = scalar_select %p3265, %s25, 1
        %s3267 = smul.addr %s3266, 2
        %s3268 = scalar_lea.vmem %s7, %s3267
      $region68: #{activated_resblock2d.9} parent=59 // pred_fallthru
        _
    $region60: #{activated_resblock2d.9} parent=5 // pred_fallthru
      _
  $region6: #{activated_resblock2d.9} parent=0 // loop_footer
    %s18 = sadd.s32 1, %s14
  $region7: #{activated_resblock2d.9} parent=0 // loop_footer_branch
    %13 = sbr.rel target = $region3
  $region8: #{activated_resblock2d.9} parent=0 // loop_exit
    _

// kernel: activated_resblock2d.11
$region0: #{activated_resblock2d.11}
  #allocation0 [shape = 'u32[]', space=smem, size = 0x4, offset = 0x4, fixed_abs, tag = 'smem constant byte address 0x4 - core index']
  #allocation1 [shape = 'u32[144,128]{1,0:T(1,128)}', space=vmem, size = 0x12000, scoped, tag = 'internal scratch']
  %s0 = inlined_call_operand.vmem [shape: f32[2,16,16,128], index: 0, kind: input, shape index: {}, may-alias: {0,1,2}]
  %s1 = inlined_call_operand.vmem [shape: f32[2,16,16,128], index: 1, kind: input, shape index: {}, may-alias: {0,1,2}]
  %s2 = inlined_call_operand.vmem [shape: f32[2,16,16,128], index: 2, kind: input, shape index: {}, may-alias: {0,1,2}]
  %s3 = inlined_call_operand.vmem [shape: bf16[9,128,128], index: 3, kind: input, shape index: {}]
  %s4 = inlined_call_operand.vmem [shape: f32[2,128], index: 4, kind: input, shape index: {}]
  %s5 = inlined_call_operand.vmem [shape: f32[2,1,128], index: 5, kind: input, shape index: {}]
  %s6 = inlined_call_operand.vmem [shape: f32[2,16,16,128], index: 6, kind: output, shape index: {0}]
  %s7 = inlined_call_operand.vmem [shape: f32[2,2,128], index: 7, kind: output, shape index: {1}]
  %8 = xla_tuple %s6, %s7
  %s9 = sld [smem:[#allocation0]]
  $region69: #{activated_resblock2d.11} parent=0
    _
  %s11 = ssub.s32 1, %s9
  %s12 = scalar_select 0, %s11, %s9
  loop: start=0, step=1, limit=4
  $region2: #{activated_resblock2d.11} parent=0 // loop_pre_header
    _
  $region3: #{activated_resblock2d.11} parent=0 // loop_header
    %s14 = sphi 0, %s18
    %p15 = scmp.ge.s32.totalorder %s14, 4
    %s21 = sphi 0, %s33
    %s22 = sphi 0, %s29
    %s23 = sphi 0, %s21
    %s24 = sphi 0, %s22
    %s25 = sphi 0, %s23
    %s26 = sphi 0, %s24
    %s46 = sphi 0, %s48
    %s49 = sphi 0, %s46
    %s50 = sphi 0, %s49
    %s66 = sphi 0, %s50
    %s74 = sphi 0, %s76
    %s77 = sphi 0, %s74
    %s78 = sphi 0, %s77
    %s94 = sphi 0, %s78
    %s110 = sphi 0, %s112
    %s113 = sphi 0, %s110
    %s114 = sphi 0, %s113
    %s130 = sphi 0, %s114
    %s134 = sphi 0, %s134
    %s136 = sphi 0, %s134
    %s137 = sphi 0, %s136
    %s151 = sphi 0, %s137
    %s155 = sphi 0, %s155
    %s157 = sphi 0, %s155
    %s158 = sphi 0, %s157
    %s172 = sphi 0, %s158
    %s178 = sphi 0, %s180
    %s181 = sphi 0, %s178
    %s182 = sphi 0, %s181
    %s198 = sphi 0, %s182
    %s206 = sphi 0, %s208
    %s209 = sphi 0, %s206
    %s210 = sphi 0, %s209
    %s226 = sphi 0, %s210
    %s232 = sphi 0, %s234
    %s235 = sphi 0, %s232
    %s236 = sphi 0, %s235
    %s252 = sphi 0, %s236
  $region4: #{activated_resblock2d.11} parent=0 // loop_header_branch
    %17 = sbr.rel (%p15) target = $region8
  $region5: #{activated_resblock2d.11} parent=0 // loop_body
    %s19 = ssub.s32 %s14, 1
    %s20 = ssub.s32 %s14, 2
    %s27 = sadd.s32 1, %s22
    %p28 = scmp.ge.s32.totalorder %s27, 1
    %s29 = scalar_select %p28, 0, %s27
    %s30 = sadd.s32 1, %s21
    %s31 = scalar_select %p28, %s30, %s21
    %p32 = scmp.ge.s32.totalorder %s31, 2
    %s33 = scalar_select %p32, 0, %s31
    %s34 = smul.u32 %s22, 16
    %s35 = ssub.s32 %s34, 1
    %p36 = scmp.gt.s32.totalorder %s35, 0
    %s37 = scalar_select %p36, %s35, 0
    %s38 = smul.u32 %s29, 16
    %s39 = ssub.s32 %s38, 1
    %p40 = scmp.gt.s32.totalorder %s39, 0
    %s41 = scalar_select %p40, %s39, 0
    %s42 = ssub.s32 %s21, %s33
    %s43 = ssub.s32 %s37, %s41
    %s44 = sor.u32 %s42, %s43
    %p45 = scmp.eq.s32.totalorder %s44, 0
    %s47 = sadd.s32 %s46, 1
    %s48 = scalar_select %p45, %s46, %s47
    %p51 = pneg %p45
    %p52 = scmp.eq.s32.totalorder %s14, 1
    %p53 = por %p51, %p52
    %p54 = scmp.ne.s32.totalorder %s46, %s49
    %p55 = scmp.eq.s32.totalorder %s14, 0
    %p56 = por %p54, %p55
    %p57 = scmp.ne.s32.totalorder %s46, %s49
    %p58 = scmp.eq.s32.totalorder %s19, 1
    %p59 = por %p57, %p58
    %p60 = scmp.ne.s32.totalorder %s49, %s50
    %p61 = scmp.eq.s32.totalorder %s19, 0
    %p62 = por %p60, %p61
    %p63 = scmp.ne.s32.totalorder %s49, %s50
    %p64 = scmp.eq.s32.totalorder %s20, 1
    %p65 = por %p63, %p64
    %p67 = scmp.ne.s32.totalorder %s50, %s66
    %p68 = scmp.eq.s32.totalorder %s20, 0
    %p69 = por %p67, %p68
    %s70 = ssub.s32 %s21, %s33
    %s71 = ssub.s32 %s22, %s29
    %s72 = sor.u32 %s70, %s71
    %p73 = scmp.eq.s32.totalorder %s72, 0
    %s75 = sadd.s32 %s74, 1
    %s76 = scalar_select %p73, %s74, %s75
    %p79 = pneg %p73
    %p80 = scmp.eq.s32.totalorder %s14, 1
    %p81 = por %p79, %p80
    %p82 = scmp.ne.s32.totalorder %s74, %s77
    %p83 = scmp.eq.s32.totalorder %s14, 0
    %p84 = por %p82, %p83
    %p85 = scmp.ne.s32.totalorder %s74, %s77
    %p86 = scmp.eq.s32.totalorder %s19, 1
    %p87 = por %p85, %p86
    %p88 = scmp.ne.s32.totalorder %s77, %s78
    %p89 = scmp.eq.s32.totalorder %s19, 0
    %p90 = por %p88, %p89
    %p91 = scmp.ne.s32.totalorder %s77, %s78
    %p92 = scmp.eq.s32.totalorder %s20, 1
    %p93 = por %p91, %p92
    %p95 = scmp.ne.s32.totalorder %s78, %s94
    %p96 = scmp.eq.s32.totalorder %s20, 0
    %p97 = por %p95, %p96
    %s98 = smul.u32 %s22, 16
    %s99 = sadd.s32 %s98, 16
    %p100 = scmp.lt.s32.totalorder %s99, 15
    %s101 = scalar_select %p100, %s99, 15
    %s102 = smul.u32 %s29, 16
    %s103 = sadd.s32 %s102, 16
    %p104 = scmp.lt.s32.totalorder %s103, 15
    %s105 = scalar_select %p104, %s103, 15
    %s106 = ssub.s32 %s21, %s33
    %s107 = ssub.s32 %s101, %s105
    %s108 = sor.u32 %s106, %s107
    %p109 = scmp.eq.s32.totalorder %s108, 0
    %s111 = sadd.s32 %s110, 1
    %s112 = scalar_select %p109, %s110, %s111
    %p115 = pneg %p109
    %p116 = scmp.eq.s32.totalorder %s14, 1
    %p117 = por %p115, %p116
    %p118 = scmp.ne.s32.totalorder %s110, %s113
    %p119 = scmp.eq.s32.totalorder %s14, 0
    %p120 = por %p118, %p119
    %p121 = scmp.ne.s32.totalorder %s110, %s113
    %p122 = scmp.eq.s32.totalorder %s19, 1
    %p123 = por %p121, %p122
    %p124 = scmp.ne.s32.totalorder %s113, %s114
    %p125 = scmp.eq.s32.totalorder %s19, 0
    %p126 = por %p124, %p125
    %p127 = scmp.ne.s32.totalorder %s113, %s114
    %p128 = scmp.eq.s32.totalorder %s20, 1
    %p129 = por %p127, %p128
    %p131 = scmp.ne.s32.totalorder %s114, %s130
    %p132 = scmp.eq.s32.totalorder %s20, 0
    %p133 = por %p131, %p132
    %s135 = sadd.s32 %s134, 1
    %p138 = scmp.eq.s32.totalorder %s14, 1
    %p139 = scmp.ne.s32.totalorder %s134, %s136
    %p140 = scmp.eq.s32.totalorder %s14, 0
    %p141 = por %p139, %p140
    %p142 = scmp.ne.s32.totalorder %s134, %s136
    %p143 = scmp.eq.s32.totalorder %s19, 1
    %p144 = por %p142, %p143
    %p145 = scmp.ne.s32.totalorder %s136, %s137
    %p146 = scmp.eq.s32.totalorder %s19, 0
    %p147 = por %p145, %p146
    %p148 = scmp.ne.s32.totalorder %s136, %s137
    %p149 = scmp.eq.s32.totalorder %s20, 1
    %p150 = por %p148, %p149
    %p152 = scmp.ne.s32.totalorder %s137, %s151
    %p153 = scmp.eq.s32.totalorder %s20, 0
    %p154 = por %p152, %p153
    %s156 = sadd.s32 %s155, 1
    %p159 = scmp.eq.s32.totalorder %s14, 1
    %p160 = scmp.ne.s32.totalorder %s155, %s157
    %p161 = scmp.eq.s32.totalorder %s14, 0
    %p162 = por %p160, %p161
    %p163 = scmp.ne.s32.totalorder %s155, %s157
    %p164 = scmp.eq.s32.totalorder %s19, 1
    %p165 = por %p163, %p164
    %p166 = scmp.ne.s32.totalorder %s157, %s158
    %p167 = scmp.eq.s32.totalorder %s19, 0
    %p168 = por %p166, %p167
    %p169 = scmp.ne.s32.totalorder %s157, %s158
    %p170 = scmp.eq.s32.totalorder %s20, 1
    %p171 = por %p169, %p170
    %p173 = scmp.ne.s32.totalorder %s158, %s172
    %p174 = scmp.eq.s32.totalorder %s20, 0
    %p175 = por %p173, %p174
    %s176 = ssub.s32 %s21, %s33
    %p177 = scmp.eq.s32.totalorder %s176, 0
    %s179 = sadd.s32 %s178, 1
    %s180 = scalar_select %p177, %s178, %s179
    %p183 = pneg %p177
    %p184 = scmp.eq.s32.totalorder %s14, 1
    %p185 = por %p183, %p184
    %p186 = scmp.ne.s32.totalorder %s178, %s181
    %p187 = scmp.eq.s32.totalorder %s14, 0
    %p188 = por %p186, %p187
    %p189 = scmp.ne.s32.totalorder %s178, %s181
    %p190 = scmp.eq.s32.totalorder %s19, 1
    %p191 = por %p189, %p190
    %p192 = scmp.ne.s32.totalorder %s181, %s182
    %p193 = scmp.eq.s32.totalorder %s19, 0
    %p194 = por %p192, %p193
    %p195 = scmp.ne.s32.totalorder %s181, %s182
    %p196 = scmp.eq.s32.totalorder %s20, 1
    %p197 = por %p195, %p196
    %p199 = scmp.ne.s32.totalorder %s182, %s198
    %p200 = scmp.eq.s32.totalorder %s20, 0
    %p201 = por %p199, %p200
    %s202 = ssub.s32 %s21, %s33
    %s203 = ssub.s32 %s22, %s29
    %s204 = sor.u32 %s202, %s203
    %p205 = scmp.eq.s32.totalorder %s204, 0
    %s207 = sadd.s32 %s206, 1
    %s208 = scalar_select %p205, %s206, %s207
    %p211 = pneg %p205
    %p212 = scmp.eq.s32.totalorder %s14, 1
    %p213 = por %p211, %p212
    %p214 = scmp.ne.s32.totalorder %s206, %s209
    %p215 = scmp.eq.s32.totalorder %s14, 0
    %p216 = por %p214, %p215
    %p217 = scmp.ne.s32.totalorder %s206, %s209
    %p218 = scmp.eq.s32.totalorder %s19, 1
    %p219 = por %p217, %p218
    %p220 = scmp.ne.s32.totalorder %s209, %s210
    %p221 = scmp.eq.s32.totalorder %s19, 0
    %p222 = por %p220, %p221
    %p223 = scmp.ne.s32.totalorder %s209, %s210
    %p224 = scmp.eq.s32.totalorder %s20, 1
    %p225 = por %p223, %p224
    %p227 = scmp.ne.s32.totalorder %s210, %s226
    %p228 = scmp.eq.s32.totalorder %s20, 0
    %p229 = por %p227, %p228
    %s230 = ssub.s32 %s21, %s33
    %p231 = scmp.eq.s32.totalorder %s230, 0
    %s233 = sadd.s32 %s232, 1
    %s234 = scalar_select %p231, %s232, %s233
    %p237 = pneg %p231
    %p238 = scmp.eq.s32.totalorder %s14, 1
    %p239 = por %p237, %p238
    %p240 = scmp.ne.s32.totalorder %s232, %s235
    %p241 = scmp.eq.s32.totalorder %s14, 0
    %p242 = por %p240, %p241
    %p243 = scmp.ne.s32.totalorder %s232, %s235
    %p244 = scmp.eq.s32.totalorder %s19, 1
    %p245 = por %p243, %p244
    %p246 = scmp.ne.s32.totalorder %s235, %s236
    %p247 = scmp.eq.s32.totalorder %s19, 0
    %p248 = por %p246, %p247
    %p249 = scmp.ne.s32.totalorder %s235, %s236
    %p250 = scmp.eq.s32.totalorder %s20, 1
    %p251 = por %p249, %p250
    %p253 = scmp.ne.s32.totalorder %s236, %s252
    %p254 = scmp.eq.s32.totalorder %s20, 0
    %p255 = por %p253, %p254
    %p256 = scmp.le.s32.totalorder 1, %s14
    %p257 = scmp.lt.s32.totalorder %s14, 3
    %p258 = pnand %p256, %p257
    %p259 = pneg %p258
    // Predicated region
    $region9: #{activated_resblock2d.11} parent=5 // pred_check
      _
    $region10: #{activated_resblock2d.11} parent=5 // pred_check_branch
      %261 = sbr.rel (%p258) target = $region12
    $region11: #{activated_resblock2d.11} parent=5 // pred_region
      %s262 = ssub.s32 %s14, 1
      // Predicated region
      $region13: #{activated_resblock2d.11} parent=11 // pred_check
        %p263 = pneg %p147
      $region14: #{activated_resblock2d.11} parent=11 // pred_check_branch
        %265 = sbr.rel (%p263) target = $region16
      $region15: #{activated_resblock2d.11} parent=11 // pred_region
        _
      $region16: #{activated_resblock2d.11} parent=11 // pred_fallthru
        _
      // Predicated region
      $region17: #{activated_resblock2d.11} parent=11 // pred_check
        %p266 = pneg %p168
      $region18: #{activated_resblock2d.11} parent=11 // pred_check_branch
        %268 = sbr.rel (%p266) target = $region20
      $region19: #{activated_resblock2d.11} parent=11 // pred_region
        _
      $region20: #{activated_resblock2d.11} parent=11 // pred_fallthru
        _
    $region12: #{activated_resblock2d.11} parent=5 // pred_fallthru
      _
    %p269 = scmp.lt.s32.totalorder %s14, 2
    // Predicated region
    $region21: #{activated_resblock2d.11} parent=5 // pred_check
      %p270 = pneg %p269
    $region22: #{activated_resblock2d.11} parent=5 // pred_check_branch
      %272 = sbr.rel (%p270) target = $region24
    $region23: #{activated_resblock2d.11} parent=5 // pred_region
      // Predicated region
      $region25: #{activated_resblock2d.11} parent=23 // pred_check
        %p273 = pneg %p56
      $region26: #{activated_resblock2d.11} parent=23 // pred_check_branch
        %275 = sbr.rel (%p273) target = $region28
      $region27: #{activated_resblock2d.11} parent=23 // pred_region
        %s276 = smul.u32 %s22, 16
        %s277 = ssub.s32 %s276, 1
        %p278 = scmp.gt.s32.totalorder %s277, 0
        %s279 = scalar_select %p278, %s277, 0
        %p280 = scmp.lt.s32.totalorder %s21, 1
        %s281 = scalar_select %p280, %s21, 1
        %p282 = scmp.lt.s32.totalorder %s279, 15
        %s283 = scalar_select %p282, %s279, 15
        %s284 = smul.addr %s283, 2
        %s285 = smul.addr %s281, 32
        %s286 = sadd.s32 %s284, %s285
        %s287 = smul.addr %s286, 8
        %s288 = scalar_lea.vmem %s0, %s287
        %s289 = smul.u32 %s22, 16
        %s290 = ssub.s32 %s289, 1
        %p291 = scmp.gt.s32.totalorder %s290, 0
        %s292 = scalar_select %p291, %s290, 0
      $region28: #{activated_resblock2d.11} parent=23 // pred_fallthru
        _
      // Predicated region
      $region29: #{activated_resblock2d.11} parent=23 // pred_check
        %p293 = pneg %p84
      $region30: #{activated_resblock2d.11} parent=23 // pred_check_branch
        %295 = sbr.rel (%p293) target = $region32
      $region31: #{activated_resblock2d.11} parent=23 // pred_region
        %s296 = smul.u32 16, %s22
        %p297 = scmp.lt.s32.totalorder %s21, 1
        %s298 = scalar_select %p297, %s21, 1
        %p299 = scmp.lt.s32.totalorder %s296, 15
        %s300 = scalar_select %p299, %s296, 15
        %s301 = smul.addr %s300, 2
        %s302 = smul.addr %s298, 32
        %s303 = sadd.s32 %s301, %s302
        %s304 = smul.addr %s303, 8
        %s305 = scalar_lea.vmem %s1, %s304
        %s306 = smul.u32 16, %s22
      $region32: #{activated_resblock2d.11} parent=23 // pred_fallthru
        _
      // Predicated region
      $region33: #{activated_resblock2d.11} parent=23 // pred_check
        %p307 = pneg %p120
      $region34: #{activated_resblock2d.11} parent=23 // pred_check_branch
        %309 = sbr.rel (%p307) target = $region36
      $region35: #{activated_resblock2d.11} parent=23 // pred_region
        %s310 = smul.u32 %s22, 16
        %s311 = sadd.s32 %s310, 16
        %p312 = scmp.lt.s32.totalorder %s311, 15
        %s313 = scalar_select %p312, %s311, 15
        %p314 = scmp.lt.s32.totalorder %s21, 1
        %s315 = scalar_select %p314, %s21, 1
        %p316 = scmp.lt.s32.totalorder %s313, 15
        %s317 = scalar_select %p316, %s313, 15
        %s318 = smul.addr %s317, 2
        %s319 = smul.addr %s315, 32
        %s320 = sadd.s32 %s318, %s319
        %s321 = smul.addr %s320, 8
        %s322 = scalar_lea.vmem %s2, %s321
        %s323 = smul.u32 %s22, 16
        %s324 = sadd.s32 %s323, 16
        %p325 = scmp.lt.s32.totalorder %s324, 15
        %s326 = scalar_select %p325, %s324, 15
      $region36: #{activated_resblock2d.11} parent=23 // pred_fallthru
        _
      // Predicated region
      $region37: #{activated_resblock2d.11} parent=23 // pred_check
        %p327 = pneg %p188
      $region38: #{activated_resblock2d.11} parent=23 // pred_check_branch
        %329 = sbr.rel (%p327) target = $region40
      $region39: #{activated_resblock2d.11} parent=23 // pred_region
        %p330 = scmp.lt.s32.totalorder %s21, 1
        %s331 = scalar_select %p330, %s21, 1
        %s332 = scalar_lea.vmem %s5, %s331
      $region40: #{activated_resblock2d.11} parent=23 // pred_fallthru
        _
    $region24: #{activated_resblock2d.11} parent=5 // pred_fallthru
      _
    %p333 = scmp.le.s32.totalorder 1, %s14
    %p334 = scmp.lt.s32.totalorder %s14, 3
    %p335 = pnand %p333, %p334
    %p336 = pneg %p335
    // Predicated region
    $region41: #{activated_resblock2d.11} parent=5 // pred_check
      _
    $region42: #{activated_resblock2d.11} parent=5 // pred_check_branch
      %338 = sbr.rel (%p335) target = $region44
    $region43: #{activated_resblock2d.11} parent=5 // pred_region
      %s339 = ssub.s32 %s14, 1
      %s340 = smul.u32 %s24, 16
      %s341 = ssub.s32 %s340, 1
      %p342 = scmp.gt.s32.totalorder %s341, 0
      %s343 = scalar_select %p342, %s341, 0
      %p344 = scmp.lt.s32.totalorder %s23, 1
      %s345 = scalar_select %p344, %s23, 1
      %p346 = scmp.lt.s32.totalorder %s343, 15
      %s347 = scalar_select %p346, %s343, 15
      %s348 = smul.addr %s347, 2
      %s349 = smul.addr %s345, 32
      %s350 = sadd.s32 %s348, %s349
      %s351 = smul.addr %s350, 8
      %s352 = scalar_lea.vmem %s0, %s351
      %p353 = pneg %p62
      %p354 = pneg %p59
      %s355 = smul.u32 16, %s24
      %p356 = scmp.lt.s32.totalorder %s23, 1
      %s357 = scalar_select %p356, %s23, 1
      %p358 = scmp.lt.s32.totalorder %s355, 15
      %s359 = scalar_select %p358, %s355, 15
      %s360 = smul.addr %s359, 2
      %s361 = smul.addr %s357, 32
      %s362 = sadd.s32 %s360, %s361
      %s363 = smul.addr %s362, 8
      %s364 = scalar_lea.vmem %s1, %s363
      %p365 = pneg %p90
      %p366 = pneg %p87
      %s367 = smul.u32 %s24, 16
      %s368 = sadd.s32 %s367, 16
      %p369 = scmp.lt.s32.totalorder %s368, 15
      %s370 = scalar_select %p369, %s368, 15
      %p371 = scmp.lt.s32.totalorder %s23, 1
      %s372 = scalar_select %p371, %s23, 1
      %p373 = scmp.lt.s32.totalorder %s370, 15
      %s374 = scalar_select %p373, %s370, 15
      %s375 = smul.addr %s374, 2
      %s376 = smul.addr %s372, 32
      %s377 = sadd.s32 %s375, %s376
      %s378 = smul.addr %s377, 8
      %s379 = scalar_lea.vmem %s2, %s378
      %p380 = pneg %p126
      %p381 = pneg %p123
      %p382 = pneg %p147
      %p383 = pneg %p144
      %p384 = pneg %p168
      %p385 = pneg %p165
      %p386 = scmp.lt.s32.totalorder %s23, 1
      %s387 = scalar_select %p386, %s23, 1
      %s388 = scalar_lea.vmem %s5, %s387
      %p389 = pneg %p194
      %p390 = pneg %p191
      %p391 = pneg %p222
      %p392 = pneg %p219
      %s393 = smul.u32 16, %s24
      %p394 = scmp.lt.s32.totalorder %s23, 1
      %s395 = scalar_select %p394, %s23, 1
      %p396 = scmp.lt.s32.totalorder %s393, 15
      %s397 = scalar_select %p396, %s393, 15
      %s398 = smul.addr %s397, 2
      %s399 = smul.addr %s395, 32
      %s400 = sadd.s32 %s398, %s399
      %s401 = smul.addr %s400, 8
      %s402 = scalar_lea.vmem %s6, %s401
      %p403 = pneg %p248
      %p404 = pneg %p245
      %p405 = scmp.lt.s32.totalorder %s23, 1
      %s406 = scalar_select %p405, %s23, 1
      %s407 = smul.addr %s406, 2
      %s408 = scalar_lea.vmem %s7, %s407
      %s409 = smul.u32 %s24, 16
      %s410 = ssub.s32 %s409, 1
      %p411 = scmp.gt.s32.totalorder %s410, 0
      %s412 = scalar_select %p411, %s410, 0
      %p413 = scmp.lt.s32.totalorder %s23, 1
      %s414 = scalar_select %p413, %s23, 1
      %p415 = scmp.lt.s32.totalorder %s412, 15
      %s416 = scalar_select %p415, %s412, 15
      %s417 = smul.addr %s416, 2
      %s418 = smul.addr %s414, 32
      %s419 = sadd.s32 %s417, %s418
      %s420 = smul.addr %s419, 8
      %s421 = scalar_lea.vmem %s0, %s420
      %s422 = smul.u32 %s24, 16
      %s423 = ssub.s32 %s422, 1
      %p424 = scmp.gt.s32.totalorder %s423, 0
      %s425 = scalar_select %p424, %s423, 0
      %s426 = smul.u32 16, %s24
      %p427 = scmp.lt.s32.totalorder %s23, 1
      %s428 = scalar_select %p427, %s23, 1
      %p429 = scmp.lt.s32.totalorder %s426, 15
      %s430 = scalar_select %p429, %s426, 15
      %s431 = smul.addr %s430, 2
      %s432 = smul.addr %s428, 32
      %s433 = sadd.s32 %s431, %s432
      %s434 = smul.addr %s433, 8
      %s435 = scalar_lea.vmem %s1, %s434
      %s436 = smul.u32 16, %s24
      %s437 = smul.u32 %s24, 16
      %s438 = sadd.s32 %s437, 16
      %p439 = scmp.lt.s32.totalorder %s438, 15
      %s440 = scalar_select %p439, %s438, 15
      %p441 = scmp.lt.s32.totalorder %s23, 1
      %s442 = scalar_select %p441, %s23, 1
      %p443 = scmp.lt.s32.totalorder %s440, 15
      %s444 = scalar_select %p443, %s440, 15
      %s445 = smul.addr %s444, 2
      %s446 = smul.addr %s442, 32
      %s447 = sadd.s32 %s445, %s446
      %s448 = smul.addr %s447, 8
      %s449 = scalar_lea.vmem %s2, %s448
      %s450 = smul.u32 %s24, 16
      %s451 = sadd.s32 %s450, 16
      %p452 = scmp.lt.s32.totalorder %s451, 15
      %s453 = scalar_select %p452, %s451, 15
      %p454 = scmp.lt.s32.totalorder %s23, 1
      %s455 = scalar_select %p454, %s23, 1
      %s456 = scalar_lea.vmem %s5, %s455
      %s457 = smul.u32 16, %s24
      %p458 = scmp.lt.s32.totalorder %s23, 1
      %s459 = scalar_select %p458, %s23, 1
      %p460 = scmp.lt.s32.totalorder %s457, 15
      %s461 = scalar_select %p460, %s457, 15
      %s462 = smul.addr %s461, 2
      %s463 = smul.addr %s459, 32
      %s464 = sadd.s32 %s462, %s463
      %s465 = smul.addr %s464, 8
      %s466 = scalar_lea.vmem %s6, %s465
      %s467 = smul.u32 16, %s24
      %p468 = scmp.lt.s32.totalorder %s23, 1
      %s469 = scalar_select %p468, %s23, 1
      %s470 = smul.addr %s469, 2
      %s471 = scalar_lea.vmem %s7, %s470
      %v473 = vld [vmem:[%s421] sm:$0xff]
      %v474 = vld [vmem:[%s421 + $0x8] sm:$0xff]
      %v475 = vld [vmem:[%s435] sm:$0xff]
      %v476 = vld [vmem:[%s435 + $0x8] sm:$0xff]
      %v477 = vld [vmem:[%s435 + $0x10] sm:$0xff]
      %v478 = vld [vmem:[%s435 + $0x18] sm:$0xff]
      %v479 = vld [vmem:[%s435 + $0x20] sm:$0xff]
      %v480 = vld [vmem:[%s435 + $0x28] sm:$0xff]
      %v481 = vld [vmem:[%s435 + $0x30] sm:$0xff]
      %v482 = vld [vmem:[%s435 + $0x38] sm:$0xff]
      %v483 = vld [vmem:[%s435 + $0x40] sm:$0xff]
      %v484 = vld [vmem:[%s435 + $0x48] sm:$0xff]
      %v485 = vld [vmem:[%s435 + $0x50] sm:$0xff]
      %v486 = vld [vmem:[%s435 + $0x58] sm:$0xff]
      %v487 = vld [vmem:[%s435 + $0x60] sm:$0xff]
      %v488 = vld [vmem:[%s435 + $0x68] sm:$0xff]
      %v489 = vld [vmem:[%s435 + $0x70] sm:$0xff]
      %v490 = vld [vmem:[%s435 + $0x78] sm:$0xff]
      %v491 = vld [vmem:[%s435 + $0x80] sm:$0xff]
      %v492 = vld [vmem:[%s435 + $0x88] sm:$0xff]
      %v493 = vld [vmem:[%s435 + $0x90] sm:$0xff]
      %v494 = vld [vmem:[%s435 + $0x98] sm:$0xff]
      %v495 = vld [vmem:[%s435 + $0xa0] sm:$0xff]
      %v496 = vld [vmem:[%s435 + $0xa8] sm:$0xff]
      %v497 = vld [vmem:[%s435 + $0xb0] sm:$0xff]
      %v498 = vld [vmem:[%s435 + $0xb8] sm:$0xff]
      %v499 = vld [vmem:[%s435 + $0xc0] sm:$0xff]
      %v500 = vld [vmem:[%s435 + $0xc8] sm:$0xff]
      %v501 = vld [vmem:[%s435 + $0xd0] sm:$0xff]
      %v502 = vld [vmem:[%s435 + $0xd8] sm:$0xff]
      %v503 = vld [vmem:[%s435 + $0xe0] sm:$0xff]
      %v504 = vld [vmem:[%s435 + $0xe8] sm:$0xff]
      %v505 = vld [vmem:[%s435 + $0xf0] sm:$0xff]
      %v506 = vld [vmem:[%s435 + $0xf8] sm:$0xff]
      %v507 = vld [vmem:[%s449] sm:$0xff]
      %v508 = vld [vmem:[%s449 + $0x8] sm:$0xff]
      %v509 = vld [vmem:[%s4] sm:$0x1]
      %v510 = vld [vmem:[%s4 + $0x1] sm:$0x1]
      %v511 = vlaneseq
      %v512 = vshrl.u32 %v511, 7
      %v513 = vsub.s32 0, %v512
      %v514 = vrot.slane %v509, %v513
      %v515 = vmul.f32 %v473, %v514
      %v516 = vmul.f32 %v474, %v514
      %v517 = vlaneseq
      %v518 = vshrl.u32 %v517, 7
      %v519 = vsub.s32 0, %v518
      %v520 = vrot.slane %v510, %v519
      %v521 = vadd.f32 %v515, %v520
      %v522 = vadd.f32 %v516, %v520
      %v523 = vmax.f32 %v521, 0.0
      %v524 = vmax.f32 %v522, 0.0
      %v525 = vmul.f32 %v475, %v514
      %v526 = vmul.f32 %v476, %v514
      %v527 = vmul.f32 %v477, %v514
      %v528 = vmul.f32 %v478, %v514
      %v529 = vmul.f32 %v479, %v514
      %v530 = vmul.f32 %v480, %v514
      %v531 = vmul.f32 %v481, %v514
      %v532 = vmul.f32 %v482, %v514
      %v533 = vmul.f32 %v483, %v514
      %v534 = vmul.f32 %v484, %v514
      %v535 = vmul.f32 %v485, %v514
      %v536 = vmul.f32 %v486, %v514
      %v537 = vmul.f32 %v487, %v514
      %v538 = vmul.f32 %v488, %v514
      %v539 = vmul.f32 %v489, %v514
      %v540 = vmul.f32 %v490, %v514
      %v541 = vmul.f32 %v491, %v514
      %v542 = vmul.f32 %v492, %v514
      %v543 = vmul.f32 %v493, %v514
      %v544 = vmul.f32 %v494, %v514
      %v545 = vmul.f32 %v495, %v514
      %v546 = vmul.f32 %v496, %v514
      %v547 = vmul.f32 %v497, %v514
      %v548 = vmul.f32 %v498, %v514
      %v549 = vmul.f32 %v499, %v514
      %v550 = vmul.f32 %v500, %v514
      %v551 = vmul.f32 %v501, %v514
      %v552 = vmul.f32 %v502, %v514
      %v553 = vmul.f32 %v503, %v514
      %v554 = vmul.f32 %v504, %v514
      %v555 = vmul.f32 %v505, %v514
      %v556 = vmul.f32 %v506, %v514
      %v557 = vadd.f32 %v525, %v520
      %v558 = vadd.f32 %v526, %v520
      %v559 = vadd.f32 %v527, %v520
      %v560 = vadd.f32 %v528, %v520
      %v561 = vadd.f32 %v529, %v520
      %v562 = vadd.f32 %v530, %v520
      %v563 = vadd.f32 %v531, %v520
      %v564 = vadd.f32 %v532, %v520
      %v565 = vadd.f32 %v533, %v520
      %v566 = vadd.f32 %v534, %v520
      %v567 = vadd.f32 %v535, %v520
      %v568 = vadd.f32 %v536, %v520
      %v569 = vadd.f32 %v537, %v520
      %v570 = vadd.f32 %v538, %v520
      %v571 = vadd.f32 %v539, %v520
      %v572 = vadd.f32 %v540, %v520
      %v573 = vadd.f32 %v541, %v520
      %v574 = vadd.f32 %v542, %v520
      %v575 = vadd.f32 %v543, %v520
      %v576 = vadd.f32 %v544, %v520
      %v577 = vadd.f32 %v545, %v520
      %v578 = vadd.f32 %v546, %v520
      %v579 = vadd.f32 %v547, %v520
      %v580 = vadd.f32 %v548, %v520
      %v581 = vadd.f32 %v549, %v520
      %v582 = vadd.f32 %v550, %v520
      %v583 = vadd.f32 %v551, %v520
      %v584 = vadd.f32 %v552, %v520
      %v585 = vadd.f32 %v553, %v520
      %v586 = vadd.f32 %v554, %v520
      %v587 = vadd.f32 %v555, %v520
      %v588 = vadd.f32 %v556, %v520
      %v589 = vmax.f32 %v557, 0.0
      %v590 = vmax.f32 %v558, 0.0
      %v591 = vmax.f32 %v559, 0.0
      %v592 = vmax.f32 %v560, 0.0
      %v593 = vmax.f32 %v561, 0.0
      %v594 = vmax.f32 %v562, 0.0
      %v595 = vmax.f32 %v563, 0.0
      %v596 = vmax.f32 %v564, 0.0
      %v597 = vmax.f32 %v565, 0.0
      %v598 = vmax.f32 %v566, 0.0
      %v599 = vmax.f32 %v567, 0.0
      %v600 = vmax.f32 %v568, 0.0
      %v601 = vmax.f32 %v569, 0.0
      %v602 = vmax.f32 %v570, 0.0
      %v603 = vmax.f32 %v571, 0.0
      %v604 = vmax.f32 %v572, 0.0
      %v605 = vmax.f32 %v573, 0.0
      %v606 = vmax.f32 %v574, 0.0
      %v607 = vmax.f32 %v575, 0.0
      %v608 = vmax.f32 %v576, 0.0
      %v609 = vmax.f32 %v577, 0.0
      %v610 = vmax.f32 %v578, 0.0
      %v611 = vmax.f32 %v579, 0.0
      %v612 = vmax.f32 %v580, 0.0
      %v613 = vmax.f32 %v581, 0.0
      %v614 = vmax.f32 %v582, 0.0
      %v615 = vmax.f32 %v583, 0.0
      %v616 = vmax.f32 %v584, 0.0
      %v617 = vmax.f32 %v585, 0.0
      %v618 = vmax.f32 %v586, 0.0
      %v619 = vmax.f32 %v587, 0.0
      %v620 = vmax.f32 %v588, 0.0
      %v621 = vmul.f32 %v507, %v514
      %v622 = vmul.f32 %v508, %v514
      %v623 = vadd.f32 %v621, %v520
      %v624 = vadd.f32 %v622, %v520
      %v625 = vmax.f32 %v623, 0.0
      %v626 = vmax.f32 %v624, 0.0
      %p627 = scmp.gt.s32.totalorder %s24, 0
      %s628 = scalar_select %p627, 1, 0
      %s629 = scvt.s32.f32 %s628
      %v630 = vstv %s629
      %v631 = vmul.f32 %v523, %v630
      %v632 = vmul.f32 %v524, %v630
      %p633 = scmp.lt.s32.totalorder %s24, 0
      %s634 = scalar_select %p633, 1, 0
      %s635 = scvt.s32.f32 %s634
      %v636 = vstv %s635
      %v637 = vmul.f32 %v625, %v636
      %v638 = vmul.f32 %v626, %v636
      %v639 = vpack.c.bf16 %v632, %v631
      %v640 = vpack.c.bf16 %v590, %v589
      %v641 = vpack.c.bf16 %v592, %v591
      %v642 = vpack.c.bf16 %v594, %v593
      %v643 = vpack.c.bf16 %v596, %v595
      %v644 = vpack.c.bf16 %v598, %v597
      %v645 = vpack.c.bf16 %v600, %v599
      %v646 = vpack.c.bf16 %v602, %v601
      %v647 = vpack.c.bf16 %v604, %v603
      %v648 = vpack.c.bf16 %v606, %v605
      %v649 = vpack.c.bf16 %v608, %v607
      %v650 = vpack.c.bf16 %v610, %v609
      %v651 = vpack.c.bf16 %v612, %v611
      %v652 = vpack.c.bf16 %v614, %v613
      %v653 = vpack.c.bf16 %v616, %v615
      %v654 = vpack.c.bf16 %v618, %v617
      %v655 = vpack.c.bf16 %v620, %v619
      %v656 = vpack.c.bf16 %v638, %v637
      %v658 = vshrl.u32 %v639, 16
      %v660 = vrot.slane %v658, 7
      %v661 = vshll.u32 %v639, 16
      %v663 = vor.u32 %v660, %v661
      %v665 = vshrl.u32 %v640, 16
      %v667 = vrot.slane %v665, 7
      %v668 = vshll.u32 %v640, 16
      %v670 = vor.u32 %v667, %v668
      %v672 = vshrl.u32 %v641, 16
      %v674 = vrot.slane %v672, 7
      %v675 = vshll.u32 %v641, 16
      %v677 = vor.u32 %v674, %v675
      %v679 = vshrl.u32 %v642, 16
      %v681 = vrot.slane %v679, 7
      %v682 = vshll.u32 %v642, 16
      %v684 = vor.u32 %v681, %v682
      %v686 = vshrl.u32 %v643, 16
      %v688 = vrot.slane %v686, 7
      %v689 = vshll.u32 %v643, 16
      %v691 = vor.u32 %v688, %v689
      %v693 = vshrl.u32 %v644, 16
      %v695 = vrot.slane %v693, 7
      %v696 = vshll.u32 %v644, 16
      %v698 = vor.u32 %v695, %v696
      %v700 = vshrl.u32 %v645, 16
      %v702 = vrot.slane %v700, 7
      %v703 = vshll.u32 %v645, 16
      %v705 = vor.u32 %v702, %v703
      %v707 = vshrl.u32 %v646, 16
      %v709 = vrot.slane %v707, 7
      %v710 = vshll.u32 %v646, 16
      %v712 = vor.u32 %v709, %v710
      %v714 = vshrl.u32 %v647, 16
      %v716 = vrot.slane %v714, 7
      %v717 = vshll.u32 %v647, 16
      %v719 = vor.u32 %v716, %v717
      %v721 = vshrl.u32 %v648, 16
      %v723 = vrot.slane %v721, 7
      %v724 = vshll.u32 %v648, 16
      %v726 = vor.u32 %v723, %v724
      %v728 = vshrl.u32 %v649, 16
      %v730 = vrot.slane %v728, 7
      %v731 = vshll.u32 %v649, 16
      %v733 = vor.u32 %v730, %v731
      %v735 = vshrl.u32 %v650, 16
      %v737 = vrot.slane %v735, 7
      %v738 = vshll.u32 %v650, 16
      %v740 = vor.u32 %v737, %v738
      %v742 = vshrl.u32 %v651, 16
      %v744 = vrot.slane %v742, 7
      %v745 = vshll.u32 %v651, 16
      %v747 = vor.u32 %v744, %v745
      %v749 = vshrl.u32 %v652, 16
      %v751 = vrot.slane %v749, 7
      %v752 = vshll.u32 %v652, 16
      %v754 = vor.u32 %v751, %v752
      %v756 = vshrl.u32 %v653, 16
      %v758 = vrot.slane %v756, 7
      %v759 = vshll.u32 %v653, 16
      %v761 = vor.u32 %v758, %v759
      %v763 = vshrl.u32 %v654, 16
      %v765 = vrot.slane %v763, 7
      %v766 = vshll.u32 %v654, 16
      %v768 = vor.u32 %v765, %v766
      %vm785 = vcmask 1040384
      %vm786 = vsmask.f32 256
      %vm787 = vmand %vm785, %vm786
      %v788 = vsel %vm787, 0, %v663
      %v789 = vsel %vm787, 0, %v670
      %v790 = vsel %vm787, 0, %v677
      %v791 = vsel %vm787, 0, %v684
      %v792 = vsel %vm787, 0, %v691
      %v793 = vsel %vm787, 0, %v698
      %v794 = vsel %vm787, 0, %v705
      %v795 = vsel %vm787, 0, %v712
      %v796 = vsel %vm787, 0, %v719
      %v797 = vsel %vm787, 0, %v726
      %v798 = vsel %vm787, 0, %v733
      %v799 = vsel %vm787, 0, %v740
      %v800 = vsel %vm787, 0, %v747
      %v801 = vsel %vm787, 0, %v754
      %v802 = vsel %vm787, 0, %v761
      %v803 = vsel %vm787, 0, %v768
      %v804 = vld [vmem:[%s3] sm:$0xf]
      %v805 = vld [vmem:[%s3 + $0x4] sm:$0xf]
      %v806 = vld [vmem:[%s3 + $0x8] sm:$0xf]
      %v807 = vld [vmem:[%s3 + $0xc] sm:$0xf]
      %v808 = vld [vmem:[%s3 + $0x10] sm:$0xf]
      %v809 = vld [vmem:[%s3 + $0x14] sm:$0xf]
      %v810 = vld [vmem:[%s3 + $0x18] sm:$0xf]
      %v811 = vld [vmem:[%s3 + $0x1c] sm:$0xf]
      %v812 = vld [vmem:[%s3 + $0x20] sm:$0xf]
      %v813 = vld [vmem:[%s3 + $0x24] sm:$0xf]
      %v814 = vld [vmem:[%s3 + $0x28] sm:$0xf]
      %v815 = vld [vmem:[%s3 + $0x2c] sm:$0xf]
      %v816 = vld [vmem:[%s3 + $0x30] sm:$0xf]
      %v817 = vld [vmem:[%s3 + $0x34] sm:$0xf]
      %v818 = vld [vmem:[%s3 + $0x38] sm:$0xf]
      %v819 = vld [vmem:[%s3 + $0x3c] sm:$0xf]
      %s820 = scalar_lea.vmem %s3, 64
      %v821 = vld [vmem:[%s820] sm:$0xf]
      %v822 = vld [vmem:[%s820 + $0x4] sm:$0xf]
      %v823 = vld [vmem:[%s820 + $0x8] sm:$0xf]
      %v824 = vld [vmem:[%s820 + $0xc] sm:$0xf]
      %v825 = vld [vmem:[%s820 + $0x10] sm:$0xf]
      %v826 = vld [vmem:[%s820 + $0x14] sm:$0xf]
      %v827 = vld [vmem:[%s820 + $0x18] sm:$0xf]
      %v828 = vld [vmem:[%s820 + $0x1c] sm:$0xf]
      %v829 = vld [vmem:[%s820 + $0x20] sm:$0xf]
      %v830 = vld [vmem:[%s820 + $0x24] sm:$0xf]
      %v831 = vld [vmem:[%s820 + $0x28] sm:$0xf]
      %v832 = vld [vmem:[%s820 + $0x2c] sm:$0xf]
      %v833 = vld [vmem:[%s820 + $0x30] sm:$0xf]
      %v834 = vld [vmem:[%s820 + $0x34] sm:$0xf]
      %v835 = vld [vmem:[%s820 + $0x38] sm:$0xf]
      %v836 = vld [vmem:[%s820 + $0x3c] sm:$0xf]
      %v853 = vunpack.c.l.b16 %v821
      %v854 = vunpack.c.l.b16 %v822
      %v855 = vunpack.c.l.b16 %v823
      %v856 = vunpack.c.l.b16 %v824
      %v857 = vunpack.c.l.b16 %v825
      %v858 = vunpack.c.l.b16 %v826
      %v859 = vunpack.c.l.b16 %v827
      %v860 = vunpack.c.l.b16 %v828
      %v861 = vunpack.c.l.b16 %v829
      %v862 = vunpack.c.l.b16 %v830
      %v863 = vunpack.c.l.b16 %v831
      %v864 = vunpack.c.l.b16 %v832
      %v865 = vunpack.c.l.b16 %v833
      %v866 = vunpack.c.l.b16 %v834
      %v867 = vunpack.c.l.b16 %v835
      %v868 = vunpack.c.l.b16 %v836
      %v869 = vpack.c.b16 %v854, %v853
      %v870 = vpack.c.b16 %v856, %v855
      %v871 = vpack.c.b16 %v858, %v857
      %v872 = vpack.c.b16 %v860, %v859
      %v873 = vpack.c.b16 %v862, %v861
      %v874 = vpack.c.b16 %v864, %v863
      %v875 = vpack.c.b16 %v866, %v865
      %v876 = vpack.c.b16 %v868, %v867
      %885 = vmatprep.subr.bf16.mxu0 0
      %886 = vmatpush1.bf16.msra.mxu0 %v869
      %887 = vmatprep.subr.bf16.mxu0 0
      %888 = vmatpush1.bf16.msra.mxu0 %v870
      %889 = vmatprep.subr.bf16.mxu0 0
      %890 = vmatpush1.bf16.msra.mxu0 %v871
      %891 = vmatprep.subr.bf16.mxu0 0
      %892 = vmatpush1.bf16.msra.mxu0 %v872
      %893 = vmatprep.subr.bf16.mxu0 0
      %894 = vmatpush1.bf16.msra.mxu0 %v873
      %895 = vmatprep.subr.bf16.mxu0 0
      %896 = vmatpush1.bf16.msra.mxu0 %v874
      %897 = vmatprep.subr.bf16.mxu0 0
      %898 = vmatpush1.bf16.msra.mxu0 %v875
      %899 = vmatprep.subr.bf16.mxu0 0
      %900 = vmatpush1.bf16.msra.mxu0 %v876
      %901 = vmatprep.subr.bf16.mxu0 0
      %902 = vmatpush1.bf16.msra.mxu0 0
      %903 = vmatprep.subr.bf16.mxu0 0
      %904 = vmatpush1.bf16.msra.mxu0 0
      %905 = vmatprep.subr.bf16.mxu0 0
      %906 = vmatpush1.bf16.msra.mxu0 0
      %907 = vmatprep.subr.bf16.mxu0 0
      %908 = vmatpush1.bf16.msra.mxu0 0
      %909 = vmatprep.subr.bf16.mxu0 0
      %910 = vmatpush1.bf16.msra.mxu0 0
      %911 = vmatprep.subr.bf16.mxu0 0
      %912 = vmatpush1.bf16.msra.mxu0 0
      %913 = vmatprep.subr.bf16.mxu0 0
      %914 = vmatpush1.bf16.msra.mxu0 0
      %915 = vmatprep.subr.bf16.mxu0 0
      %916 = vmatpush1.bf16.msra.mxu0 0
      %917 = vmatprep.mubr.bf16.mxu0 0
      %918 = vmatmul.mubr.bf16.gmra.mrb[0].mxu0 %v639
      %v919 = vpop.f32.mrb[0].mxu0
      %v920 = vadd.f32 0.0, %v919
      %v921 = vpop.f32.mrb[0].mxu0
      %v922 = vpop.f32.mrb[0].mxu0
      %v923 = vadd.f32 0.0, %v922
      %v924 = vpop.f32.mrb[0].mxu0
      %925 = vmatprep.mubr.bf16.mxu0 0
      %926 = vmatmul.mubr.bf16.gmra.mrb[0].mxu0 %v640
      %v927 = vpop.f32.mrb[0].mxu0
      %v928 = vadd.f32 0.0, %v927
      %v929 = vpop.f32.mrb[0].mxu0
      %v930 = vpop.f32.mrb[0].mxu0
      %v931 = vadd.f32 0.0, %v930
      %v932 = vpop.f32.mrb[0].mxu0
      %933 = vmatprep.mubr.bf16.mxu0 0
      %934 = vmatmul.mubr.bf16.gmra.mrb[0].mxu0 %v641
      %v935 = vpop.f32.mrb[0].mxu0
      %v936 = vadd.f32 0.0, %v935
      %v937 = vpop.f32.mrb[0].mxu0
      %v938 = vpop.f32.mrb[0].mxu0
      %v939 = vadd.f32 0.0, %v938
      %v940 = vpop.f32.mrb[0].mxu0
      %941 = vmatprep.mubr.bf16.mxu0 0
      %942 = vmatmul.mubr.bf16.gmra.mrb[0].mxu0 %v642
      %v943 = vpop.f32.mrb[0].mxu0
      %v944 = vadd.f32 0.0, %v943
      %v945 = vpop.f32.mrb[0].mxu0
      %v946 = vpop.f32.mrb[0].mxu0
      %v947 = vadd.f32 0.0, %v946
      %v948 = vpop.f32.mrb[0].mxu0
      %949 = vmatprep.mubr.bf16.mxu0 0
      %950 = vmatmul.mubr.bf16.gmra.mrb[0].mxu0 %v643
      %v951 = vpop.f32.mrb[0].mxu0
      %v952 = vadd.f32 0.0, %v951
      %v953 = vpop.f32.mrb[0].mxu0
      %v954 = vpop.f32.mrb[0].mxu0
      %v955 = vadd.f32 0.0, %v954
      %v956 = vpop.f32.mrb[0].mxu0
      %957 = vmatprep.mubr.bf16.mxu0 0
      %958 = vmatmul.mubr.bf16.gmra.mrb[0].mxu0 %v644
      %v959 = vpop.f32.mrb[0].mxu0
      %v960 = vadd.f32 0.0, %v959
      %v961 = vpop.f32.mrb[0].mxu0
      %v962 = vpop.f32.mrb[0].mxu0
      %v963 = vadd.f32 0.0, %v962
      %v964 = vpop.f32.mrb[0].mxu0
      %965 = vmatprep.mubr.bf16.mxu0 0
      %966 = vmatmul.mubr.bf16.gmra.mrb[0].mxu0 %v645
      %v967 = vpop.f32.mrb[0].mxu0
      %v968 = vadd.f32 0.0, %v967
      %v969 = vpop.f32.mrb[0].mxu0
      %v970 = vpop.f32.mrb[0].mxu0
      %v971 = vadd.f32 0.0, %v970
      %v972 = vpop.f32.mrb[0].mxu0
      %973 = vmatprep.mubr.bf16.mxu0 0
      %974 = vmatmul.mubr.bf16.gmra.mrb[0].mxu0 %v646
      %v975 = vpop.f32.mrb[0].mxu0
      %v976 = vadd.f32 0.0, %v975
      %v977 = vpop.f32.mrb[0].mxu0
      %v978 = vpop.f32.mrb[0].mxu0
      %v979 = vadd.f32 0.0, %v978
      %v980 = vpop.f32.mrb[0].mxu0
      %981 = vmatprep.mubr.bf16.mxu0 0
      %982 = vmatmul.mubr.bf16.gmra.mrb[0].mxu0 %v647
      %v983 = vpop.f32.mrb[0].mxu0
      %v984 = vadd.f32 0.0, %v983
      %v985 = vpop.f32.mrb[0].mxu0
      %v986 = vpop.f32.mrb[0].mxu0
      %v987 = vadd.f32 0.0, %v986
      %v988 = vpop.f32.mrb[0].mxu0
      %989 = vmatprep.mubr.bf16.mxu0 0
      %990 = vmatmul.mubr.bf16.gmra.mrb[0].mxu0 %v648
      %v991 = vpop.f32.mrb[0].mxu0
      %v992 = vadd.f32 0.0, %v991
      %v993 = vpop.f32.mrb[0].mxu0
      %v994 = vpop.f32.mrb[0].mxu0
      %v995 = vadd.f32 0.0, %v994
      %v996 = vpop.f32.mrb[0].mxu0
      %997 = vmatprep.mubr.bf16.mxu0 0
      %998 = vmatmul.mubr.bf16.gmra.mrb[0].mxu0 %v649
      %v999 = vpop.f32.mrb[0].mxu0
      %v1000 = vadd.f32 0.0, %v999
      %v1001 = vpop.f32.mrb[0].mxu0
      %v1002 = vpop.f32.mrb[0].mxu0
      %v1003 = vadd.f32 0.0, %v1002
      %v1004 = vpop.f32.mrb[0].mxu0
      %1005 = vmatprep.mubr.bf16.mxu0 0
      %1006 = vmatmul.mubr.bf16.gmra.mrb[0].mxu0 %v650
      %v1007 = vpop.f32.mrb[0].mxu0
      %v1008 = vadd.f32 0.0, %v1007
      %v1009 = vpop.f32.mrb[0].mxu0
      %v1010 = vpop.f32.mrb[0].mxu0
      %v1011 = vadd.f32 0.0, %v1010
      %v1012 = vpop.f32.mrb[0].mxu0
      %1013 = vmatprep.mubr.bf16.mxu0 0
      %1014 = vmatmul.mubr.bf16.gmra.mrb[0].mxu0 %v651
      %v1015 = vpop.f32.mrb[0].mxu0
      %v1016 = vadd.f32 0.0, %v1015
      %v1017 = vpop.f32.mrb[0].mxu0
      %v1018 = vpop.f32.mrb[0].mxu0
      %v1019 = vadd.f32 0.0, %v1018
      %v1020 = vpop.f32.mrb[0].mxu0
      %1021 = vmatprep.mubr.bf16.mxu0 0
      %1022 = vmatmul.mubr.bf16.gmra.mrb[0].mxu0 %v652
      %v1023 = vpop.f32.mrb[0].mxu0
      %v1024 = vadd.f32 0.0, %v1023
      %v1025 = vpop.f32.mrb[0].mxu0
      %v1026 = vpop.f32.mrb[0].mxu0
      %v1027 = vadd.f32 0.0, %v1026
      %v1028 = vpop.f32.mrb[0].mxu0
      %1029 = vmatprep.mubr.bf16.mxu0 0
      %1030 = vmatmul.mubr.bf16.gmra.mrb[0].mxu0 %v653
      %v1031 = vpop.f32.mrb[0].mxu0
      %v1032 = vadd.f32 0.0, %v1031
      %v1033 = vpop.f32.mrb[0].mxu0
      %v1034 = vpop.f32.mrb[0].mxu0
      %v1035 = vadd.f32 0.0, %v1034
      %v1036 = vpop.f32.mrb[0].mxu0
      %1037 = vmatprep.mubr.bf16.mxu0 0
      %1038 = vmatmul.mubr.bf16.gmra.mrb[0].mxu0 %v654
      %v1039 = vpop.f32.mrb[0].mxu0
      %v1040 = vadd.f32 0.0, %v1039
      %v1041 = vpop.f32.mrb[0].mxu0
      %v1042 = vpop.f32.mrb[0].mxu0
      %v1043 = vadd.f32 0.0, %v1042
      %v1044 = vpop.f32.mrb[0].mxu0
      %1045 = vdwg.mxu0
      %v1062 = vunpack.c.l.b16 %v804
      %v1063 = vunpack.c.l.b16 %v805
      %v1064 = vunpack.c.l.b16 %v806
      %v1065 = vunpack.c.l.b16 %v807
      %v1066 = vunpack.c.l.b16 %v808
      %v1067 = vunpack.c.l.b16 %v809
      %v1068 = vunpack.c.l.b16 %v810
      %v1069 = vunpack.c.l.b16 %v811
      %v1070 = vunpack.c.l.b16 %v812
      %v1071 = vunpack.c.l.b16 %v813
      %v1072 = vunpack.c.l.b16 %v814
      %v1073 = vunpack.c.l.b16 %v815
      %v1074 = vunpack.c.l.b16 %v816
      %v1075 = vunpack.c.l.b16 %v817
      %v1076 = vunpack.c.l.b16 %v818
      %v1077 = vunpack.c.l.b16 %v819
      %v1078 = vpack.c.b16 %v1063, %v1062
      %v1079 = vpack.c.b16 %v1065, %v1064
      %v1080 = vpack.c.b16 %v1067, %v1066
      %v1081 = vpack.c.b16 %v1069, %v1068
      %v1082 = vpack.c.b16 %v1071, %v1070
      %v1083 = vpack.c.b16 %v1073, %v1072
      %v1084 = vpack.c.b16 %v1075, %v1074
      %v1085 = vpack.c.b16 %v1077, %v1076
      %1094 = vmatprep.subr.bf16.mxu0 0
      %1095 = vmatpush1.bf16.msra.mxu0 %v1078
      %1096 = vmatprep.subr.bf16.mxu0 0
      %1097 = vmatpush1.bf16.msra.mxu0 %v1079
      %1098 = vmatprep.subr.bf16.mxu0 0
      %1099 = vmatpush1.bf16.msra.mxu0 %v1080
      %1100 = vmatprep.subr.bf16.mxu0 0
      %1101 = vmatpush1.bf16.msra.mxu0 %v1081
      %1102 = vmatprep.subr.bf16.mxu0 0
      %1103 = vmatpush1.bf16.msra.mxu0 %v1082
      %1104 = vmatprep.subr.bf16.mxu0 0
      %1105 = vmatpush1.bf16.msra.mxu0 %v1083
      %1106 = vmatprep.subr.bf16.mxu0 0
      %1107 = vmatpush1.bf16.msra.mxu0 %v1084
      %1108 = vmatprep.subr.bf16.mxu0 0
      %1109 = vmatpush1.bf16.msra.mxu0 %v1085
      %1110 = vmatprep.subr.bf16.mxu0 0
      %1111 = vmatpush1.bf16.msra.mxu0 0
      %1112 = vmatprep.subr.bf16.mxu0 0
      %1113 = vmatpush1.bf16.msra.mxu0 0
      %1114 = vmatprep.subr.bf16.mxu0 0
      %1115 = vmatpush1.bf16.msra.mxu0 0
      %1116 = vmatprep.subr.bf16.mxu0 0
      %1117 = vmatpush1.bf16.msra.mxu0 0
      %1118 = vmatprep.subr.bf16.mxu0 0
      %1119 = vmatpush1.bf16.msra.mxu0 0
      %1120 = vmatprep.subr.bf16.mxu0 0
      %1121 = vmatpush1.bf16.msra.mxu0 0
      %1122 = vmatprep.subr.bf16.mxu0 0
      %1123 = vmatpush1.bf16.msra.mxu0 0
      %1124 = vmatprep.subr.bf16.mxu0 0
      %1125 = vmatpush1.bf16.msra.mxu0 0
      %1126 = vmatprep.mubr.bf16.mxu0 0
      %1127 = vmatmul.mubr.bf16.gmra.mrb[0].mxu0 %v788
      %v1128 = vpop.f32.mrb[0].mxu0
      %v1129 = vadd.f32 %v920, %v1128
      %v1130 = vpop.f32.mrb[0].mxu0
      %v1131 = vpop.f32.mrb[0].mxu0
      %v1132 = vadd.f32 %v923, %v1131
      %v1133 = vpop.f32.mrb[0].mxu0
      %1134 = vmatprep.mubr.bf16.mxu0 0
      %1135 = vmatmul.mubr.bf16.gmra.mrb[0].mxu0 %v789
      %v1136 = vpop.f32.mrb[0].mxu0
      %v1137 = vadd.f32 %v928, %v1136
      %v1138 = vpop.f32.mrb[0].mxu0
      %v1139 = vpop.f32.mrb[0].mxu0
      %v1140 = vadd.f32 %v931, %v1139
      %v1141 = vpop.f32.mrb[0].mxu0
      %1142 = vmatprep.mubr.bf16.mxu0 0
      %1143 = vmatmul.mubr.bf16.gmra.mrb[0].mxu0 %v790
      %v1144 = vpop.f32.mrb[0].mxu0
      %v1145 = vadd.f32 %v936, %v1144
      %v1146 = vpop.f32.mrb[0].mxu0
      %v1147 = vpop.f32.mrb[0].mxu0
      %v1148 = vadd.f32 %v939, %v1147
      %v1149 = vpop.f32.mrb[0].mxu0
      %1150 = vmatprep.mubr.bf16.mxu0 0
      %1151 = vmatmul.mubr.bf16.gmra.mrb[0].mxu0 %v791
      %v1152 = vpop.f32.mrb[0].mxu0
      %v1153 = vadd.f32 %v944, %v1152
      %v1154 = vpop.f32.mrb[0].mxu0
      %v1155 = vpop.f32.mrb[0].mxu0
      %v1156 = vadd.f32 %v947, %v1155
      %v1157 = vpop.f32.mrb[0].mxu0
      %1158 = vmatprep.mubr.bf16.mxu0 0
      %1159 = vmatmul.mubr.bf16.gmra.mrb[0].mxu0 %v792
      %v1160 = vpop.f32.mrb[0].mxu0
      %v1161 = vadd.f32 %v952, %v1160
      %v1162 = vpop.f32.mrb[0].mxu0
      %v1163 = vpop.f32.mrb[0].mxu0
      %v1164 = vadd.f32 %v955, %v1163
      %v1165 = vpop.f32.mrb[0].mxu0
      %1166 = vmatprep.mubr.bf16.mxu0 0
      %1167 = vmatmul.mubr.bf16.gmra.mrb[0].mxu0 %v793
      %v1168 = vpop.f32.mrb[0].mxu0
      %v1169 = vadd.f32 %v960, %v1168
      %v1170 = vpop.f32.mrb[0].mxu0
      %v1171 = vpop.f32.mrb[0].mxu0
      %v1172 = vadd.f32 %v963, %v1171
      %v1173 = vpop.f32.mrb[0].mxu0
      %1174 = vmatprep.mubr.bf16.mxu0 0
      %1175 = vmatmul.mubr.bf16.gmra.mrb[0].mxu0 %v794
      %v1176 = vpop.f32.mrb[0].mxu0
      %v1177 = vadd.f32 %v968, %v1176
      %v1178 = vpop.f32.mrb[0].mxu0
      %v1179 = vpop.f32.mrb[0].mxu0
      %v1180 = vadd.f32 %v971, %v1179
      %v1181 = vpop.f32.mrb[0].mxu0
      %1182 = vmatprep.mubr.bf16.mxu0 0
      %1183 = vmatmul.mubr.bf16.gmra.mrb[0].mxu0 %v795
      %v1184 = vpop.f32.mrb[0].mxu0
      %v1185 = vadd.f32 %v976, %v1184
      %v1186 = vpop.f32.mrb[0].mxu0
      %v1187 = vpop.f32.mrb[0].mxu0
      %v1188 = vadd.f32 %v979, %v1187
      %v1189 = vpop.f32.mrb[0].mxu0
      %1190 = vmatprep.mubr.bf16.mxu0 0
      %1191 = vmatmul.mubr.bf16.gmra.mrb[0].mxu0 %v796
      %v1192 = vpop.f32.mrb[0].mxu0
      %v1193 = vadd.f32 %v984, %v1192
      %v1194 = vpop.f32.mrb[0].mxu0
      %v1195 = vpop.f32.mrb[0].mxu0
      %v1196 = vadd.f32 %v987, %v1195
      %v1197 = vpop.f32.mrb[0].mxu0
      %1198 = vmatprep.mubr.bf16.mxu0 0
      %1199 = vmatmul.mubr.bf16.gmra.mrb[0].mxu0 %v797
      %v1200 = vpop.f32.mrb[0].mxu0
      %v1201 = vadd.f32 %v992, %v1200
      %v1202 = vpop.f32.mrb[0].mxu0
      %v1203 = vpop.f32.mrb[0].mxu0
      %v1204 = vadd.f32 %v995, %v1203
      %v1205 = vpop.f32.mrb[0].mxu0
      %1206 = vmatprep.mubr.bf16.mxu0 0
      %1207 = vmatmul.mubr.bf16.gmra.mrb[0].mxu0 %v798
      %v1208 = vpop.f32.mrb[0].mxu0
      %v1209 = vadd.f32 %v1000, %v1208
      %v1210 = vpop.f32.mrb[0].mxu0
      %v1211 = vpop.f32.mrb[0].mxu0
      %v1212 = vadd.f32 %v1003, %v1211
      %v1213 = vpop.f32.mrb[0].mxu0
      %1214 = vmatprep.mubr.bf16.mxu0 0
      %1215 = vmatmul.mubr.bf16.gmra.mrb[0].mxu0 %v799
      %v1216 = vpop.f32.mrb[0].mxu0
      %v1217 = vadd.f32 %v1008, %v1216
      %v1218 = vpop.f32.mrb[0].mxu0
      %v1219 = vpop.f32.mrb[0].mxu0
      %v1220 = vadd.f32 %v1011, %v1219
      %v1221 = vpop.f32.mrb[0].mxu0
      %1222 = vmatprep.mubr.bf16.mxu0 0
      %1223 = vmatmul.mubr.bf16.gmra.mrb[0].mxu0 %v800
      %v1224 = vpop.f32.mrb[0].mxu0
      %v1225 = vadd.f32 %v1016, %v1224
      %v1226 = vpop.f32.mrb[0].mxu0
      %v1227 = vpop.f32.mrb[0].mxu0
      %v1228 = vadd.f32 %v1019, %v1227
      %v1229 = vpop.f32.mrb[0].mxu0
      %1230 = vmatprep.mubr.bf16.mxu0 0
      %1231 = vmatmul.mubr.bf16.gmra.mrb[0].mxu0 %v801
      %v1232 = vpop.f32.mrb[0].mxu0
      %v1233 = vadd.f32 %v1024, %v1232
      %v1234 = vpop.f32.mrb[0].mxu0
      %v1235 = vpop.f32.mrb[0].mxu0
      %v1236 = vadd.f32 %v1027, %v1235
      %v1237 = vpop.f32.mrb[0].mxu0
      %1238 = vmatprep.mubr.bf16.mxu0 0
      %1239 = vmatmul.mubr.bf16.gmra.mrb[0].mxu0 %v802
      %v1240 = vpop.f32.mrb[0].mxu0
      %v1241 = vadd.f32 %v1032, %v1240
      %v1242 = vpop.f32.mrb[0].mxu0
      %v1243 = vpop.f32.mrb[0].mxu0
      %v1244 = vadd.f32 %v1035, %v1243
      %v1245 = vpop.f32.mrb[0].mxu0
      %1246 = vmatprep.mubr.bf16.mxu0 0
      %1247 = vmatmul.mubr.bf16.gmra.mrb[0].mxu0 %v803
      %v1248 = vpop.f32.mrb[0].mxu0
      %v1249 = vadd.f32 %v1040, %v1248
      %v1250 = vpop.f32.mrb[0].mxu0
      %v1251 = vpop.f32.mrb[0].mxu0
      %v1252 = vadd.f32 %v1043, %v1251
      %v1253 = vpop.f32.mrb[0].mxu0
      %1254 = vdwg.mxu0
      %v1255 = vrot.slane %v661, 1
      %v1256 = vor.u32 %v658, %v1255
      %v1257 = vrot.slane %v668, 1
      %v1258 = vor.u32 %v665, %v1257
      %v1259 = vrot.slane %v675, 1
      %v1260 = vor.u32 %v672, %v1259
      %v1261 = vrot.slane %v682, 1
      %v1262 = vor.u32 %v679, %v1261
      %v1263 = vrot.slane %v689, 1
      %v1264 = vor.u32 %v686, %v1263
      %v1265 = vrot.slane %v696, 1
      %v1266 = vor.u32 %v693, %v1265
      %v1267 = vrot.slane %v703, 1
      %v1268 = vor.u32 %v700, %v1267
      %v1269 = vrot.slane %v710, 1
      %v1270 = vor.u32 %v707, %v1269
      %v1271 = vrot.slane %v717, 1
      %v1272 = vor.u32 %v714, %v1271
      %v1273 = vrot.slane %v724, 1
      %v1274 = vor.u32 %v721, %v1273
      %v1275 = vrot.slane %v731, 1
      %v1276 = vor.u32 %v728, %v1275
      %v1277 = vrot.slane %v738, 1
      %v1278 = vor.u32 %v735, %v1277
      %v1279 = vrot.slane %v745, 1
      %v1280 = vor.u32 %v742, %v1279
      %v1281 = vrot.slane %v752, 1
      %v1282 = vor.u32 %v749, %v1281
      %v1283 = vrot.slane %v759, 1
      %v1284 = vor.u32 %v756, %v1283
      %v1285 = vrot.slane %v766, 1
      %v1286 = vor.u32 %v763, %v1285
      %vm1303 = vcmask 1047552
      %vm1304 = vsmask.f32 7424
      %vm1305 = vmand %vm1303, %vm1304
      %v1306 = vsel %vm1305, %v1256, 0
      %v1307 = vsel %vm1305, %v1258, 0
      %v1308 = vsel %vm1305, %v1260, 0
      %v1309 = vsel %vm1305, %v1262, 0
      %v1310 = vsel %vm1305, %v1264, 0
      %v1311 = vsel %vm1305, %v1266, 0
      %v1312 = vsel %vm1305, %v1268, 0
      %v1313 = vsel %vm1305, %v1270, 0
      %v1314 = vsel %vm1305, %v1272, 0
      %v1315 = vsel %vm1305, %v1274, 0
      %v1316 = vsel %vm1305, %v1276, 0
      %v1317 = vsel %vm1305, %v1278, 0
      %v1318 = vsel %vm1305, %v1280, 0
      %v1319 = vsel %vm1305, %v1282, 0
      %v1320 = vsel %vm1305, %v1284, 0
      %v1321 = vsel %vm1305, %v1286, 0
      %s1322 = scalar_lea.vmem %s3, 128
      %v1323 = vld [vmem:[%s1322] sm:$0xf]
      %v1324 = vld [vmem:[%s1322 + $0x4] sm:$0xf]
      %v1325 = vld [vmem:[%s1322 + $0x8] sm:$0xf]
      %v1326 = vld [vmem:[%s1322 + $0xc] sm:$0xf]
      %v1327 = vld [vmem:[%s1322 + $0x10] sm:$0xf]
      %v1328 = vld [vmem:[%s1322 + $0x14] sm:$0xf]
      %v1329 = vld [vmem:[%s1322 + $0x18] sm:$0xf]
      %v1330 = vld [vmem:[%s1322 + $0x1c] sm:$0xf]
      %v1331 = vld [vmem:[%s1322 + $0x20] sm:$0xf]
      %v1332 = vld [vmem:[%s1322 + $0x24] sm:$0xf]
      %v1333 = vld [vmem:[%s1322 + $0x28] sm:$0xf]
      %v1334 = vld [vmem:[%s1322 + $0x2c] sm:$0xf]
      %v1335 = vld [vmem:[%s1322 + $0x30] sm:$0xf]
      %v1336 = vld [vmem:[%s1322 + $0x34] sm:$0xf]
      %v1337 = vld [vmem:[%s1322 + $0x38] sm:$0xf]
      %v1338 = vld [vmem:[%s1322 + $0x3c] sm:$0xf]
      %v1355 = vunpack.c.l.b16 %v1323
      %v1356 = vunpack.c.l.b16 %v1324
      %v1357 = vunpack.c.l.b16 %v1325
      %v1358 = vunpack.c.l.b16 %v1326
      %v1359 = vunpack.c.l.b16 %v1327
      %v1360 = vunpack.c.l.b16 %v1328
      %v1361 = vunpack.c.l.b16 %v1329
      %v1362 = vunpack.c.l.b16 %v1330
      %v1363 = vunpack.c.l.b16 %v1331
      %v1364 = vunpack.c.l.b16 %v1332
      %v1365 = vunpack.c.l.b16 %v1333
      %v1366 = vunpack.c.l.b16 %v1334
      %v1367 = vunpack.c.l.b16 %v1335
      %v1368 = vunpack.c.l.b16 %v1336
      %v1369 = vunpack.c.l.b16 %v1337
      %v1370 = vunpack.c.l.b16 %v1338
      %v1371 = vpack.c.b16 %v1356, %v1355
      %v1372 = vpack.c.b16 %v1358, %v1357
      %v1373 = vpack.c.b16 %v1360, %v1359
      %v1374 = vpack.c.b16 %v1362, %v1361
      %v1375 = vpack.c.b16 %v1364, %v1363
      %v1376 = vpack.c.b16 %v1366, %v1365
      %v1377 = vpack.c.b16 %v1368, %v1367
      %v1378 = vpack.c.b16 %v1370, %v1369
      %1387 = vmatprep.subr.bf16.mxu0 0
      %1388 = vmatpush1.bf16.msra.mxu0 %v1371
      %1389 = vmatprep.subr.bf16.mxu0 0
      %1390 = vmatpush1.bf16.msra.mxu0 %v1372
      %1391 = vmatprep.subr.bf16.mxu0 0
      %1392 = vmatpush1.bf16.msra.mxu0 %v1373
      %1393 = vmatprep.subr.bf16.mxu0 0
      %1394 = vmatpush1.bf16.msra.mxu0 %v1374
      %1395 = vmatprep.subr.bf16.mxu0 0
      %1396 = vmatpush1.bf16.msra.mxu0 %v1375
      %1397 = vmatprep.subr.bf16.mxu0 0
      %1398 = vmatpush1.bf16.msra.mxu0 %v1376
      %1399 = vmatprep.subr.bf16.mxu0 0
      %1400 = vmatpush1.bf16.msra.mxu0 %v1377
      %1401 = vmatprep.subr.bf16.mxu0 0
      %1402 = vmatpush1.bf16.msra.mxu0 %v1378
      %1403 = vmatprep.subr.bf16.mxu0 0
      %1404 = vmatpush1.bf16.msra.mxu0 0
      %1405 = vmatprep.subr.bf16.mxu0 0
      %1406 = vmatpush1.bf16.msra.mxu0 0
      %1407 = vmatprep.subr.bf16.mxu0 0
      %1408 = vmatpush1.bf16.msra.mxu0 0
      %1409 = vmatprep.subr.bf16.mxu0 0
      %1410 = vmatpush1.bf16.msra.mxu0 0
      %1411 = vmatprep.subr.bf16.mxu0 0
      %1412 = vmatpush1.bf16.msra.mxu0 0
      %1413 = vmatprep.subr.bf16.mxu0 0
      %1414 = vmatpush1.bf16.msra.mxu0 0
      %1415 = vmatprep.subr.bf16.mxu0 0
      %1416 = vmatpush1.bf16.msra.mxu0 0
      %1417 = vmatprep.subr.bf16.mxu0 0
      %1418 = vmatpush1.bf16.msra.mxu0 0
      %1419 = vmatprep.mubr.bf16.mxu0 0
      %1420 = vmatmul.mubr.bf16.gmra.mrb[0].mxu0 %v1306
      %v1421 = vpop.f32.mrb[0].mxu0
      %v1422 = vadd.f32 0.0, %v1421
      %v1423 = vpop.f32.mrb[0].mxu0
      %v1424 = vpop.f32.mrb[0].mxu0
      %v1425 = vadd.f32 0.0, %v1424
      %v1426 = vpop.f32.mrb[0].mxu0
      %1427 = vmatprep.mubr.bf16.mxu0 0
      %1428 = vmatmul.mubr.bf16.gmra.mrb[0].mxu0 %v1307
      %v1429 = vpop.f32.mrb[0].mxu0
      %v1430 = vadd.f32 0.0, %v1429
      %v1431 = vpop.f32.mrb[0].mxu0
      %v1432 = vpop.f32.mrb[0].mxu0
      %v1433 = vadd.f32 0.0, %v1432
      %v1434 = vpop.f32.mrb[0].mxu0
      %1435 = vmatprep.mubr.bf16.mxu0 0
      %1436 = vmatmul.mubr.bf16.gmra.mrb[0].mxu0 %v1308
      %v1437 = vpop.f32.mrb[0].mxu0
      %v1438 = vadd.f32 0.0, %v1437
      %v1439 = vpop.f32.mrb[0].mxu0
      %v1440 = vpop.f32.mrb[0].mxu0
      %v1441 = vadd.f32 0.0, %v1440
      %v1442 = vpop.f32.mrb[0].mxu0
      %1443 = vmatprep.mubr.bf16.mxu0 0
      %1444 = vmatmul.mubr.bf16.gmra.mrb[0].mxu0 %v1309
      %v1445 = vpop.f32.mrb[0].mxu0
      %v1446 = vadd.f32 0.0, %v1445
      %v1447 = vpop.f32.mrb[0].mxu0
      %v1448 = vpop.f32.mrb[0].mxu0
      %v1449 = vadd.f32 0.0, %v1448
      %v1450 = vpop.f32.mrb[0].mxu0
      %1451 = vmatprep.mubr.bf16.mxu0 0
      %1452 = vmatmul.mubr.bf16.gmra.mrb[0].mxu0 %v1310
      %v1453 = vpop.f32.mrb[0].mxu0
      %v1454 = vadd.f32 0.0, %v1453
      %v1455 = vpop.f32.mrb[0].mxu0
      %v1456 = vpop.f32.mrb[0].mxu0
      %v1457 = vadd.f32 0.0, %v1456
      %v1458 = vpop.f32.mrb[0].mxu0
      %1459 = vmatprep.mubr.bf16.mxu0 0
      %1460 = vmatmul.mubr.bf16.gmra.mrb[0].mxu0 %v1311
      %v1461 = vpop.f32.mrb[0].mxu0
      %v1462 = vadd.f32 0.0, %v1461
      %v1463 = vpop.f32.mrb[0].mxu0
      %v1464 = vpop.f32.mrb[0].mxu0
      %v1465 = vadd.f32 0.0, %v1464
      %v1466 = vpop.f32.mrb[0].mxu0
      %1467 = vmatprep.mubr.bf16.mxu0 0
      %1468 = vmatmul.mubr.bf16.gmra.mrb[0].mxu0 %v1312
      %v1469 = vpop.f32.mrb[0].mxu0
      %v1470 = vadd.f32 0.0, %v1469
      %v1471 = vpop.f32.mrb[0].mxu0
      %v1472 = vpop.f32.mrb[0].mxu0
      %v1473 = vadd.f32 0.0, %v1472
      %v1474 = vpop.f32.mrb[0].mxu0
      %1475 = vmatprep.mubr.bf16.mxu0 0
      %1476 = vmatmul.mubr.bf16.gmra.mrb[0].mxu0 %v1313
      %v1477 = vpop.f32.mrb[0].mxu0
      %v1478 = vadd.f32 0.0, %v1477
      %v1479 = vpop.f32.mrb[0].mxu0
      %v1480 = vpop.f32.mrb[0].mxu0
      %v1481 = vadd.f32 0.0, %v1480
      %v1482 = vpop.f32.mrb[0].mxu0
      %1483 = vmatprep.mubr.bf16.mxu0 0
      %1484 = vmatmul.mubr.bf16.gmra.mrb[0].mxu0 %v1314
      %v1485 = vpop.f32.mrb[0].mxu0
      %v1486 = vadd.f32 0.0, %v1485
      %v1487 = vpop.f32.mrb[0].mxu0
      %v1488 = vpop.f32.mrb[0].mxu0
      %v1489 = vadd.f32 0.0, %v1488
      %v1490 = vpop.f32.mrb[0].mxu0
      %1491 = vmatprep.mubr.bf16.mxu0 0
      %1492 = vmatmul.mubr.bf16.gmra.mrb[0].mxu0 %v1315
      %v1493 = vpop.f32.mrb[0].mxu0
      %v1494 = vadd.f32 0.0, %v1493
      %v1495 = vpop.f32.mrb[0].mxu0
      %v1496 = vpop.f32.mrb[0].mxu0
      %v1497 = vadd.f32 0.0, %v1496
      %v1498 = vpop.f32.mrb[0].mxu0
      %1499 = vmatprep.mubr.bf16.mxu0 0
      %1500 = vmatmul.mubr.bf16.gmra.mrb[0].mxu0 %v1316
      %v1501 = vpop.f32.mrb[0].mxu0
      %v1502 = vadd.f32 0.0, %v1501
      %v1503 = vpop.f32.mrb[0].mxu0
      %v1504 = vpop.f32.mrb[0].mxu0
      %v1505 = vadd.f32 0.0, %v1504
      %v1506 = vpop.f32.mrb[0].mxu0
      %1507 = vmatprep.mubr.bf16.mxu0 0
      %1508 = vmatmul.mubr.bf16.gmra.mrb[0].mxu0 %v1317
      %v1509 = vpop.f32.mrb[0].mxu0
      %v1510 = vadd.f32 0.0, %v1509
      %v1511 = vpop.f32.mrb[0].mxu0
      %v1512 = vpop.f32.mrb[0].mxu0
      %v1513 = vadd.f32 0.0, %v1512
      %v1514 = vpop.f32.mrb[0].mxu0
      %1515 = vmatprep.mubr.bf16.mxu0 0
      %1516 = vmatmul.mubr.bf16.gmra.mrb[0].mxu0 %v1318
      %v1517 = vpop.f32.mrb[0].mxu0
      %v1518 = vadd.f32 0.0, %v1517
      %v1519 = vpop.f32.mrb[0].mxu0
      %v1520 = vpop.f32.mrb[0].mxu0
      %v1521 = vadd.f32 0.0, %v1520
      %v1522 = vpop.f32.mrb[0].mxu0
      %1523 = vmatprep.mubr.bf16.mxu0 0
      %1524 = vmatmul.mubr.bf16.gmra.mrb[0].mxu0 %v1319
      %v1525 = vpop.f32.mrb[0].mxu0
      %v1526 = vadd.f32 0.0, %v1525
      %v1527 = vpop.f32.mrb[0].mxu0
      %v1528 = vpop.f32.mrb[0].mxu0
      %v1529 = vadd.f32 0.0, %v1528
      %v1530 = vpop.f32.mrb[0].mxu0
      %1531 = vmatprep.mubr.bf16.mxu0 0
      %1532 = vmatmul.mubr.bf16.gmra.mrb[0].mxu0 %v1320
      %v1533 = vpop.f32.mrb[0].mxu0
      %v1534 = vadd.f32 0.0, %v1533
      %v1535 = vpop.f32.mrb[0].mxu0
      %v1536 = vpop.f32.mrb[0].mxu0
      %v1537 = vadd.f32 0.0, %v1536
      %v1538 = vpop.f32.mrb[0].mxu0
      %1539 = vmatprep.mubr.bf16.mxu0 0
      %1540 = vmatmul.mubr.bf16.gmra.mrb[0].mxu0 %v1321
      %v1541 = vpop.f32.mrb[0].mxu0
      %v1542 = vadd.f32 0.0, %v1541
      %v1543 = vpop.f32.mrb[0].mxu0
      %v1544 = vpop.f32.mrb[0].mxu0
      %v1545 = vadd.f32 0.0, %v1544
      %v1546 = vpop.f32.mrb[0].mxu0
      %1547 = vdwg.mxu0
      %v1548 = vadd.f32 %v1129, %v1422
      %v1549 = vadd.f32 %v1132, %v1425
      %v1550 = vadd.f32 %v1137, %v1430
      %v1551 = vadd.f32 %v1140, %v1433
      %v1552 = vadd.f32 %v1145, %v1438
      %v1553 = vadd.f32 %v1148, %v1441
      %v1554 = vadd.f32 %v1153, %v1446
      %v1555 = vadd.f32 %v1156, %v1449
      %v1556 = vadd.f32 %v1161, %v1454
      %v1557 = vadd.f32 %v1164, %v1457
      %v1558 = vadd.f32 %v1169, %v1462
      %v1559 = vadd.f32 %v1172, %v1465
      %v1560 = vadd.f32 %v1177, %v1470
      %v1561 = vadd.f32 %v1180, %v1473
      %v1562 = vadd.f32 %v1185, %v1478
      %v1563 = vadd.f32 %v1188, %v1481
      %v1564 = vadd.f32 %v1193, %v1486
      %v1565 = vadd.f32 %v1196, %v1489
      %v1566 = vadd.f32 %v1201, %v1494
      %v1567 = vadd.f32 %v1204, %v1497
      %v1568 = vadd.f32 %v1209, %v1502
      %v1569 = vadd.f32 %v1212, %v1505
      %v1570 = vadd.f32 %v1217, %v1510
      %v1571 = vadd.f32 %v1220, %v1513
      %v1572 = vadd.f32 %v1225, %v1518
      %v1573 = vadd.f32 %v1228, %v1521
      %v1574 = vadd.f32 %v1233, %v1526
      %v1575 = vadd.f32 %v1236, %v1529
      %v1576 = vadd.f32 %v1241, %v1534
      %v1577 = vadd.f32 %v1244, %v1537
      %v1578 = vadd.f32 %v1249, %v1542
      %v1579 = vadd.f32 %v1252, %v1545
      %v1581 = vshrl.u32 %v655, 16
      %v1583 = vrot.slane %v1581, 7
      %v1584 = vshll.u32 %v655, 16
      %v1586 = vor.u32 %v1583, %v1584
      %v1588 = vsel %vm787, 0, %v1586
      %s1589 = scalar_lea.vmem %s3, 192
      %v1590 = vld [vmem:[%s1589] sm:$0xf]
      %v1591 = vld [vmem:[%s1589 + $0x4] sm:$0xf]
      %v1592 = vld [vmem:[%s1589 + $0x8] sm:$0xf]
      %v1593 = vld [vmem:[%s1589 + $0xc] sm:$0xf]
      %v1594 = vld [vmem:[%s1589 + $0x10] sm:$0xf]
      %v1595 = vld [vmem:[%s1589 + $0x14] sm:$0xf]
      %v1596 = vld [vmem:[%s1589 + $0x18] sm:$0xf]
      %v1597 = vld [vmem:[%s1589 + $0x1c] sm:$0xf]
      %v1598 = vld [vmem:[%s1589 + $0x20] sm:$0xf]
      %v1599 = vld [vmem:[%s1589 + $0x24] sm:$0xf]
      %v1600 = vld [vmem:[%s1589 + $0x28] sm:$0xf]
      %v1601 = vld [vmem:[%s1589 + $0x2c] sm:$0xf]
      %v1602 = vld [vmem:[%s1589 + $0x30] sm:$0xf]
      %v1603 = vld [vmem:[%s1589 + $0x34] sm:$0xf]
      %v1604 = vld [vmem:[%s1589 + $0x38] sm:$0xf]
      %v1605 = vld [vmem:[%s1589 + $0x3c] sm:$0xf]
      %v1622 = vunpack.c.l.b16 %v1590
      %v1623 = vunpack.c.l.b16 %v1591
      %v1624 = vunpack.c.l.b16 %v1592
      %v1625 = vunpack.c.l.b16 %v1593
      %v1626 = vunpack.c.l.b16 %v1594
      %v1627 = vunpack.c.l.b16 %v1595
      %v1628 = vunpack.c.l.b16 %v1596
      %v1629 = vunpack.c.l.b16 %v1597
      %v1630 = vunpack.c.l.b16 %v1598
      %v1631 = vunpack.c.l.b16 %v1599
      %v1632 = vunpack.c.l.b16 %v1600
      %v1633 = vunpack.c.l.b16 %v1601
      %v1634 = vunpack.c.l.b16 %v1602
      %v1635 = vunpack.c.l.b16 %v1603
      %v1636 = vunpack.c.l.b16 %v1604
      %v1637 = vunpack.c.l.b16 %v1605
      %v1638 = vpack.c.b16 %v1623, %v1622
      %v1639 = vpack.c.b16 %v1625, %v1624
      %v1640 = vpack.c.b16 %v1627, %v1626
      %v1641 = vpack.c.b16 %v1629, %v1628
      %v1642 = vpack.c.b16 %v1631, %v1630
      %v1643 = vpack.c.b16 %v1633, %v1632
      %v1644 = vpack.c.b16 %v1635, %v1634
      %v1645 = vpack.c.b16 %v1637, %v1636
      %1654 = vmatprep.subr.bf16.mxu0 0
      %1655 = vmatpush1.bf16.msra.mxu0 %v1638
      %1656 = vmatprep.subr.bf16.mxu0 0
      %1657 = vmatpush1.bf16.msra.mxu0 %v1639
      %1658 = vmatprep.subr.bf16.mxu0 0
      %1659 = vmatpush1.bf16.msra.mxu0 %v1640
      %1660 = vmatprep.subr.bf16.mxu0 0
      %1661 = vmatpush1.bf16.msra.mxu0 %v1641
      %1662 = vmatprep.subr.bf16.mxu0 0
      %1663 = vmatpush1.bf16.msra.mxu0 %v1642
      %1664 = vmatprep.subr.bf16.mxu0 0
      %1665 = vmatpush1.bf16.msra.mxu0 %v1643
      %1666 = vmatprep.subr.bf16.mxu0 0
      %1667 = vmatpush1.bf16.msra.mxu0 %v1644
      %1668 = vmatprep.subr.bf16.mxu0 0
      %1669 = vmatpush1.bf16.msra.mxu0 %v1645
      %1670 = vmatprep.subr.bf16.mxu0 0
      %1671 = vmatpush1.bf16.msra.mxu0 0
      %1672 = vmatprep.subr.bf16.mxu0 0
      %1673 = vmatpush1.bf16.msra.mxu0 0
      %1674 = vmatprep.subr.bf16.mxu0 0
      %1675 = vmatpush1.bf16.msra.mxu0 0
      %1676 = vmatprep.subr.bf16.mxu0 0
      %1677 = vmatpush1.bf16.msra.mxu0 0
      %1678 = vmatprep.subr.bf16.mxu0 0
      %1679 = vmatpush1.bf16.msra.mxu0 0
      %1680 = vmatprep.subr.bf16.mxu0 0
      %1681 = vmatpush1.bf16.msra.mxu0 0
      %1682 = vmatprep.subr.bf16.mxu0 0
      %1683 = vmatpush1.bf16.msra.mxu0 0
      %1684 = vmatprep.subr.bf16.mxu0 0
      %1685 = vmatpush1.bf16.msra.mxu0 0
      %1686 = vmatprep.mubr.bf16.mxu0 0
      %1687 = vmatmul.mubr.bf16.gmra.mrb[0].mxu0 %v789
      %v1688 = vpop.f32.mrb[0].mxu0
      %v1689 = vadd.f32 0.0, %v1688
      %v1690 = vpop.f32.mrb[0].mxu0
      %v1691 = vpop.f32.mrb[0].mxu0
      %v1692 = vadd.f32 0.0, %v1691
      %v1693 = vpop.f32.mrb[0].mxu0
      %1694 = vmatprep.mubr.bf16.mxu0 0
      %1695 = vmatmul.mubr.bf16.gmra.mrb[0].mxu0 %v790
      %v1696 = vpop.f32.mrb[0].mxu0
      %v1697 = vadd.f32 0.0, %v1696
      %v1698 = vpop.f32.mrb[0].mxu0
      %v1699 = vpop.f32.mrb[0].mxu0
      %v1700 = vadd.f32 0.0, %v1699
      %v1701 = vpop.f32.mrb[0].mxu0
      %1702 = vmatprep.mubr.bf16.mxu0 0
      %1703 = vmatmul.mubr.bf16.gmra.mrb[0].mxu0 %v791
      %v1704 = vpop.f32.mrb[0].mxu0
      %v1705 = vadd.f32 0.0, %v1704
      %v1706 = vpop.f32.mrb[0].mxu0
      %v1707 = vpop.f32.mrb[0].mxu0
      %v1708 = vadd.f32 0.0, %v1707
      %v1709 = vpop.f32.mrb[0].mxu0
      %1710 = vmatprep.mubr.bf16.mxu0 0
      %1711 = vmatmul.mubr.bf16.gmra.mrb[0].mxu0 %v792
      %v1712 = vpop.f32.mrb[0].mxu0
      %v1713 = vadd.f32 0.0, %v1712
      %v1714 = vpop.f32.mrb[0].mxu0
      %v1715 = vpop.f32.mrb[0].mxu0
      %v1716 = vadd.f32 0.0, %v1715
      %v1717 = vpop.f32.mrb[0].mxu0
      %1718 = vmatprep.mubr.bf16.mxu0 0
      %1719 = vmatmul.mubr.bf16.gmra.mrb[0].mxu0 %v793
      %v1720 = vpop.f32.mrb[0].mxu0
      %v1721 = vadd.f32 0.0, %v1720
      %v1722 = vpop.f32.mrb[0].mxu0
      %v1723 = vpop.f32.mrb[0].mxu0
      %v1724 = vadd.f32 0.0, %v1723
      %v1725 = vpop.f32.mrb[0].mxu0
      %1726 = vmatprep.mubr.bf16.mxu0 0
      %1727 = vmatmul.mubr.bf16.gmra.mrb[0].mxu0 %v794
      %v1728 = vpop.f32.mrb[0].mxu0
      %v1729 = vadd.f32 0.0, %v1728
      %v1730 = vpop.f32.mrb[0].mxu0
      %v1731 = vpop.f32.mrb[0].mxu0
      %v1732 = vadd.f32 0.0, %v1731
      %v1733 = vpop.f32.mrb[0].mxu0
      %1734 = vmatprep.mubr.bf16.mxu0 0
      %1735 = vmatmul.mubr.bf16.gmra.mrb[0].mxu0 %v795
      %v1736 = vpop.f32.mrb[0].mxu0
      %v1737 = vadd.f32 0.0, %v1736
      %v1738 = vpop.f32.mrb[0].mxu0
      %v1739 = vpop.f32.mrb[0].mxu0
      %v1740 = vadd.f32 0.0, %v1739
      %v1741 = vpop.f32.mrb[0].mxu0
      %1742 = vmatprep.mubr.bf16.mxu0 0
      %1743 = vmatmul.mubr.bf16.gmra.mrb[0].mxu0 %v796
      %v1744 = vpop.f32.mrb[0].mxu0
      %v1745 = vadd.f32 0.0, %v1744
      %v1746 = vpop.f32.mrb[0].mxu0
      %v1747 = vpop.f32.mrb[0].mxu0
      %v1748 = vadd.f32 0.0, %v1747
      %v1749 = vpop.f32.mrb[0].mxu0
      %1750 = vmatprep.mubr.bf16.mxu0 0
      %1751 = vmatmul.mubr.bf16.gmra.mrb[0].mxu0 %v797
      %v1752 = vpop.f32.mrb[0].mxu0
      %v1753 = vadd.f32 0.0, %v1752
      %v1754 = vpop.f32.mrb[0].mxu0
      %v1755 = vpop.f32.mrb[0].mxu0
      %v1756 = vadd.f32 0.0, %v1755
      %v1757 = vpop.f32.mrb[0].mxu0
      %1758 = vmatprep.mubr.bf16.mxu0 0
      %1759 = vmatmul.mubr.bf16.gmra.mrb[0].mxu0 %v798
      %v1760 = vpop.f32.mrb[0].mxu0
      %v1761 = vadd.f32 0.0, %v1760
      %v1762 = vpop.f32.mrb[0].mxu0
      %v1763 = vpop.f32.mrb[0].mxu0
      %v1764 = vadd.f32 0.0, %v1763
      %v1765 = vpop.f32.mrb[0].mxu0
      %1766 = vmatprep.mubr.bf16.mxu0 0
      %1767 = vmatmul.mubr.bf16.gmra.mrb[0].mxu0 %v799
      %v1768 = vpop.f32.mrb[0].mxu0
      %v1769 = vadd.f32 0.0, %v1768
      %v1770 = vpop.f32.mrb[0].mxu0
      %v1771 = vpop.f32.mrb[0].mxu0
      %v1772 = vadd.f32 0.0, %v1771
      %v1773 = vpop.f32.mrb[0].mxu0
      %1774 = vmatprep.mubr.bf16.mxu0 0
      %1775 = vmatmul.mubr.bf16.gmra.mrb[0].mxu0 %v800
      %v1776 = vpop.f32.mrb[0].mxu0
      %v1777 = vadd.f32 0.0, %v1776
      %v1778 = vpop.f32.mrb[0].mxu0
      %v1779 = vpop.f32.mrb[0].mxu0
      %v1780 = vadd.f32 0.0, %v1779
      %v1781 = vpop.f32.mrb[0].mxu0
      %1782 = vmatprep.mubr.bf16.mxu0 0
      %1783 = vmatmul.mubr.bf16.gmra.mrb[0].mxu0 %v801
      %v1784 = vpop.f32.mrb[0].mxu0
      %v1785 = vadd.f32 0.0, %v1784
      %v1786 = vpop.f32.mrb[0].mxu0
      %v1787 = vpop.f32.mrb[0].mxu0
      %v1788 = vadd.f32 0.0, %v1787
      %v1789 = vpop.f32.mrb[0].mxu0
      %1790 = vmatprep.mubr.bf16.mxu0 0
      %1791 = vmatmul.mubr.bf16.gmra.mrb[0].mxu0 %v802
      %v1792 = vpop.f32.mrb[0].mxu0
      %v1793 = vadd.f32 0.0, %v1792
      %v1794 = vpop.f32.mrb[0].mxu0
      %v1795 = vpop.f32.mrb[0].mxu0
      %v1796 = vadd.f32 0.0, %v1795
      %v1797 = vpop.f32.mrb[0].mxu0
      %1798 = vmatprep.mubr.bf16.mxu0 0
      %1799 = vmatmul.mubr.bf16.gmra.mrb[0].mxu0 %v803
      %v1800 = vpop.f32.mrb[0].mxu0
      %v1801 = vadd.f32 0.0, %v1800
      %v1802 = vpop.f32.mrb[0].mxu0
      %v1803 = vpop.f32.mrb[0].mxu0
      %v1804 = vadd.f32 0.0, %v1803
      %v1805 = vpop.f32.mrb[0].mxu0
      %1806 = vmatprep.mubr.bf16.mxu0 0
      %1807 = vmatmul.mubr.bf16.gmra.mrb[0].mxu0 %v1588
      %v1808 = vpop.f32.mrb[0].mxu0
      %v1809 = vadd.f32 0.0, %v1808
      %v1810 = vpop.f32.mrb[0].mxu0
      %v1811 = vpop.f32.mrb[0].mxu0
      %v1812 = vadd.f32 0.0, %v1811
      %v1813 = vpop.f32.mrb[0].mxu0
      %1814 = vdwg.mxu0
      %v1815 = vadd.f32 %v1548, %v1689
      %v1816 = vadd.f32 %v1549, %v1692
      %v1817 = vadd.f32 %v1550, %v1697
      %v1818 = vadd.f32 %v1551, %v1700
      %v1819 = vadd.f32 %v1552, %v1705
      %v1820 = vadd.f32 %v1553, %v1708
      %v1821 = vadd.f32 %v1554, %v1713
      %v1822 = vadd.f32 %v1555, %v1716
      %v1823 = vadd.f32 %v1556, %v1721
      %v1824 = vadd.f32 %v1557, %v1724
      %v1825 = vadd.f32 %v1558, %v1729
      %v1826 = vadd.f32 %v1559, %v1732
      %v1827 = vadd.f32 %v1560, %v1737
      %v1828 = vadd.f32 %v1561, %v1740
      %v1829 = vadd.f32 %v1562, %v1745
      %v1830 = vadd.f32 %v1563, %v1748
      %v1831 = vadd.f32 %v1564, %v1753
      %v1832 = vadd.f32 %v1565, %v1756
      %v1833 = vadd.f32 %v1566, %v1761
      %v1834 = vadd.f32 %v1567, %v1764
      %v1835 = vadd.f32 %v1568, %v1769
      %v1836 = vadd.f32 %v1569, %v1772
      %v1837 = vadd.f32 %v1570, %v1777
      %v1838 = vadd.f32 %v1571, %v1780
      %v1839 = vadd.f32 %v1572, %v1785
      %v1840 = vadd.f32 %v1573, %v1788
      %v1841 = vadd.f32 %v1574, %v1793
      %v1842 = vadd.f32 %v1575, %v1796
      %v1843 = vadd.f32 %v1576, %v1801
      %v1844 = vadd.f32 %v1577, %v1804
      %v1845 = vadd.f32 %v1578, %v1809
      %v1846 = vadd.f32 %v1579, %v1812
      %s1847 = scalar_lea.vmem %s3, 256
      %v1848 = vld [vmem:[%s1847] sm:$0xf]
      %v1849 = vld [vmem:[%s1847 + $0x4] sm:$0xf]
      %v1850 = vld [vmem:[%s1847 + $0x8] sm:$0xf]
      %v1851 = vld [vmem:[%s1847 + $0xc] sm:$0xf]
      %v1852 = vld [vmem:[%s1847 + $0x10] sm:$0xf]
      %v1853 = vld [vmem:[%s1847 + $0x14] sm:$0xf]
      %v1854 = vld [vmem:[%s1847 + $0x18] sm:$0xf]
      %v1855 = vld [vmem:[%s1847 + $0x1c] sm:$0xf]
      %v1856 = vld [vmem:[%s1847 + $0x20] sm:$0xf]
      %v1857 = vld [vmem:[%s1847 + $0x24] sm:$0xf]
      %v1858 = vld [vmem:[%s1847 + $0x28] sm:$0xf]
      %v1859 = vld [vmem:[%s1847 + $0x2c] sm:$0xf]
      %v1860 = vld [vmem:[%s1847 + $0x30] sm:$0xf]
      %v1861 = vld [vmem:[%s1847 + $0x34] sm:$0xf]
      %v1862 = vld [vmem:[%s1847 + $0x38] sm:$0xf]
      %v1863 = vld [vmem:[%s1847 + $0x3c] sm:$0xf]
      %v1880 = vunpack.c.l.b16 %v1848
      %v1881 = vunpack.c.l.b16 %v1849
      %v1882 = vunpack.c.l.b16 %v1850
      %v1883 = vunpack.c.l.b16 %v1851
      %v1884 = vunpack.c.l.b16 %v1852
      %v1885 = vunpack.c.l.b16 %v1853
      %v1886 = vunpack.c.l.b16 %v1854
      %v1887 = vunpack.c.l.b16 %v1855
      %v1888 = vunpack.c.l.b16 %v1856
      %v1889 = vunpack.c.l.b16 %v1857
      %v1890 = vunpack.c.l.b16 %v1858
      %v1891 = vunpack.c.l.b16 %v1859
      %v1892 = vunpack.c.l.b16 %v1860
      %v1893 = vunpack.c.l.b16 %v1861
      %v1894 = vunpack.c.l.b16 %v1862
      %v1895 = vunpack.c.l.b16 %v1863
      %v1896 = vpack.c.b16 %v1881, %v1880
      %v1897 = vpack.c.b16 %v1883, %v1882
      %v1898 = vpack.c.b16 %v1885, %v1884
      %v1899 = vpack.c.b16 %v1887, %v1886
      %v1900 = vpack.c.b16 %v1889, %v1888
      %v1901 = vpack.c.b16 %v1891, %v1890
      %v1902 = vpack.c.b16 %v1893, %v1892
      %v1903 = vpack.c.b16 %v1895, %v1894
      %1912 = vmatprep.subr.bf16.mxu0 0
      %1913 = vmatpush1.bf16.msra.mxu0 %v1896
      %1914 = vmatprep.subr.bf16.mxu0 0
      %1915 = vmatpush1.bf16.msra.mxu0 %v1897
      %1916 = vmatprep.subr.bf16.mxu0 0
      %1917 = vmatpush1.bf16.msra.mxu0 %v1898
      %1918 = vmatprep.subr.bf16.mxu0 0
      %1919 = vmatpush1.bf16.msra.mxu0 %v1899
      %1920 = vmatprep.subr.bf16.mxu0 0
      %1921 = vmatpush1.bf16.msra.mxu0 %v1900
      %1922 = vmatprep.subr.bf16.mxu0 0
      %1923 = vmatpush1.bf16.msra.mxu0 %v1901
      %1924 = vmatprep.subr.bf16.mxu0 0
      %1925 = vmatpush1.bf16.msra.mxu0 %v1902
      %1926 = vmatprep.subr.bf16.mxu0 0
      %1927 = vmatpush1.bf16.msra.mxu0 %v1903
      %1928 = vmatprep.subr.bf16.mxu0 0
      %1929 = vmatpush1.bf16.msra.mxu0 0
      %1930 = vmatprep.subr.bf16.mxu0 0
      %1931 = vmatpush1.bf16.msra.mxu0 0
      %1932 = vmatprep.subr.bf16.mxu0 0
      %1933 = vmatpush1.bf16.msra.mxu0 0
      %1934 = vmatprep.subr.bf16.mxu0 0
      %1935 = vmatpush1.bf16.msra.mxu0 0
      %1936 = vmatprep.subr.bf16.mxu0 0
      %1937 = vmatpush1.bf16.msra.mxu0 0
      %1938 = vmatprep.subr.bf16.mxu0 0
      %1939 = vmatpush1.bf16.msra.mxu0 0
      %1940 = vmatprep.subr.bf16.mxu0 0
      %1941 = vmatpush1.bf16.msra.mxu0 0
      %1942 = vmatprep.subr.bf16.mxu0 0
      %1943 = vmatpush1.bf16.msra.mxu0 0
      %1944 = vmatprep.mubr.bf16.mxu0 0
      %1945 = vmatmul.mubr.bf16.gmra.mrb[0].mxu0 %v640
      %v1946 = vpop.f32.mrb[0].mxu0
      %v1947 = vadd.f32 0.0, %v1946
      %v1948 = vpop.f32.mrb[0].mxu0
      %v1949 = vpop.f32.mrb[0].mxu0
      %v1950 = vadd.f32 0.0, %v1949
      %v1951 = vpop.f32.mrb[0].mxu0
      %1952 = vmatprep.mubr.bf16.mxu0 0
      %1953 = vmatmul.mubr.bf16.gmra.mrb[0].mxu0 %v641
      %v1954 = vpop.f32.mrb[0].mxu0
      %v1955 = vadd.f32 0.0, %v1954
      %v1956 = vpop.f32.mrb[0].mxu0
      %v1957 = vpop.f32.mrb[0].mxu0
      %v1958 = vadd.f32 0.0, %v1957
      %v1959 = vpop.f32.mrb[0].mxu0
      %1960 = vmatprep.mubr.bf16.mxu0 0
      %1961 = vmatmul.mubr.bf16.gmra.mrb[0].mxu0 %v642
      %v1962 = vpop.f32.mrb[0].mxu0
      %v1963 = vadd.f32 0.0, %v1962
      %v1964 = vpop.f32.mrb[0].mxu0
      %v1965 = vpop.f32.mrb[0].mxu0
      %v1966 = vadd.f32 0.0, %v1965
      %v1967 = vpop.f32.mrb[0].mxu0
      %1968 = vmatprep.mubr.bf16.mxu0 0
      %1969 = vmatmul.mubr.bf16.gmra.mrb[0].mxu0 %v643
      %v1970 = vpop.f32.mrb[0].mxu0
      %v1971 = vadd.f32 0.0, %v1970
      %v1972 = vpop.f32.mrb[0].mxu0
      %v1973 = vpop.f32.mrb[0].mxu0
      %v1974 = vadd.f32 0.0, %v1973
      %v1975 = vpop.f32.mrb[0].mxu0
      %1976 = vmatprep.mubr.bf16.mxu0 0
      %1977 = vmatmul.mubr.bf16.gmra.mrb[0].mxu0 %v644
      %v1978 = vpop.f32.mrb[0].mxu0
      %v1979 = vadd.f32 0.0, %v1978
      %v1980 = vpop.f32.mrb[0].mxu0
      %v1981 = vpop.f32.mrb[0].mxu0
      %v1982 = vadd.f32 0.0, %v1981
      %v1983 = vpop.f32.mrb[0].mxu0
      %1984 = vmatprep.mubr.bf16.mxu0 0
      %1985 = vmatmul.mubr.bf16.gmra.mrb[0].mxu0 %v645
      %v1986 = vpop.f32.mrb[0].mxu0
      %v1987 = vadd.f32 0.0, %v1986
      %v1988 = vpop.f32.mrb[0].mxu0
      %v1989 = vpop.f32.mrb[0].mxu0
      %v1990 = vadd.f32 0.0, %v1989
      %v1991 = vpop.f32.mrb[0].mxu0
      %1992 = vmatprep.mubr.bf16.mxu0 0
      %1993 = vmatmul.mubr.bf16.gmra.mrb[0].mxu0 %v646
      %v1994 = vpop.f32.mrb[0].mxu0
      %v1995 = vadd.f32 0.0, %v1994
      %v1996 = vpop.f32.mrb[0].mxu0
      %v1997 = vpop.f32.mrb[0].mxu0
      %v1998 = vadd.f32 0.0, %v1997
      %v1999 = vpop.f32.mrb[0].mxu0
      %2000 = vmatprep.mubr.bf16.mxu0 0
      %2001 = vmatmul.mubr.bf16.gmra.mrb[0].mxu0 %v647
      %v2002 = vpop.f32.mrb[0].mxu0
      %v2003 = vadd.f32 0.0, %v2002
      %v2004 = vpop.f32.mrb[0].mxu0
      %v2005 = vpop.f32.mrb[0].mxu0
      %v2006 = vadd.f32 0.0, %v2005
      %v2007 = vpop.f32.mrb[0].mxu0
      %2008 = vmatprep.mubr.bf16.mxu0 0
      %2009 = vmatmul.mubr.bf16.gmra.mrb[0].mxu0 %v648
      %v2010 = vpop.f32.mrb[0].mxu0
      %v2011 = vadd.f32 0.0, %v2010
      %v2012 = vpop.f32.mrb[0].mxu0
      %v2013 = vpop.f32.mrb[0].mxu0
      %v2014 = vadd.f32 0.0, %v2013
      %v2015 = vpop.f32.mrb[0].mxu0
      %2016 = vmatprep.mubr.bf16.mxu0 0
      %2017 = vmatmul.mubr.bf16.gmra.mrb[0].mxu0 %v649
      %v2018 = vpop.f32.mrb[0].mxu0
      %v2019 = vadd.f32 0.0, %v2018
      %v2020 = vpop.f32.mrb[0].mxu0
      %v2021 = vpop.f32.mrb[0].mxu0
      %v2022 = vadd.f32 0.0, %v2021
      %v2023 = vpop.f32.mrb[0].mxu0
      %2024 = vmatprep.mubr.bf16.mxu0 0
      %2025 = vmatmul.mubr.bf16.gmra.mrb[0].mxu0 %v650
      %v2026 = vpop.f32.mrb[0].mxu0
      %v2027 = vadd.f32 0.0, %v2026
      %v2028 = vpop.f32.mrb[0].mxu0
      %v2029 = vpop.f32.mrb[0].mxu0
      %v2030 = vadd.f32 0.0, %v2029
      %v2031 = vpop.f32.mrb[0].mxu0
      %2032 = vmatprep.mubr.bf16.mxu0 0
      %2033 = vmatmul.mubr.bf16.gmra.mrb[0].mxu0 %v651
      %v2034 = vpop.f32.mrb[0].mxu0
      %v2035 = vadd.f32 0.0, %v2034
      %v2036 = vpop.f32.mrb[0].mxu0
      %v2037 = vpop.f32.mrb[0].mxu0
      %v2038 = vadd.f32 0.0, %v2037
      %v2039 = vpop.f32.mrb[0].mxu0
      %2040 = vmatprep.mubr.bf16.mxu0 0
      %2041 = vmatmul.mubr.bf16.gmra.mrb[0].mxu0 %v652
      %v2042 = vpop.f32.mrb[0].mxu0
      %v2043 = vadd.f32 0.0, %v2042
      %v2044 = vpop.f32.mrb[0].mxu0
      %v2045 = vpop.f32.mrb[0].mxu0
      %v2046 = vadd.f32 0.0, %v2045
      %v2047 = vpop.f32.mrb[0].mxu0
      %2048 = vmatprep.mubr.bf16.mxu0 0
      %2049 = vmatmul.mubr.bf16.gmra.mrb[0].mxu0 %v653
      %v2050 = vpop.f32.mrb[0].mxu0
      %v2051 = vadd.f32 0.0, %v2050
      %v2052 = vpop.f32.mrb[0].mxu0
      %v2053 = vpop.f32.mrb[0].mxu0
      %v2054 = vadd.f32 0.0, %v2053
      %v2055 = vpop.f32.mrb[0].mxu0
      %2056 = vmatprep.mubr.bf16.mxu0 0
      %2057 = vmatmul.mubr.bf16.gmra.mrb[0].mxu0 %v654
      %v2058 = vpop.f32.mrb[0].mxu0
      %v2059 = vadd.f32 0.0, %v2058
      %v2060 = vpop.f32.mrb[0].mxu0
      %v2061 = vpop.f32.mrb[0].mxu0
      %v2062 = vadd.f32 0.0, %v2061
      %v2063 = vpop.f32.mrb[0].mxu0
      %2064 = vmatprep.mubr.bf16.mxu0 0
      %2065 = vmatmul.mubr.bf16.gmra.mrb[0].mxu0 %v655
      %v2066 = vpop.f32.mrb[0].mxu0
      %v2067 = vadd.f32 0.0, %v2066
      %v2068 = vpop.f32.mrb[0].mxu0
      %v2069 = vpop.f32.mrb[0].mxu0
      %v2070 = vadd.f32 0.0, %v2069
      %v2071 = vpop.f32.mrb[0].mxu0
      %2072 = vdwg.mxu0
      %v2073 = vadd.f32 %v1815, %v1947
      %v2074 = vadd.f32 %v1816, %v1950
      %v2075 = vadd.f32 %v1817, %v1955
      %v2076 = vadd.f32 %v1818, %v1958
      %v2077 = vadd.f32 %v1819, %v1963
      %v2078 = vadd.f32 %v1820, %v1966
      %v2079 = vadd.f32 %v1821, %v1971
      %v2080 = vadd.f32 %v1822, %v1974
      %v2081 = vadd.f32 %v1823, %v1979
      %v2082 = vadd.f32 %v1824, %v1982
      %v2083 = vadd.f32 %v1825, %v1987
      %v2084 = vadd.f32 %v1826, %v1990
      %v2085 = vadd.f32 %v1827, %v1995
      %v2086 = vadd.f32 %v1828, %v1998
      %v2087 = vadd.f32 %v1829, %v2003
      %v2088 = vadd.f32 %v1830, %v2006
      %v2089 = vadd.f32 %v1831, %v2011
      %v2090 = vadd.f32 %v1832, %v2014
      %v2091 = vadd.f32 %v1833, %v2019
      %v2092 = vadd.f32 %v1834, %v2022
      %v2093 = vadd.f32 %v1835, %v2027
      %v2094 = vadd.f32 %v1836, %v2030
      %v2095 = vadd.f32 %v1837, %v2035
      %v2096 = vadd.f32 %v1838, %v2038
      %v2097 = vadd.f32 %v1839, %v2043
      %v2098 = vadd.f32 %v1840, %v2046
      %v2099 = vadd.f32 %v1841, %v2051
      %v2100 = vadd.f32 %v1842, %v2054
      %v2101 = vadd.f32 %v1843, %v2059
      %v2102 = vadd.f32 %v1844, %v2062
      %v2103 = vadd.f32 %v1845, %v2067
      %v2104 = vadd.f32 %v1846, %v2070
      %v2105 = vrot.slane %v1584, 1
      %v2106 = vor.u32 %v1581, %v2105
      %v2108 = vsel %vm1305, %v2106, 0
      %s2109 = scalar_lea.vmem %s3, 320
      %v2110 = vld [vmem:[%s2109] sm:$0xf]
      %v2111 = vld [vmem:[%s2109 + $0x4] sm:$0xf]
      %v2112 = vld [vmem:[%s2109 + $0x8] sm:$0xf]
      %v2113 = vld [vmem:[%s2109 + $0xc] sm:$0xf]
      %v2114 = vld [vmem:[%s2109 + $0x10] sm:$0xf]
      %v2115 = vld [vmem:[%s2109 + $0x14] sm:$0xf]
      %v2116 = vld [vmem:[%s2109 + $0x18] sm:$0xf]
      %v2117 = vld [vmem:[%s2109 + $0x1c] sm:$0xf]
      %v2118 = vld [vmem:[%s2109 + $0x20] sm:$0xf]
      %v2119 = vld [vmem:[%s2109 + $0x24] sm:$0xf]
      %v2120 = vld [vmem:[%s2109 + $0x28] sm:$0xf]
      %v2121 = vld [vmem:[%s2109 + $0x2c] sm:$0xf]
      %v2122 = vld [vmem:[%s2109 + $0x30] sm:$0xf]
      %v2123 = vld [vmem:[%s2109 + $0x34] sm:$0xf]
      %v2124 = vld [vmem:[%s2109 + $0x38] sm:$0xf]
      %v2125 = vld [vmem:[%s2109 + $0x3c] sm:$0xf]
      %v2142 = vunpack.c.l.b16 %v2110
      %v2143 = vunpack.c.l.b16 %v2111
      %v2144 = vunpack.c.l.b16 %v2112
      %v2145 = vunpack.c.l.b16 %v2113
      %v2146 = vunpack.c.l.b16 %v2114
      %v2147 = vunpack.c.l.b16 %v2115
      %v2148 = vunpack.c.l.b16 %v2116
      %v2149 = vunpack.c.l.b16 %v2117
      %v2150 = vunpack.c.l.b16 %v2118
      %v2151 = vunpack.c.l.b16 %v2119
      %v2152 = vunpack.c.l.b16 %v2120
      %v2153 = vunpack.c.l.b16 %v2121
      %v2154 = vunpack.c.l.b16 %v2122
      %v2155 = vunpack.c.l.b16 %v2123
      %v2156 = vunpack.c.l.b16 %v2124
      %v2157 = vunpack.c.l.b16 %v2125
      %v2158 = vpack.c.b16 %v2143, %v2142
      %v2159 = vpack.c.b16 %v2145, %v2144
      %v2160 = vpack.c.b16 %v2147, %v2146
      %v2161 = vpack.c.b16 %v2149, %v2148
      %v2162 = vpack.c.b16 %v2151, %v2150
      %v2163 = vpack.c.b16 %v2153, %v2152
      %v2164 = vpack.c.b16 %v2155, %v2154
      %v2165 = vpack.c.b16 %v2157, %v2156
      %2174 = vmatprep.subr.bf16.mxu0 0
      %2175 = vmatpush1.bf16.msra.mxu0 %v2158
      %2176 = vmatprep.subr.bf16.mxu0 0
      %2177 = vmatpush1.bf16.msra.mxu0 %v2159
      %2178 = vmatprep.subr.bf16.mxu0 0
      %2179 = vmatpush1.bf16.msra.mxu0 %v2160
      %2180 = vmatprep.subr.bf16.mxu0 0
      %2181 = vmatpush1.bf16.msra.mxu0 %v2161
      %2182 = vmatprep.subr.bf16.mxu0 0
      %2183 = vmatpush1.bf16.msra.mxu0 %v2162
      %2184 = vmatprep.subr.bf16.mxu0 0
      %2185 = vmatpush1.bf16.msra.mxu0 %v2163
      %2186 = vmatprep.subr.bf16.mxu0 0
      %2187 = vmatpush1.bf16.msra.mxu0 %v2164
      %2188 = vmatprep.subr.bf16.mxu0 0
      %2189 = vmatpush1.bf16.msra.mxu0 %v2165
      %2190 = vmatprep.subr.bf16.mxu0 0
      %2191 = vmatpush1.bf16.msra.mxu0 0
      %2192 = vmatprep.subr.bf16.mxu0 0
      %2193 = vmatpush1.bf16.msra.mxu0 0
      %2194 = vmatprep.subr.bf16.mxu0 0
      %2195 = vmatpush1.bf16.msra.mxu0 0
      %2196 = vmatprep.subr.bf16.mxu0 0
      %2197 = vmatpush1.bf16.msra.mxu0 0
      %2198 = vmatprep.subr.bf16.mxu0 0
      %2199 = vmatpush1.bf16.msra.mxu0 0
      %2200 = vmatprep.subr.bf16.mxu0 0
      %2201 = vmatpush1.bf16.msra.mxu0 0
      %2202 = vmatprep.subr.bf16.mxu0 0
      %2203 = vmatpush1.bf16.msra.mxu0 0
      %2204 = vmatprep.subr.bf16.mxu0 0
      %2205 = vmatpush1.bf16.msra.mxu0 0
      %2206 = vmatprep.mubr.bf16.mxu0 0
      %2207 = vmatmul.mubr.bf16.gmra.mrb[0].mxu0 %v1307
      %v2208 = vpop.f32.mrb[0].mxu0
      %v2209 = vadd.f32 0.0, %v2208
      %v2210 = vpop.f32.mrb[0].mxu0
      %v2211 = vpop.f32.mrb[0].mxu0
      %v2212 = vadd.f32 0.0, %v2211
      %v2213 = vpop.f32.mrb[0].mxu0
      %2214 = vmatprep.mubr.bf16.mxu0 0
      %2215 = vmatmul.mubr.bf16.gmra.mrb[0].mxu0 %v1308
      %v2216 = vpop.f32.mrb[0].mxu0
      %v2217 = vadd.f32 0.0, %v2216
      %v2218 = vpop.f32.mrb[0].mxu0
      %v2219 = vpop.f32.mrb[0].mxu0
      %v2220 = vadd.f32 0.0, %v2219
      %v2221 = vpop.f32.mrb[0].mxu0
      %2222 = vmatprep.mubr.bf16.mxu0 0
      %2223 = vmatmul.mubr.bf16.gmra.mrb[0].mxu0 %v1309
      %v2224 = vpop.f32.mrb[0].mxu0
      %v2225 = vadd.f32 0.0, %v2224
      %v2226 = vpop.f32.mrb[0].mxu0
      %v2227 = vpop.f32.mrb[0].mxu0
      %v2228 = vadd.f32 0.0, %v2227
      %v2229 = vpop.f32.mrb[0].mxu0
      %2230 = vmatprep.mubr.bf16.mxu0 0
      %2231 = vmatmul.mubr.bf16.gmra.mrb[0].mxu0 %v1310
      %v2232 = vpop.f32.mrb[0].mxu0
      %v2233 = vadd.f32 0.0, %v2232
      %v2234 = vpop.f32.mrb[0].mxu0
      %v2235 = vpop.f32.mrb[0].mxu0
      %v2236 = vadd.f32 0.0, %v2235
      %v2237 = vpop.f32.mrb[0].mxu0
      %2238 = vmatprep.mubr.bf16.mxu0 0
      %2239 = vmatmul.mubr.bf16.gmra.mrb[0].mxu0 %v1311
      %v2240 = vpop.f32.mrb[0].mxu0
      %v2241 = vadd.f32 0.0, %v2240
      %v2242 = vpop.f32.mrb[0].mxu0
      %v2243 = vpop.f32.mrb[0].mxu0
      %v2244 = vadd.f32 0.0, %v2243
      %v2245 = vpop.f32.mrb[0].mxu0
      %2246 = vmatprep.mubr.bf16.mxu0 0
      %2247 = vmatmul.mubr.bf16.gmra.mrb[0].mxu0 %v1312
      %v2248 = vpop.f32.mrb[0].mxu0
      %v2249 = vadd.f32 0.0, %v2248
      %v2250 = vpop.f32.mrb[0].mxu0
      %v2251 = vpop.f32.mrb[0].mxu0
      %v2252 = vadd.f32 0.0, %v2251
      %v2253 = vpop.f32.mrb[0].mxu0
      %2254 = vmatprep.mubr.bf16.mxu0 0
      %2255 = vmatmul.mubr.bf16.gmra.mrb[0].mxu0 %v1313
      %v2256 = vpop.f32.mrb[0].mxu0
      %v2257 = vadd.f32 0.0, %v2256
      %v2258 = vpop.f32.mrb[0].mxu0
      %v2259 = vpop.f32.mrb[0].mxu0
      %v2260 = vadd.f32 0.0, %v2259
      %v2261 = vpop.f32.mrb[0].mxu0
      %2262 = vmatprep.mubr.bf16.mxu0 0
      %2263 = vmatmul.mubr.bf16.gmra.mrb[0].mxu0 %v1314
      %v2264 = vpop.f32.mrb[0].mxu0
      %v2265 = vadd.f32 0.0, %v2264
      %v2266 = vpop.f32.mrb[0].mxu0
      %v2267 = vpop.f32.mrb[0].mxu0
      %v2268 = vadd.f32 0.0, %v2267
      %v2269 = vpop.f32.mrb[0].mxu0
      %2270 = vmatprep.mubr.bf16.mxu0 0
      %2271 = vmatmul.mubr.bf16.gmra.mrb[0].mxu0 %v1315
      %v2272 = vpop.f32.mrb[0].mxu0
      %v2273 = vadd.f32 0.0, %v2272
      %v2274 = vpop.f32.mrb[0].mxu0
      %v2275 = vpop.f32.mrb[0].mxu0
      %v2276 = vadd.f32 0.0, %v2275
      %v2277 = vpop.f32.mrb[0].mxu0
      %2278 = vmatprep.mubr.bf16.mxu0 0
      %2279 = vmatmul.mubr.bf16.gmra.mrb[0].mxu0 %v1316
      %v2280 = vpop.f32.mrb[0].mxu0
      %v2281 = vadd.f32 0.0, %v2280
      %v2282 = vpop.f32.mrb[0].mxu0
      %v2283 = vpop.f32.mrb[0].mxu0
      %v2284 = vadd.f32 0.0, %v2283
      %v2285 = vpop.f32.mrb[0].mxu0
      %2286 = vmatprep.mubr.bf16.mxu0 0
      %2287 = vmatmul.mubr.bf16.gmra.mrb[0].mxu0 %v1317
      %v2288 = vpop.f32.mrb[0].mxu0
      %v2289 = vadd.f32 0.0, %v2288
      %v2290 = vpop.f32.mrb[0].mxu0
      %v2291 = vpop.f32.mrb[0].mxu0
      %v2292 = vadd.f32 0.0, %v2291
      %v2293 = vpop.f32.mrb[0].mxu0
      %2294 = vmatprep.mubr.bf16.mxu0 0
      %2295 = vmatmul.mubr.bf16.gmra.mrb[0].mxu0 %v1318
      %v2296 = vpop.f32.mrb[0].mxu0
      %v2297 = vadd.f32 0.0, %v2296
      %v2298 = vpop.f32.mrb[0].mxu0
      %v2299 = vpop.f32.mrb[0].mxu0
      %v2300 = vadd.f32 0.0, %v2299
      %v2301 = vpop.f32.mrb[0].mxu0
      %2302 = vmatprep.mubr.bf16.mxu0 0
      %2303 = vmatmul.mubr.bf16.gmra.mrb[0].mxu0 %v1319
      %v2304 = vpop.f32.mrb[0].mxu0
      %v2305 = vadd.f32 0.0, %v2304
      %v2306 = vpop.f32.mrb[0].mxu0
      %v2307 = vpop.f32.mrb[0].mxu0
      %v2308 = vadd.f32 0.0, %v2307
      %v2309 = vpop.f32.mrb[0].mxu0
      %2310 = vmatprep.mubr.bf16.mxu0 0
      %2311 = vmatmul.mubr.bf16.gmra.mrb[0].mxu0 %v1320
      %v2312 = vpop.f32.mrb[0].mxu0
      %v2313 = vadd.f32 0.0, %v2312
      %v2314 = vpop.f32.mrb[0].mxu0
      %v2315 = vpop.f32.mrb[0].mxu0
      %v2316 = vadd.f32 0.0, %v2315
      %v2317 = vpop.f32.mrb[0].mxu0
      %2318 = vmatprep.mubr.bf16.mxu0 0
      %2319 = vmatmul.mubr.bf16.gmra.mrb[0].mxu0 %v1321
      %v2320 = vpop.f32.mrb[0].mxu0
      %v2321 = vadd.f32 0.0, %v2320
      %v2322 = vpop.f32.mrb[0].mxu0
      %v2323 = vpop.f32.mrb[0].mxu0
      %v2324 = vadd.f32 0.0, %v2323
      %v2325 = vpop.f32.mrb[0].mxu0
      %2326 = vmatprep.mubr.bf16.mxu0 0
      %2327 = vmatmul.mubr.bf16.gmra.mrb[0].mxu0 %v2108
      %v2328 = vpop.f32.mrb[0].mxu0
      %v2329 = vadd.f32 0.0, %v2328
      %v2330 = vpop.f32.mrb[0].mxu0
      %v2331 = vpop.f32.mrb[0].mxu0
      %v2332 = vadd.f32 0.0, %v2331
      %v2333 = vpop.f32.mrb[0].mxu0
      %2334 = vdwg.mxu0
      %v2335 = vadd.f32 %v2073, %v2209
      %v2336 = vadd.f32 %v2074, %v2212
      %v2337 = vadd.f32 %v2075, %v2217
      %v2338 = vadd.f32 %v2076, %v2220
      %v2339 = vadd.f32 %v2077, %v2225
      %v2340 = vadd.f32 %v2078, %v2228
      %v2341 = vadd.f32 %v2079, %v2233
      %v2342 = vadd.f32 %v2080, %v2236
      %v2343 = vadd.f32 %v2081, %v2241
      %v2344 = vadd.f32 %v2082, %v2244
      %v2345 = vadd.f32 %v2083, %v2249
      %v2346 = vadd.f32 %v2084, %v2252
      %v2347 = vadd.f32 %v2085, %v2257
      %v2348 = vadd.f32 %v2086, %v2260
      %v2349 = vadd.f32 %v2087, %v2265
      %v2350 = vadd.f32 %v2088, %v2268
      %v2351 = vadd.f32 %v2089, %v2273
      %v2352 = vadd.f32 %v2090, %v2276
      %v2353 = vadd.f32 %v2091, %v2281
      %v2354 = vadd.f32 %v2092, %v2284
      %v2355 = vadd.f32 %v2093, %v2289
      %v2356 = vadd.f32 %v2094, %v2292
      %v2357 = vadd.f32 %v2095, %v2297
      %v2358 = vadd.f32 %v2096, %v2300
      %v2359 = vadd.f32 %v2097, %v2305
      %v2360 = vadd.f32 %v2098, %v2308
      %v2361 = vadd.f32 %v2099, %v2313
      %v2362 = vadd.f32 %v2100, %v2316
      %v2363 = vadd.f32 %v2101, %v2321
      %v2364 = vadd.f32 %v2102, %v2324
      %v2365 = vadd.f32 %v2103, %v2329
      %v2366 = vadd.f32 %v2104, %v2332
      %v2368 = vshrl.u32 %v656, 16
      %v2370 = vrot.slane %v2368, 7
      %v2371 = vshll.u32 %v656, 16
      %v2373 = vor.u32 %v2370, %v2371
      %v2375 = vsel %vm787, 0, %v2373
      %s2376 = scalar_lea.vmem %s3, 384
      %v2377 = vld [vmem:[%s2376] sm:$0xf]
      %v2378 = vld [vmem:[%s2376 + $0x4] sm:$0xf]
      %v2379 = vld [vmem:[%s2376 + $0x8] sm:$0xf]
      %v2380 = vld [vmem:[%s2376 + $0xc] sm:$0xf]
      %v2381 = vld [vmem:[%s2376 + $0x10] sm:$0xf]
      %v2382 = vld [vmem:[%s2376 + $0x14] sm:$0xf]
      %v2383 = vld [vmem:[%s2376 + $0x18] sm:$0xf]
      %v2384 = vld [vmem:[%s2376 + $0x1c] sm:$0xf]
      %v2385 = vld [vmem:[%s2376 + $0x20] sm:$0xf]
      %v2386 = vld [vmem:[%s2376 + $0x24] sm:$0xf]
      %v2387 = vld [vmem:[%s2376 + $0x28] sm:$0xf]
      %v2388 = vld [vmem:[%s2376 + $0x2c] sm:$0xf]
      %v2389 = vld [vmem:[%s2376 + $0x30] sm:$0xf]
      %v2390 = vld [vmem:[%s2376 + $0x34] sm:$0xf]
      %v2391 = vld [vmem:[%s2376 + $0x38] sm:$0xf]
      %v2392 = vld [vmem:[%s2376 + $0x3c] sm:$0xf]
      %v2409 = vunpack.c.l.b16 %v2377
      %v2410 = vunpack.c.l.b16 %v2378
      %v2411 = vunpack.c.l.b16 %v2379
      %v2412 = vunpack.c.l.b16 %v2380
      %v2413 = vunpack.c.l.b16 %v2381
      %v2414 = vunpack.c.l.b16 %v2382
      %v2415 = vunpack.c.l.b16 %v2383
      %v2416 = vunpack.c.l.b16 %v2384
      %v2417 = vunpack.c.l.b16 %v2385
      %v2418 = vunpack.c.l.b16 %v2386
      %v2419 = vunpack.c.l.b16 %v2387
      %v2420 = vunpack.c.l.b16 %v2388
      %v2421 = vunpack.c.l.b16 %v2389
      %v2422 = vunpack.c.l.b16 %v2390
      %v2423 = vunpack.c.l.b16 %v2391
      %v2424 = vunpack.c.l.b16 %v2392
      %v2425 = vpack.c.b16 %v2410, %v2409
      %v2426 = vpack.c.b16 %v2412, %v2411
      %v2427 = vpack.c.b16 %v2414, %v2413
      %v2428 = vpack.c.b16 %v2416, %v2415
      %v2429 = vpack.c.b16 %v2418, %v2417
      %v2430 = vpack.c.b16 %v2420, %v2419
      %v2431 = vpack.c.b16 %v2422, %v2421
      %v2432 = vpack.c.b16 %v2424, %v2423
      %2441 = vmatprep.subr.bf16.mxu0 0
      %2442 = vmatpush1.bf16.msra.mxu0 %v2425
      %2443 = vmatprep.subr.bf16.mxu0 0
      %2444 = vmatpush1.bf16.msra.mxu0 %v2426
      %2445 = vmatprep.subr.bf16.mxu0 0
      %2446 = vmatpush1.bf16.msra.mxu0 %v2427
      %2447 = vmatprep.subr.bf16.mxu0 0
      %2448 = vmatpush1.bf16.msra.mxu0 %v2428
      %2449 = vmatprep.subr.bf16.mxu0 0
      %2450 = vmatpush1.bf16.msra.mxu0 %v2429
      %2451 = vmatprep.subr.bf16.mxu0 0
      %2452 = vmatpush1.bf16.msra.mxu0 %v2430
      %2453 = vmatprep.subr.bf16.mxu0 0
      %2454 = vmatpush1.bf16.msra.mxu0 %v2431
      %2455 = vmatprep.subr.bf16.mxu0 0
      %2456 = vmatpush1.bf16.msra.mxu0 %v2432
      %2457 = vmatprep.subr.bf16.mxu0 0
      %2458 = vmatpush1.bf16.msra.mxu0 0
      %2459 = vmatprep.subr.bf16.mxu0 0
      %2460 = vmatpush1.bf16.msra.mxu0 0
      %2461 = vmatprep.subr.bf16.mxu0 0
      %2462 = vmatpush1.bf16.msra.mxu0 0
      %2463 = vmatprep.subr.bf16.mxu0 0
      %2464 = vmatpush1.bf16.msra.mxu0 0
      %2465 = vmatprep.subr.bf16.mxu0 0
      %2466 = vmatpush1.bf16.msra.mxu0 0
      %2467 = vmatprep.subr.bf16.mxu0 0
      %2468 = vmatpush1.bf16.msra.mxu0 0
      %2469 = vmatprep.subr.bf16.mxu0 0
      %2470 = vmatpush1.bf16.msra.mxu0 0
      %2471 = vmatprep.subr.bf16.mxu0 0
      %2472 = vmatpush1.bf16.msra.mxu0 0
      %2473 = vmatprep.mubr.bf16.mxu0 0
      %2474 = vmatmul.mubr.bf16.gmra.mrb[0].mxu0 %v790
      %v2475 = vpop.f32.mrb[0].mxu0
      %v2476 = vadd.f32 0.0, %v2475
      %v2477 = vpop.f32.mrb[0].mxu0
      %v2478 = vpop.f32.mrb[0].mxu0
      %v2479 = vadd.f32 0.0, %v2478
      %v2480 = vpop.f32.mrb[0].mxu0
      %2481 = vmatprep.mubr.bf16.mxu0 0
      %2482 = vmatmul.mubr.bf16.gmra.mrb[0].mxu0 %v791
      %v2483 = vpop.f32.mrb[0].mxu0
      %v2484 = vadd.f32 0.0, %v2483
      %v2485 = vpop.f32.mrb[0].mxu0
      %v2486 = vpop.f32.mrb[0].mxu0
      %v2487 = vadd.f32 0.0, %v2486
      %v2488 = vpop.f32.mrb[0].mxu0
      %2489 = vmatprep.mubr.bf16.mxu0 0
      %2490 = vmatmul.mubr.bf16.gmra.mrb[0].mxu0 %v792
      %v2491 = vpop.f32.mrb[0].mxu0
      %v2492 = vadd.f32 0.0, %v2491
      %v2493 = vpop.f32.mrb[0].mxu0
      %v2494 = vpop.f32.mrb[0].mxu0
      %v2495 = vadd.f32 0.0, %v2494
      %v2496 = vpop.f32.mrb[0].mxu0
      %2497 = vmatprep.mubr.bf16.mxu0 0
      %2498 = vmatmul.mubr.bf16.gmra.mrb[0].mxu0 %v793
      %v2499 = vpop.f32.mrb[0].mxu0
      %v2500 = vadd.f32 0.0, %v2499
      %v2501 = vpop.f32.mrb[0].mxu0
      %v2502 = vpop.f32.mrb[0].mxu0
      %v2503 = vadd.f32 0.0, %v2502
      %v2504 = vpop.f32.mrb[0].mxu0
      %2505 = vmatprep.mubr.bf16.mxu0 0
      %2506 = vmatmul.mubr.bf16.gmra.mrb[0].mxu0 %v794
      %v2507 = vpop.f32.mrb[0].mxu0
      %v2508 = vadd.f32 0.0, %v2507
      %v2509 = vpop.f32.mrb[0].mxu0
      %v2510 = vpop.f32.mrb[0].mxu0
      %v2511 = vadd.f32 0.0, %v2510
      %v2512 = vpop.f32.mrb[0].mxu0
      %2513 = vmatprep.mubr.bf16.mxu0 0
      %2514 = vmatmul.mubr.bf16.gmra.mrb[0].mxu0 %v795
      %v2515 = vpop.f32.mrb[0].mxu0
      %v2516 = vadd.f32 0.0, %v2515
      %v2517 = vpop.f32.mrb[0].mxu0
      %v2518 = vpop.f32.mrb[0].mxu0
      %v2519 = vadd.f32 0.0, %v2518
      %v2520 = vpop.f32.mrb[0].mxu0
      %2521 = vmatprep.mubr.bf16.mxu0 0
      %2522 = vmatmul.mubr.bf16.gmra.mrb[0].mxu0 %v796
      %v2523 = vpop.f32.mrb[0].mxu0
      %v2524 = vadd.f32 0.0, %v2523
      %v2525 = vpop.f32.mrb[0].mxu0
      %v2526 = vpop.f32.mrb[0].mxu0
      %v2527 = vadd.f32 0.0, %v2526
      %v2528 = vpop.f32.mrb[0].mxu0
      %2529 = vmatprep.mubr.bf16.mxu0 0
      %2530 = vmatmul.mubr.bf16.gmra.mrb[0].mxu0 %v797
      %v2531 = vpop.f32.mrb[0].mxu0
      %v2532 = vadd.f32 0.0, %v2531
      %v2533 = vpop.f32.mrb[0].mxu0
      %v2534 = vpop.f32.mrb[0].mxu0
      %v2535 = vadd.f32 0.0, %v2534
      %v2536 = vpop.f32.mrb[0].mxu0
      %2537 = vmatprep.mubr.bf16.mxu0 0
      %2538 = vmatmul.mubr.bf16.gmra.mrb[0].mxu0 %v798
      %v2539 = vpop.f32.mrb[0].mxu0
      %v2540 = vadd.f32 0.0, %v2539
      %v2541 = vpop.f32.mrb[0].mxu0
      %v2542 = vpop.f32.mrb[0].mxu0
      %v2543 = vadd.f32 0.0, %v2542
      %v2544 = vpop.f32.mrb[0].mxu0
      %2545 = vmatprep.mubr.bf16.mxu0 0
      %2546 = vmatmul.mubr.bf16.gmra.mrb[0].mxu0 %v799
      %v2547 = vpop.f32.mrb[0].mxu0
      %v2548 = vadd.f32 0.0, %v2547
      %v2549 = vpop.f32.mrb[0].mxu0
      %v2550 = vpop.f32.mrb[0].mxu0
      %v2551 = vadd.f32 0.0, %v2550
      %v2552 = vpop.f32.mrb[0].mxu0
      %2553 = vmatprep.mubr.bf16.mxu0 0
      %2554 = vmatmul.mubr.bf16.gmra.mrb[0].mxu0 %v800
      %v2555 = vpop.f32.mrb[0].mxu0
      %v2556 = vadd.f32 0.0, %v2555
      %v2557 = vpop.f32.mrb[0].mxu0
      %v2558 = vpop.f32.mrb[0].mxu0
      %v2559 = vadd.f32 0.0, %v2558
      %v2560 = vpop.f32.mrb[0].mxu0
      %2561 = vmatprep.mubr.bf16.mxu0 0
      %2562 = vmatmul.mubr.bf16.gmra.mrb[0].mxu0 %v801
      %v2563 = vpop.f32.mrb[0].mxu0
      %v2564 = vadd.f32 0.0, %v2563
      %v2565 = vpop.f32.mrb[0].mxu0
      %v2566 = vpop.f32.mrb[0].mxu0
      %v2567 = vadd.f32 0.0, %v2566
      %v2568 = vpop.f32.mrb[0].mxu0
      %2569 = vmatprep.mubr.bf16.mxu0 0
      %2570 = vmatmul.mubr.bf16.gmra.mrb[0].mxu0 %v802
      %v2571 = vpop.f32.mrb[0].mxu0
      %v2572 = vadd.f32 0.0, %v2571
      %v2573 = vpop.f32.mrb[0].mxu0
      %v2574 = vpop.f32.mrb[0].mxu0
      %v2575 = vadd.f32 0.0, %v2574
      %v2576 = vpop.f32.mrb[0].mxu0
      %2577 = vmatprep.mubr.bf16.mxu0 0
      %2578 = vmatmul.mubr.bf16.gmra.mrb[0].mxu0 %v803
      %v2579 = vpop.f32.mrb[0].mxu0
      %v2580 = vadd.f32 0.0, %v2579
      %v2581 = vpop.f32.mrb[0].mxu0
      %v2582 = vpop.f32.mrb[0].mxu0
      %v2583 = vadd.f32 0.0, %v2582
      %v2584 = vpop.f32.mrb[0].mxu0
      %2585 = vmatprep.mubr.bf16.mxu0 0
      %2586 = vmatmul.mubr.bf16.gmra.mrb[0].mxu0 %v1588
      %v2587 = vpop.f32.mrb[0].mxu0
      %v2588 = vadd.f32 0.0, %v2587
      %v2589 = vpop.f32.mrb[0].mxu0
      %v2590 = vpop.f32.mrb[0].mxu0
      %v2591 = vadd.f32 0.0, %v2590
      %v2592 = vpop.f32.mrb[0].mxu0
      %2593 = vmatprep.mubr.bf16.mxu0 0
      %2594 = vmatmul.mubr.bf16.gmra.mrb[0].mxu0 %v2375
      %v2595 = vpop.f32.mrb[0].mxu0
      %v2596 = vadd.f32 0.0, %v2595
      %v2597 = vpop.f32.mrb[0].mxu0
      %v2598 = vpop.f32.mrb[0].mxu0
      %v2599 = vadd.f32 0.0, %v2598
      %v2600 = vpop.f32.mrb[0].mxu0
      %2601 = vdwg.mxu0
      %v2602 = vadd.f32 %v2335, %v2476
      %v2603 = vadd.f32 %v2336, %v2479
      %v2604 = vadd.f32 %v2337, %v2484
      %v2605 = vadd.f32 %v2338, %v2487
      %v2606 = vadd.f32 %v2339, %v2492
      %v2607 = vadd.f32 %v2340, %v2495
      %v2608 = vadd.f32 %v2341, %v2500
      %v2609 = vadd.f32 %v2342, %v2503
      %v2610 = vadd.f32 %v2343, %v2508
      %v2611 = vadd.f32 %v2344, %v2511
      %v2612 = vadd.f32 %v2345, %v2516
      %v2613 = vadd.f32 %v2346, %v2519
      %v2614 = vadd.f32 %v2347, %v2524
      %v2615 = vadd.f32 %v2348, %v2527
      %v2616 = vadd.f32 %v2349, %v2532
      %v2617 = vadd.f32 %v2350, %v2535
      %v2618 = vadd.f32 %v2351, %v2540
      %v2619 = vadd.f32 %v2352, %v2543
      %v2620 = vadd.f32 %v2353, %v2548
      %v2621 = vadd.f32 %v2354, %v2551
      %v2622 = vadd.f32 %v2355, %v2556
      %v2623 = vadd.f32 %v2356, %v2559
      %v2624 = vadd.f32 %v2357, %v2564
      %v2625 = vadd.f32 %v2358, %v2567
      %v2626 = vadd.f32 %v2359, %v2572
      %v2627 = vadd.f32 %v2360, %v2575
      %v2628 = vadd.f32 %v2361, %v2580
      %v2629 = vadd.f32 %v2362, %v2583
      %v2630 = vadd.f32 %v2363, %v2588
      %v2631 = vadd.f32 %v2364, %v2591
      %v2632 = vadd.f32 %v2365, %v2596
      %v2633 = vadd.f32 %v2366, %v2599
      %s2634 = scalar_lea.vmem %s3, 448
      %v2635 = vld [vmem:[%s2634] sm:$0xf]
      %v2636 = vld [vmem:[%s2634 + $0x4] sm:$0xf]
      %v2637 = vld [vmem:[%s2634 + $0x8] sm:$0xf]
      %v2638 = vld [vmem:[%s2634 + $0xc] sm:$0xf]
      %v2639 = vld [vmem:[%s2634 + $0x10] sm:$0xf]
      %v2640 = vld [vmem:[%s2634 + $0x14] sm:$0xf]
      %v2641 = vld [vmem:[%s2634 + $0x18] sm:$0xf]
      %v2642 = vld [vmem:[%s2634 + $0x1c] sm:$0xf]
      %v2643 = vld [vmem:[%s2634 + $0x20] sm:$0xf]
      %v2644 = vld [vmem:[%s2634 + $0x24] sm:$0xf]
      %v2645 = vld [vmem:[%s2634 + $0x28] sm:$0xf]
      %v2646 = vld [vmem:[%s2634 + $0x2c] sm:$0xf]
      %v2647 = vld [vmem:[%s2634 + $0x30] sm:$0xf]
      %v2648 = vld [vmem:[%s2634 + $0x34] sm:$0xf]
      %v2649 = vld [vmem:[%s2634 + $0x38] sm:$0xf]
      %v2650 = vld [vmem:[%s2634 + $0x3c] sm:$0xf]
      %v2667 = vunpack.c.l.b16 %v2635
      %v2668 = vunpack.c.l.b16 %v2636
      %v2669 = vunpack.c.l.b16 %v2637
      %v2670 = vunpack.c.l.b16 %v2638
      %v2671 = vunpack.c.l.b16 %v2639
      %v2672 = vunpack.c.l.b16 %v2640
      %v2673 = vunpack.c.l.b16 %v2641
      %v2674 = vunpack.c.l.b16 %v2642
      %v2675 = vunpack.c.l.b16 %v2643
      %v2676 = vunpack.c.l.b16 %v2644
      %v2677 = vunpack.c.l.b16 %v2645
      %v2678 = vunpack.c.l.b16 %v2646
      %v2679 = vunpack.c.l.b16 %v2647
      %v2680 = vunpack.c.l.b16 %v2648
      %v2681 = vunpack.c.l.b16 %v2649
      %v2682 = vunpack.c.l.b16 %v2650
      %v2683 = vpack.c.b16 %v2668, %v2667
      %v2684 = vpack.c.b16 %v2670, %v2669
      %v2685 = vpack.c.b16 %v2672, %v2671
      %v2686 = vpack.c.b16 %v2674, %v2673
      %v2687 = vpack.c.b16 %v2676, %v2675
      %v2688 = vpack.c.b16 %v2678, %v2677
      %v2689 = vpack.c.b16 %v2680, %v2679
      %v2690 = vpack.c.b16 %v2682, %v2681
      %2699 = vmatprep.subr.bf16.mxu0 0
      %2700 = vmatpush1.bf16.msra.mxu0 %v2683
      %2701 = vmatprep.subr.bf16.mxu0 0
      %2702 = vmatpush1.bf16.msra.mxu0 %v2684
      %2703 = vmatprep.subr.bf16.mxu0 0
      %2704 = vmatpush1.bf16.msra.mxu0 %v2685
      %2705 = vmatprep.subr.bf16.mxu0 0
      %2706 = vmatpush1.bf16.msra.mxu0 %v2686
      %2707 = vmatprep.subr.bf16.mxu0 0
      %2708 = vmatpush1.bf16.msra.mxu0 %v2687
      %2709 = vmatprep.subr.bf16.mxu0 0
      %2710 = vmatpush1.bf16.msra.mxu0 %v2688
      %2711 = vmatprep.subr.bf16.mxu0 0
      %2712 = vmatpush1.bf16.msra.mxu0 %v2689
      %2713 = vmatprep.subr.bf16.mxu0 0
      %2714 = vmatpush1.bf16.msra.mxu0 %v2690
      %2715 = vmatprep.subr.bf16.mxu0 0
      %2716 = vmatpush1.bf16.msra.mxu0 0
      %2717 = vmatprep.subr.bf16.mxu0 0
      %2718 = vmatpush1.bf16.msra.mxu0 0
      %2719 = vmatprep.subr.bf16.mxu0 0
      %2720 = vmatpush1.bf16.msra.mxu0 0
      %2721 = vmatprep.subr.bf16.mxu0 0
      %2722 = vmatpush1.bf16.msra.mxu0 0
      %2723 = vmatprep.subr.bf16.mxu0 0
      %2724 = vmatpush1.bf16.msra.mxu0 0
      %2725 = vmatprep.subr.bf16.mxu0 0
      %2726 = vmatpush1.bf16.msra.mxu0 0
      %2727 = vmatprep.subr.bf16.mxu0 0
      %2728 = vmatpush1.bf16.msra.mxu0 0
      %2729 = vmatprep.subr.bf16.mxu0 0
      %2730 = vmatpush1.bf16.msra.mxu0 0
      %2731 = vmatprep.mubr.bf16.mxu0 0
      %2732 = vmatmul.mubr.bf16.gmra.mrb[0].mxu0 %v641
      %v2733 = vpop.f32.mrb[0].mxu0
      %v2734 = vadd.f32 0.0, %v2733
      %v2735 = vpop.f32.mrb[0].mxu0
      %v2736 = vpop.f32.mrb[0].mxu0
      %v2737 = vadd.f32 0.0, %v2736
      %v2738 = vpop.f32.mrb[0].mxu0
      %2739 = vmatprep.mubr.bf16.mxu0 0
      %2740 = vmatmul.mubr.bf16.gmra.mrb[0].mxu0 %v642
      %v2741 = vpop.f32.mrb[0].mxu0
      %v2742 = vadd.f32 0.0, %v2741
      %v2743 = vpop.f32.mrb[0].mxu0
      %v2744 = vpop.f32.mrb[0].mxu0
      %v2745 = vadd.f32 0.0, %v2744
      %v2746 = vpop.f32.mrb[0].mxu0
      %2747 = vmatprep.mubr.bf16.mxu0 0
      %2748 = vmatmul.mubr.bf16.gmra.mrb[0].mxu0 %v643
      %v2749 = vpop.f32.mrb[0].mxu0
      %v2750 = vadd.f32 0.0, %v2749
      %v2751 = vpop.f32.mrb[0].mxu0
      %v2752 = vpop.f32.mrb[0].mxu0
      %v2753 = vadd.f32 0.0, %v2752
      %v2754 = vpop.f32.mrb[0].mxu0
      %2755 = vmatprep.mubr.bf16.mxu0 0
      %2756 = vmatmul.mubr.bf16.gmra.mrb[0].mxu0 %v644
      %v2757 = vpop.f32.mrb[0].mxu0
      %v2758 = vadd.f32 0.0, %v2757
      %v2759 = vpop.f32.mrb[0].mxu0
      %v2760 = vpop.f32.mrb[0].mxu0
      %v2761 = vadd.f32 0.0, %v2760
      %v2762 = vpop.f32.mrb[0].mxu0
      %2763 = vmatprep.mubr.bf16.mxu0 0
      %2764 = vmatmul.mubr.bf16.gmra.mrb[0].mxu0 %v645
      %v2765 = vpop.f32.mrb[0].mxu0
      %v2766 = vadd.f32 0.0, %v2765
      %v2767 = vpop.f32.mrb[0].mxu0
      %v2768 = vpop.f32.mrb[0].mxu0
      %v2769 = vadd.f32 0.0, %v2768
      %v2770 = vpop.f32.mrb[0].mxu0
      %2771 = vmatprep.mubr.bf16.mxu0 0
      %2772 = vmatmul.mubr.bf16.gmra.mrb[0].mxu0 %v646
      %v2773 = vpop.f32.mrb[0].mxu0
      %v2774 = vadd.f32 0.0, %v2773
      %v2775 = vpop.f32.mrb[0].mxu0
      %v2776 = vpop.f32.mrb[0].mxu0
      %v2777 = vadd.f32 0.0, %v2776
      %v2778 = vpop.f32.mrb[0].mxu0
      %2779 = vmatprep.mubr.bf16.mxu0 0
      %2780 = vmatmul.mubr.bf16.gmra.mrb[0].mxu0 %v647
      %v2781 = vpop.f32.mrb[0].mxu0
      %v2782 = vadd.f32 0.0, %v2781
      %v2783 = vpop.f32.mrb[0].mxu0
      %v2784 = vpop.f32.mrb[0].mxu0
      %v2785 = vadd.f32 0.0, %v2784
      %v2786 = vpop.f32.mrb[0].mxu0
      %2787 = vmatprep.mubr.bf16.mxu0 0
      %2788 = vmatmul.mubr.bf16.gmra.mrb[0].mxu0 %v648
      %v2789 = vpop.f32.mrb[0].mxu0
      %v2790 = vadd.f32 0.0, %v2789
      %v2791 = vpop.f32.mrb[0].mxu0
      %v2792 = vpop.f32.mrb[0].mxu0
      %v2793 = vadd.f32 0.0, %v2792
      %v2794 = vpop.f32.mrb[0].mxu0
      %2795 = vmatprep.mubr.bf16.mxu0 0
      %2796 = vmatmul.mubr.bf16.gmra.mrb[0].mxu0 %v649
      %v2797 = vpop.f32.mrb[0].mxu0
      %v2798 = vadd.f32 0.0, %v2797
      %v2799 = vpop.f32.mrb[0].mxu0
      %v2800 = vpop.f32.mrb[0].mxu0
      %v2801 = vadd.f32 0.0, %v2800
      %v2802 = vpop.f32.mrb[0].mxu0
      %2803 = vmatprep.mubr.bf16.mxu0 0
      %2804 = vmatmul.mubr.bf16.gmra.mrb[0].mxu0 %v650
      %v2805 = vpop.f32.mrb[0].mxu0
      %v2806 = vadd.f32 0.0, %v2805
      %v2807 = vpop.f32.mrb[0].mxu0
      %v2808 = vpop.f32.mrb[0].mxu0
      %v2809 = vadd.f32 0.0, %v2808
      %v2810 = vpop.f32.mrb[0].mxu0
      %2811 = vmatprep.mubr.bf16.mxu0 0
      %2812 = vmatmul.mubr.bf16.gmra.mrb[0].mxu0 %v651
      %v2813 = vpop.f32.mrb[0].mxu0
      %v2814 = vadd.f32 0.0, %v2813
      %v2815 = vpop.f32.mrb[0].mxu0
      %v2816 = vpop.f32.mrb[0].mxu0
      %v2817 = vadd.f32 0.0, %v2816
      %v2818 = vpop.f32.mrb[0].mxu0
      %2819 = vmatprep.mubr.bf16.mxu0 0
      %2820 = vmatmul.mubr.bf16.gmra.mrb[0].mxu0 %v652
      %v2821 = vpop.f32.mrb[0].mxu0
      %v2822 = vadd.f32 0.0, %v2821
      %v2823 = vpop.f32.mrb[0].mxu0
      %v2824 = vpop.f32.mrb[0].mxu0
      %v2825 = vadd.f32 0.0, %v2824
      %v2826 = vpop.f32.mrb[0].mxu0
      %2827 = vmatprep.mubr.bf16.mxu0 0
      %2828 = vmatmul.mubr.bf16.gmra.mrb[0].mxu0 %v653
      %v2829 = vpop.f32.mrb[0].mxu0
      %v2830 = vadd.f32 0.0, %v2829
      %v2831 = vpop.f32.mrb[0].mxu0
      %v2832 = vpop.f32.mrb[0].mxu0
      %v2833 = vadd.f32 0.0, %v2832
      %v2834 = vpop.f32.mrb[0].mxu0
      %2835 = vmatprep.mubr.bf16.mxu0 0
      %2836 = vmatmul.mubr.bf16.gmra.mrb[0].mxu0 %v654
      %v2837 = vpop.f32.mrb[0].mxu0
      %v2838 = vadd.f32 0.0, %v2837
      %v2839 = vpop.f32.mrb[0].mxu0
      %v2840 = vpop.f32.mrb[0].mxu0
      %v2841 = vadd.f32 0.0, %v2840
      %v2842 = vpop.f32.mrb[0].mxu0
      %2843 = vmatprep.mubr.bf16.mxu0 0
      %2844 = vmatmul.mubr.bf16.gmra.mrb[0].mxu0 %v655
      %v2845 = vpop.f32.mrb[0].mxu0
      %v2846 = vadd.f32 0.0, %v2845
      %v2847 = vpop.f32.mrb[0].mxu0
      %v2848 = vpop.f32.mrb[0].mxu0
      %v2849 = vadd.f32 0.0, %v2848
      %v2850 = vpop.f32.mrb[0].mxu0
      %2851 = vmatprep.mubr.bf16.mxu0 0
      %2852 = vmatmul.mubr.bf16.gmra.mrb[0].mxu0 %v656
      %v2853 = vpop.f32.mrb[0].mxu0
      %v2854 = vadd.f32 0.0, %v2853
      %v2855 = vpop.f32.mrb[0].mxu0
      %v2856 = vpop.f32.mrb[0].mxu0
      %v2857 = vadd.f32 0.0, %v2856
      %v2858 = vpop.f32.mrb[0].mxu0
      %2859 = vdwg.mxu0
      %v2860 = vadd.f32 %v2602, %v2734
      %v2861 = vadd.f32 %v2603, %v2737
      %v2862 = vadd.f32 %v2604, %v2742
      %v2863 = vadd.f32 %v2605, %v2745
      %v2864 = vadd.f32 %v2606, %v2750
      %v2865 = vadd.f32 %v2607, %v2753
      %v2866 = vadd.f32 %v2608, %v2758
      %v2867 = vadd.f32 %v2609, %v2761
      %v2868 = vadd.f32 %v2610, %v2766
      %v2869 = vadd.f32 %v2611, %v2769
      %v2870 = vadd.f32 %v2612, %v2774
      %v2871 = vadd.f32 %v2613, %v2777
      %v2872 = vadd.f32 %v2614, %v2782
      %v2873 = vadd.f32 %v2615, %v2785
      %v2874 = vadd.f32 %v2616, %v2790
      %v2875 = vadd.f32 %v2617, %v2793
      %v2876 = vadd.f32 %v2618, %v2798
      %v2877 = vadd.f32 %v2619, %v2801
      %v2878 = vadd.f32 %v2620, %v2806
      %v2879 = vadd.f32 %v2621, %v2809
      %v2880 = vadd.f32 %v2622, %v2814
      %v2881 = vadd.f32 %v2623, %v2817
      %v2882 = vadd.f32 %v2624, %v2822
      %v2883 = vadd.f32 %v2625, %v2825
      %v2884 = vadd.f32 %v2626, %v2830
      %v2885 = vadd.f32 %v2627, %v2833
      %v2886 = vadd.f32 %v2628, %v2838
      %v2887 = vadd.f32 %v2629, %v2841
      %v2888 = vadd.f32 %v2630, %v2846
      %v2889 = vadd.f32 %v2631, %v2849
      %v2890 = vadd.f32 %v2632, %v2854
      %v2891 = vadd.f32 %v2633, %v2857
      %v2892 = vrot.slane %v2371, 1
      %v2893 = vor.u32 %v2368, %v2892
      %v2895 = vsel %vm1305, %v2893, 0
      %s2896 = scalar_lea.vmem %s3, 512
      %v2897 = vld [vmem:[%s2896] sm:$0xf]
      %v2898 = vld [vmem:[%s2896 + $0x4] sm:$0xf]
      %v2899 = vld [vmem:[%s2896 + $0x8] sm:$0xf]
      %v2900 = vld [vmem:[%s2896 + $0xc] sm:$0xf]
      %v2901 = vld [vmem:[%s2896 + $0x10] sm:$0xf]
      %v2902 = vld [vmem:[%s2896 + $0x14] sm:$0xf]
      %v2903 = vld [vmem:[%s2896 + $0x18] sm:$0xf]
      %v2904 = vld [vmem:[%s2896 + $0x1c] sm:$0xf]
      %v2905 = vld [vmem:[%s2896 + $0x20] sm:$0xf]
      %v2906 = vld [vmem:[%s2896 + $0x24] sm:$0xf]
      %v2907 = vld [vmem:[%s2896 + $0x28] sm:$0xf]
      %v2908 = vld [vmem:[%s2896 + $0x2c] sm:$0xf]
      %v2909 = vld [vmem:[%s2896 + $0x30] sm:$0xf]
      %v2910 = vld [vmem:[%s2896 + $0x34] sm:$0xf]
      %v2911 = vld [vmem:[%s2896 + $0x38] sm:$0xf]
      %v2912 = vld [vmem:[%s2896 + $0x3c] sm:$0xf]
      %v2929 = vunpack.c.l.b16 %v2897
      %v2930 = vunpack.c.l.b16 %v2898
      %v2931 = vunpack.c.l.b16 %v2899
      %v2932 = vunpack.c.l.b16 %v2900
      %v2933 = vunpack.c.l.b16 %v2901
      %v2934 = vunpack.c.l.b16 %v2902
      %v2935 = vunpack.c.l.b16 %v2903
      %v2936 = vunpack.c.l.b16 %v2904
      %v2937 = vunpack.c.l.b16 %v2905
      %v2938 = vunpack.c.l.b16 %v2906
      %v2939 = vunpack.c.l.b16 %v2907
      %v2940 = vunpack.c.l.b16 %v2908
      %v2941 = vunpack.c.l.b16 %v2909
      %v2942 = vunpack.c.l.b16 %v2910
      %v2943 = vunpack.c.l.b16 %v2911
      %v2944 = vunpack.c.l.b16 %v2912
      %v2945 = vpack.c.b16 %v2930, %v2929
      %v2946 = vpack.c.b16 %v2932, %v2931
      %v2947 = vpack.c.b16 %v2934, %v2933
      %v2948 = vpack.c.b16 %v2936, %v2935
      %v2949 = vpack.c.b16 %v2938, %v2937
      %v2950 = vpack.c.b16 %v2940, %v2939
      %v2951 = vpack.c.b16 %v2942, %v2941
      %v2952 = vpack.c.b16 %v2944, %v2943
      %2961 = vmatprep.subr.bf16.mxu0 0
      %2962 = vmatpush1.bf16.msra.mxu0 %v2945
      %2963 = vmatprep.subr.bf16.mxu0 0
      %2964 = vmatpush1.bf16.msra.mxu0 %v2946
      %2965 = vmatprep.subr.bf16.mxu0 0
      %2966 = vmatpush1.bf16.msra.mxu0 %v2947
      %2967 = vmatprep.subr.bf16.mxu0 0
      %2968 = vmatpush1.bf16.msra.mxu0 %v2948
      %2969 = vmatprep.subr.bf16.mxu0 0
      %2970 = vmatpush1.bf16.msra.mxu0 %v2949
      %2971 = vmatprep.subr.bf16.mxu0 0
      %2972 = vmatpush1.bf16.msra.mxu0 %v2950
      %2973 = vmatprep.subr.bf16.mxu0 0
      %2974 = vmatpush1.bf16.msra.mxu0 %v2951
      %2975 = vmatprep.subr.bf16.mxu0 0
      %2976 = vmatpush1.bf16.msra.mxu0 %v2952
      %2977 = vmatprep.subr.bf16.mxu0 0
      %2978 = vmatpush1.bf16.msra.mxu0 0
      %2979 = vmatprep.subr.bf16.mxu0 0
      %2980 = vmatpush1.bf16.msra.mxu0 0
      %2981 = vmatprep.subr.bf16.mxu0 0
      %2982 = vmatpush1.bf16.msra.mxu0 0
      %2983 = vmatprep.subr.bf16.mxu0 0
      %2984 = vmatpush1.bf16.msra.mxu0 0
      %2985 = vmatprep.subr.bf16.mxu0 0
      %2986 = vmatpush1.bf16.msra.mxu0 0
      %2987 = vmatprep.subr.bf16.mxu0 0
      %2988 = vmatpush1.bf16.msra.mxu0 0
      %2989 = vmatprep.subr.bf16.mxu0 0
      %2990 = vmatpush1.bf16.msra.mxu0 0
      %2991 = vmatprep.subr.bf16.mxu0 0
      %2992 = vmatpush1.bf16.msra.mxu0 0
      %2993 = vmatprep.mubr.bf16.mxu0 0
      %2994 = vmatmul.mubr.bf16.gmra.mrb[0].mxu0 %v1308
      %v2995 = vpop.f32.mrb[0].mxu0
      %v2996 = vadd.f32 0.0, %v2995
      %v2997 = vpop.f32.mrb[0].mxu0
      %v2998 = vpop.f32.mrb[0].mxu0
      %v2999 = vadd.f32 0.0, %v2998
      %v3000 = vpop.f32.mrb[0].mxu0
      %3001 = vmatprep.mubr.bf16.mxu0 0
      %3002 = vmatmul.mubr.bf16.gmra.mrb[0].mxu0 %v1309
      %v3003 = vpop.f32.mrb[0].mxu0
      %v3004 = vadd.f32 0.0, %v3003
      %v3005 = vpop.f32.mrb[0].mxu0
      %v3006 = vpop.f32.mrb[0].mxu0
      %v3007 = vadd.f32 0.0, %v3006
      %v3008 = vpop.f32.mrb[0].mxu0
      %3009 = vmatprep.mubr.bf16.mxu0 0
      %3010 = vmatmul.mubr.bf16.gmra.mrb[0].mxu0 %v1310
      %v3011 = vpop.f32.mrb[0].mxu0
      %v3012 = vadd.f32 0.0, %v3011
      %v3013 = vpop.f32.mrb[0].mxu0
      %v3014 = vpop.f32.mrb[0].mxu0
      %v3015 = vadd.f32 0.0, %v3014
      %v3016 = vpop.f32.mrb[0].mxu0
      %3017 = vmatprep.mubr.bf16.mxu0 0
      %3018 = vmatmul.mubr.bf16.gmra.mrb[0].mxu0 %v1311
      %v3019 = vpop.f32.mrb[0].mxu0
      %v3020 = vadd.f32 0.0, %v3019
      %v3021 = vpop.f32.mrb[0].mxu0
      %v3022 = vpop.f32.mrb[0].mxu0
      %v3023 = vadd.f32 0.0, %v3022
      %v3024 = vpop.f32.mrb[0].mxu0
      %3025 = vmatprep.mubr.bf16.mxu0 0
      %3026 = vmatmul.mubr.bf16.gmra.mrb[0].mxu0 %v1312
      %v3027 = vpop.f32.mrb[0].mxu0
      %v3028 = vadd.f32 0.0, %v3027
      %v3029 = vpop.f32.mrb[0].mxu0
      %v3030 = vpop.f32.mrb[0].mxu0
      %v3031 = vadd.f32 0.0, %v3030
      %v3032 = vpop.f32.mrb[0].mxu0
      %3033 = vmatprep.mubr.bf16.mxu0 0
      %3034 = vmatmul.mubr.bf16.gmra.mrb[0].mxu0 %v1313
      %v3035 = vpop.f32.mrb[0].mxu0
      %v3036 = vadd.f32 0.0, %v3035
      %v3037 = vpop.f32.mrb[0].mxu0
      %v3038 = vpop.f32.mrb[0].mxu0
      %v3039 = vadd.f32 0.0, %v3038
      %v3040 = vpop.f32.mrb[0].mxu0
      %3041 = vmatprep.mubr.bf16.mxu0 0
      %3042 = vmatmul.mubr.bf16.gmra.mrb[0].mxu0 %v1314
      %v3043 = vpop.f32.mrb[0].mxu0
      %v3044 = vadd.f32 0.0, %v3043
      %v3045 = vpop.f32.mrb[0].mxu0
      %v3046 = vpop.f32.mrb[0].mxu0
      %v3047 = vadd.f32 0.0, %v3046
      %v3048 = vpop.f32.mrb[0].mxu0
      %3049 = vmatprep.mubr.bf16.mxu0 0
      %3050 = vmatmul.mubr.bf16.gmra.mrb[0].mxu0 %v1315
      %v3051 = vpop.f32.mrb[0].mxu0
      %v3052 = vadd.f32 0.0, %v3051
      %v3053 = vpop.f32.mrb[0].mxu0
      %v3054 = vpop.f32.mrb[0].mxu0
      %v3055 = vadd.f32 0.0, %v3054
      %v3056 = vpop.f32.mrb[0].mxu0
      %3057 = vmatprep.mubr.bf16.mxu0 0
      %3058 = vmatmul.mubr.bf16.gmra.mrb[0].mxu0 %v1316
      %v3059 = vpop.f32.mrb[0].mxu0
      %v3060 = vadd.f32 0.0, %v3059
      %v3061 = vpop.f32.mrb[0].mxu0
      %v3062 = vpop.f32.mrb[0].mxu0
      %v3063 = vadd.f32 0.0, %v3062
      %v3064 = vpop.f32.mrb[0].mxu0
      %3065 = vmatprep.mubr.bf16.mxu0 0
      %3066 = vmatmul.mubr.bf16.gmra.mrb[0].mxu0 %v1317
      %v3067 = vpop.f32.mrb[0].mxu0
      %v3068 = vadd.f32 0.0, %v3067
      %v3069 = vpop.f32.mrb[0].mxu0
      %v3070 = vpop.f32.mrb[0].mxu0
      %v3071 = vadd.f32 0.0, %v3070
      %v3072 = vpop.f32.mrb[0].mxu0
      %3073 = vmatprep.mubr.bf16.mxu0 0
      %3074 = vmatmul.mubr.bf16.gmra.mrb[0].mxu0 %v1318
      %v3075 = vpop.f32.mrb[0].mxu0
      %v3076 = vadd.f32 0.0, %v3075
      %v3077 = vpop.f32.mrb[0].mxu0
      %v3078 = vpop.f32.mrb[0].mxu0
      %v3079 = vadd.f32 0.0, %v3078
      %v3080 = vpop.f32.mrb[0].mxu0
      %3081 = vmatprep.mubr.bf16.mxu0 0
      %3082 = vmatmul.mubr.bf16.gmra.mrb[0].mxu0 %v1319
      %v3083 = vpop.f32.mrb[0].mxu0
      %v3084 = vadd.f32 0.0, %v3083
      %v3085 = vpop.f32.mrb[0].mxu0
      %v3086 = vpop.f32.mrb[0].mxu0
      %v3087 = vadd.f32 0.0, %v3086
      %v3088 = vpop.f32.mrb[0].mxu0
      %3089 = vmatprep.mubr.bf16.mxu0 0
      %3090 = vmatmul.mubr.bf16.gmra.mrb[0].mxu0 %v1320
      %v3091 = vpop.f32.mrb[0].mxu0
      %v3092 = vadd.f32 0.0, %v3091
      %v3093 = vpop.f32.mrb[0].mxu0
      %v3094 = vpop.f32.mrb[0].mxu0
      %v3095 = vadd.f32 0.0, %v3094
      %v3096 = vpop.f32.mrb[0].mxu0
      %3097 = vmatprep.mubr.bf16.mxu0 0
      %3098 = vmatmul.mubr.bf16.gmra.mrb[0].mxu0 %v1321
      %v3099 = vpop.f32.mrb[0].mxu0
      %v3100 = vadd.f32 0.0, %v3099
      %v3101 = vpop.f32.mrb[0].mxu0
      %v3102 = vpop.f32.mrb[0].mxu0
      %v3103 = vadd.f32 0.0, %v3102
      %v3104 = vpop.f32.mrb[0].mxu0
      %3105 = vmatprep.mubr.bf16.mxu0 0
      %3106 = vmatmul.mubr.bf16.gmra.mrb[0].mxu0 %v2108
      %v3107 = vpop.f32.mrb[0].mxu0
      %v3108 = vadd.f32 0.0, %v3107
      %v3109 = vpop.f32.mrb[0].mxu0
      %v3110 = vpop.f32.mrb[0].mxu0
      %v3111 = vadd.f32 0.0, %v3110
      %v3112 = vpop.f32.mrb[0].mxu0
      %3113 = vmatprep.mubr.bf16.mxu0 0
      %3114 = vmatmul.mubr.bf16.gmra.mrb[0].mxu0 %v2895
      %v3115 = vpop.f32.mrb[0].mxu0
      %v3116 = vadd.f32 0.0, %v3115
      %v3117 = vpop.f32.mrb[0].mxu0
      %v3118 = vpop.f32.mrb[0].mxu0
      %v3119 = vadd.f32 0.0, %v3118
      %v3120 = vpop.f32.mrb[0].mxu0
      %3121 = vdwg.mxu0
      %v3122 = vadd.f32 %v2860, %v2996
      %v3123 = vadd.f32 %v2861, %v2999
      %v3124 = vadd.f32 %v2862, %v3004
      %v3125 = vadd.f32 %v2863, %v3007
      %v3126 = vadd.f32 %v2864, %v3012
      %v3127 = vadd.f32 %v2865, %v3015
      %v3128 = vadd.f32 %v2866, %v3020
      %v3129 = vadd.f32 %v2867, %v3023
      %v3130 = vadd.f32 %v2868, %v3028
      %v3131 = vadd.f32 %v2869, %v3031
      %v3132 = vadd.f32 %v2870, %v3036
      %v3133 = vadd.f32 %v2871, %v3039
      %v3134 = vadd.f32 %v2872, %v3044
      %v3135 = vadd.f32 %v2873, %v3047
      %v3136 = vadd.f32 %v2874, %v3052
      %v3137 = vadd.f32 %v2875, %v3055
      %v3138 = vadd.f32 %v2876, %v3060
      %v3139 = vadd.f32 %v2877, %v3063
      %v3140 = vadd.f32 %v2878, %v3068
      %v3141 = vadd.f32 %v2879, %v3071
      %v3142 = vadd.f32 %v2880, %v3076
      %v3143 = vadd.f32 %v2881, %v3079
      %v3144 = vadd.f32 %v2882, %v3084
      %v3145 = vadd.f32 %v2883, %v3087
      %v3146 = vadd.f32 %v2884, %v3092
      %v3147 = vadd.f32 %v2885, %v3095
      %v3148 = vadd.f32 %v2886, %v3100
      %v3149 = vadd.f32 %v2887, %v3103
      %v3150 = vadd.f32 %v2888, %v3108
      %v3151 = vadd.f32 %v2889, %v3111
      %v3152 = vadd.f32 %v2890, %v3116
      %v3153 = vadd.f32 %v2891, %v3119
      %v3154 = vld [vmem:[%s456] sm:$0x1]
      %v3156 = vlaneseq
      %v3157 = vshrl.u32 %v3156, 7
      %v3158 = vsub.s32 0, %v3157
      %v3159 = vrot.slane %v3154, %v3158
      %v3161 = vmul.f32 %v3122, %v3159
      %v3162 = vmul.f32 %v3123, %v3159
      %v3163 = vmul.f32 %v3124, %v3159
      %v3164 = vmul.f32 %v3125, %v3159
      %v3165 = vmul.f32 %v3126, %v3159
      %v3166 = vmul.f32 %v3127, %v3159
      %v3167 = vmul.f32 %v3128, %v3159
      %v3168 = vmul.f32 %v3129, %v3159
      %v3169 = vmul.f32 %v3130, %v3159
      %v3170 = vmul.f32 %v3131, %v3159
      %v3171 = vmul.f32 %v3132, %v3159
      %v3172 = vmul.f32 %v3133, %v3159
      %v3173 = vmul.f32 %v3134, %v3159
      %v3174 = vmul.f32 %v3135, %v3159
      %v3175 = vmul.f32 %v3136, %v3159
      %v3176 = vmul.f32 %v3137, %v3159
      %v3177 = vmul.f32 %v3138, %v3159
      %v3178 = vmul.f32 %v3139, %v3159
      %v3179 = vmul.f32 %v3140, %v3159
      %v3180 = vmul.f32 %v3141, %v3159
      %v3181 = vmul.f32 %v3142, %v3159
      %v3182 = vmul.f32 %v3143, %v3159
      %v3183 = vmul.f32 %v3144, %v3159
      %v3184 = vmul.f32 %v3145, %v3159
      %v3185 = vmul.f32 %v3146, %v3159
      %v3186 = vmul.f32 %v3147, %v3159
      %v3187 = vmul.f32 %v3148, %v3159
      %v3188 = vmul.f32 %v3149, %v3159
      %v3189 = vmul.f32 %v3150, %v3159
      %v3190 = vmul.f32 %v3151, %v3159
      %v3191 = vmul.f32 %v3152, %v3159
      %v3192 = vmul.f32 %v3153, %v3159
      %3193 = vst [vmem:[%s466] sm:$0xff] %v3161
      %3194 = vst [vmem:[%s466 + $0x8] sm:$0xff] %v3162
      %3195 = vst [vmem:[%s466 + $0x10] sm:$0xff] %v3163
      %3196 = vst [vmem:[%s466 + $0x18] sm:$0xff] %v3164
      %3197 = vst [vmem:[%s466 + $0x20] sm:$0xff] %v3165
      %3198 = vst [vmem:[%s466 + $0x28] sm:$0xff] %v3166
      %3199 = vst [vmem:[%s466 + $0x30] sm:$0xff] %v3167
      %3200 = vst [vmem:[%s466 + $0x38] sm:$0xff] %v3168
      %3201 = vst [vmem:[%s466 + $0x40] sm:$0xff] %v3169
      %3202 = vst [vmem:[%s466 + $0x48] sm:$0xff] %v3170
      %3203 = vst [vmem:[%s466 + $0x50] sm:$0xff] %v3171
      %3204 = vst [vmem:[%s466 + $0x58] sm:$0xff] %v3172
      %3205 = vst [vmem:[%s466 + $0x60] sm:$0xff] %v3173
      %3206 = vst [vmem:[%s466 + $0x68] sm:$0xff] %v3174
      %3207 = vst [vmem:[%s466 + $0x70] sm:$0xff] %v3175
      %3208 = vst [vmem:[%s466 + $0x78] sm:$0xff] %v3176
      %3209 = vst [vmem:[%s466 + $0x80] sm:$0xff] %v3177
      %3210 = vst [vmem:[%s466 + $0x88] sm:$0xff] %v3178
      %3211 = vst [vmem:[%s466 + $0x90] sm:$0xff] %v3179
      %3212 = vst [vmem:[%s466 + $0x98] sm:$0xff] %v3180
      %3213 = vst [vmem:[%s466 + $0xa0] sm:$0xff] %v3181
      %3214 = vst [vmem:[%s466 + $0xa8] sm:$0xff] %v3182
      %3215 = vst [vmem:[%s466 + $0xb0] sm:$0xff] %v3183
      %3216 = vst [vmem:[%s466 + $0xb8] sm:$0xff] %v3184
      %3217 = vst [vmem:[%s466 + $0xc0] sm:$0xff] %v3185
      %3218 = vst [vmem:[%s466 + $0xc8] sm:$0xff] %v3186
      %3219 = vst [vmem:[%s466 + $0xd0] sm:$0xff] %v3187
      %3220 = vst [vmem:[%s466 + $0xd8] sm:$0xff] %v3188
      %3221 = vst [vmem:[%s466 + $0xe0] sm:$0xff] %v3189
      %3222 = vst [vmem:[%s466 + $0xe8] sm:$0xff] %v3190
      %3223 = vst [vmem:[%s466 + $0xf0] sm:$0xff] %v3191
      %3224 = vst [vmem:[%s466 + $0xf8] sm:$0xff] %v3192
      %v3225 = vadd.f32 %v3161, %v3162
      %v3226 = vadd.f32 %v3225, %v3163
      %v3227 = vadd.f32 %v3226, %v3164
      %v3228 = vadd.f32 %v3227, %v3165
      %v3229 = vadd.f32 %v3228, %v3166
      %v3230 = vadd.f32 %v3229, %v3167
      %v3231 = vadd.f32 %v3230, %v3168
      %v3232 = vadd.f32 %v3231, %v3169
      %v3233 = vadd.f32 %v3232, %v3170
      %v3234 = vadd.f32 %v3233, %v3171
      %v3235 = vadd.f32 %v3234, %v3172
      %v3236 = vadd.f32 %v3235, %v3173
      %v3237 = vadd.f32 %v3236, %v3174
      %v3238 = vadd.f32 %v3237, %v3175
      %v3239 = vadd.f32 %v3238, %v3176
      %v3240 = vadd.f32 %v3239, %v3177
      %v3241 = vadd.f32 %v3240, %v3178
      %v3242 = vadd.f32 %v3241, %v3179
      %v3243 = vadd.f32 %v3242, %v3180
      %v3244 = vadd.f32 %v3243, %v3181
      %v3245 = vadd.f32 %v3244, %v3182
      %v3246 = vadd.f32 %v3245, %v3183
      %v3247 = vadd.f32 %v3246, %v3184
      %v3248 = vadd.f32 %v3247, %v3185
      %v3249 = vadd.f32 %v3248, %v3186
      %v3250 = vadd.f32 %v3249, %v3187
      %v3251 = vadd.f32 %v3250, %v3188
      %v3252 = vadd.f32 %v3251, %v3189
      %v3253 = vadd.f32 %v3252, %v3190
      %v3254 = vadd.f32 %v3253, %v3191
      %v3255 = vadd.f32 %v3254, %v3192
      %v3256 = vrot.slane %v3255, 4
      %v3257 = vadd.f32 %v3255, %v3256
      %v3258 = vrot.slane %v3257, 2
      %v3259 = vadd.f32 %v3257, %v3258
      %v3260 = vrot.slane %v3259, 1
      %v3261 = vadd.f32 %v3259, %v3260
      %v3262 = vmul.f32 %v3161, %v3161
      %v3263 = vmul.f32 %v3162, %v3162
      %v3264 = vmul.f32 %v3163, %v3163
      %v3265 = vmul.f32 %v3164, %v3164
      %v3266 = vmul.f32 %v3165, %v3165
      %v3267 = vmul.f32 %v3166, %v3166
      %v3268 = vmul.f32 %v3167, %v3167
      %v3269 = vmul.f32 %v3168, %v3168
      %v3270 = vmul.f32 %v3169, %v3169
      %v3271 = vmul.f32 %v3170, %v3170
      %v3272 = vmul.f32 %v3171, %v3171
      %v3273 = vmul.f32 %v3172, %v3172
      %v3274 = vmul.f32 %v3173, %v3173
      %v3275 = vmul.f32 %v3174, %v3174
      %v3276 = vmul.f32 %v3175, %v3175
      %v3277 = vmul.f32 %v3176, %v3176
      %v3278 = vmul.f32 %v3177, %v3177
      %v3279 = vmul.f32 %v3178, %v3178
      %v3280 = vmul.f32 %v3179, %v3179
      %v3281 = vmul.f32 %v3180, %v3180
      %v3282 = vmul.f32 %v3181, %v3181
      %v3283 = vmul.f32 %v3182, %v3182
      %v3284 = vmul.f32 %v3183, %v3183
      %v3285 = vmul.f32 %v3184, %v3184
      %v3286 = vmul.f32 %v3185, %v3185
      %v3287 = vmul.f32 %v3186, %v3186
      %v3288 = vmul.f32 %v3187, %v3187
      %v3289 = vmul.f32 %v3188, %v3188
      %v3290 = vmul.f32 %v3189, %v3189
      %v3291 = vmul.f32 %v3190, %v3190
      %v3292 = vmul.f32 %v3191, %v3191
      %v3293 = vmul.f32 %v3192, %v3192
      %v3294 = vadd.f32 %v3262, %v3263
      %v3295 = vadd.f32 %v3294, %v3264
      %v3296 = vadd.f32 %v3295, %v3265
      %v3297 = vadd.f32 %v3296, %v3266
      %v3298 = vadd.f32 %v3297, %v3267
      %v3299 = vadd.f32 %v3298, %v3268
      %v3300 = vadd.f32 %v3299, %v3269
      %v3301 = vadd.f32 %v3300, %v3270
      %v3302 = vadd.f32 %v3301, %v3271
      %v3303 = vadd.f32 %v3302, %v3272
      %v3304 = vadd.f32 %v3303, %v3273
      %v3305 = vadd.f32 %v3304, %v3274
      %v3306 = vadd.f32 %v3305, %v3275
      %v3307 = vadd.f32 %v3306, %v3276
      %v3308 = vadd.f32 %v3307, %v3277
      %v3309 = vadd.f32 %v3308, %v3278
      %v3310 = vadd.f32 %v3309, %v3279
      %v3311 = vadd.f32 %v3310, %v3280
      %v3312 = vadd.f32 %v3311, %v3281
      %v3313 = vadd.f32 %v3312, %v3282
      %v3314 = vadd.f32 %v3313, %v3283
      %v3315 = vadd.f32 %v3314, %v3284
      %v3316 = vadd.f32 %v3315, %v3285
      %v3317 = vadd.f32 %v3316, %v3286
      %v3318 = vadd.f32 %v3317, %v3287
      %v3319 = vadd.f32 %v3318, %v3288
      %v3320 = vadd.f32 %v3319, %v3289
      %v3321 = vadd.f32 %v3320, %v3290
      %v3322 = vadd.f32 %v3321, %v3291
      %v3323 = vadd.f32 %v3322, %v3292
      %v3324 = vadd.f32 %v3323, %v3293
      %v3325 = vrot.slane %v3324, 4
      %v3326 = vadd.f32 %v3324, %v3325
      %v3327 = vrot.slane %v3326, 2
      %v3328 = vadd.f32 %v3326, %v3327
      %v3329 = vrot.slane %v3328, 1
      %v3330 = vadd.f32 %v3328, %v3329
      %p3331 = scmp.eq.s32.totalorder %s24, 0
      // Predicated region
      $region45: #{activated_resblock2d.11} parent=43 // pred_check
        %p3332 = pneg %p3331
      $region46: #{activated_resblock2d.11} parent=43 // pred_check_branch
        %3334 = sbr.rel (%p3332) target = $region48
      $region47: #{activated_resblock2d.11} parent=43 // pred_region
        %3335 = vst [vmem:[%s471] sm:$0x3] 0.0
      $region48: #{activated_resblock2d.11} parent=43 // pred_fallthru
        _
      %v3336 = vld [vmem:[%s471] sm:$0x3]
      %vm3337 = vcmask 1040384
      %v3338 = vsel %vm3337, %v3261, %v3330
      %v3339 = vadd.f32 %v3336, %v3338
      %3340 = vst [vmem:[%s471] sm:$0x3] %v3339
      %s3341 = smul.u32 16, %s24
      %p3342 = scmp.lt.s32.totalorder %s23, 1
      %s3343 = scalar_select %p3342, %s23, 1
      %p3344 = scmp.lt.s32.totalorder %s3341, 15
      %s3345 = scalar_select %p3344, %s3341, 15
      %s3346 = smul.addr %s3345, 2
      %s3347 = smul.addr %s3343, 32
      %s3348 = sadd.s32 %s3346, %s3347
      %s3349 = smul.addr %s3348, 8
      %s3350 = scalar_lea.vmem %s6, %s3349
      %p3351 = scmp.lt.s32.totalorder %s23, 1
      %s3352 = scalar_select %p3351, %s23, 1
      %s3353 = smul.addr %s3352, 2
      %s3354 = scalar_lea.vmem %s7, %s3353
      // Predicated region
      $region49: #{activated_resblock2d.11} parent=43 // pred_check
        %p3355 = pneg %p219
      $region50: #{activated_resblock2d.11} parent=43 // pred_check_branch
        %3357 = sbr.rel (%p3355) target = $region52
      $region51: #{activated_resblock2d.11} parent=43 // pred_region
        %s3358 = smul.u32 16, %s24
      $region52: #{activated_resblock2d.11} parent=43 // pred_fallthru
        _
      // Predicated region
      $region53: #{activated_resblock2d.11} parent=43 // pred_check
        %p3359 = pneg %p245
      $region54: #{activated_resblock2d.11} parent=43 // pred_check_branch
        %3361 = sbr.rel (%p3359) target = $region56
      $region55: #{activated_resblock2d.11} parent=43 // pred_region
        _
      $region56: #{activated_resblock2d.11} parent=43 // pred_fallthru
        _
    $region44: #{activated_resblock2d.11} parent=5 // pred_fallthru
      _
    %p3362 = scmp.le.s32.totalorder 2, %s14
    // Predicated region
    $region57: #{activated_resblock2d.11} parent=5 // pred_check
      %p3363 = pneg %p3362
    $region58: #{activated_resblock2d.11} parent=5 // pred_check_branch
      %3365 = sbr.rel (%p3363) target = $region60
    $region59: #{activated_resblock2d.11} parent=5 // pred_region
      %s3366 = ssub.s32 %s14, 2
      // Predicated region
      $region61: #{activated_resblock2d.11} parent=59 // pred_check
        %p3367 = pneg %p225
      $region62: #{activated_resblock2d.11} parent=59 // pred_check_branch
        %3369 = sbr.rel (%p3367) target = $region64
      $region63: #{activated_resblock2d.11} parent=59 // pred_region
        %s3370 = smul.u32 16, %s26
        %p3371 = scmp.lt.s32.totalorder %s25, 1
        %s3372 = scalar_select %p3371, %s25, 1
        %p3373 = scmp.lt.s32.totalorder %s3370, 15
        %s3374 = scalar_select %p3373, %s3370, 15
        %s3375 = smul.addr %s3374, 2
        %s3376 = smul.addr %s3372, 32
        %s3377 = sadd.s32 %s3375, %s3376
        %s3378 = smul.addr %s3377, 8
        %s3379 = scalar_lea.vmem %s6, %s3378
      $region64: #{activated_resblock2d.11} parent=59 // pred_fallthru
        _
      // Predicated region
      $region65: #{activated_resblock2d.11} parent=59 // pred_check
        %p3380 = pneg %p251
      $region66: #{activated_resblock2d.11} parent=59 // pred_check_branch
        %3382 = sbr.rel (%p3380) target = $region68
      $region67: #{activated_resblock2d.11} parent=59 // pred_region
        %p3383 = scmp.lt.s32.totalorder %s25, 1
        %s3384 = scalar_select %p3383, %s25, 1
        %s3385 = smul.addr %s3384, 2
        %s3386 = scalar_lea.vmem %s7, %s3385
      $region68: #{activated_resblock2d.11} parent=59 // pred_fallthru
        _
    $region60: #{activated_resblock2d.11} parent=5 // pred_fallthru
      _
  $region6: #{activated_resblock2d.11} parent=0 // loop_footer
    %s18 = sadd.s32 1, %s14
  $region7: #{activated_resblock2d.11} parent=0 // loop_footer_branch
    %13 = sbr.rel target = $region3
  $region8: #{activated_resblock2d.11} parent=0 // loop_exit
    _

</llo_original>
